<compile_context>
chip_gen: v5e
topology: v5e:2x2
jax: 0.10.0
libtpu: 0.0.40
codegen_flags: <defaults>
</compile_context>

<pallas_src>
import functools

import jax
import jax.numpy as jnp
import numpy as np
from jax.experimental import pallas as pl
from jax.experimental.pallas import tpu as pltpu

# Static problem sizes.
H_IN, W_IN, C_IN = 16, 16, 3
C_PAD = 8                      # input channels zero-padded 3 -> 8  (W*C = 128 lanes)
WC_IN = W_IN * C_PAD           # 128
H1, C1 = 14, 16
H2, C2 = 12, 32
H3, C3 = 10, 64
POOL = 5
FEAT = C3 * POOL * POOL        # 1600 (torch flatten width)
HID = 448
HID_PAD = 512                  # fc1 width padded to a lane multiple of 128
NCLS = 100
OUT_PAD = 128                  # lane-dense padded logits width


def model_kernel(x_ref, t1_ref, bc1_ref, t2_ref, bc2_ref, t3_ref, bc3_ref,
                 w1f_ref, bl1_ref, w2_ref, b2_ref, out_ref):
    """One batch tile per grid step. Activation layout: [H, B_TILE, W*C]."""
    bt = x_ref.shape[1]                              # batch tile (static)

    def conv3x3_relu(a16, t_ref, b_ref, h_out, out_dtype):
        # a16: [h_in, bt, W_in*C_in] bf16 (already cast once by the caller).
        # t_ref: [3, W_in*C_in, W_out*C_out] bf16 block-Toeplitz weights.
        wc_in = a16.shape[-1]
        wc_out = t_ref.shape[-1]
        # Accumulator starts from the first dot (no zeros init / extra add).
        acc = jnp.dot(a16[0:h_out].reshape(h_out * bt, wc_in), t_ref[0],
                      preferred_element_type=jnp.float32)
        for kh in range(1, 3):                       # 3 matmuls total per conv layer
            acc = acc + jnp.dot(a16[kh:kh + h_out].reshape(h_out * bt, wc_in),
                                t_ref[kh], preferred_element_type=jnp.float32)
        y = jnp.maximum(acc + b_ref[...], 0.0)       # bias + ReLU in f32
        return y.reshape(h_out, bt, wc_out).astype(out_dtype)

    x16 = x_ref[...].astype(jnp.bfloat16)            # cast input tile once
    y1 = conv3x3_relu(x16, t1_ref, bc1_ref, H1, jnp.bfloat16)   # [14, bt, 224] bf16
    y2 = conv3x3_relu(y1, t2_ref, bc2_ref, H2, jnp.bfloat16)    # [12, bt, 384] bf16
    y3 = conv3x3_relu(y2, t3_ref, bc3_ref, H3, jnp.float32)     # [10, bt, 640] f32

    # 2x2 avg pool + flatten + Linear(1600,448) fused into one K=3200 matmul.
    # Height-pair sums stay in f32; width pool, 0.25 factor and torch's (C,H,W)
    # flatten order are folded into w1f on the host.  640 = 5x128 so the lane
    # concatenation is vreg-aligned.
    pooled = jnp.concatenate([y3[2 * i] + y3[2 * i + 1] for i in range(POOL)],
                             axis=-1)                # [bt, 3200] f32
    h1 = jnp.dot(pooled.astype(jnp.bfloat16), w1f_ref[...],
                 preferred_element_type=jnp.float32) + bl1_ref[...]   # [bt, 512]

    logits = jnp.dot(h1.astype(jnp.bfloat16), w2_ref[...],
                     preferred_element_type=jnp.float32) + b2_ref[...]
    out_ref[...] = logits                            # [bt, 128] lane-dense store


def prepare_params(w1_t, b1_t, w2_t, b2_t, w3_t, b3_t,
                   wl1_t, bl1_t, wl2_t, bl2_t):
    """Repack torch-layout parameters (all slicing/reshaping done once on host)."""

    def toeplitz(wt, w_in, w_out, cin_pad=None):
        # wt: [Cout, Cin, 3, 3] -> [3, W_in*Cin_pad, W_out*Cout] block-Toeplitz bf16.
        wt = np.asarray(wt, np.float32)
        cout, cin, _, _ = wt.shape
        cp = cin if cin_pad is None else cin_pad
        t = np.zeros((3, w_in * cp, w_out * cout), np.float32)
        for kh in range(3):
            for kw in range(3):
                blk = wt[:, :, kh, kw].T                       # [Cin, Cout]
                for wo in range(w_out):
                    wi = wo + kw
                    t[kh, wi * cp:wi * cp + cin,
                          wo * cout:(wo + 1) * cout] = blk
        return jnp.asarray(t, jnp.bfloat16)

    def bias_row(b, w_out):
        return jnp.asarray(np.tile(np.asarray(b, np.float32), w_out)[None, :],
                           jnp.float32)

    # Folded 2x2-avg-pool + torch-flatten + Linear(1600,448) -> [3200, 512].
    # Pooled-row block i occupies K rows i*640:(i+1)*640; within a block, row
    # (w3*64 + c) multiplies torch column c*25 + i*5 + (w3//2), scaled by 0.25.
    wl1 = np.asarray(wl1_t, np.float32)                        # [448, 1600]
    w1f = np.zeros((POOL, H3 * C3, HID_PAD), np.float32)
    for i in range(POOL):
        for w3 in range(H3):
            j = w3 // 2
            w1f[i, w3 * C3:(w3 + 1) * C3, :HID] = \
                0.25 * wl1[:, i * POOL + j::POOL * POOL].T
    w1f = w1f.reshape(POOL * H3 * C3, HID_PAD)                 # [3200, 512]

    bl1 = np.zeros((1, HID_PAD), np.float32)
    bl1[0, :HID] = np.asarray(bl1_t, np.float32)

    # Linear(448,100): K padded to 512 (zero rows), output padded to 128 lanes.
    wl2 = np.asarray(wl2_t, np.float32)                        # [100, 448]
    w2p = np.zeros((HID_PAD, OUT_PAD), np.float32)
    w2p[:HID, :NCLS] = wl2.T
    b2p = np.zeros((1, OUT_PAD), np.float32)
    b2p[0, :NCLS] = np.asarray(bl2_t, np.float32)

    return (toeplitz(w1_t, W_IN, H1, cin_pad=C_PAD), bias_row(b1_t, H1),
            toeplitz(w2_t, H1, H2), bias_row(b2_t, H2),
            toeplitz(w3_t, H2, H3), bias_row(b3_t, H3),
            jnp.asarray(w1f, jnp.bfloat16),
            jnp.asarray(bl1, jnp.float32),
            jnp.asarray(w2p, jnp.bfloat16),
            jnp.asarray(b2p, jnp.float32))


def _full_spec(p):
    zeros = (0,) * p.ndim
    return pl.BlockSpec(p.shape, lambda b, z=zeros: z)


def _round_up(x, m):
    return -(-x // m) * m


@functools.partial(jax.jit, static_argnames=("b_tile",))
def simple_model_forward(x_nchw, params, b_tile=128):
    # The host packing (Toeplitz + pool folding) is hard-coded to 16x16 RGB input.
    assert x_nchw.shape[1:] == (C_IN, H_IN, W_IN), \
        f"expected [N,{C_IN},{H_IN},{W_IN}] input, got {x_nchw.shape}"
    n = x_nchw.shape[0]

    # Effective batch tile: large (128) for throughput, but never larger than the
    # padded batch.  For big batches the grid has >= 2 steps, which the "parallel"
    # semantics shard across both v7x TensorCores.
    bt = max(8, min(_round_up(b_tile, 8), _round_up(n, 8)))
    n_pad = _round_up(n, bt)

    # NCHW -> [H, N, W, C] -> pad C 3->8 -> [H, N, W*C_PAD=128] (lane-dense).
    xt = jnp.transpose(x_nchw.astype(jnp.float32), (2, 0, 3, 1))   # [H, N, W, C]
    xt = jnp.pad(xt, ((0, 0), (0, n_pad - n), (0, 0), (0, C_PAD - C_IN)))
    xt = xt.reshape(H_IN, n_pad, WC_IN)

    in_specs = [pl.BlockSpec((H_IN, bt, WC_IN), lambda b: (0, b, 0))]
    in_specs += [_full_spec(p) for p in params]

    out = pl.pallas_call(
        model_kernel,
        out_shape=jax.ShapeDtypeStruct((n_pad, OUT_PAD), jnp.float32),
        grid=(n_pad // bt,),
        in_specs=in_specs,
        out_specs=pl.BlockSpec((bt, OUT_PAD), lambda b: (b, 0)),
        compiler_params=pltpu.CompilerParams(
            dimension_semantics=("parallel",),       # shard batch tiles across TCs
            vmem_limit_bytes=48 * 1024 * 1024),
    )(xt, *params)
    return out[:n, :NCLS]


def reference_forward(x_nchw, w1_t, b1_t, w2_t, b2_t, w3_t, b3_t,
                      wl1_t, bl1_t, wl2_t, bl2_t):
    y = x_nchw
    for w, b in ((w1_t, b1_t), (w2_t, b2_t), (w3_t, b3_t)):
        y = jax.lax.conv_general_dilated(
            y, w, window_strides=(1, 1), padding="VALID",
            dimension_numbers=("NCHW", "OIHW", "NCHW"),
            precision=jax.lax.Precision.HIGHEST)
        y = jnp.maximum(y + b[None, :, None, None], 0.0)
    n, c, _, _ = y.shape
    y = y.reshape(n, c, POOL, 2, POOL, 2).mean(axis=(3, 5))      # adaptive avg pool
    flat = y.reshape(n, c * POOL * POOL)                         # torch.flatten(x, 1)
    h = jnp.dot(flat, wl1_t.T, precision=jax.lax.Precision.HIGHEST) + bl1_t
    return jnp.dot(h, wl2_t.T, precision=jax.lax.Precision.HIGHEST) + bl2_t


if __name__ == "__main__":
    key = jax.random.PRNGKey(0)
    keys = jax.random.split(key, 11)

    x = jax.random.normal(keys[0], (2, C_IN, H_IN, W_IN), jnp.float32)

    # Deterministic synthetic parameters (torch layouts).
    w1_t = jax.random.normal(keys[1], (C1, C_IN, 3, 3), jnp.float32) * 0.2
    b1_t = jax.random.normal(keys[2], (C1,), jnp.float32) * 0.1
    w2_t = jax.random.normal(keys[3], (C2, C1, 3, 3), jnp.float32) * 0.1
    b2_t = jax.random.normal(keys[4], (C2,), jnp.float32) * 0.1
    w3_t = jax.random.normal(keys[5], (C3, C2, 3, 3), jnp.float32) * 0.05
    b3_t = jax.random.normal(keys[6], (C3,), jnp.float32) * 0.1
    wl1_t = jax.random.normal(keys[7], (HID, FEAT), jnp.float32) * 0.02
    bl1_t = jax.random.normal(keys[8], (HID,), jnp.float32) * 0.1
    wl2_t = jax.random.normal(keys[9], (NCLS, HID), jnp.float32) * 0.05
    bl2_t = jax.random.normal(keys[10], (NCLS,), jnp.float32) * 0.1

    params = prepare_params(w1_t, b1_t, w2_t, b2_t, w3_t, b3_t,
                            wl1_t, bl1_t, wl2_t, bl2_t)

    out = simple_model_forward(x, params)
    out = jax.block_until_ready(out)
    assert out.shape == (2, NCLS) and out.dtype == jnp.float32

    ref = reference_forward(x, w1_t, b1_t, w2_t, b2_t, w3_t, b3_t,
                            wl1_t, bl1_t, wl2_t, bl2_t)
    ref = jax.block_until_ready(ref)
    max_err = float(jnp.max(jnp.abs(out - ref)))
    # bf16 matmul operands with f32 accumulation -> loosened tolerance.
    assert max_err < 1e-1, f"mismatch vs reference: max abs err {max_err}"

    print("KERNEL_OK")
</pallas_src>

<mosaic_0001>
module attributes {stable_mosaic.version = 11 : i64} {
  func.func @model_kernel(%arg0: i32, %arg1: memref<16x8x128xf32, #tpu.memory_space<vmem>>, %arg2: memref<3x128x224xbf16, #tpu.memory_space<vmem>>, %arg3: memref<1x224xf32, #tpu.memory_space<vmem>>, %arg4: memref<3x224x384xbf16, #tpu.memory_space<vmem>>, %arg5: memref<1x384xf32, #tpu.memory_space<vmem>>, %arg6: memref<3x384x640xbf16, #tpu.memory_space<vmem>>, %arg7: memref<1x640xf32, #tpu.memory_space<vmem>>, %arg8: memref<3200x512xbf16, #tpu.memory_space<vmem>>, %arg9: memref<1x512xf32, #tpu.memory_space<vmem>>, %arg10: memref<512x128xbf16, #tpu.memory_space<vmem>>, %arg11: memref<1x128xf32, #tpu.memory_space<vmem>>, %arg12: memref<8x128xf32, #tpu.memory_space<vmem>>) attributes {dimension_semantics = [#tpu.dimension_semantics<parallel>], iteration_bounds = array<i64: 1>, scalar_prefetch = 0 : i64, scratch_operands = 0 : i64, tpu.core_type = #tpu.core_type<tc>, window_params = [{transform_indices = @transform_0, window_bounds = array<i64: 16, 8, 128>}, {pipeline_mode = #tpu.pipeline_mode<synchronous>, transform_indices = @transform_1, window_bounds = array<i64: 3, 128, 224>}, {pipeline_mode = #tpu.pipeline_mode<synchronous>, transform_indices = @transform_2, window_bounds = array<i64: 1, 224>}, {pipeline_mode = #tpu.pipeline_mode<synchronous>, transform_indices = @transform_3, window_bounds = array<i64: 3, 224, 384>}, {pipeline_mode = #tpu.pipeline_mode<synchronous>, transform_indices = @transform_4, window_bounds = array<i64: 1, 384>}, {pipeline_mode = #tpu.pipeline_mode<synchronous>, transform_indices = @transform_5, window_bounds = array<i64: 3, 384, 640>}, {pipeline_mode = #tpu.pipeline_mode<synchronous>, transform_indices = @transform_6, window_bounds = array<i64: 1, 640>}, {pipeline_mode = #tpu.pipeline_mode<synchronous>, transform_indices = @transform_7, window_bounds = array<i64: 3200, 512>}, {pipeline_mode = #tpu.pipeline_mode<synchronous>, transform_indices = @transform_8, window_bounds = array<i64: 1, 512>}, {pipeline_mode = #tpu.pipeline_mode<synchronous>, transform_indices = @transform_9, window_bounds = array<i64: 512, 128>}, {pipeline_mode = #tpu.pipeline_mode<synchronous>, transform_indices = @transform_10, window_bounds = array<i64: 1, 128>}, {transform_indices = @transform_11, window_bounds = array<i64: 8, 128>}]} {
    %c0 = arith.constant 0 : index
    %c0_0 = arith.constant 0 : index
    %c0_1 = arith.constant 0 : index
    %0 = vector.load %arg1[%c0, %c0_0, %c0_1] : memref<16x8x128xf32, #tpu.memory_space<vmem>>, vector<16x8x128xf32>
    %1 = arith.truncf %0 : vector<16x8x128xf32> to vector<16x8x128xbf16>
    %2 = vector.extract_strided_slice %1 {offsets = [0, 0, 0], sizes = [14, 8, 128], strides = [1, 1, 1]} : vector<16x8x128xbf16> to vector<14x8x128xbf16>
    %3 = vector.shape_cast %2 : vector<14x8x128xbf16> to vector<112x128xbf16>
    %c0_2 = arith.constant 0 : index
    %c0_3 = arith.constant 0 : index
    %c0_4 = arith.constant 0 : index
    %4 = vector.load %arg2[%c0_2, %c0_3, %c0_4] : memref<3x128x224xbf16, #tpu.memory_space<vmem>>, vector<1x128x224xbf16>
    %5 = vector.shape_cast %4 : vector<1x128x224xbf16> to vector<128x224xbf16>
    %cst = arith.constant dense<0.000000e+00> : vector<112x224xf32>
    %6 = tpu.matmul %3, %5, %cst {dimension_numbers = #tpu.dot_dimension_numbers<[1], [0], [0], [1], [0, 0, 1, 1], [], []>} : vector<112x128xbf16>, vector<128x224xbf16>, vector<112x224xf32> -> vector<112x224xf32>
    %7 = vector.extract_strided_slice %1 {offsets = [1, 0, 0], sizes = [14, 8, 128], strides = [1, 1, 1]} : vector<16x8x128xbf16> to vector<14x8x128xbf16>
    %8 = vector.shape_cast %7 : vector<14x8x128xbf16> to vector<112x128xbf16>
    %c1 = arith.constant 1 : index
    %c0_5 = arith.constant 0 : index
    %c0_6 = arith.constant 0 : index
    %9 = vector.load %arg2[%c1, %c0_5, %c0_6] : memref<3x128x224xbf16, #tpu.memory_space<vmem>>, vector<1x128x224xbf16>
    %10 = vector.shape_cast %9 : vector<1x128x224xbf16> to vector<128x224xbf16>
    %cst_7 = arith.constant dense<0.000000e+00> : vector<112x224xf32>
    %11 = tpu.matmul %8, %10, %cst_7 {dimension_numbers = #tpu.dot_dimension_numbers<[1], [0], [0], [1], [0, 0, 1, 1], [], []>} : vector<112x128xbf16>, vector<128x224xbf16>, vector<112x224xf32> -> vector<112x224xf32>
    %12 = arith.addf %6, %11 : vector<112x224xf32>
    %13 = vector.extract_strided_slice %1 {offsets = [2, 0, 0], sizes = [14, 8, 128], strides = [1, 1, 1]} : vector<16x8x128xbf16> to vector<14x8x128xbf16>
    %14 = vector.shape_cast %13 : vector<14x8x128xbf16> to vector<112x128xbf16>
    %c2 = arith.constant 2 : index
    %c0_8 = arith.constant 0 : index
    %c0_9 = arith.constant 0 : index
    %15 = vector.load %arg2[%c2, %c0_8, %c0_9] : memref<3x128x224xbf16, #tpu.memory_space<vmem>>, vector<1x128x224xbf16>
    %16 = vector.shape_cast %15 : vector<1x128x224xbf16> to vector<128x224xbf16>
    %cst_10 = arith.constant dense<0.000000e+00> : vector<112x224xf32>
    %17 = tpu.matmul %14, %16, %cst_10 {dimension_numbers = #tpu.dot_dimension_numbers<[1], [0], [0], [1], [0, 0, 1, 1], [], []>} : vector<112x128xbf16>, vector<128x224xbf16>, vector<112x224xf32> -> vector<112x224xf32>
    %18 = arith.addf %12, %17 : vector<112x224xf32>
    %c0_11 = arith.constant 0 : index
    %c0_12 = arith.constant 0 : index
    %19 = vector.load %arg3[%c0_11, %c0_12] : memref<1x224xf32, #tpu.memory_space<vmem>>, vector<1x224xf32>
    %20 = vector.broadcast %19 : vector<1x224xf32> to vector<112x224xf32>
    %21 = arith.addf %18, %20 : vector<112x224xf32>
    %cst_13 = arith.constant 0.000000e+00 : f32
    %22 = vector.broadcast %cst_13 : f32 to vector<112x224xf32>
    %23 = arith.maximumf %21, %22 : vector<112x224xf32>
    %24 = vector.shape_cast %23 : vector<112x224xf32> to vector<14x8x224xf32>
    %25 = arith.truncf %24 : vector<14x8x224xf32> to vector<14x8x224xbf16>
    %26 = vector.extract_strided_slice %25 {offsets = [0, 0, 0], sizes = [12, 8, 224], strides = [1, 1, 1]} : vector<14x8x224xbf16> to vector<12x8x224xbf16>
    %27 = vector.shape_cast %26 : vector<12x8x224xbf16> to vector<96x224xbf16>
    %c0_14 = arith.constant 0 : index
    %c0_15 = arith.constant 0 : index
    %c0_16 = arith.constant 0 : index
    %28 = vector.load %arg4[%c0_14, %c0_15, %c0_16] : memref<3x224x384xbf16, #tpu.memory_space<vmem>>, vector<1x224x384xbf16>
    %29 = vector.shape_cast %28 : vector<1x224x384xbf16> to vector<224x384xbf16>
    %cst_17 = arith.constant dense<0.000000e+00> : vector<96x384xf32>
    %30 = tpu.matmul %27, %29, %cst_17 {dimension_numbers = #tpu.dot_dimension_numbers<[1], [0], [0], [1], [0, 0, 1, 1], [], []>} : vector<96x224xbf16>, vector<224x384xbf16>, vector<96x384xf32> -> vector<96x384xf32>
    %31 = vector.extract_strided_slice %25 {offsets = [1, 0, 0], sizes = [12, 8, 224], strides = [1, 1, 1]} : vector<14x8x224xbf16> to vector<12x8x224xbf16>
    %32 = vector.shape_cast %31 : vector<12x8x224xbf16> to vector<96x224xbf16>
    %c1_18 = arith.constant 1 : index
    %c0_19 = arith.constant 0 : index
    %c0_20 = arith.constant 0 : index
    %33 = vector.load %arg4[%c1_18, %c0_19, %c0_20] : memref<3x224x384xbf16, #tpu.memory_space<vmem>>, vector<1x224x384xbf16>
    %34 = vector.shape_cast %33 : vector<1x224x384xbf16> to vector<224x384xbf16>
    %cst_21 = arith.constant dense<0.000000e+00> : vector<96x384xf32>
    %35 = tpu.matmul %32, %34, %cst_21 {dimension_numbers = #tpu.dot_dimension_numbers<[1], [0], [0], [1], [0, 0, 1, 1], [], []>} : vector<96x224xbf16>, vector<224x384xbf16>, vector<96x384xf32> -> vector<96x384xf32>
    %36 = arith.addf %30, %35 : vector<96x384xf32>
    %37 = vector.extract_strided_slice %25 {offsets = [2, 0, 0], sizes = [12, 8, 224], strides = [1, 1, 1]} : vector<14x8x224xbf16> to vector<12x8x224xbf16>
    %38 = vector.shape_cast %37 : vector<12x8x224xbf16> to vector<96x224xbf16>
    %c2_22 = arith.constant 2 : index
    %c0_23 = arith.constant 0 : index
    %c0_24 = arith.constant 0 : index
    %39 = vector.load %arg4[%c2_22, %c0_23, %c0_24] : memref<3x224x384xbf16, #tpu.memory_space<vmem>>, vector<1x224x384xbf16>
    %40 = vector.shape_cast %39 : vector<1x224x384xbf16> to vector<224x384xbf16>
    %cst_25 = arith.constant dense<0.000000e+00> : vector<96x384xf32>
    %41 = tpu.matmul %38, %40, %cst_25 {dimension_numbers = #tpu.dot_dimension_numbers<[1], [0], [0], [1], [0, 0, 1, 1], [], []>} : vector<96x224xbf16>, vector<224x384xbf16>, vector<96x384xf32> -> vector<96x384xf32>
    %42 = arith.addf %36, %41 : vector<96x384xf32>
    %c0_26 = arith.constant 0 : index
    %c0_27 = arith.constant 0 : index
    %43 = vector.load %arg5[%c0_26, %c0_27] : memref<1x384xf32, #tpu.memory_space<vmem>>, vector<1x384xf32>
    %44 = vector.broadcast %43 : vector<1x384xf32> to vector<96x384xf32>
    %45 = arith.addf %42, %44 : vector<96x384xf32>
    %cst_28 = arith.constant 0.000000e+00 : f32
    %46 = vector.broadcast %cst_28 : f32 to vector<96x384xf32>
    %47 = arith.maximumf %45, %46 : vector<96x384xf32>
    %48 = vector.shape_cast %47 : vector<96x384xf32> to vector<12x8x384xf32>
    %49 = arith.truncf %48 : vector<12x8x384xf32> to vector<12x8x384xbf16>
    %50 = vector.extract_strided_slice %49 {offsets = [0, 0, 0], sizes = [10, 8, 384], strides = [1, 1, 1]} : vector<12x8x384xbf16> to vector<10x8x384xbf16>
    %51 = vector.shape_cast %50 : vector<10x8x384xbf16> to vector<80x384xbf16>
    %c0_29 = arith.constant 0 : index
    %c0_30 = arith.constant 0 : index
    %c0_31 = arith.constant 0 : index
    %52 = vector.load %arg6[%c0_29, %c0_30, %c0_31] : memref<3x384x640xbf16, #tpu.memory_space<vmem>>, vector<1x384x640xbf16>
    %53 = vector.shape_cast %52 : vector<1x384x640xbf16> to vector<384x640xbf16>
    %cst_32 = arith.constant dense<0.000000e+00> : vector<80x640xf32>
    %54 = tpu.matmul %51, %53, %cst_32 {dimension_numbers = #tpu.dot_dimension_numbers<[1], [0], [0], [1], [0, 0, 1, 1], [], []>} : vector<80x384xbf16>, vector<384x640xbf16>, vector<80x640xf32> -> vector<80x640xf32>
    %55 = vector.extract_strided_slice %49 {offsets = [1, 0, 0], sizes = [10, 8, 384], strides = [1, 1, 1]} : vector<12x8x384xbf16> to vector<10x8x384xbf16>
    %56 = vector.shape_cast %55 : vector<10x8x384xbf16> to vector<80x384xbf16>
    %c1_33 = arith.constant 1 : index
    %c0_34 = arith.constant 0 : index
    %c0_35 = arith.constant 0 : index
    %57 = vector.load %arg6[%c1_33, %c0_34, %c0_35] : memref<3x384x640xbf16, #tpu.memory_space<vmem>>, vector<1x384x640xbf16>
    %58 = vector.shape_cast %57 : vector<1x384x640xbf16> to vector<384x640xbf16>
    %cst_36 = arith.constant dense<0.000000e+00> : vector<80x640xf32>
    %59 = tpu.matmul %56, %58, %cst_36 {dimension_numbers = #tpu.dot_dimension_numbers<[1], [0], [0], [1], [0, 0, 1, 1], [], []>} : vector<80x384xbf16>, vector<384x640xbf16>, vector<80x640xf32> -> vector<80x640xf32>
    %60 = arith.addf %54, %59 : vector<80x640xf32>
    %61 = vector.extract_strided_slice %49 {offsets = [2, 0, 0], sizes = [10, 8, 384], strides = [1, 1, 1]} : vector<12x8x384xbf16> to vector<10x8x384xbf16>
    %62 = vector.shape_cast %61 : vector<10x8x384xbf16> to vector<80x384xbf16>
    %c2_37 = arith.constant 2 : index
    %c0_38 = arith.constant 0 : index
    %c0_39 = arith.constant 0 : index
    %63 = vector.load %arg6[%c2_37, %c0_38, %c0_39] : memref<3x384x640xbf16, #tpu.memory_space<vmem>>, vector<1x384x640xbf16>
    %64 = vector.shape_cast %63 : vector<1x384x640xbf16> to vector<384x640xbf16>
    %cst_40 = arith.constant dense<0.000000e+00> : vector<80x640xf32>
    %65 = tpu.matmul %62, %64, %cst_40 {dimension_numbers = #tpu.dot_dimension_numbers<[1], [0], [0], [1], [0, 0, 1, 1], [], []>} : vector<80x384xbf16>, vector<384x640xbf16>, vector<80x640xf32> -> vector<80x640xf32>
    %66 = arith.addf %60, %65 : vector<80x640xf32>
    %c0_41 = arith.constant 0 : index
    %c0_42 = arith.constant 0 : index
    %67 = vector.load %arg7[%c0_41, %c0_42] : memref<1x640xf32, #tpu.memory_space<vmem>>, vector<1x640xf32>
    %68 = vector.broadcast %67 : vector<1x640xf32> to vector<80x640xf32>
    %69 = arith.addf %66, %68 : vector<80x640xf32>
    %cst_43 = arith.constant 0.000000e+00 : f32
    %70 = vector.broadcast %cst_43 : f32 to vector<80x640xf32>
    %71 = arith.maximumf %69, %70 : vector<80x640xf32>
    %72 = vector.shape_cast %71 : vector<80x640xf32> to vector<10x8x640xf32>
    %73 = vector.extract_strided_slice %72 {offsets = [0, 0, 0], sizes = [1, 8, 640], strides = [1, 1, 1]} : vector<10x8x640xf32> to vector<1x8x640xf32>
    %74 = vector.shape_cast %73 : vector<1x8x640xf32> to vector<8x640xf32>
    %75 = vector.extract_strided_slice %72 {offsets = [1, 0, 0], sizes = [1, 8, 640], strides = [1, 1, 1]} : vector<10x8x640xf32> to vector<1x8x640xf32>
    %76 = vector.shape_cast %75 : vector<1x8x640xf32> to vector<8x640xf32>
    %77 = arith.addf %74, %76 : vector<8x640xf32>
    %78 = vector.extract_strided_slice %72 {offsets = [2, 0, 0], sizes = [1, 8, 640], strides = [1, 1, 1]} : vector<10x8x640xf32> to vector<1x8x640xf32>
    %79 = vector.shape_cast %78 : vector<1x8x640xf32> to vector<8x640xf32>
    %80 = vector.extract_strided_slice %72 {offsets = [3, 0, 0], sizes = [1, 8, 640], strides = [1, 1, 1]} : vector<10x8x640xf32> to vector<1x8x640xf32>
    %81 = vector.shape_cast %80 : vector<1x8x640xf32> to vector<8x640xf32>
    %82 = arith.addf %79, %81 : vector<8x640xf32>
    %83 = vector.extract_strided_slice %72 {offsets = [4, 0, 0], sizes = [1, 8, 640], strides = [1, 1, 1]} : vector<10x8x640xf32> to vector<1x8x640xf32>
    %84 = vector.shape_cast %83 : vector<1x8x640xf32> to vector<8x640xf32>
    %85 = vector.extract_strided_slice %72 {offsets = [5, 0, 0], sizes = [1, 8, 640], strides = [1, 1, 1]} : vector<10x8x640xf32> to vector<1x8x640xf32>
    %86 = vector.shape_cast %85 : vector<1x8x640xf32> to vector<8x640xf32>
    %87 = arith.addf %84, %86 : vector<8x640xf32>
    %88 = vector.extract_strided_slice %72 {offsets = [6, 0, 0], sizes = [1, 8, 640], strides = [1, 1, 1]} : vector<10x8x640xf32> to vector<1x8x640xf32>
    %89 = vector.shape_cast %88 : vector<1x8x640xf32> to vector<8x640xf32>
    %90 = vector.extract_strided_slice %72 {offsets = [7, 0, 0], sizes = [1, 8, 640], strides = [1, 1, 1]} : vector<10x8x640xf32> to vector<1x8x640xf32>
    %91 = vector.shape_cast %90 : vector<1x8x640xf32> to vector<8x640xf32>
    %92 = arith.addf %89, %91 : vector<8x640xf32>
    %93 = vector.extract_strided_slice %72 {offsets = [8, 0, 0], sizes = [1, 8, 640], strides = [1, 1, 1]} : vector<10x8x640xf32> to vector<1x8x640xf32>
    %94 = vector.shape_cast %93 : vector<1x8x640xf32> to vector<8x640xf32>
    %95 = vector.extract_strided_slice %72 {offsets = [9, 0, 0], sizes = [1, 8, 640], strides = [1, 1, 1]} : vector<10x8x640xf32> to vector<1x8x640xf32>
    %96 = vector.shape_cast %95 : vector<1x8x640xf32> to vector<8x640xf32>
    %97 = arith.addf %94, %96 : vector<8x640xf32>
    %98 = tpu.concatenate %77, %82, %87, %92, %97 in 1 : vector<8x640xf32>, vector<8x640xf32>, vector<8x640xf32>, vector<8x640xf32>, vector<8x640xf32> -> vector<8x3200xf32>
    %99 = arith.truncf %98 : vector<8x3200xf32> to vector<8x3200xbf16>
    %c0_44 = arith.constant 0 : index
    %c0_45 = arith.constant 0 : index
    %100 = vector.load %arg8[%c0_44, %c0_45] : memref<3200x512xbf16, #tpu.memory_space<vmem>>, vector<3200x512xbf16>
    %cst_46 = arith.constant dense<0.000000e+00> : vector<8x512xf32>
    %101 = tpu.matmul %99, %100, %cst_46 {dimension_numbers = #tpu.dot_dimension_numbers<[1], [0], [0], [1], [0, 0, 1, 1], [], []>} : vector<8x3200xbf16>, vector<3200x512xbf16>, vector<8x512xf32> -> vector<8x512xf32>
    %c0_47 = arith.constant 0 : index
    %c0_48 = arith.constant 0 : index
    %102 = vector.load %arg9[%c0_47, %c0_48] : memref<1x512xf32, #tpu.memory_space<vmem>>, vector<1x512xf32>
    %103 = vector.broadcast %102 : vector<1x512xf32> to vector<8x512xf32>
    %104 = arith.addf %101, %103 : vector<8x512xf32>
    %105 = arith.truncf %104 : vector<8x512xf32> to vector<8x512xbf16>
    %c0_49 = arith.constant 0 : index
    %c0_50 = arith.constant 0 : index
    %106 = vector.load %arg10[%c0_49, %c0_50] : memref<512x128xbf16, #tpu.memory_space<vmem>>, vector<512x128xbf16>
    %cst_51 = arith.constant dense<0.000000e+00> : vector<8x128xf32>
    %107 = tpu.matmul %105, %106, %cst_51 {dimension_numbers = #tpu.dot_dimension_numbers<[1], [0], [0], [1], [0, 0, 1, 1], [], []>} : vector<8x512xbf16>, vector<512x128xbf16>, vector<8x128xf32> -> vector<8x128xf32>
    %c0_52 = arith.constant 0 : index
    %c0_53 = arith.constant 0 : index
    %108 = vector.load %arg11[%c0_52, %c0_53] : memref<1x128xf32, #tpu.memory_space<vmem>>, vector<1x128xf32>
    %109 = vector.broadcast %108 : vector<1x128xf32> to vector<8x128xf32>
    %110 = arith.addf %107, %109 : vector<8x128xf32>
    %c0_54 = arith.constant 0 : index
    %c0_55 = arith.constant 0 : index
    %111 = vector.load %arg12[%c0_54, %c0_55] : memref<8x128xf32, #tpu.memory_space<vmem>>, vector<8x128xf32>
    tpu.vector_store %arg12[%c0_54, %c0_55], %110 {strides = array<i32>} : memref<8x128xf32, #tpu.memory_space<vmem>>, vector<8x128xf32>,
    return
  }
  func.func @transform_0(%arg0: i32) -> (i32, i32, i32) {
    %c0_i32 = arith.constant 0 : i32
    %c0_i32_0 = arith.constant 0 : i32
    %c0_i32_1 = arith.constant 0 : i32
    return %c0_i32, %arg0, %c0_i32_0 : i32, i32, i32
  }
  func.func @transform_1(%arg0: i32) -> (i32, i32, i32) {
    %c0_i32 = arith.constant 0 : i32
    %c0_i32_0 = arith.constant 0 : i32
    %c0_i32_1 = arith.constant 0 : i32
    %c0_i32_2 = arith.constant 0 : i32
    return %c0_i32, %c0_i32_0, %c0_i32_1 : i32, i32, i32
  }
  func.func @transform_2(%arg0: i32) -> (i32, i32) {
    %c0_i32 = arith.constant 0 : i32
    %c0_i32_0 = arith.constant 0 : i32
    %c0_i32_1 = arith.constant 0 : i32
    return %c0_i32, %c0_i32_0 : i32, i32
  }
  func.func @transform_3(%arg0: i32) -> (i32, i32, i32) {
    %c0_i32 = arith.constant 0 : i32
    %c0_i32_0 = arith.constant 0 : i32
    %c0_i32_1 = arith.constant 0 : i32
    %c0_i32_2 = arith.constant 0 : i32
    return %c0_i32, %c0_i32_0, %c0_i32_1 : i32, i32, i32
  }
  func.func @transform_4(%arg0: i32) -> (i32, i32) {
    %c0_i32 = arith.constant 0 : i32
    %c0_i32_0 = arith.constant 0 : i32
    %c0_i32_1 = arith.constant 0 : i32
    return %c0_i32, %c0_i32_0 : i32, i32
  }
  func.func @transform_5(%arg0: i32) -> (i32, i32, i32) {
    %c0_i32 = arith.constant 0 : i32
    %c0_i32_0 = arith.constant 0 : i32
    %c0_i32_1 = arith.constant 0 : i32
    %c0_i32_2 = arith.constant 0 : i32
    return %c0_i32, %c0_i32_0, %c0_i32_1 : i32, i32, i32
  }
  func.func @transform_6(%arg0: i32) -> (i32, i32) {
    %c0_i32 = arith.constant 0 : i32
    %c0_i32_0 = arith.constant 0 : i32
    %c0_i32_1 = arith.constant 0 : i32
    return %c0_i32, %c0_i32_0 : i32, i32
  }
  func.func @transform_7(%arg0: i32) -> (i32, i32) {
    %c0_i32 = arith.constant 0 : i32
    %c0_i32_0 = arith.constant 0 : i32
    %c0_i32_1 = arith.constant 0 : i32
    return %c0_i32, %c0_i32_0 : i32, i32
  }
  func.func @transform_8(%arg0: i32) -> (i32, i32) {
    %c0_i32 = arith.constant 0 : i32
    %c0_i32_0 = arith.constant 0 : i32
    %c0_i32_1 = arith.constant 0 : i32
    return %c0_i32, %c0_i32_0 : i32, i32
  }
  func.func @transform_9(%arg0: i32) -> (i32, i32) {
    %c0_i32 = arith.constant 0 : i32
    %c0_i32_0 = arith.constant 0 : i32
    %c0_i32_1 = arith.constant 0 : i32
    return %c0_i32, %c0_i32_0 : i32, i32
  }
  func.func @transform_10(%arg0: i32) -> (i32, i32) {
    %c0_i32 = arith.constant 0 : i32
    %c0_i32_0 = arith.constant 0 : i32
    %c0_i32_1 = arith.constant 0 : i32
    return %c0_i32, %c0_i32_0 : i32, i32
  }
  func.func @transform_11(%arg0: i32) -> (i32, i32) {
    %c0_i32 = arith.constant 0 : i32
    %c0_i32_0 = arith.constant 0 : i32
    return %arg0, %c0_i32 : i32, i32
  }
}

</mosaic_0001>

<llo_original>
// kernel: simple_model_forward.1
$region0: #{simple_model_forward.1}
  #allocation0 [shape = 'u32[]', space=smem, size = 0x4, offset = 0x4, fixed_abs, tag = 'smem constant byte address 0x4 - core index']
  #allocation1 [shape = 'u32[72,128]{1,0:T(1,128)}', space=vmem, size = 0x9000, scoped, tag = 'internal scratch']
  %s0 = inlined_call_operand.vmem [shape: f32[16,8,128], index: 0, kind: input, shape index: {}]
  %s1 = inlined_call_operand.vmem [shape: bf16[3,128,224], index: 1, kind: input, shape index: {}]
  %s2 = inlined_call_operand.hbm [shape: f32[1,224], index: 2, kind: input, shape index: {}]
  %s3 = inlined_call_operand.hbm [shape: bf16[3,224,384], index: 3, kind: input, shape index: {}]
  %s4 = inlined_call_operand.hbm [shape: f32[1,384], index: 4, kind: input, shape index: {}]
  %s5 = inlined_call_operand.hbm [shape: bf16[3,384,640], index: 5, kind: input, shape index: {}]
  %s6 = inlined_call_operand.hbm [shape: f32[1,640], index: 6, kind: input, shape index: {}]
  %s7 = inlined_call_operand.hbm [shape: bf16[3200,512], index: 7, kind: input, shape index: {}]
  %s8 = inlined_call_operand.hbm [shape: f32[1,512], index: 8, kind: input, shape index: {}]
  %s9 = inlined_call_operand.hbm [shape: bf16[512,128], index: 9, kind: input, shape index: {}]
  %s10 = inlined_call_operand.hbm [shape: f32[1,128], index: 10, kind: input, shape index: {}]
  %s11 = inlined_call_operand.vmem [shape: f32[8,128], index: 11, kind: output, shape index: {}]
  %s12 = sld [smem:[#allocation0]]
  $region90: #{simple_model_forward.1} parent=0
    _
  %s14 = ssub.s32 1, %s12
  %s15 = scalar_select 0, %s14, %s12
  $region1: #{simple_model_forward.1} parent=0
    #allocation2 [shape = 'u8[1024]{0}', space=vmem, size = 0x400, scoped, tag = 'input window, operand 2, single buffered']
    #allocation3 [shape = 's32[1]{0}', space=sflag, size = 0x4, scoped, tag = 'scoped memory for simple_model_forward.1']
    #allocation4 [shape = 'u8[516096]{0}', space=vmem, size = 0x7e000, scoped, tag = 'input window, operand 3, single buffered']
    #allocation5 [shape = 's32[1]{0}', space=sflag, size = 0x4, scoped, tag = 'scoped memory for simple_model_forward.1']
    #allocation6 [shape = 'u8[1536]{0}', space=vmem, size = 0x800, scoped, tag = 'input window, operand 4, single buffered']
    #allocation7 [shape = 'u8[1474560]{0}', space=vmem, size = 0x168000, scoped, tag = 'input window, operand 5, single buffered']
    #allocation8 [shape = 's32[1]{0}', space=sflag, size = 0x4, scoped, tag = 'scoped memory for simple_model_forward.1']
    #allocation9 [shape = 'u8[2560]{0}', space=vmem, size = 0xc00, scoped, tag = 'input window, operand 6, single buffered']
    #allocation10 [shape = 'u8[3276800]{0}', space=vmem, size = 0x320000, scoped, tag = 'input window, operand 7, single buffered']
    #allocation11 [shape = 's32[1]{0}', space=sflag, size = 0x4, scoped, tag = 'scoped memory for simple_model_forward.1']
    #allocation12 [shape = 'u8[2048]{0}', space=vmem, size = 0x800, scoped, tag = 'input window, operand 8, single buffered']
    #allocation13 [shape = 'u8[131072]{0}', space=vmem, size = 0x20000, scoped, tag = 'input window, operand 9, single buffered']
    #allocation14 [shape = 's32[1]{0}', space=sflag, size = 0x4, scoped, tag = 'scoped memory for simple_model_forward.1']
    #allocation15 [shape = 'u8[512]{0}', space=vmem, size = 0x400, scoped, tag = 'input window, operand 10, single buffered']
    %16 = vsyncpa [#allocation3], 0
    %17 = vsyncpa [#allocation5], 0
    %18 = vsyncpa [#allocation8], 0
    %19 = vsyncpa [#allocation11], 0
    %20 = vsyncpa [#allocation14], 0
    // Predicated region
    $region2: #{simple_model_forward.1} parent=1 // pred_check
      _
    $region3: #{simple_model_forward.1} parent=1 // pred_check_branch
      %22 = sbr.rel (0) target = $region5
    $region4: #{simple_model_forward.1} parent=1 // pred_region
      _
    $region5: #{simple_model_forward.1} parent=1 // pred_fallthru
      _
    // Predicated region
    $region6: #{simple_model_forward.1} parent=1 // pred_check
      _
    $region7: #{simple_model_forward.1} parent=1 // pred_check_branch
      %24 = sbr.rel (0) target = $region9
    $region8: #{simple_model_forward.1} parent=1 // pred_region
      _
    $region9: #{simple_model_forward.1} parent=1 // pred_fallthru
      _
    // Predicated region
    $region10: #{simple_model_forward.1} parent=1 // pred_check
      _
    $region11: #{simple_model_forward.1} parent=1 // pred_check_branch
      %26 = sbr.rel (0) target = $region13
    $region12: #{simple_model_forward.1} parent=1 // pred_region
      %28 = vsyncadd [#allocation3], 0
      %s30 = sshll.u32 %s2, 4
      %s31 = int_to_ptr.hbm [resolvable:$true] %s30
      %s32 = sshll.u32 [#allocation2], 4
      %s33 = int_to_ptr.vmem [resolvable:$true] %s32
      %35 = dma.hbm_to_vmem [thread:$0]  %s31, 32, %s33, [#allocation3]
    $region13: #{simple_model_forward.1} parent=1 // pred_fallthru
      _
    // Predicated region
    $region14: #{simple_model_forward.1} parent=1 // pred_check
      _
    $region15: #{simple_model_forward.1} parent=1 // pred_check_branch
      %37 = sbr.rel (0) target = $region17
    $region16: #{simple_model_forward.1} parent=1 // pred_region
      %39 = vsyncadd [#allocation5], 0
      %s40 = sshll.u32 %s3, 4
      %s41 = int_to_ptr.hbm [resolvable:$true] %s40
      %s42 = sshll.u32 [#allocation4], 4
      %s43 = int_to_ptr.vmem [resolvable:$true] %s42
      %48 = dma.hbm_to_vmem [thread:$0]  %s41, 16128, %s43, [#allocation5], 192, 192, 12
    $region17: #{simple_model_forward.1} parent=1 // pred_fallthru
      _
    // Predicated region
    $region18: #{simple_model_forward.1} parent=1 // pred_check
      _
    $region19: #{simple_model_forward.1} parent=1 // pred_check_branch
      %50 = sbr.rel (0) target = $region21
    $region20: #{simple_model_forward.1} parent=1 // pred_region
      %52 = vsyncadd [#allocation5], 0
      %s54 = sshll.u32 %s4, 4
      %s55 = int_to_ptr.hbm [resolvable:$true] %s54
      %s56 = sshll.u32 [#allocation6], 4
      %s57 = int_to_ptr.vmem [resolvable:$true] %s56
      %59 = dma.hbm_to_vmem [thread:$0]  %s55, 48, %s57, [#allocation5]
    $region21: #{simple_model_forward.1} parent=1 // pred_fallthru
      _
    // Predicated region
    $region22: #{simple_model_forward.1} parent=1 // pred_check
      _
    $region23: #{simple_model_forward.1} parent=1 // pred_check_branch
      %61 = sbr.rel (0) target = $region25
    $region24: #{simple_model_forward.1} parent=1 // pred_region
      %63 = vsyncadd [#allocation8], 0
      %s64 = sshll.u32 %s5, 4
      %s65 = int_to_ptr.hbm [resolvable:$true] %s64
      %s66 = sshll.u32 [#allocation7], 4
      %s67 = int_to_ptr.vmem [resolvable:$true] %s66
      %72 = dma.hbm_to_vmem [thread:$0]  %s65, 46080, %s67, [#allocation8], 320, 320, 20
    $region25: #{simple_model_forward.1} parent=1 // pred_fallthru
      _
    // Predicated region
    $region26: #{simple_model_forward.1} parent=1 // pred_check
      _
    $region27: #{simple_model_forward.1} parent=1 // pred_check_branch
      %74 = sbr.rel (0) target = $region29
    $region28: #{simple_model_forward.1} parent=1 // pred_region
      %76 = vsyncadd [#allocation8], 0
      %s78 = sshll.u32 %s6, 4
      %s79 = int_to_ptr.hbm [resolvable:$true] %s78
      %s80 = sshll.u32 [#allocation9], 4
      %s81 = int_to_ptr.vmem [resolvable:$true] %s80
      %83 = dma.hbm_to_vmem [thread:$0]  %s79, 80, %s81, [#allocation8]
    $region29: #{simple_model_forward.1} parent=1 // pred_fallthru
      _
    // Predicated region
    $region30: #{simple_model_forward.1} parent=1 // pred_check
      _
    $region31: #{simple_model_forward.1} parent=1 // pred_check_branch
      %85 = sbr.rel (0) target = $region33
    $region32: #{simple_model_forward.1} parent=1 // pred_region
      %87 = vsyncadd [#allocation11], 0
      %s88 = sshll.u32 %s7, 4
      %s89 = int_to_ptr.hbm [resolvable:$true] %s88
      %s90 = sshll.u32 [#allocation10], 4
      %s91 = int_to_ptr.vmem [resolvable:$true] %s90
      %96 = dma.hbm_to_vmem [thread:$0]  %s89, 102400, %s91, [#allocation11], 256, 256, 16
    $region33: #{simple_model_forward.1} parent=1 // pred_fallthru
      _
    // Predicated region
    $region34: #{simple_model_forward.1} parent=1 // pred_check
      _
    $region35: #{simple_model_forward.1} parent=1 // pred_check_branch
      %98 = sbr.rel (0) target = $region37
    $region36: #{simple_model_forward.1} parent=1 // pred_region
      %100 = vsyncadd [#allocation11], 0
      %s102 = sshll.u32 %s8, 4
      %s103 = int_to_ptr.hbm [resolvable:$true] %s102
      %s104 = sshll.u32 [#allocation12], 4
      %s105 = int_to_ptr.vmem [resolvable:$true] %s104
      %107 = dma.hbm_to_vmem [thread:$0]  %s103, 64, %s105, [#allocation11]
    $region37: #{simple_model_forward.1} parent=1 // pred_fallthru
      _
    // Predicated region
    $region38: #{simple_model_forward.1} parent=1 // pred_check
      _
    $region39: #{simple_model_forward.1} parent=1 // pred_check_branch
      %109 = sbr.rel (0) target = $region41
    $region40: #{simple_model_forward.1} parent=1 // pred_region
      %111 = vsyncadd [#allocation14], 0
      %s112 = sshll.u32 %s9, 4
      %s113 = int_to_ptr.hbm [resolvable:$true] %s112
      %s114 = sshll.u32 [#allocation13], 4
      %s115 = int_to_ptr.vmem [resolvable:$true] %s114
      %120 = dma.hbm_to_vmem [thread:$0]  %s113, 4096, %s115, [#allocation14], 64, 64, 4
    $region41: #{simple_model_forward.1} parent=1 // pred_fallthru
      _
    // Predicated region
    $region42: #{simple_model_forward.1} parent=1 // pred_check
      _
    $region43: #{simple_model_forward.1} parent=1 // pred_check_branch
      %122 = sbr.rel (0) target = $region45
    $region44: #{simple_model_forward.1} parent=1 // pred_region
      %124 = vsyncadd [#allocation14], 0
      %s126 = sshll.u32 %s10, 4
      %s127 = int_to_ptr.hbm [resolvable:$true] %s126
      %s128 = sshll.u32 [#allocation15], 4
      %s129 = int_to_ptr.vmem [resolvable:$true] %s128
      %131 = dma.hbm_to_vmem [thread:$0]  %s127, 16, %s129, [#allocation14]
    $region45: #{simple_model_forward.1} parent=1 // pred_fallthru
      _
    // Predicated region
    $region46: #{simple_model_forward.1} parent=1 // pred_check
      _
    $region47: #{simple_model_forward.1} parent=1 // pred_check_branch
      %133 = sbr.rel (0) target = $region49
    $region48: #{simple_model_forward.1} parent=1 // pred_region
      %135 = dma.done [#allocation3], 32
    $region49: #{simple_model_forward.1} parent=1 // pred_fallthru
      _
    // Predicated region
    $region50: #{simple_model_forward.1} parent=1 // pred_check
      _
    $region51: #{simple_model_forward.1} parent=1 // pred_check_branch
      %137 = sbr.rel (0) target = $region53
    $region52: #{simple_model_forward.1} parent=1 // pred_region
      %139 = dma.done [#allocation5], 16128
    $region53: #{simple_model_forward.1} parent=1 // pred_fallthru
      _
    // Predicated region
    $region54: #{simple_model_forward.1} parent=1 // pred_check
      _
    $region55: #{simple_model_forward.1} parent=1 // pred_check_branch
      %141 = sbr.rel (0) target = $region57
    $region56: #{simple_model_forward.1} parent=1 // pred_region
      %143 = dma.done [#allocation5], 48
    $region57: #{simple_model_forward.1} parent=1 // pred_fallthru
      _
    // Predicated region
    $region58: #{simple_model_forward.1} parent=1 // pred_check
      _
    $region59: #{simple_model_forward.1} parent=1 // pred_check_branch
      %145 = sbr.rel (0) target = $region61
    $region60: #{simple_model_forward.1} parent=1 // pred_region
      %147 = dma.done [#allocation8], 46080
    $region61: #{simple_model_forward.1} parent=1 // pred_fallthru
      _
    // Predicated region
    $region62: #{simple_model_forward.1} parent=1 // pred_check
      _
    $region63: #{simple_model_forward.1} parent=1 // pred_check_branch
      %149 = sbr.rel (0) target = $region65
    $region64: #{simple_model_forward.1} parent=1 // pred_region
      %151 = dma.done [#allocation8], 80
    $region65: #{simple_model_forward.1} parent=1 // pred_fallthru
      _
    // Predicated region
    $region66: #{simple_model_forward.1} parent=1 // pred_check
      _
    $region67: #{simple_model_forward.1} parent=1 // pred_check_branch
      %153 = sbr.rel (0) target = $region69
    $region68: #{simple_model_forward.1} parent=1 // pred_region
      %155 = dma.done [#allocation11], 102400
    $region69: #{simple_model_forward.1} parent=1 // pred_fallthru
      _
    // Predicated region
    $region70: #{simple_model_forward.1} parent=1 // pred_check
      _
    $region71: #{simple_model_forward.1} parent=1 // pred_check_branch
      %157 = sbr.rel (0) target = $region73
    $region72: #{simple_model_forward.1} parent=1 // pred_region
      %159 = dma.done [#allocation11], 64
    $region73: #{simple_model_forward.1} parent=1 // pred_fallthru
      _
    // Predicated region
    $region74: #{simple_model_forward.1} parent=1 // pred_check
      _
    $region75: #{simple_model_forward.1} parent=1 // pred_check_branch
      %161 = sbr.rel (0) target = $region77
    $region76: #{simple_model_forward.1} parent=1 // pred_region
      %163 = dma.done [#allocation14], 4096
    $region77: #{simple_model_forward.1} parent=1 // pred_fallthru
      _
    // Predicated region
    $region78: #{simple_model_forward.1} parent=1 // pred_check
      _
    $region79: #{simple_model_forward.1} parent=1 // pred_check_branch
      %165 = sbr.rel (0) target = $region81
    $region80: #{simple_model_forward.1} parent=1 // pred_region
      %167 = dma.done [#allocation14], 16
    $region81: #{simple_model_forward.1} parent=1 // pred_fallthru
      _
    %v169 = vld [vmem:[%s0] sm:$0xff]
    %v170 = vld [vmem:[%s0 + $0x8] sm:$0xff]
    %v171 = vld [vmem:[%s0 + $0x10] sm:$0xff]
    %v172 = vld [vmem:[%s0 + $0x18] sm:$0xff]
    %v173 = vld [vmem:[%s0 + $0x20] sm:$0xff]
    %v174 = vld [vmem:[%s0 + $0x28] sm:$0xff]
    %v175 = vld [vmem:[%s0 + $0x30] sm:$0xff]
    %v176 = vld [vmem:[%s0 + $0x38] sm:$0xff]
    %v177 = vld [vmem:[%s0 + $0x40] sm:$0xff]
    %v178 = vld [vmem:[%s0 + $0x48] sm:$0xff]
    %v179 = vld [vmem:[%s0 + $0x50] sm:$0xff]
    %v180 = vld [vmem:[%s0 + $0x58] sm:$0xff]
    %v181 = vld [vmem:[%s0 + $0x60] sm:$0xff]
    %v182 = vld [vmem:[%s0 + $0x68] sm:$0xff]
    %v183 = vld [vmem:[%s0 + $0x70] sm:$0xff]
    %v184 = vld [vmem:[%s0 + $0x78] sm:$0xff]
    %v185 = vpack.c.bf16 %v169, %v169
    %v186 = vpack.c.bf16 %v170, %v170
    %v187 = vpack.c.bf16 %v171, %v171
    %v188 = vpack.c.bf16 %v172, %v172
    %v189 = vpack.c.bf16 %v173, %v173
    %v190 = vpack.c.bf16 %v174, %v174
    %v191 = vpack.c.bf16 %v175, %v175
    %v192 = vpack.c.bf16 %v176, %v176
    %v193 = vpack.c.bf16 %v177, %v177
    %v194 = vpack.c.bf16 %v178, %v178
    %v195 = vpack.c.bf16 %v179, %v179
    %v196 = vpack.c.bf16 %v180, %v180
    %v197 = vpack.c.bf16 %v181, %v181
    %v198 = vpack.c.bf16 %v182, %v182
    %v199 = vpack.c.bf16 %v183, %v183
    %v200 = vpack.c.bf16 %v184, %v184
    %v201 = vld [vmem:[%s1] sm:$0xff]
    %v202 = vld [vmem:[%s1 + $0x8] sm:$0xff]
    %v203 = vld [vmem:[%s1 + $0x10] sm:$0xff]
    %v204 = vld [vmem:[%s1 + $0x18] sm:$0xff]
    %v205 = vld [vmem:[%s1 + $0x20] sm:$0xff]
    %v206 = vld [vmem:[%s1 + $0x28] sm:$0xff]
    %v207 = vld [vmem:[%s1 + $0x30] sm:$0xff]
    %v208 = vld [vmem:[%s1 + $0x38] sm:$0xff]
    %v209 = vld [vmem:[%s1 + $0x40] sm:$0xff]
    %v210 = vld [vmem:[%s1 + $0x48] sm:$0xff]
    %v211 = vld [vmem:[%s1 + $0x50] sm:$0xff]
    %v212 = vld [vmem:[%s1 + $0x58] sm:$0xff]
    %v213 = vld [vmem:[%s1 + $0x60] sm:$0xff]
    %v214 = vld [vmem:[%s1 + $0x68] sm:$0xff]
    %v215 = vld [vmem:[%s1 + $0x70] sm:$0xff]
    %v216 = vld [vmem:[%s1 + $0x78] sm:$0xff]
    %s217 = scalar_lea.vmem %s1, 128
    %v218 = vld [vmem:[%s217] sm:$0xff]
    %v219 = vld [vmem:[%s217 + $0x8] sm:$0xff]
    %v220 = vld [vmem:[%s217 + $0x10] sm:$0xff]
    %v221 = vld [vmem:[%s217 + $0x18] sm:$0xff]
    %v222 = vld [vmem:[%s217 + $0x20] sm:$0xff]
    %v223 = vld [vmem:[%s217 + $0x28] sm:$0xff]
    %v224 = vld [vmem:[%s217 + $0x30] sm:$0xff]
    %v225 = vld [vmem:[%s217 + $0x38] sm:$0xff]
    %v226 = vld [vmem:[%s217 + $0x40] sm:$0xff]
    %v227 = vld [vmem:[%s217 + $0x48] sm:$0xff]
    %v228 = vld [vmem:[%s217 + $0x50] sm:$0xff]
    %v229 = vld [vmem:[%s217 + $0x58] sm:$0xff]
    %v230 = vld [vmem:[%s217 + $0x60] sm:$0xff]
    %v231 = vld [vmem:[%s217 + $0x68] sm:$0xff]
    %v232 = vld [vmem:[%s217 + $0x70] sm:$0xff]
    %v233 = vld [vmem:[%s217 + $0x78] sm:$0xff]
    %v248 = vunpack.c.l.b16 %v186
    %v249 = vunpack.c.l.b16 %v187
    %v250 = vunpack.c.l.b16 %v188
    %v251 = vunpack.c.l.b16 %v189
    %v252 = vunpack.c.l.b16 %v190
    %v253 = vunpack.c.l.b16 %v191
    %v254 = vunpack.c.l.b16 %v192
    %v255 = vunpack.c.l.b16 %v193
    %v256 = vunpack.c.l.b16 %v194
    %v257 = vunpack.c.l.b16 %v195
    %v258 = vunpack.c.l.b16 %v196
    %v259 = vunpack.c.l.b16 %v197
    %v260 = vunpack.c.l.b16 %v198
    %v261 = vunpack.c.l.b16 %v199
    %v262 = vpack.c.b16 %v249, %v248
    %v263 = vpack.c.b16 %v251, %v250
    %v264 = vpack.c.b16 %v253, %v252
    %v265 = vpack.c.b16 %v255, %v254
    %v266 = vpack.c.b16 %v257, %v256
    %v267 = vpack.c.b16 %v259, %v258
    %v268 = vpack.c.b16 %v261, %v260
    %v292 = vunpack.c.l.b16 %v218
    %v293 = vunpack.c.h.b16 %v218
    %v294 = vunpack.c.l.b16 %v219
    %v295 = vunpack.c.h.b16 %v219
    %v296 = vunpack.c.l.b16 %v220
    %v297 = vunpack.c.h.b16 %v220
    %v298 = vunpack.c.l.b16 %v221
    %v299 = vunpack.c.h.b16 %v221
    %v300 = vunpack.c.l.b16 %v222
    %v301 = vunpack.c.h.b16 %v222
    %v302 = vunpack.c.l.b16 %v223
    %v303 = vunpack.c.h.b16 %v223
    %v304 = vunpack.c.l.b16 %v224
    %v305 = vunpack.c.h.b16 %v224
    %v306 = vunpack.c.l.b16 %v225
    %v307 = vunpack.c.h.b16 %v225
    %v308 = vunpack.c.l.b16 %v226
    %v309 = vunpack.c.h.b16 %v226
    %v310 = vunpack.c.l.b16 %v227
    %v311 = vunpack.c.h.b16 %v227
    %v312 = vunpack.c.l.b16 %v228
    %v313 = vunpack.c.h.b16 %v228
    %v314 = vunpack.c.l.b16 %v229
    %v315 = vunpack.c.h.b16 %v229
    %v316 = vunpack.c.l.b16 %v230
    %v317 = vunpack.c.h.b16 %v230
    %v318 = vunpack.c.l.b16 %v231
    %v319 = vunpack.c.h.b16 %v231
    %v320 = vunpack.c.l.b16 %v232
    %v321 = vunpack.c.h.b16 %v232
    %v322 = vunpack.c.l.b16 %v233
    %v323 = vunpack.c.h.b16 %v233
    %v324 = vpack.c.b16 %v294, %v292
    %v325 = vpack.c.b16 %v295, %v293
    %v326 = vpack.c.b16 %v298, %v296
    %v327 = vpack.c.b16 %v299, %v297
    %v328 = vpack.c.b16 %v302, %v300
    %v329 = vpack.c.b16 %v303, %v301
    %v330 = vpack.c.b16 %v306, %v304
    %v331 = vpack.c.b16 %v307, %v305
    %v332 = vpack.c.b16 %v310, %v308
    %v333 = vpack.c.b16 %v311, %v309
    %v334 = vpack.c.b16 %v314, %v312
    %v335 = vpack.c.b16 %v315, %v313
    %v336 = vpack.c.b16 %v318, %v316
    %v337 = vpack.c.b16 %v319, %v317
    %v338 = vpack.c.b16 %v322, %v320
    %v339 = vpack.c.b16 %v323, %v321
    %356 = vmatpush.bf16.msra.mxu0 %v338
    %357 = vmatpush.bf16.msra.mxu0 %v336
    %358 = vmatpush.bf16.msra.mxu0 %v334
    %359 = vmatpush.bf16.msra.mxu0 %v332
    %360 = vmatpush.bf16.msra.mxu0 %v330
    %361 = vmatpush.bf16.msra.mxu0 %v328
    %362 = vmatpush.bf16.msra.mxu0 %v326
    %363 = vmatpush.bf16.msra.mxu0 %v324
    %364 = vmatmul.bf16.gmra.mxu0 %v262
    %v365 = vpop.f32.mrf.mxu0
    %v366 = vadd.f32 0.0, %v365
    %v367 = vpop.f32.mrf.mxu0
    %v368 = vadd.f32 0.0, %v367
    %369 = vmatmul.bf16.gmra.mxu0 %v263
    %v370 = vpop.f32.mrf.mxu0
    %v371 = vadd.f32 0.0, %v370
    %v372 = vpop.f32.mrf.mxu0
    %v373 = vadd.f32 0.0, %v372
    %374 = vmatmul.bf16.gmra.mxu0 %v264
    %v375 = vpop.f32.mrf.mxu0
    %v376 = vadd.f32 0.0, %v375
    %v377 = vpop.f32.mrf.mxu0
    %v378 = vadd.f32 0.0, %v377
    %379 = vmatmul.bf16.gmra.mxu0 %v265
    %v380 = vpop.f32.mrf.mxu0
    %v381 = vadd.f32 0.0, %v380
    %v382 = vpop.f32.mrf.mxu0
    %v383 = vadd.f32 0.0, %v382
    %384 = vmatmul.bf16.gmra.mxu0 %v266
    %v385 = vpop.f32.mrf.mxu0
    %v386 = vadd.f32 0.0, %v385
    %v387 = vpop.f32.mrf.mxu0
    %v388 = vadd.f32 0.0, %v387
    %389 = vmatmul.bf16.gmra.mxu0 %v267
    %v390 = vpop.f32.mrf.mxu0
    %v391 = vadd.f32 0.0, %v390
    %v392 = vpop.f32.mrf.mxu0
    %v393 = vadd.f32 0.0, %v392
    %394 = vmatmul.bf16.gmra.mxu0 %v268
    %v395 = vpop.f32.mrf.mxu0
    %v396 = vadd.f32 0.0, %v395
    %v397 = vpop.f32.mrf.mxu0
    %v398 = vadd.f32 0.0, %v397
    %399 = vdwg.mxu0
    %400 = vmatpush.bf16.msra.mxu0 %v339
    %401 = vmatpush.bf16.msra.mxu0 %v337
    %402 = vmatpush.bf16.msra.mxu0 %v335
    %403 = vmatpush.bf16.msra.mxu0 %v333
    %404 = vmatpush.bf16.msra.mxu0 %v331
    %405 = vmatpush.bf16.msra.mxu0 %v329
    %406 = vmatpush.bf16.msra.mxu0 %v327
    %407 = vmatpush.bf16.msra.mxu0 %v325
    %408 = vmatmul.bf16.gmra.mxu0 %v262
    %v409 = vpop.f32.mrf.mxu0
    %v410 = vadd.f32 0.0, %v409
    %v411 = vpop.f32.mrf.mxu0
    %v412 = vadd.f32 0.0, %v411
    %413 = vmatmul.bf16.gmra.mxu0 %v263
    %v414 = vpop.f32.mrf.mxu0
    %v415 = vadd.f32 0.0, %v414
    %v416 = vpop.f32.mrf.mxu0
    %v417 = vadd.f32 0.0, %v416
    %418 = vmatmul.bf16.gmra.mxu0 %v264
    %v419 = vpop.f32.mrf.mxu0
    %v420 = vadd.f32 0.0, %v419
    %v421 = vpop.f32.mrf.mxu0
    %v422 = vadd.f32 0.0, %v421
    %423 = vmatmul.bf16.gmra.mxu0 %v265
    %v424 = vpop.f32.mrf.mxu0
    %v425 = vadd.f32 0.0, %v424
    %v426 = vpop.f32.mrf.mxu0
    %v427 = vadd.f32 0.0, %v426
    %428 = vmatmul.bf16.gmra.mxu0 %v266
    %v429 = vpop.f32.mrf.mxu0
    %v430 = vadd.f32 0.0, %v429
    %v431 = vpop.f32.mrf.mxu0
    %v432 = vadd.f32 0.0, %v431
    %433 = vmatmul.bf16.gmra.mxu0 %v267
    %v434 = vpop.f32.mrf.mxu0
    %v435 = vadd.f32 0.0, %v434
    %v436 = vpop.f32.mrf.mxu0
    %v437 = vadd.f32 0.0, %v436
    %438 = vmatmul.bf16.gmra.mxu0 %v268
    %v439 = vpop.f32.mrf.mxu0
    %v440 = vadd.f32 0.0, %v439
    %v441 = vpop.f32.mrf.mxu0
    %v442 = vadd.f32 0.0, %v441
    %443 = vdwg.mxu0
    %v445 = vunpack.c.l.b16 %v185
    %v446 = vpack.c.b16 %v248, %v445
    %v447 = vpack.c.b16 %v250, %v249
    %v448 = vpack.c.b16 %v252, %v251
    %v449 = vpack.c.b16 %v254, %v253
    %v450 = vpack.c.b16 %v256, %v255
    %v451 = vpack.c.b16 %v258, %v257
    %v452 = vpack.c.b16 %v260, %v259
    %v476 = vunpack.c.l.b16 %v201
    %v477 = vunpack.c.h.b16 %v201
    %v478 = vunpack.c.l.b16 %v202
    %v479 = vunpack.c.h.b16 %v202
    %v480 = vunpack.c.l.b16 %v203
    %v481 = vunpack.c.h.b16 %v203
    %v482 = vunpack.c.l.b16 %v204
    %v483 = vunpack.c.h.b16 %v204
    %v484 = vunpack.c.l.b16 %v205
    %v485 = vunpack.c.h.b16 %v205
    %v486 = vunpack.c.l.b16 %v206
    %v487 = vunpack.c.h.b16 %v206
    %v488 = vunpack.c.l.b16 %v207
    %v489 = vunpack.c.h.b16 %v207
    %v490 = vunpack.c.l.b16 %v208
    %v491 = vunpack.c.h.b16 %v208
    %v492 = vunpack.c.l.b16 %v209
    %v493 = vunpack.c.h.b16 %v209
    %v494 = vunpack.c.l.b16 %v210
    %v495 = vunpack.c.h.b16 %v210
    %v496 = vunpack.c.l.b16 %v211
    %v497 = vunpack.c.h.b16 %v211
    %v498 = vunpack.c.l.b16 %v212
    %v499 = vunpack.c.h.b16 %v212
    %v500 = vunpack.c.l.b16 %v213
    %v501 = vunpack.c.h.b16 %v213
    %v502 = vunpack.c.l.b16 %v214
    %v503 = vunpack.c.h.b16 %v214
    %v504 = vunpack.c.l.b16 %v215
    %v505 = vunpack.c.h.b16 %v215
    %v506 = vunpack.c.l.b16 %v216
    %v507 = vunpack.c.h.b16 %v216
    %v508 = vpack.c.b16 %v478, %v476
    %v509 = vpack.c.b16 %v479, %v477
    %v510 = vpack.c.b16 %v482, %v480
    %v511 = vpack.c.b16 %v483, %v481
    %v512 = vpack.c.b16 %v486, %v484
    %v513 = vpack.c.b16 %v487, %v485
    %v514 = vpack.c.b16 %v490, %v488
    %v515 = vpack.c.b16 %v491, %v489
    %v516 = vpack.c.b16 %v494, %v492
    %v517 = vpack.c.b16 %v495, %v493
    %v518 = vpack.c.b16 %v498, %v496
    %v519 = vpack.c.b16 %v499, %v497
    %v520 = vpack.c.b16 %v502, %v500
    %v521 = vpack.c.b16 %v503, %v501
    %v522 = vpack.c.b16 %v506, %v504
    %v523 = vpack.c.b16 %v507, %v505
    %540 = vmatpush.bf16.msra.mxu0 %v522
    %541 = vmatpush.bf16.msra.mxu0 %v520
    %542 = vmatpush.bf16.msra.mxu0 %v518
    %543 = vmatpush.bf16.msra.mxu0 %v516
    %544 = vmatpush.bf16.msra.mxu0 %v514
    %545 = vmatpush.bf16.msra.mxu0 %v512
    %546 = vmatpush.bf16.msra.mxu0 %v510
    %547 = vmatpush.bf16.msra.mxu0 %v508
    %548 = vmatmul.bf16.gmra.mxu0 %v446
    %v549 = vpop.f32.mrf.mxu0
    %v550 = vadd.f32 %v366, %v549
    %v551 = vpop.f32.mrf.mxu0
    %v552 = vadd.f32 %v368, %v551
    %553 = vmatmul.bf16.gmra.mxu0 %v447
    %v554 = vpop.f32.mrf.mxu0
    %v555 = vadd.f32 %v371, %v554
    %v556 = vpop.f32.mrf.mxu0
    %v557 = vadd.f32 %v373, %v556
    %558 = vmatmul.bf16.gmra.mxu0 %v448
    %v559 = vpop.f32.mrf.mxu0
    %v560 = vadd.f32 %v376, %v559
    %v561 = vpop.f32.mrf.mxu0
    %v562 = vadd.f32 %v378, %v561
    %563 = vmatmul.bf16.gmra.mxu0 %v449
    %v564 = vpop.f32.mrf.mxu0
    %v565 = vadd.f32 %v381, %v564
    %v566 = vpop.f32.mrf.mxu0
    %v567 = vadd.f32 %v383, %v566
    %568 = vmatmul.bf16.gmra.mxu0 %v450
    %v569 = vpop.f32.mrf.mxu0
    %v570 = vadd.f32 %v386, %v569
    %v571 = vpop.f32.mrf.mxu0
    %v572 = vadd.f32 %v388, %v571
    %573 = vmatmul.bf16.gmra.mxu0 %v451
    %v574 = vpop.f32.mrf.mxu0
    %v575 = vadd.f32 %v391, %v574
    %v576 = vpop.f32.mrf.mxu0
    %v577 = vadd.f32 %v393, %v576
    %578 = vmatmul.bf16.gmra.mxu0 %v452
    %v579 = vpop.f32.mrf.mxu0
    %v580 = vadd.f32 %v396, %v579
    %v581 = vpop.f32.mrf.mxu0
    %v582 = vadd.f32 %v398, %v581
    %583 = vdwg.mxu0
    %584 = vmatpush.bf16.msra.mxu0 %v523
    %585 = vmatpush.bf16.msra.mxu0 %v521
    %586 = vmatpush.bf16.msra.mxu0 %v519
    %587 = vmatpush.bf16.msra.mxu0 %v517
    %588 = vmatpush.bf16.msra.mxu0 %v515
    %589 = vmatpush.bf16.msra.mxu0 %v513
    %590 = vmatpush.bf16.msra.mxu0 %v511
    %591 = vmatpush.bf16.msra.mxu0 %v509
    %592 = vmatmul.bf16.gmra.mxu0 %v446
    %v593 = vpop.f32.mrf.mxu0
    %v594 = vadd.f32 %v410, %v593
    %v595 = vpop.f32.mrf.mxu0
    %v596 = vadd.f32 %v412, %v595
    %597 = vmatmul.bf16.gmra.mxu0 %v447
    %v598 = vpop.f32.mrf.mxu0
    %v599 = vadd.f32 %v415, %v598
    %v600 = vpop.f32.mrf.mxu0
    %v601 = vadd.f32 %v417, %v600
    %602 = vmatmul.bf16.gmra.mxu0 %v448
    %v603 = vpop.f32.mrf.mxu0
    %v604 = vadd.f32 %v420, %v603
    %v605 = vpop.f32.mrf.mxu0
    %v606 = vadd.f32 %v422, %v605
    %607 = vmatmul.bf16.gmra.mxu0 %v449
    %v608 = vpop.f32.mrf.mxu0
    %v609 = vadd.f32 %v425, %v608
    %v610 = vpop.f32.mrf.mxu0
    %v611 = vadd.f32 %v427, %v610
    %612 = vmatmul.bf16.gmra.mxu0 %v450
    %v613 = vpop.f32.mrf.mxu0
    %v614 = vadd.f32 %v430, %v613
    %v615 = vpop.f32.mrf.mxu0
    %v616 = vadd.f32 %v432, %v615
    %617 = vmatmul.bf16.gmra.mxu0 %v451
    %v618 = vpop.f32.mrf.mxu0
    %v619 = vadd.f32 %v435, %v618
    %v620 = vpop.f32.mrf.mxu0
    %v621 = vadd.f32 %v437, %v620
    %622 = vmatmul.bf16.gmra.mxu0 %v452
    %v623 = vpop.f32.mrf.mxu0
    %v624 = vadd.f32 %v440, %v623
    %v625 = vpop.f32.mrf.mxu0
    %v626 = vadd.f32 %v442, %v625
    %627 = vdwg.mxu0
    %s628 = scalar_lea.vmem %s1, 256
    %v629 = vld [vmem:[%s628] sm:$0xff]
    %v630 = vld [vmem:[%s628 + $0x8] sm:$0xff]
    %v631 = vld [vmem:[%s628 + $0x10] sm:$0xff]
    %v632 = vld [vmem:[%s628 + $0x18] sm:$0xff]
    %v633 = vld [vmem:[%s628 + $0x20] sm:$0xff]
    %v634 = vld [vmem:[%s628 + $0x28] sm:$0xff]
    %v635 = vld [vmem:[%s628 + $0x30] sm:$0xff]
    %v636 = vld [vmem:[%s628 + $0x38] sm:$0xff]
    %v637 = vld [vmem:[%s628 + $0x40] sm:$0xff]
    %v638 = vld [vmem:[%s628 + $0x48] sm:$0xff]
    %v639 = vld [vmem:[%s628 + $0x50] sm:$0xff]
    %v640 = vld [vmem:[%s628 + $0x58] sm:$0xff]
    %v641 = vld [vmem:[%s628 + $0x60] sm:$0xff]
    %v642 = vld [vmem:[%s628 + $0x68] sm:$0xff]
    %v643 = vld [vmem:[%s628 + $0x70] sm:$0xff]
    %v644 = vld [vmem:[%s628 + $0x78] sm:$0xff]
    %v646 = vunpack.c.l.b16 %v200
    %v647 = vpack.c.b16 %v646, %v261
    %v665 = vunpack.c.l.b16 %v629
    %v666 = vunpack.c.h.b16 %v629
    %v667 = vunpack.c.l.b16 %v630
    %v668 = vunpack.c.h.b16 %v630
    %v669 = vunpack.c.l.b16 %v631
    %v670 = vunpack.c.h.b16 %v631
    %v671 = vunpack.c.l.b16 %v632
    %v672 = vunpack.c.h.b16 %v632
    %v673 = vunpack.c.l.b16 %v633
    %v674 = vunpack.c.h.b16 %v633
    %v675 = vunpack.c.l.b16 %v634
    %v676 = vunpack.c.h.b16 %v634
    %v677 = vunpack.c.l.b16 %v635
    %v678 = vunpack.c.h.b16 %v635
    %v679 = vunpack.c.l.b16 %v636
    %v680 = vunpack.c.h.b16 %v636
    %v681 = vunpack.c.l.b16 %v637
    %v682 = vunpack.c.h.b16 %v637
    %v683 = vunpack.c.l.b16 %v638
    %v684 = vunpack.c.h.b16 %v638
    %v685 = vunpack.c.l.b16 %v639
    %v686 = vunpack.c.h.b16 %v639
    %v687 = vunpack.c.l.b16 %v640
    %v688 = vunpack.c.h.b16 %v640
    %v689 = vunpack.c.l.b16 %v641
    %v690 = vunpack.c.h.b16 %v641
    %v691 = vunpack.c.l.b16 %v642
    %v692 = vunpack.c.h.b16 %v642
    %v693 = vunpack.c.l.b16 %v643
    %v694 = vunpack.c.h.b16 %v643
    %v695 = vunpack.c.l.b16 %v644
    %v696 = vunpack.c.h.b16 %v644
    %v697 = vpack.c.b16 %v667, %v665
    %v698 = vpack.c.b16 %v668, %v666
    %v699 = vpack.c.b16 %v671, %v669
    %v700 = vpack.c.b16 %v672, %v670
    %v701 = vpack.c.b16 %v675, %v673
    %v702 = vpack.c.b16 %v676, %v674
    %v703 = vpack.c.b16 %v679, %v677
    %v704 = vpack.c.b16 %v680, %v678
    %v705 = vpack.c.b16 %v683, %v681
    %v706 = vpack.c.b16 %v684, %v682
    %v707 = vpack.c.b16 %v687, %v685
    %v708 = vpack.c.b16 %v688, %v686
    %v709 = vpack.c.b16 %v691, %v689
    %v710 = vpack.c.b16 %v692, %v690
    %v711 = vpack.c.b16 %v695, %v693
    %v712 = vpack.c.b16 %v696, %v694
    %729 = vmatpush.bf16.msra.mxu0 %v711
    %730 = vmatpush.bf16.msra.mxu0 %v709
    %731 = vmatpush.bf16.msra.mxu0 %v707
    %732 = vmatpush.bf16.msra.mxu0 %v705
    %733 = vmatpush.bf16.msra.mxu0 %v703
    %734 = vmatpush.bf16.msra.mxu0 %v701
    %735 = vmatpush.bf16.msra.mxu0 %v699
    %736 = vmatpush.bf16.msra.mxu0 %v697
    %737 = vmatmul.bf16.gmra.mxu0 %v447
    %v738 = vpop.f32.mrf.mxu0
    %v739 = vadd.f32 0.0, %v738
    %v740 = vpop.f32.mrf.mxu0
    %v741 = vadd.f32 0.0, %v740
    %742 = vmatmul.bf16.gmra.mxu0 %v448
    %v743 = vpop.f32.mrf.mxu0
    %v744 = vadd.f32 0.0, %v743
    %v745 = vpop.f32.mrf.mxu0
    %v746 = vadd.f32 0.0, %v745
    %747 = vmatmul.bf16.gmra.mxu0 %v449
    %v748 = vpop.f32.mrf.mxu0
    %v749 = vadd.f32 0.0, %v748
    %v750 = vpop.f32.mrf.mxu0
    %v751 = vadd.f32 0.0, %v750
    %752 = vmatmul.bf16.gmra.mxu0 %v450
    %v753 = vpop.f32.mrf.mxu0
    %v754 = vadd.f32 0.0, %v753
    %v755 = vpop.f32.mrf.mxu0
    %v756 = vadd.f32 0.0, %v755
    %757 = vmatmul.bf16.gmra.mxu0 %v451
    %v758 = vpop.f32.mrf.mxu0
    %v759 = vadd.f32 0.0, %v758
    %v760 = vpop.f32.mrf.mxu0
    %v761 = vadd.f32 0.0, %v760
    %762 = vmatmul.bf16.gmra.mxu0 %v452
    %v763 = vpop.f32.mrf.mxu0
    %v764 = vadd.f32 0.0, %v763
    %v765 = vpop.f32.mrf.mxu0
    %v766 = vadd.f32 0.0, %v765
    %767 = vmatmul.bf16.gmra.mxu0 %v647
    %v768 = vpop.f32.mrf.mxu0
    %v769 = vadd.f32 0.0, %v768
    %v770 = vpop.f32.mrf.mxu0
    %v771 = vadd.f32 0.0, %v770
    %772 = vdwg.mxu0
    %773 = vmatpush.bf16.msra.mxu0 %v712
    %774 = vmatpush.bf16.msra.mxu0 %v710
    %775 = vmatpush.bf16.msra.mxu0 %v708
    %776 = vmatpush.bf16.msra.mxu0 %v706
    %777 = vmatpush.bf16.msra.mxu0 %v704
    %778 = vmatpush.bf16.msra.mxu0 %v702
    %779 = vmatpush.bf16.msra.mxu0 %v700
    %780 = vmatpush.bf16.msra.mxu0 %v698
    %781 = vmatmul.bf16.gmra.mxu0 %v447
    %v782 = vpop.f32.mrf.mxu0
    %v783 = vadd.f32 0.0, %v782
    %v784 = vpop.f32.mrf.mxu0
    %v785 = vadd.f32 0.0, %v784
    %786 = vmatmul.bf16.gmra.mxu0 %v448
    %v787 = vpop.f32.mrf.mxu0
    %v788 = vadd.f32 0.0, %v787
    %v789 = vpop.f32.mrf.mxu0
    %v790 = vadd.f32 0.0, %v789
    %791 = vmatmul.bf16.gmra.mxu0 %v449
    %v792 = vpop.f32.mrf.mxu0
    %v793 = vadd.f32 0.0, %v792
    %v794 = vpop.f32.mrf.mxu0
    %v795 = vadd.f32 0.0, %v794
    %796 = vmatmul.bf16.gmra.mxu0 %v450
    %v797 = vpop.f32.mrf.mxu0
    %v798 = vadd.f32 0.0, %v797
    %v799 = vpop.f32.mrf.mxu0
    %v800 = vadd.f32 0.0, %v799
    %801 = vmatmul.bf16.gmra.mxu0 %v451
    %v802 = vpop.f32.mrf.mxu0
    %v803 = vadd.f32 0.0, %v802
    %v804 = vpop.f32.mrf.mxu0
    %v805 = vadd.f32 0.0, %v804
    %806 = vmatmul.bf16.gmra.mxu0 %v452
    %v807 = vpop.f32.mrf.mxu0
    %v808 = vadd.f32 0.0, %v807
    %v809 = vpop.f32.mrf.mxu0
    %v810 = vadd.f32 0.0, %v809
    %811 = vmatmul.bf16.gmra.mxu0 %v647
    %v812 = vpop.f32.mrf.mxu0
    %v813 = vadd.f32 0.0, %v812
    %v814 = vpop.f32.mrf.mxu0
    %v815 = vadd.f32 0.0, %v814
    %816 = vdwg.mxu0
    %v817 = vadd.f32 %v550, %v739
    %v818 = vadd.f32 %v594, %v783
    %v819 = vadd.f32 %v552, %v741
    %v820 = vadd.f32 %v596, %v785
    %v821 = vadd.f32 %v555, %v744
    %v822 = vadd.f32 %v599, %v788
    %v823 = vadd.f32 %v557, %v746
    %v824 = vadd.f32 %v601, %v790
    %v825 = vadd.f32 %v560, %v749
    %v826 = vadd.f32 %v604, %v793
    %v827 = vadd.f32 %v562, %v751
    %v828 = vadd.f32 %v606, %v795
    %v829 = vadd.f32 %v565, %v754
    %v830 = vadd.f32 %v609, %v798
    %v831 = vadd.f32 %v567, %v756
    %v832 = vadd.f32 %v611, %v800
    %v833 = vadd.f32 %v570, %v759
    %v834 = vadd.f32 %v614, %v803
    %v835 = vadd.f32 %v572, %v761
    %v836 = vadd.f32 %v616, %v805
    %v837 = vadd.f32 %v575, %v764
    %v838 = vadd.f32 %v619, %v808
    %v839 = vadd.f32 %v577, %v766
    %v840 = vadd.f32 %v621, %v810
    %v841 = vadd.f32 %v580, %v769
    %v842 = vadd.f32 %v624, %v813
    %v843 = vadd.f32 %v582, %v771
    %v844 = vadd.f32 %v626, %v815
    %v845 = vld [vmem:[#allocation2] sm:$0x3]
    %v847 = vperm.slane %v845, 0
    %v848 = vperm.slane %v845, 1
    %v851 = vadd.f32 %v817, %v847
    %v852 = vadd.f32 %v818, %v848
    %v853 = vadd.f32 %v819, %v847
    %v854 = vadd.f32 %v820, %v848
    %v855 = vadd.f32 %v821, %v847
    %v856 = vadd.f32 %v822, %v848
    %v857 = vadd.f32 %v823, %v847
    %v858 = vadd.f32 %v824, %v848
    %v859 = vadd.f32 %v825, %v847
    %v860 = vadd.f32 %v826, %v848
    %v861 = vadd.f32 %v827, %v847
    %v862 = vadd.f32 %v828, %v848
    %v863 = vadd.f32 %v829, %v847
    %v864 = vadd.f32 %v830, %v848
    %v865 = vadd.f32 %v831, %v847
    %v866 = vadd.f32 %v832, %v848
    %v867 = vadd.f32 %v833, %v847
    %v868 = vadd.f32 %v834, %v848
    %v869 = vadd.f32 %v835, %v847
    %v870 = vadd.f32 %v836, %v848
    %v871 = vadd.f32 %v837, %v847
    %v872 = vadd.f32 %v838, %v848
    %v873 = vadd.f32 %v839, %v847
    %v874 = vadd.f32 %v840, %v848
    %v875 = vadd.f32 %v841, %v847
    %v876 = vadd.f32 %v842, %v848
    %v877 = vadd.f32 %v843, %v847
    %v878 = vadd.f32 %v844, %v848
    %v879 = vmax.f32 %v851, 0.0
    %v880 = vmax.f32 %v852, 0.0
    %v881 = vmax.f32 %v853, 0.0
    %v882 = vmax.f32 %v854, 0.0
    %v883 = vmax.f32 %v855, 0.0
    %v884 = vmax.f32 %v856, 0.0
    %v885 = vmax.f32 %v857, 0.0
    %v886 = vmax.f32 %v858, 0.0
    %v887 = vmax.f32 %v859, 0.0
    %v888 = vmax.f32 %v860, 0.0
    %v889 = vmax.f32 %v861, 0.0
    %v890 = vmax.f32 %v862, 0.0
    %v891 = vmax.f32 %v863, 0.0
    %v892 = vmax.f32 %v864, 0.0
    %v893 = vmax.f32 %v865, 0.0
    %v894 = vmax.f32 %v866, 0.0
    %v895 = vmax.f32 %v867, 0.0
    %v896 = vmax.f32 %v868, 0.0
    %v897 = vmax.f32 %v869, 0.0
    %v898 = vmax.f32 %v870, 0.0
    %v899 = vmax.f32 %v871, 0.0
    %v900 = vmax.f32 %v872, 0.0
    %v901 = vmax.f32 %v873, 0.0
    %v902 = vmax.f32 %v874, 0.0
    %v903 = vmax.f32 %v875, 0.0
    %v904 = vmax.f32 %v876, 0.0
    %v905 = vmax.f32 %v877, 0.0
    %v906 = vmax.f32 %v878, 0.0
    %v907 = vpack.c.bf16 %v880, %v879
    %v908 = vpack.c.bf16 %v882, %v881
    %v909 = vpack.c.bf16 %v884, %v883
    %v910 = vpack.c.bf16 %v886, %v885
    %v911 = vpack.c.bf16 %v888, %v887
    %v912 = vpack.c.bf16 %v890, %v889
    %v913 = vpack.c.bf16 %v892, %v891
    %v914 = vpack.c.bf16 %v894, %v893
    %v915 = vpack.c.bf16 %v896, %v895
    %v916 = vpack.c.bf16 %v898, %v897
    %v917 = vpack.c.bf16 %v900, %v899
    %v918 = vpack.c.bf16 %v902, %v901
    %v919 = vpack.c.bf16 %v904, %v903
    %v920 = vpack.c.bf16 %v906, %v905
    %v921 = vld [vmem:[#allocation4] sm:$0xff]
    %v922 = vld [vmem:[#allocation4 + $0x8] sm:$0xf]
    %v923 = vld [vmem:[#allocation4 + $0xc] sm:$0xff]
    %v924 = vld [vmem:[#allocation4 + $0x14] sm:$0xf]
    %v925 = vld [vmem:[#allocation4 + $0x18] sm:$0xff]
    %v926 = vld [vmem:[#allocation4 + $0x20] sm:$0xf]
    %v927 = vld [vmem:[#allocation4 + $0x24] sm:$0xff]
    %v928 = vld [vmem:[#allocation4 + $0x2c] sm:$0xf]
    %v929 = vld [vmem:[#allocation4 + $0x30] sm:$0xff]
    %v930 = vld [vmem:[#allocation4 + $0x38] sm:$0xf]
    %v931 = vld [vmem:[#allocation4 + $0x3c] sm:$0xff]
    %v932 = vld [vmem:[#allocation4 + $0x44] sm:$0xf]
    %v933 = vld [vmem:[#allocation4 + $0x48] sm:$0xff]
    %v934 = vld [vmem:[#allocation4 + $0x50] sm:$0xf]
    %v935 = vld [vmem:[#allocation4 + $0x54] sm:$0xff]
    %v936 = vld [vmem:[#allocation4 + $0x5c] sm:$0xf]
    %v937 = vld [vmem:[#allocation4 + $0x60] sm:$0xff]
    %v938 = vld [vmem:[#allocation4 + $0x68] sm:$0xf]
    %v939 = vld [vmem:[#allocation4 + $0x6c] sm:$0xff]
    %v940 = vld [vmem:[#allocation4 + $0x74] sm:$0xf]
    %v941 = vld [vmem:[#allocation4 + $0x78] sm:$0xff]
    %v942 = vld [vmem:[#allocation4 + $0x80] sm:$0xf]
    %v943 = vld [vmem:[#allocation4 + $0x84] sm:$0xff]
    %v944 = vld [vmem:[#allocation4 + $0x8c] sm:$0xf]
    %v945 = vld [vmem:[#allocation4 + $0x90] sm:$0xff]
    %v946 = vld [vmem:[#allocation4 + $0x98] sm:$0xf]
    %v947 = vld [vmem:[#allocation4 + $0x9c] sm:$0xff]
    %v948 = vld [vmem:[#allocation4 + $0xa4] sm:$0xf]
    %v949 = vld [vmem:[#allocation4 + $0xa8] sm:$0xff]
    %v950 = vld [vmem:[#allocation4 + $0xb0] sm:$0xf]
    %v951 = vld [vmem:[#allocation4 + $0xb4] sm:$0xff]
    %v952 = vld [vmem:[#allocation4 + $0xbc] sm:$0xf]
    %v953 = vld [vmem:[#allocation4 + $0xc0] sm:$0xff]
    %v954 = vld [vmem:[#allocation4 + $0xc8] sm:$0xf]
    %v955 = vld [vmem:[#allocation4 + $0xcc] sm:$0xff]
    %v956 = vld [vmem:[#allocation4 + $0xd4] sm:$0xf]
    %v957 = vld [vmem:[#allocation4 + $0xd8] sm:$0xff]
    %v958 = vld [vmem:[#allocation4 + $0xe0] sm:$0xf]
    %v959 = vld [vmem:[#allocation4 + $0xe4] sm:$0xff]
    %v960 = vld [vmem:[#allocation4 + $0xec] sm:$0xf]
    %v961 = vld [vmem:[#allocation4 + $0xf0] sm:$0xff]
    %v962 = vld [vmem:[#allocation4 + $0xf8] sm:$0xf]
    %v963 = vld [vmem:[#allocation4 + $0xfc] sm:$0xff]
    %v964 = vld [vmem:[#allocation4 + $0x104] sm:$0xf]
    %v965 = vld [vmem:[#allocation4 + $0x108] sm:$0xff]
    %v966 = vld [vmem:[#allocation4 + $0x110] sm:$0xf]
    %v967 = vld [vmem:[#allocation4 + $0x114] sm:$0xff]
    %v968 = vld [vmem:[#allocation4 + $0x11c] sm:$0xf]
    %v969 = vld [vmem:[#allocation4 + $0x120] sm:$0xff]
    %v970 = vld [vmem:[#allocation4 + $0x128] sm:$0xf]
    %v971 = vld [vmem:[#allocation4 + $0x12c] sm:$0xff]
    %v972 = vld [vmem:[#allocation4 + $0x134] sm:$0xf]
    %v973 = vld [vmem:[#allocation4 + $0x138] sm:$0xff]
    %v974 = vld [vmem:[#allocation4 + $0x140] sm:$0xf]
    %v975 = vld [vmem:[#allocation4 + $0x144] sm:$0xff]
    %v976 = vld [vmem:[#allocation4 + $0x14c] sm:$0xf]
    %s977 = scalar_lea.vmem [#allocation4], 336
    %v978 = vld [vmem:[%s977] sm:$0xff]
    %v979 = vld [vmem:[%s977 + $0x8] sm:$0xf]
    %v980 = vld [vmem:[%s977 + $0xc] sm:$0xff]
    %v981 = vld [vmem:[%s977 + $0x14] sm:$0xf]
    %v982 = vld [vmem:[%s977 + $0x18] sm:$0xff]
    %v983 = vld [vmem:[%s977 + $0x20] sm:$0xf]
    %v984 = vld [vmem:[%s977 + $0x24] sm:$0xff]
    %v985 = vld [vmem:[%s977 + $0x2c] sm:$0xf]
    %v986 = vld [vmem:[%s977 + $0x30] sm:$0xff]
    %v987 = vld [vmem:[%s977 + $0x38] sm:$0xf]
    %v988 = vld [vmem:[%s977 + $0x3c] sm:$0xff]
    %v989 = vld [vmem:[%s977 + $0x44] sm:$0xf]
    %v990 = vld [vmem:[%s977 + $0x48] sm:$0xff]
    %v991 = vld [vmem:[%s977 + $0x50] sm:$0xf]
    %v992 = vld [vmem:[%s977 + $0x54] sm:$0xff]
    %v993 = vld [vmem:[%s977 + $0x5c] sm:$0xf]
    %v994 = vld [vmem:[%s977 + $0x60] sm:$0xff]
    %v995 = vld [vmem:[%s977 + $0x68] sm:$0xf]
    %v996 = vld [vmem:[%s977 + $0x6c] sm:$0xff]
    %v997 = vld [vmem:[%s977 + $0x74] sm:$0xf]
    %v998 = vld [vmem:[%s977 + $0x78] sm:$0xff]
    %v999 = vld [vmem:[%s977 + $0x80] sm:$0xf]
    %v1000 = vld [vmem:[%s977 + $0x84] sm:$0xff]
    %v1001 = vld [vmem:[%s977 + $0x8c] sm:$0xf]
    %v1002 = vld [vmem:[%s977 + $0x90] sm:$0xff]
    %v1003 = vld [vmem:[%s977 + $0x98] sm:$0xf]
    %v1004 = vld [vmem:[%s977 + $0x9c] sm:$0xff]
    %v1005 = vld [vmem:[%s977 + $0xa4] sm:$0xf]
    %v1006 = vld [vmem:[%s977 + $0xa8] sm:$0xff]
    %v1007 = vld [vmem:[%s977 + $0xb0] sm:$0xf]
    %v1008 = vld [vmem:[%s977 + $0xb4] sm:$0xff]
    %v1009 = vld [vmem:[%s977 + $0xbc] sm:$0xf]
    %v1010 = vld [vmem:[%s977 + $0xc0] sm:$0xff]
    %v1011 = vld [vmem:[%s977 + $0xc8] sm:$0xf]
    %v1012 = vld [vmem:[%s977 + $0xcc] sm:$0xff]
    %v1013 = vld [vmem:[%s977 + $0xd4] sm:$0xf]
    %v1014 = vld [vmem:[%s977 + $0xd8] sm:$0xff]
    %v1015 = vld [vmem:[%s977 + $0xe0] sm:$0xf]
    %v1016 = vld [vmem:[%s977 + $0xe4] sm:$0xff]
    %v1017 = vld [vmem:[%s977 + $0xec] sm:$0xf]
    %v1018 = vld [vmem:[%s977 + $0xf0] sm:$0xff]
    %v1019 = vld [vmem:[%s977 + $0xf8] sm:$0xf]
    %v1020 = vld [vmem:[%s977 + $0xfc] sm:$0xff]
    %v1021 = vld [vmem:[%s977 + $0x104] sm:$0xf]
    %v1022 = vld [vmem:[%s977 + $0x108] sm:$0xff]
    %v1023 = vld [vmem:[%s977 + $0x110] sm:$0xf]
    %v1024 = vld [vmem:[%s977 + $0x114] sm:$0xff]
    %v1025 = vld [vmem:[%s977 + $0x11c] sm:$0xf]
    %v1026 = vld [vmem:[%s977 + $0x120] sm:$0xff]
    %v1027 = vld [vmem:[%s977 + $0x128] sm:$0xf]
    %v1028 = vld [vmem:[%s977 + $0x12c] sm:$0xff]
    %v1029 = vld [vmem:[%s977 + $0x134] sm:$0xf]
    %v1030 = vld [vmem:[%s977 + $0x138] sm:$0xff]
    %v1031 = vld [vmem:[%s977 + $0x140] sm:$0xf]
    %v1032 = vld [vmem:[%s977 + $0x144] sm:$0xff]
    %v1033 = vld [vmem:[%s977 + $0x14c] sm:$0xf]
    %v1046 = vunpack.c.l.b16 %v908
    %v1047 = vunpack.c.h.b16 %v908
    %v1048 = vunpack.c.l.b16 %v909
    %v1049 = vunpack.c.h.b16 %v909
    %v1050 = vunpack.c.l.b16 %v910
    %v1051 = vunpack.c.h.b16 %v910
    %v1052 = vunpack.c.l.b16 %v911
    %v1053 = vunpack.c.h.b16 %v911
    %v1054 = vunpack.c.l.b16 %v912
    %v1055 = vunpack.c.h.b16 %v912
    %v1056 = vunpack.c.l.b16 %v913
    %v1057 = vunpack.c.h.b16 %v913
    %v1058 = vunpack.c.l.b16 %v914
    %v1059 = vunpack.c.h.b16 %v914
    %v1060 = vunpack.c.l.b16 %v915
    %v1061 = vunpack.c.h.b16 %v915
    %v1062 = vunpack.c.l.b16 %v916
    %v1063 = vunpack.c.h.b16 %v916
    %v1064 = vunpack.c.l.b16 %v917
    %v1065 = vunpack.c.h.b16 %v917
    %v1066 = vunpack.c.l.b16 %v918
    %v1067 = vunpack.c.h.b16 %v918
    %v1068 = vunpack.c.l.b16 %v919
    %v1069 = vunpack.c.h.b16 %v919
    %v1070 = vpack.c.b16 %v1048, %v1046
    %v1071 = vpack.c.b16 %v1049, %v1047
    %v1072 = vpack.c.b16 %v1052, %v1050
    %v1073 = vpack.c.b16 %v1053, %v1051
    %v1074 = vpack.c.b16 %v1056, %v1054
    %v1075 = vpack.c.b16 %v1057, %v1055
    %v1076 = vpack.c.b16 %v1060, %v1058
    %v1077 = vpack.c.b16 %v1061, %v1059
    %v1078 = vpack.c.b16 %v1064, %v1062
    %v1079 = vpack.c.b16 %v1065, %v1063
    %v1080 = vpack.c.b16 %v1068, %v1066
    %v1081 = vpack.c.b16 %v1069, %v1067
    %v1144 = vunpack.c.l.b16 %v978
    %v1145 = vunpack.c.h.b16 %v978
    %v1146 = vunpack.c.l.b16 %v979
    %v1147 = vunpack.c.l.b16 %v980
    %v1148 = vunpack.c.h.b16 %v980
    %v1149 = vunpack.c.l.b16 %v981
    %v1150 = vunpack.c.l.b16 %v982
    %v1151 = vunpack.c.h.b16 %v982
    %v1152 = vunpack.c.l.b16 %v983
    %v1153 = vunpack.c.l.b16 %v984
    %v1154 = vunpack.c.h.b16 %v984
    %v1155 = vunpack.c.l.b16 %v985
    %v1156 = vunpack.c.l.b16 %v986
    %v1157 = vunpack.c.h.b16 %v986
    %v1158 = vunpack.c.l.b16 %v987
    %v1159 = vunpack.c.l.b16 %v988
    %v1160 = vunpack.c.h.b16 %v988
    %v1161 = vunpack.c.l.b16 %v989
    %v1162 = vunpack.c.l.b16 %v990
    %v1163 = vunpack.c.h.b16 %v990
    %v1164 = vunpack.c.l.b16 %v991
    %v1165 = vunpack.c.l.b16 %v992
    %v1166 = vunpack.c.h.b16 %v992
    %v1167 = vunpack.c.l.b16 %v993
    %v1168 = vunpack.c.l.b16 %v994
    %v1169 = vunpack.c.h.b16 %v994
    %v1170 = vunpack.c.l.b16 %v995
    %v1171 = vunpack.c.l.b16 %v996
    %v1172 = vunpack.c.h.b16 %v996
    %v1173 = vunpack.c.l.b16 %v997
    %v1174 = vunpack.c.l.b16 %v998
    %v1175 = vunpack.c.h.b16 %v998
    %v1176 = vunpack.c.l.b16 %v999
    %v1177 = vunpack.c.l.b16 %v1000
    %v1178 = vunpack.c.h.b16 %v1000
    %v1179 = vunpack.c.l.b16 %v1001
    %v1180 = vunpack.c.l.b16 %v1002
    %v1181 = vunpack.c.h.b16 %v1002
    %v1182 = vunpack.c.l.b16 %v1003
    %v1183 = vunpack.c.l.b16 %v1004
    %v1184 = vunpack.c.h.b16 %v1004
    %v1185 = vunpack.c.l.b16 %v1005
    %v1186 = vunpack.c.l.b16 %v1006
    %v1187 = vunpack.c.h.b16 %v1006
    %v1188 = vunpack.c.l.b16 %v1007
    %v1189 = vunpack.c.l.b16 %v1008
    %v1190 = vunpack.c.h.b16 %v1008
    %v1191 = vunpack.c.l.b16 %v1009
    %v1192 = vunpack.c.l.b16 %v1010
    %v1193 = vunpack.c.h.b16 %v1010
    %v1194 = vunpack.c.l.b16 %v1011
    %v1195 = vunpack.c.l.b16 %v1012
    %v1196 = vunpack.c.h.b16 %v1012
    %v1197 = vunpack.c.l.b16 %v1013
    %v1198 = vunpack.c.l.b16 %v1014
    %v1199 = vunpack.c.h.b16 %v1014
    %v1200 = vunpack.c.l.b16 %v1015
    %v1201 = vunpack.c.l.b16 %v1016
    %v1202 = vunpack.c.h.b16 %v1016
    %v1203 = vunpack.c.l.b16 %v1017
    %v1204 = vunpack.c.l.b16 %v1018
    %v1205 = vunpack.c.h.b16 %v1018
    %v1206 = vunpack.c.l.b16 %v1019
    %v1207 = vunpack.c.l.b16 %v1020
    %v1208 = vunpack.c.h.b16 %v1020
    %v1209 = vunpack.c.l.b16 %v1021
    %v1210 = vunpack.c.l.b16 %v1022
    %v1211 = vunpack.c.h.b16 %v1022
    %v1212 = vunpack.c.l.b16 %v1023
    %v1213 = vunpack.c.l.b16 %v1024
    %v1214 = vunpack.c.h.b16 %v1024
    %v1215 = vunpack.c.l.b16 %v1025
    %v1216 = vunpack.c.l.b16 %v1026
    %v1217 = vunpack.c.h.b16 %v1026
    %v1218 = vunpack.c.l.b16 %v1027
    %v1219 = vunpack.c.l.b16 %v1028
    %v1220 = vunpack.c.h.b16 %v1028
    %v1221 = vunpack.c.l.b16 %v1029
    %v1222 = vunpack.c.l.b16 %v1030
    %v1223 = vunpack.c.h.b16 %v1030
    %v1224 = vunpack.c.l.b16 %v1031
    %v1225 = vunpack.c.l.b16 %v1032
    %v1226 = vunpack.c.h.b16 %v1032
    %v1227 = vunpack.c.l.b16 %v1033
    %v1228 = vpack.c.b16 %v1147, %v1144
    %v1229 = vpack.c.b16 %v1148, %v1145
    %v1230 = vpack.c.b16 %v1149, %v1146
    %v1231 = vpack.c.b16 %v1153, %v1150
    %v1232 = vpack.c.b16 %v1154, %v1151
    %v1233 = vpack.c.b16 %v1155, %v1152
    %v1234 = vpack.c.b16 %v1159, %v1156
    %v1235 = vpack.c.b16 %v1160, %v1157
    %v1236 = vpack.c.b16 %v1161, %v1158
    %v1237 = vpack.c.b16 %v1165, %v1162
    %v1238 = vpack.c.b16 %v1166, %v1163
    %v1239 = vpack.c.b16 %v1167, %v1164
    %v1240 = vpack.c.b16 %v1171, %v1168
    %v1241 = vpack.c.b16 %v1172, %v1169
    %v1242 = vpack.c.b16 %v1173, %v1170
    %v1243 = vpack.c.b16 %v1177, %v1174
    %v1244 = vpack.c.b16 %v1178, %v1175
    %v1245 = vpack.c.b16 %v1179, %v1176
    %v1246 = vpack.c.b16 %v1183, %v1180
    %v1247 = vpack.c.b16 %v1184, %v1181
    %v1248 = vpack.c.b16 %v1185, %v1182
    %v1249 = vpack.c.b16 %v1189, %v1186
    %v1250 = vpack.c.b16 %v1190, %v1187
    %v1251 = vpack.c.b16 %v1191, %v1188
    %v1252 = vpack.c.b16 %v1195, %v1192
    %v1253 = vpack.c.b16 %v1196, %v1193
    %v1254 = vpack.c.b16 %v1197, %v1194
    %v1255 = vpack.c.b16 %v1201, %v1198
    %v1256 = vpack.c.b16 %v1202, %v1199
    %v1257 = vpack.c.b16 %v1203, %v1200
    %v1258 = vpack.c.b16 %v1207, %v1204
    %v1259 = vpack.c.b16 %v1208, %v1205
    %v1260 = vpack.c.b16 %v1209, %v1206
    %v1261 = vpack.c.b16 %v1213, %v1210
    %v1262 = vpack.c.b16 %v1214, %v1211
    %v1263 = vpack.c.b16 %v1215, %v1212
    %v1264 = vpack.c.b16 %v1219, %v1216
    %v1265 = vpack.c.b16 %v1220, %v1217
    %v1266 = vpack.c.b16 %v1221, %v1218
    %v1267 = vpack.c.b16 %v1225, %v1222
    %v1268 = vpack.c.b16 %v1226, %v1223
    %v1269 = vpack.c.b16 %v1227, %v1224
    %vm1312 = vcmask 785408
    %v1314 = vsel %vm1312, %v1071, 0
    %v1317 = vsel %vm1312, %v1073, 0
    %v1320 = vsel %vm1312, %v1075, 0
    %v1323 = vsel %vm1312, %v1077, 0
    %v1326 = vsel %vm1312, %v1079, 0
    %v1329 = vsel %vm1312, %v1081, 0
    %1331 = vmatpush.bf16.msra.mxu0 %v1249
    %1332 = vmatpush.bf16.msra.mxu0 %v1246
    %1333 = vmatpush.bf16.msra.mxu0 %v1243
    %1334 = vmatpush.bf16.msra.mxu0 %v1240
    %1335 = vmatpush.bf16.msra.mxu0 %v1237
    %1336 = vmatpush.bf16.msra.mxu0 %v1234
    %1337 = vmatpush.bf16.msra.mxu0 %v1231
    %1338 = vmatpush.bf16.msra.mxu0 %v1228
    %1339 = vmatmul.bf16.gmra.mxu0 %v1070
    %v1340 = vpop.f32.mrf.mxu0
    %v1341 = vadd.f32 0.0, %v1340
    %v1342 = vpop.f32.mrf.mxu0
    %v1343 = vadd.f32 0.0, %v1342
    %1344 = vmatmul.bf16.gmra.mxu0 %v1072
    %v1345 = vpop.f32.mrf.mxu0
    %v1346 = vadd.f32 0.0, %v1345
    %v1347 = vpop.f32.mrf.mxu0
    %v1348 = vadd.f32 0.0, %v1347
    %1349 = vmatmul.bf16.gmra.mxu0 %v1074
    %v1350 = vpop.f32.mrf.mxu0
    %v1351 = vadd.f32 0.0, %v1350
    %v1352 = vpop.f32.mrf.mxu0
    %v1353 = vadd.f32 0.0, %v1352
    %1354 = vmatmul.bf16.gmra.mxu0 %v1076
    %v1355 = vpop.f32.mrf.mxu0
    %v1356 = vadd.f32 0.0, %v1355
    %v1357 = vpop.f32.mrf.mxu0
    %v1358 = vadd.f32 0.0, %v1357
    %1359 = vmatmul.bf16.gmra.mxu0 %v1078
    %v1360 = vpop.f32.mrf.mxu0
    %v1361 = vadd.f32 0.0, %v1360
    %v1362 = vpop.f32.mrf.mxu0
    %v1363 = vadd.f32 0.0, %v1362
    %1364 = vmatmul.bf16.gmra.mxu0 %v1080
    %v1365 = vpop.f32.mrf.mxu0
    %v1366 = vadd.f32 0.0, %v1365
    %v1367 = vpop.f32.mrf.mxu0
    %v1368 = vadd.f32 0.0, %v1367
    %1369 = vdwg.mxu0
    %1370 = vmatpush.bf16.msra.mxu0 0
    %1371 = vmatpush.bf16.msra.mxu0 0
    %1372 = vmatpush.bf16.msra.mxu0 %v1267
    %1373 = vmatpush.bf16.msra.mxu0 %v1264
    %1374 = vmatpush.bf16.msra.mxu0 %v1261
    %1375 = vmatpush.bf16.msra.mxu0 %v1258
    %1376 = vmatpush.bf16.msra.mxu0 %v1255
    %1377 = vmatpush.bf16.msra.mxu0 %v1252
    %1378 = vmatmul.bf16.gmra.mxu0 %v1314
    %v1379 = vpop.f32.mrf.mxu0
    %v1380 = vadd.f32 %v1341, %v1379
    %v1381 = vpop.f32.mrf.mxu0
    %v1382 = vadd.f32 %v1343, %v1381
    %1383 = vmatmul.bf16.gmra.mxu0 %v1317
    %v1384 = vpop.f32.mrf.mxu0
    %v1385 = vadd.f32 %v1346, %v1384
    %v1386 = vpop.f32.mrf.mxu0
    %v1387 = vadd.f32 %v1348, %v1386
    %1388 = vmatmul.bf16.gmra.mxu0 %v1320
    %v1389 = vpop.f32.mrf.mxu0
    %v1390 = vadd.f32 %v1351, %v1389
    %v1391 = vpop.f32.mrf.mxu0
    %v1392 = vadd.f32 %v1353, %v1391
    %1393 = vmatmul.bf16.gmra.mxu0 %v1323
    %v1394 = vpop.f32.mrf.mxu0
    %v1395 = vadd.f32 %v1356, %v1394
    %v1396 = vpop.f32.mrf.mxu0
    %v1397 = vadd.f32 %v1358, %v1396
    %1398 = vmatmul.bf16.gmra.mxu0 %v1326
    %v1399 = vpop.f32.mrf.mxu0
    %v1400 = vadd.f32 %v1361, %v1399
    %v1401 = vpop.f32.mrf.mxu0
    %v1402 = vadd.f32 %v1363, %v1401
    %1403 = vmatmul.bf16.gmra.mxu0 %v1329
    %v1404 = vpop.f32.mrf.mxu0
    %v1405 = vadd.f32 %v1366, %v1404
    %v1406 = vpop.f32.mrf.mxu0
    %v1407 = vadd.f32 %v1368, %v1406
    %1408 = vdwg.mxu0
    %1409 = vmatpush.bf16.msra.mxu0 %v1250
    %1410 = vmatpush.bf16.msra.mxu0 %v1247
    %1411 = vmatpush.bf16.msra.mxu0 %v1244
    %1412 = vmatpush.bf16.msra.mxu0 %v1241
    %1413 = vmatpush.bf16.msra.mxu0 %v1238
    %1414 = vmatpush.bf16.msra.mxu0 %v1235
    %1415 = vmatpush.bf16.msra.mxu0 %v1232
    %1416 = vmatpush.bf16.msra.mxu0 %v1229
    %1417 = vmatmul.bf16.gmra.mxu0 %v1070
    %v1418 = vpop.f32.mrf.mxu0
    %v1419 = vadd.f32 0.0, %v1418
    %v1420 = vpop.f32.mrf.mxu0
    %v1421 = vadd.f32 0.0, %v1420
    %1422 = vmatmul.bf16.gmra.mxu0 %v1072
    %v1423 = vpop.f32.mrf.mxu0
    %v1424 = vadd.f32 0.0, %v1423
    %v1425 = vpop.f32.mrf.mxu0
    %v1426 = vadd.f32 0.0, %v1425
    %1427 = vmatmul.bf16.gmra.mxu0 %v1074
    %v1428 = vpop.f32.mrf.mxu0
    %v1429 = vadd.f32 0.0, %v1428
    %v1430 = vpop.f32.mrf.mxu0
    %v1431 = vadd.f32 0.0, %v1430
    %1432 = vmatmul.bf16.gmra.mxu0 %v1076
    %v1433 = vpop.f32.mrf.mxu0
    %v1434 = vadd.f32 0.0, %v1433
    %v1435 = vpop.f32.mrf.mxu0
    %v1436 = vadd.f32 0.0, %v1435
    %1437 = vmatmul.bf16.gmra.mxu0 %v1078
    %v1438 = vpop.f32.mrf.mxu0
    %v1439 = vadd.f32 0.0, %v1438
    %v1440 = vpop.f32.mrf.mxu0
    %v1441 = vadd.f32 0.0, %v1440
    %1442 = vmatmul.bf16.gmra.mxu0 %v1080
    %v1443 = vpop.f32.mrf.mxu0
    %v1444 = vadd.f32 0.0, %v1443
    %v1445 = vpop.f32.mrf.mxu0
    %v1446 = vadd.f32 0.0, %v1445
    %1447 = vdwg.mxu0
    %1448 = vmatpush.bf16.msra.mxu0 0
    %1449 = vmatpush.bf16.msra.mxu0 0
    %1450 = vmatpush.bf16.msra.mxu0 %v1268
    %1451 = vmatpush.bf16.msra.mxu0 %v1265
    %1452 = vmatpush.bf16.msra.mxu0 %v1262
    %1453 = vmatpush.bf16.msra.mxu0 %v1259
    %1454 = vmatpush.bf16.msra.mxu0 %v1256
    %1455 = vmatpush.bf16.msra.mxu0 %v1253
    %1456 = vmatmul.bf16.gmra.mxu0 %v1314
    %v1457 = vpop.f32.mrf.mxu0
    %v1458 = vadd.f32 %v1419, %v1457
    %v1459 = vpop.f32.mrf.mxu0
    %v1460 = vadd.f32 %v1421, %v1459
    %1461 = vmatmul.bf16.gmra.mxu0 %v1317
    %v1462 = vpop.f32.mrf.mxu0
    %v1463 = vadd.f32 %v1424, %v1462
    %v1464 = vpop.f32.mrf.mxu0
    %v1465 = vadd.f32 %v1426, %v1464
    %1466 = vmatmul.bf16.gmra.mxu0 %v1320
    %v1467 = vpop.f32.mrf.mxu0
    %v1468 = vadd.f32 %v1429, %v1467
    %v1469 = vpop.f32.mrf.mxu0
    %v1470 = vadd.f32 %v1431, %v1469
    %1471 = vmatmul.bf16.gmra.mxu0 %v1323
    %v1472 = vpop.f32.mrf.mxu0
    %v1473 = vadd.f32 %v1434, %v1472
    %v1474 = vpop.f32.mrf.mxu0
    %v1475 = vadd.f32 %v1436, %v1474
    %1476 = vmatmul.bf16.gmra.mxu0 %v1326
    %v1477 = vpop.f32.mrf.mxu0
    %v1478 = vadd.f32 %v1439, %v1477
    %v1479 = vpop.f32.mrf.mxu0
    %v1480 = vadd.f32 %v1441, %v1479
    %1481 = vmatmul.bf16.gmra.mxu0 %v1329
    %v1482 = vpop.f32.mrf.mxu0
    %v1483 = vadd.f32 %v1444, %v1482
    %v1484 = vpop.f32.mrf.mxu0
    %v1485 = vadd.f32 %v1446, %v1484
    %1486 = vdwg.mxu0
    %1487 = vmatpush.bf16.msra.mxu0 %v1251
    %1488 = vmatpush.bf16.msra.mxu0 %v1248
    %1489 = vmatpush.bf16.msra.mxu0 %v1245
    %1490 = vmatpush.bf16.msra.mxu0 %v1242
    %1491 = vmatpush.bf16.msra.mxu0 %v1239
    %1492 = vmatpush.bf16.msra.mxu0 %v1236
    %1493 = vmatpush.bf16.msra.mxu0 %v1233
    %1494 = vmatpush.bf16.msra.mxu0 %v1230
    %1495 = vmatmul.bf16.gmra.mxu0 %v1070
    %v1496 = vpop.f32.mrf.mxu0
    %v1497 = vadd.f32 0.0, %v1496
    %v1498 = vpop.f32.mrf.mxu0
    %v1499 = vadd.f32 0.0, %v1498
    %1500 = vmatmul.bf16.gmra.mxu0 %v1072
    %v1501 = vpop.f32.mrf.mxu0
    %v1502 = vadd.f32 0.0, %v1501
    %v1503 = vpop.f32.mrf.mxu0
    %v1504 = vadd.f32 0.0, %v1503
    %1505 = vmatmul.bf16.gmra.mxu0 %v1074
    %v1506 = vpop.f32.mrf.mxu0
    %v1507 = vadd.f32 0.0, %v1506
    %v1508 = vpop.f32.mrf.mxu0
    %v1509 = vadd.f32 0.0, %v1508
    %1510 = vmatmul.bf16.gmra.mxu0 %v1076
    %v1511 = vpop.f32.mrf.mxu0
    %v1512 = vadd.f32 0.0, %v1511
    %v1513 = vpop.f32.mrf.mxu0
    %v1514 = vadd.f32 0.0, %v1513
    %1515 = vmatmul.bf16.gmra.mxu0 %v1078
    %v1516 = vpop.f32.mrf.mxu0
    %v1517 = vadd.f32 0.0, %v1516
    %v1518 = vpop.f32.mrf.mxu0
    %v1519 = vadd.f32 0.0, %v1518
    %1520 = vmatmul.bf16.gmra.mxu0 %v1080
    %v1521 = vpop.f32.mrf.mxu0
    %v1522 = vadd.f32 0.0, %v1521
    %v1523 = vpop.f32.mrf.mxu0
    %v1524 = vadd.f32 0.0, %v1523
    %1525 = vdwg.mxu0
    %1526 = vmatpush.bf16.msra.mxu0 0
    %1527 = vmatpush.bf16.msra.mxu0 0
    %1528 = vmatpush.bf16.msra.mxu0 %v1269
    %1529 = vmatpush.bf16.msra.mxu0 %v1266
    %1530 = vmatpush.bf16.msra.mxu0 %v1263
    %1531 = vmatpush.bf16.msra.mxu0 %v1260
    %1532 = vmatpush.bf16.msra.mxu0 %v1257
    %1533 = vmatpush.bf16.msra.mxu0 %v1254
    %1534 = vmatmul.bf16.gmra.mxu0 %v1314
    %v1535 = vpop.f32.mrf.mxu0
    %v1536 = vadd.f32 %v1497, %v1535
    %v1537 = vpop.f32.mrf.mxu0
    %v1538 = vadd.f32 %v1499, %v1537
    %1539 = vmatmul.bf16.gmra.mxu0 %v1317
    %v1540 = vpop.f32.mrf.mxu0
    %v1541 = vadd.f32 %v1502, %v1540
    %v1542 = vpop.f32.mrf.mxu0
    %v1543 = vadd.f32 %v1504, %v1542
    %1544 = vmatmul.bf16.gmra.mxu0 %v1320
    %v1545 = vpop.f32.mrf.mxu0
    %v1546 = vadd.f32 %v1507, %v1545
    %v1547 = vpop.f32.mrf.mxu0
    %v1548 = vadd.f32 %v1509, %v1547
    %1549 = vmatmul.bf16.gmra.mxu0 %v1323
    %v1550 = vpop.f32.mrf.mxu0
    %v1551 = vadd.f32 %v1512, %v1550
    %v1552 = vpop.f32.mrf.mxu0
    %v1553 = vadd.f32 %v1514, %v1552
    %1554 = vmatmul.bf16.gmra.mxu0 %v1326
    %v1555 = vpop.f32.mrf.mxu0
    %v1556 = vadd.f32 %v1517, %v1555
    %v1557 = vpop.f32.mrf.mxu0
    %v1558 = vadd.f32 %v1519, %v1557
    %1559 = vmatmul.bf16.gmra.mxu0 %v1329
    %v1560 = vpop.f32.mrf.mxu0
    %v1561 = vadd.f32 %v1522, %v1560
    %v1562 = vpop.f32.mrf.mxu0
    %v1563 = vadd.f32 %v1524, %v1562
    %1564 = vdwg.mxu0
    %v1566 = vunpack.c.l.b16 %v907
    %v1567 = vunpack.c.h.b16 %v907
    %v1568 = vpack.c.b16 %v1046, %v1566
    %v1569 = vpack.c.b16 %v1047, %v1567
    %v1570 = vpack.c.b16 %v1050, %v1048
    %v1571 = vpack.c.b16 %v1051, %v1049
    %v1572 = vpack.c.b16 %v1054, %v1052
    %v1573 = vpack.c.b16 %v1055, %v1053
    %v1574 = vpack.c.b16 %v1058, %v1056
    %v1575 = vpack.c.b16 %v1059, %v1057
    %v1576 = vpack.c.b16 %v1062, %v1060
    %v1577 = vpack.c.b16 %v1063, %v1061
    %v1578 = vpack.c.b16 %v1066, %v1064
    %v1579 = vpack.c.b16 %v1067, %v1065
    %v1642 = vunpack.c.l.b16 %v921
    %v1643 = vunpack.c.h.b16 %v921
    %v1644 = vunpack.c.l.b16 %v922
    %v1645 = vunpack.c.l.b16 %v923
    %v1646 = vunpack.c.h.b16 %v923
    %v1647 = vunpack.c.l.b16 %v924
    %v1648 = vunpack.c.l.b16 %v925
    %v1649 = vunpack.c.h.b16 %v925
    %v1650 = vunpack.c.l.b16 %v926
    %v1651 = vunpack.c.l.b16 %v927
    %v1652 = vunpack.c.h.b16 %v927
    %v1653 = vunpack.c.l.b16 %v928
    %v1654 = vunpack.c.l.b16 %v929
    %v1655 = vunpack.c.h.b16 %v929
    %v1656 = vunpack.c.l.b16 %v930
    %v1657 = vunpack.c.l.b16 %v931
    %v1658 = vunpack.c.h.b16 %v931
    %v1659 = vunpack.c.l.b16 %v932
    %v1660 = vunpack.c.l.b16 %v933
    %v1661 = vunpack.c.h.b16 %v933
    %v1662 = vunpack.c.l.b16 %v934
    %v1663 = vunpack.c.l.b16 %v935
    %v1664 = vunpack.c.h.b16 %v935
    %v1665 = vunpack.c.l.b16 %v936
    %v1666 = vunpack.c.l.b16 %v937
    %v1667 = vunpack.c.h.b16 %v937
    %v1668 = vunpack.c.l.b16 %v938
    %v1669 = vunpack.c.l.b16 %v939
    %v1670 = vunpack.c.h.b16 %v939
    %v1671 = vunpack.c.l.b16 %v940
    %v1672 = vunpack.c.l.b16 %v941
    %v1673 = vunpack.c.h.b16 %v941
    %v1674 = vunpack.c.l.b16 %v942
    %v1675 = vunpack.c.l.b16 %v943
    %v1676 = vunpack.c.h.b16 %v943
    %v1677 = vunpack.c.l.b16 %v944
    %v1678 = vunpack.c.l.b16 %v945
    %v1679 = vunpack.c.h.b16 %v945
    %v1680 = vunpack.c.l.b16 %v946
    %v1681 = vunpack.c.l.b16 %v947
    %v1682 = vunpack.c.h.b16 %v947
    %v1683 = vunpack.c.l.b16 %v948
    %v1684 = vunpack.c.l.b16 %v949
    %v1685 = vunpack.c.h.b16 %v949
    %v1686 = vunpack.c.l.b16 %v950
    %v1687 = vunpack.c.l.b16 %v951
    %v1688 = vunpack.c.h.b16 %v951
    %v1689 = vunpack.c.l.b16 %v952
    %v1690 = vunpack.c.l.b16 %v953
    %v1691 = vunpack.c.h.b16 %v953
    %v1692 = vunpack.c.l.b16 %v954
    %v1693 = vunpack.c.l.b16 %v955
    %v1694 = vunpack.c.h.b16 %v955
    %v1695 = vunpack.c.l.b16 %v956
    %v1696 = vunpack.c.l.b16 %v957
    %v1697 = vunpack.c.h.b16 %v957
    %v1698 = vunpack.c.l.b16 %v958
    %v1699 = vunpack.c.l.b16 %v959
    %v1700 = vunpack.c.h.b16 %v959
    %v1701 = vunpack.c.l.b16 %v960
    %v1702 = vunpack.c.l.b16 %v961
    %v1703 = vunpack.c.h.b16 %v961
    %v1704 = vunpack.c.l.b16 %v962
    %v1705 = vunpack.c.l.b16 %v963
    %v1706 = vunpack.c.h.b16 %v963
    %v1707 = vunpack.c.l.b16 %v964
    %v1708 = vunpack.c.l.b16 %v965
    %v1709 = vunpack.c.h.b16 %v965
    %v1710 = vunpack.c.l.b16 %v966
    %v1711 = vunpack.c.l.b16 %v967
    %v1712 = vunpack.c.h.b16 %v967
    %v1713 = vunpack.c.l.b16 %v968
    %v1714 = vunpack.c.l.b16 %v969
    %v1715 = vunpack.c.h.b16 %v969
    %v1716 = vunpack.c.l.b16 %v970
    %v1717 = vunpack.c.l.b16 %v971
    %v1718 = vunpack.c.h.b16 %v971
    %v1719 = vunpack.c.l.b16 %v972
    %v1720 = vunpack.c.l.b16 %v973
    %v1721 = vunpack.c.h.b16 %v973
    %v1722 = vunpack.c.l.b16 %v974
    %v1723 = vunpack.c.l.b16 %v975
    %v1724 = vunpack.c.h.b16 %v975
    %v1725 = vunpack.c.l.b16 %v976
    %v1726 = vpack.c.b16 %v1645, %v1642
    %v1727 = vpack.c.b16 %v1646, %v1643
    %v1728 = vpack.c.b16 %v1647, %v1644
    %v1729 = vpack.c.b16 %v1651, %v1648
    %v1730 = vpack.c.b16 %v1652, %v1649
    %v1731 = vpack.c.b16 %v1653, %v1650
    %v1732 = vpack.c.b16 %v1657, %v1654
    %v1733 = vpack.c.b16 %v1658, %v1655
    %v1734 = vpack.c.b16 %v1659, %v1656
    %v1735 = vpack.c.b16 %v1663, %v1660
    %v1736 = vpack.c.b16 %v1664, %v1661
    %v1737 = vpack.c.b16 %v1665, %v1662
    %v1738 = vpack.c.b16 %v1669, %v1666
    %v1739 = vpack.c.b16 %v1670, %v1667
    %v1740 = vpack.c.b16 %v1671, %v1668
    %v1741 = vpack.c.b16 %v1675, %v1672
    %v1742 = vpack.c.b16 %v1676, %v1673
    %v1743 = vpack.c.b16 %v1677, %v1674
    %v1744 = vpack.c.b16 %v1681, %v1678
    %v1745 = vpack.c.b16 %v1682, %v1679
    %v1746 = vpack.c.b16 %v1683, %v1680
    %v1747 = vpack.c.b16 %v1687, %v1684
    %v1748 = vpack.c.b16 %v1688, %v1685
    %v1749 = vpack.c.b16 %v1689, %v1686
    %v1750 = vpack.c.b16 %v1693, %v1690
    %v1751 = vpack.c.b16 %v1694, %v1691
    %v1752 = vpack.c.b16 %v1695, %v1692
    %v1753 = vpack.c.b16 %v1699, %v1696
    %v1754 = vpack.c.b16 %v1700, %v1697
    %v1755 = vpack.c.b16 %v1701, %v1698
    %v1756 = vpack.c.b16 %v1705, %v1702
    %v1757 = vpack.c.b16 %v1706, %v1703
    %v1758 = vpack.c.b16 %v1707, %v1704
    %v1759 = vpack.c.b16 %v1711, %v1708
    %v1760 = vpack.c.b16 %v1712, %v1709
    %v1761 = vpack.c.b16 %v1713, %v1710
    %v1762 = vpack.c.b16 %v1717, %v1714
    %v1763 = vpack.c.b16 %v1718, %v1715
    %v1764 = vpack.c.b16 %v1719, %v1716
    %v1765 = vpack.c.b16 %v1723, %v1720
    %v1766 = vpack.c.b16 %v1724, %v1721
    %v1767 = vpack.c.b16 %v1725, %v1722
    %v1811 = vsel %vm1312, %v1569, 0
    %v1814 = vsel %vm1312, %v1571, 0
    %v1817 = vsel %vm1312, %v1573, 0
    %v1820 = vsel %vm1312, %v1575, 0
    %v1823 = vsel %vm1312, %v1577, 0
    %v1826 = vsel %vm1312, %v1579, 0
    %1828 = vmatpush.bf16.msra.mxu0 %v1747
    %1829 = vmatpush.bf16.msra.mxu0 %v1744
    %1830 = vmatpush.bf16.msra.mxu0 %v1741
    %1831 = vmatpush.bf16.msra.mxu0 %v1738
    %1832 = vmatpush.bf16.msra.mxu0 %v1735
    %1833 = vmatpush.bf16.msra.mxu0 %v1732
    %1834 = vmatpush.bf16.msra.mxu0 %v1729
    %1835 = vmatpush.bf16.msra.mxu0 %v1726
    %1836 = vmatmul.bf16.gmra.mxu0 %v1568
    %v1837 = vpop.f32.mrf.mxu0
    %v1838 = vadd.f32 %v1380, %v1837
    %v1839 = vpop.f32.mrf.mxu0
    %v1840 = vadd.f32 %v1382, %v1839
    %1841 = vmatmul.bf16.gmra.mxu0 %v1570
    %v1842 = vpop.f32.mrf.mxu0
    %v1843 = vadd.f32 %v1385, %v1842
    %v1844 = vpop.f32.mrf.mxu0
    %v1845 = vadd.f32 %v1387, %v1844
    %1846 = vmatmul.bf16.gmra.mxu0 %v1572
    %v1847 = vpop.f32.mrf.mxu0
    %v1848 = vadd.f32 %v1390, %v1847
    %v1849 = vpop.f32.mrf.mxu0
    %v1850 = vadd.f32 %v1392, %v1849
    %1851 = vmatmul.bf16.gmra.mxu0 %v1574
    %v1852 = vpop.f32.mrf.mxu0
    %v1853 = vadd.f32 %v1395, %v1852
    %v1854 = vpop.f32.mrf.mxu0
    %v1855 = vadd.f32 %v1397, %v1854
    %1856 = vmatmul.bf16.gmra.mxu0 %v1576
    %v1857 = vpop.f32.mrf.mxu0
    %v1858 = vadd.f32 %v1400, %v1857
    %v1859 = vpop.f32.mrf.mxu0
    %v1860 = vadd.f32 %v1402, %v1859
    %1861 = vmatmul.bf16.gmra.mxu0 %v1578
    %v1862 = vpop.f32.mrf.mxu0
    %v1863 = vadd.f32 %v1405, %v1862
    %v1864 = vpop.f32.mrf.mxu0
    %v1865 = vadd.f32 %v1407, %v1864
    %1866 = vdwg.mxu0
    %1867 = vmatpush.bf16.msra.mxu0 0
    %1868 = vmatpush.bf16.msra.mxu0 0
    %1869 = vmatpush.bf16.msra.mxu0 %v1765
    %1870 = vmatpush.bf16.msra.mxu0 %v1762
    %1871 = vmatpush.bf16.msra.mxu0 %v1759
    %1872 = vmatpush.bf16.msra.mxu0 %v1756
    %1873 = vmatpush.bf16.msra.mxu0 %v1753
    %1874 = vmatpush.bf16.msra.mxu0 %v1750
    %1875 = vmatmul.bf16.gmra.mxu0 %v1811
    %v1876 = vpop.f32.mrf.mxu0
    %v1877 = vadd.f32 %v1838, %v1876
    %v1878 = vpop.f32.mrf.mxu0
    %v1879 = vadd.f32 %v1840, %v1878
    %1880 = vmatmul.bf16.gmra.mxu0 %v1814
    %v1881 = vpop.f32.mrf.mxu0
    %v1882 = vadd.f32 %v1843, %v1881
    %v1883 = vpop.f32.mrf.mxu0
    %v1884 = vadd.f32 %v1845, %v1883
    %1885 = vmatmul.bf16.gmra.mxu0 %v1817
    %v1886 = vpop.f32.mrf.mxu0
    %v1887 = vadd.f32 %v1848, %v1886
    %v1888 = vpop.f32.mrf.mxu0
    %v1889 = vadd.f32 %v1850, %v1888
    %1890 = vmatmul.bf16.gmra.mxu0 %v1820
    %v1891 = vpop.f32.mrf.mxu0
    %v1892 = vadd.f32 %v1853, %v1891
    %v1893 = vpop.f32.mrf.mxu0
    %v1894 = vadd.f32 %v1855, %v1893
    %1895 = vmatmul.bf16.gmra.mxu0 %v1823
    %v1896 = vpop.f32.mrf.mxu0
    %v1897 = vadd.f32 %v1858, %v1896
    %v1898 = vpop.f32.mrf.mxu0
    %v1899 = vadd.f32 %v1860, %v1898
    %1900 = vmatmul.bf16.gmra.mxu0 %v1826
    %v1901 = vpop.f32.mrf.mxu0
    %v1902 = vadd.f32 %v1863, %v1901
    %v1903 = vpop.f32.mrf.mxu0
    %v1904 = vadd.f32 %v1865, %v1903
    %1905 = vdwg.mxu0
    %1906 = vmatpush.bf16.msra.mxu0 %v1748
    %1907 = vmatpush.bf16.msra.mxu0 %v1745
    %1908 = vmatpush.bf16.msra.mxu0 %v1742
    %1909 = vmatpush.bf16.msra.mxu0 %v1739
    %1910 = vmatpush.bf16.msra.mxu0 %v1736
    %1911 = vmatpush.bf16.msra.mxu0 %v1733
    %1912 = vmatpush.bf16.msra.mxu0 %v1730
    %1913 = vmatpush.bf16.msra.mxu0 %v1727
    %1914 = vmatmul.bf16.gmra.mxu0 %v1568
    %v1915 = vpop.f32.mrf.mxu0
    %v1916 = vadd.f32 %v1458, %v1915
    %v1917 = vpop.f32.mrf.mxu0
    %v1918 = vadd.f32 %v1460, %v1917
    %1919 = vmatmul.bf16.gmra.mxu0 %v1570
    %v1920 = vpop.f32.mrf.mxu0
    %v1921 = vadd.f32 %v1463, %v1920
    %v1922 = vpop.f32.mrf.mxu0
    %v1923 = vadd.f32 %v1465, %v1922
    %1924 = vmatmul.bf16.gmra.mxu0 %v1572
    %v1925 = vpop.f32.mrf.mxu0
    %v1926 = vadd.f32 %v1468, %v1925
    %v1927 = vpop.f32.mrf.mxu0
    %v1928 = vadd.f32 %v1470, %v1927
    %1929 = vmatmul.bf16.gmra.mxu0 %v1574
    %v1930 = vpop.f32.mrf.mxu0
    %v1931 = vadd.f32 %v1473, %v1930
    %v1932 = vpop.f32.mrf.mxu0
    %v1933 = vadd.f32 %v1475, %v1932
    %1934 = vmatmul.bf16.gmra.mxu0 %v1576
    %v1935 = vpop.f32.mrf.mxu0
    %v1936 = vadd.f32 %v1478, %v1935
    %v1937 = vpop.f32.mrf.mxu0
    %v1938 = vadd.f32 %v1480, %v1937
    %1939 = vmatmul.bf16.gmra.mxu0 %v1578
    %v1940 = vpop.f32.mrf.mxu0
    %v1941 = vadd.f32 %v1483, %v1940
    %v1942 = vpop.f32.mrf.mxu0
    %v1943 = vadd.f32 %v1485, %v1942
    %1944 = vdwg.mxu0
    %1945 = vmatpush.bf16.msra.mxu0 0
    %1946 = vmatpush.bf16.msra.mxu0 0
    %1947 = vmatpush.bf16.msra.mxu0 %v1766
    %1948 = vmatpush.bf16.msra.mxu0 %v1763
    %1949 = vmatpush.bf16.msra.mxu0 %v1760
    %1950 = vmatpush.bf16.msra.mxu0 %v1757
    %1951 = vmatpush.bf16.msra.mxu0 %v1754
    %1952 = vmatpush.bf16.msra.mxu0 %v1751
    %1953 = vmatmul.bf16.gmra.mxu0 %v1811
    %v1954 = vpop.f32.mrf.mxu0
    %v1955 = vadd.f32 %v1916, %v1954
    %v1956 = vpop.f32.mrf.mxu0
    %v1957 = vadd.f32 %v1918, %v1956
    %1958 = vmatmul.bf16.gmra.mxu0 %v1814
    %v1959 = vpop.f32.mrf.mxu0
    %v1960 = vadd.f32 %v1921, %v1959
    %v1961 = vpop.f32.mrf.mxu0
    %v1962 = vadd.f32 %v1923, %v1961
    %1963 = vmatmul.bf16.gmra.mxu0 %v1817
    %v1964 = vpop.f32.mrf.mxu0
    %v1965 = vadd.f32 %v1926, %v1964
    %v1966 = vpop.f32.mrf.mxu0
    %v1967 = vadd.f32 %v1928, %v1966
    %1968 = vmatmul.bf16.gmra.mxu0 %v1820
    %v1969 = vpop.f32.mrf.mxu0
    %v1970 = vadd.f32 %v1931, %v1969
    %v1971 = vpop.f32.mrf.mxu0
    %v1972 = vadd.f32 %v1933, %v1971
    %1973 = vmatmul.bf16.gmra.mxu0 %v1823
    %v1974 = vpop.f32.mrf.mxu0
    %v1975 = vadd.f32 %v1936, %v1974
    %v1976 = vpop.f32.mrf.mxu0
    %v1977 = vadd.f32 %v1938, %v1976
    %1978 = vmatmul.bf16.gmra.mxu0 %v1826
    %v1979 = vpop.f32.mrf.mxu0
    %v1980 = vadd.f32 %v1941, %v1979
    %v1981 = vpop.f32.mrf.mxu0
    %v1982 = vadd.f32 %v1943, %v1981
    %1983 = vdwg.mxu0
    %1984 = vmatpush.bf16.msra.mxu0 %v1749
    %1985 = vmatpush.bf16.msra.mxu0 %v1746
    %1986 = vmatpush.bf16.msra.mxu0 %v1743
    %1987 = vmatpush.bf16.msra.mxu0 %v1740
    %1988 = vmatpush.bf16.msra.mxu0 %v1737
    %1989 = vmatpush.bf16.msra.mxu0 %v1734
    %1990 = vmatpush.bf16.msra.mxu0 %v1731
    %1991 = vmatpush.bf16.msra.mxu0 %v1728
    %1992 = vmatmul.bf16.gmra.mxu0 %v1568
    %v1993 = vpop.f32.mrf.mxu0
    %v1994 = vadd.f32 %v1536, %v1993
    %v1995 = vpop.f32.mrf.mxu0
    %v1996 = vadd.f32 %v1538, %v1995
    %1997 = vmatmul.bf16.gmra.mxu0 %v1570
    %v1998 = vpop.f32.mrf.mxu0
    %v1999 = vadd.f32 %v1541, %v1998
    %v2000 = vpop.f32.mrf.mxu0
    %v2001 = vadd.f32 %v1543, %v2000
    %2002 = vmatmul.bf16.gmra.mxu0 %v1572
    %v2003 = vpop.f32.mrf.mxu0
    %v2004 = vadd.f32 %v1546, %v2003
    %v2005 = vpop.f32.mrf.mxu0
    %v2006 = vadd.f32 %v1548, %v2005
    %2007 = vmatmul.bf16.gmra.mxu0 %v1574
    %v2008 = vpop.f32.mrf.mxu0
    %v2009 = vadd.f32 %v1551, %v2008
    %v2010 = vpop.f32.mrf.mxu0
    %v2011 = vadd.f32 %v1553, %v2010
    %2012 = vmatmul.bf16.gmra.mxu0 %v1576
    %v2013 = vpop.f32.mrf.mxu0
    %v2014 = vadd.f32 %v1556, %v2013
    %v2015 = vpop.f32.mrf.mxu0
    %v2016 = vadd.f32 %v1558, %v2015
    %2017 = vmatmul.bf16.gmra.mxu0 %v1578
    %v2018 = vpop.f32.mrf.mxu0
    %v2019 = vadd.f32 %v1561, %v2018
    %v2020 = vpop.f32.mrf.mxu0
    %v2021 = vadd.f32 %v1563, %v2020
    %2022 = vdwg.mxu0
    %2023 = vmatpush.bf16.msra.mxu0 0
    %2024 = vmatpush.bf16.msra.mxu0 0
    %2025 = vmatpush.bf16.msra.mxu0 %v1767
    %2026 = vmatpush.bf16.msra.mxu0 %v1764
    %2027 = vmatpush.bf16.msra.mxu0 %v1761
    %2028 = vmatpush.bf16.msra.mxu0 %v1758
    %2029 = vmatpush.bf16.msra.mxu0 %v1755
    %2030 = vmatpush.bf16.msra.mxu0 %v1752
    %2031 = vmatmul.bf16.gmra.mxu0 %v1811
    %v2032 = vpop.f32.mrf.mxu0
    %v2033 = vadd.f32 %v1994, %v2032
    %v2034 = vpop.f32.mrf.mxu0
    %v2035 = vadd.f32 %v1996, %v2034
    %2036 = vmatmul.bf16.gmra.mxu0 %v1814
    %v2037 = vpop.f32.mrf.mxu0
    %v2038 = vadd.f32 %v1999, %v2037
    %v2039 = vpop.f32.mrf.mxu0
    %v2040 = vadd.f32 %v2001, %v2039
    %2041 = vmatmul.bf16.gmra.mxu0 %v1817
    %v2042 = vpop.f32.mrf.mxu0
    %v2043 = vadd.f32 %v2004, %v2042
    %v2044 = vpop.f32.mrf.mxu0
    %v2045 = vadd.f32 %v2006, %v2044
    %2046 = vmatmul.bf16.gmra.mxu0 %v1820
    %v2047 = vpop.f32.mrf.mxu0
    %v2048 = vadd.f32 %v2009, %v2047
    %v2049 = vpop.f32.mrf.mxu0
    %v2050 = vadd.f32 %v2011, %v2049
    %2051 = vmatmul.bf16.gmra.mxu0 %v1823
    %v2052 = vpop.f32.mrf.mxu0
    %v2053 = vadd.f32 %v2014, %v2052
    %v2054 = vpop.f32.mrf.mxu0
    %v2055 = vadd.f32 %v2016, %v2054
    %2056 = vmatmul.bf16.gmra.mxu0 %v1826
    %v2057 = vpop.f32.mrf.mxu0
    %v2058 = vadd.f32 %v2019, %v2057
    %v2059 = vpop.f32.mrf.mxu0
    %v2060 = vadd.f32 %v2021, %v2059
    %2061 = vdwg.mxu0
    %s2062 = scalar_lea.vmem [#allocation4], 672
    %v2063 = vld [vmem:[%s2062] sm:$0xff]
    %v2064 = vld [vmem:[%s2062 + $0x8] sm:$0xf]
    %v2065 = vld [vmem:[%s2062 + $0xc] sm:$0xff]
    %v2066 = vld [vmem:[%s2062 + $0x14] sm:$0xf]
    %v2067 = vld [vmem:[%s2062 + $0x18] sm:$0xff]
    %v2068 = vld [vmem:[%s2062 + $0x20] sm:$0xf]
    %v2069 = vld [vmem:[%s2062 + $0x24] sm:$0xff]
    %v2070 = vld [vmem:[%s2062 + $0x2c] sm:$0xf]
    %v2071 = vld [vmem:[%s2062 + $0x30] sm:$0xff]
    %v2072 = vld [vmem:[%s2062 + $0x38] sm:$0xf]
    %v2073 = vld [vmem:[%s2062 + $0x3c] sm:$0xff]
    %v2074 = vld [vmem:[%s2062 + $0x44] sm:$0xf]
    %v2075 = vld [vmem:[%s2062 + $0x48] sm:$0xff]
    %v2076 = vld [vmem:[%s2062 + $0x50] sm:$0xf]
    %v2077 = vld [vmem:[%s2062 + $0x54] sm:$0xff]
    %v2078 = vld [vmem:[%s2062 + $0x5c] sm:$0xf]
    %v2079 = vld [vmem:[%s2062 + $0x60] sm:$0xff]
    %v2080 = vld [vmem:[%s2062 + $0x68] sm:$0xf]
    %v2081 = vld [vmem:[%s2062 + $0x6c] sm:$0xff]
    %v2082 = vld [vmem:[%s2062 + $0x74] sm:$0xf]
    %v2083 = vld [vmem:[%s2062 + $0x78] sm:$0xff]
    %v2084 = vld [vmem:[%s2062 + $0x80] sm:$0xf]
    %v2085 = vld [vmem:[%s2062 + $0x84] sm:$0xff]
    %v2086 = vld [vmem:[%s2062 + $0x8c] sm:$0xf]
    %v2087 = vld [vmem:[%s2062 + $0x90] sm:$0xff]
    %v2088 = vld [vmem:[%s2062 + $0x98] sm:$0xf]
    %v2089 = vld [vmem:[%s2062 + $0x9c] sm:$0xff]
    %v2090 = vld [vmem:[%s2062 + $0xa4] sm:$0xf]
    %v2091 = vld [vmem:[%s2062 + $0xa8] sm:$0xff]
    %v2092 = vld [vmem:[%s2062 + $0xb0] sm:$0xf]
    %v2093 = vld [vmem:[%s2062 + $0xb4] sm:$0xff]
    %v2094 = vld [vmem:[%s2062 + $0xbc] sm:$0xf]
    %v2095 = vld [vmem:[%s2062 + $0xc0] sm:$0xff]
    %v2096 = vld [vmem:[%s2062 + $0xc8] sm:$0xf]
    %v2097 = vld [vmem:[%s2062 + $0xcc] sm:$0xff]
    %v2098 = vld [vmem:[%s2062 + $0xd4] sm:$0xf]
    %v2099 = vld [vmem:[%s2062 + $0xd8] sm:$0xff]
    %v2100 = vld [vmem:[%s2062 + $0xe0] sm:$0xf]
    %v2101 = vld [vmem:[%s2062 + $0xe4] sm:$0xff]
    %v2102 = vld [vmem:[%s2062 + $0xec] sm:$0xf]
    %v2103 = vld [vmem:[%s2062 + $0xf0] sm:$0xff]
    %v2104 = vld [vmem:[%s2062 + $0xf8] sm:$0xf]
    %v2105 = vld [vmem:[%s2062 + $0xfc] sm:$0xff]
    %v2106 = vld [vmem:[%s2062 + $0x104] sm:$0xf]
    %v2107 = vld [vmem:[%s2062 + $0x108] sm:$0xff]
    %v2108 = vld [vmem:[%s2062 + $0x110] sm:$0xf]
    %v2109 = vld [vmem:[%s2062 + $0x114] sm:$0xff]
    %v2110 = vld [vmem:[%s2062 + $0x11c] sm:$0xf]
    %v2111 = vld [vmem:[%s2062 + $0x120] sm:$0xff]
    %v2112 = vld [vmem:[%s2062 + $0x128] sm:$0xf]
    %v2113 = vld [vmem:[%s2062 + $0x12c] sm:$0xff]
    %v2114 = vld [vmem:[%s2062 + $0x134] sm:$0xf]
    %v2115 = vld [vmem:[%s2062 + $0x138] sm:$0xff]
    %v2116 = vld [vmem:[%s2062 + $0x140] sm:$0xf]
    %v2117 = vld [vmem:[%s2062 + $0x144] sm:$0xff]
    %v2118 = vld [vmem:[%s2062 + $0x14c] sm:$0xf]
    %v2120 = vunpack.c.l.b16 %v920
    %v2121 = vunpack.c.h.b16 %v920
    %v2122 = vpack.c.b16 %v2120, %v1068
    %v2123 = vpack.c.b16 %v2121, %v1069
    %v2181 = vunpack.c.l.b16 %v2063
    %v2182 = vunpack.c.h.b16 %v2063
    %v2183 = vunpack.c.l.b16 %v2064
    %v2184 = vunpack.c.l.b16 %v2065
    %v2185 = vunpack.c.h.b16 %v2065
    %v2186 = vunpack.c.l.b16 %v2066
    %v2187 = vunpack.c.l.b16 %v2067
    %v2188 = vunpack.c.h.b16 %v2067
    %v2189 = vunpack.c.l.b16 %v2068
    %v2190 = vunpack.c.l.b16 %v2069
    %v2191 = vunpack.c.h.b16 %v2069
    %v2192 = vunpack.c.l.b16 %v2070
    %v2193 = vunpack.c.l.b16 %v2071
    %v2194 = vunpack.c.h.b16 %v2071
    %v2195 = vunpack.c.l.b16 %v2072
    %v2196 = vunpack.c.l.b16 %v2073
    %v2197 = vunpack.c.h.b16 %v2073
    %v2198 = vunpack.c.l.b16 %v2074
    %v2199 = vunpack.c.l.b16 %v2075
    %v2200 = vunpack.c.h.b16 %v2075
    %v2201 = vunpack.c.l.b16 %v2076
    %v2202 = vunpack.c.l.b16 %v2077
    %v2203 = vunpack.c.h.b16 %v2077
    %v2204 = vunpack.c.l.b16 %v2078
    %v2205 = vunpack.c.l.b16 %v2079
    %v2206 = vunpack.c.h.b16 %v2079
    %v2207 = vunpack.c.l.b16 %v2080
    %v2208 = vunpack.c.l.b16 %v2081
    %v2209 = vunpack.c.h.b16 %v2081
    %v2210 = vunpack.c.l.b16 %v2082
    %v2211 = vunpack.c.l.b16 %v2083
    %v2212 = vunpack.c.h.b16 %v2083
    %v2213 = vunpack.c.l.b16 %v2084
    %v2214 = vunpack.c.l.b16 %v2085
    %v2215 = vunpack.c.h.b16 %v2085
    %v2216 = vunpack.c.l.b16 %v2086
    %v2217 = vunpack.c.l.b16 %v2087
    %v2218 = vunpack.c.h.b16 %v2087
    %v2219 = vunpack.c.l.b16 %v2088
    %v2220 = vunpack.c.l.b16 %v2089
    %v2221 = vunpack.c.h.b16 %v2089
    %v2222 = vunpack.c.l.b16 %v2090
    %v2223 = vunpack.c.l.b16 %v2091
    %v2224 = vunpack.c.h.b16 %v2091
    %v2225 = vunpack.c.l.b16 %v2092
    %v2226 = vunpack.c.l.b16 %v2093
    %v2227 = vunpack.c.h.b16 %v2093
    %v2228 = vunpack.c.l.b16 %v2094
    %v2229 = vunpack.c.l.b16 %v2095
    %v2230 = vunpack.c.h.b16 %v2095
    %v2231 = vunpack.c.l.b16 %v2096
    %v2232 = vunpack.c.l.b16 %v2097
    %v2233 = vunpack.c.h.b16 %v2097
    %v2234 = vunpack.c.l.b16 %v2098
    %v2235 = vunpack.c.l.b16 %v2099
    %v2236 = vunpack.c.h.b16 %v2099
    %v2237 = vunpack.c.l.b16 %v2100
    %v2238 = vunpack.c.l.b16 %v2101
    %v2239 = vunpack.c.h.b16 %v2101
    %v2240 = vunpack.c.l.b16 %v2102
    %v2241 = vunpack.c.l.b16 %v2103
    %v2242 = vunpack.c.h.b16 %v2103
    %v2243 = vunpack.c.l.b16 %v2104
    %v2244 = vunpack.c.l.b16 %v2105
    %v2245 = vunpack.c.h.b16 %v2105
    %v2246 = vunpack.c.l.b16 %v2106
    %v2247 = vunpack.c.l.b16 %v2107
    %v2248 = vunpack.c.h.b16 %v2107
    %v2249 = vunpack.c.l.b16 %v2108
    %v2250 = vunpack.c.l.b16 %v2109
    %v2251 = vunpack.c.h.b16 %v2109
    %v2252 = vunpack.c.l.b16 %v2110
    %v2253 = vunpack.c.l.b16 %v2111
    %v2254 = vunpack.c.h.b16 %v2111
    %v2255 = vunpack.c.l.b16 %v2112
    %v2256 = vunpack.c.l.b16 %v2113
    %v2257 = vunpack.c.h.b16 %v2113
    %v2258 = vunpack.c.l.b16 %v2114
    %v2259 = vunpack.c.l.b16 %v2115
    %v2260 = vunpack.c.h.b16 %v2115
    %v2261 = vunpack.c.l.b16 %v2116
    %v2262 = vunpack.c.l.b16 %v2117
    %v2263 = vunpack.c.h.b16 %v2117
    %v2264 = vunpack.c.l.b16 %v2118
    %v2265 = vpack.c.b16 %v2184, %v2181
    %v2266 = vpack.c.b16 %v2185, %v2182
    %v2267 = vpack.c.b16 %v2186, %v2183
    %v2268 = vpack.c.b16 %v2190, %v2187
    %v2269 = vpack.c.b16 %v2191, %v2188
    %v2270 = vpack.c.b16 %v2192, %v2189
    %v2271 = vpack.c.b16 %v2196, %v2193
    %v2272 = vpack.c.b16 %v2197, %v2194
    %v2273 = vpack.c.b16 %v2198, %v2195
    %v2274 = vpack.c.b16 %v2202, %v2199
    %v2275 = vpack.c.b16 %v2203, %v2200
    %v2276 = vpack.c.b16 %v2204, %v2201
    %v2277 = vpack.c.b16 %v2208, %v2205
    %v2278 = vpack.c.b16 %v2209, %v2206
    %v2279 = vpack.c.b16 %v2210, %v2207
    %v2280 = vpack.c.b16 %v2214, %v2211
    %v2281 = vpack.c.b16 %v2215, %v2212
    %v2282 = vpack.c.b16 %v2216, %v2213
    %v2283 = vpack.c.b16 %v2220, %v2217
    %v2284 = vpack.c.b16 %v2221, %v2218
    %v2285 = vpack.c.b16 %v2222, %v2219
    %v2286 = vpack.c.b16 %v2226, %v2223
    %v2287 = vpack.c.b16 %v2227, %v2224
    %v2288 = vpack.c.b16 %v2228, %v2225
    %v2289 = vpack.c.b16 %v2232, %v2229
    %v2290 = vpack.c.b16 %v2233, %v2230
    %v2291 = vpack.c.b16 %v2234, %v2231
    %v2292 = vpack.c.b16 %v2238, %v2235
    %v2293 = vpack.c.b16 %v2239, %v2236
    %v2294 = vpack.c.b16 %v2240, %v2237
    %v2295 = vpack.c.b16 %v2244, %v2241
    %v2296 = vpack.c.b16 %v2245, %v2242
    %v2297 = vpack.c.b16 %v2246, %v2243
    %v2298 = vpack.c.b16 %v2250, %v2247
    %v2299 = vpack.c.b16 %v2251, %v2248
    %v2300 = vpack.c.b16 %v2252, %v2249
    %v2301 = vpack.c.b16 %v2256, %v2253
    %v2302 = vpack.c.b16 %v2257, %v2254
    %v2303 = vpack.c.b16 %v2258, %v2255
    %v2304 = vpack.c.b16 %v2262, %v2259
    %v2305 = vpack.c.b16 %v2263, %v2260
    %v2306 = vpack.c.b16 %v2264, %v2261
    %v2350 = vsel %vm1312, %v2123, 0
    %2352 = vmatpush.bf16.msra.mxu0 %v2286
    %2353 = vmatpush.bf16.msra.mxu0 %v2283
    %2354 = vmatpush.bf16.msra.mxu0 %v2280
    %2355 = vmatpush.bf16.msra.mxu0 %v2277
    %2356 = vmatpush.bf16.msra.mxu0 %v2274
    %2357 = vmatpush.bf16.msra.mxu0 %v2271
    %2358 = vmatpush.bf16.msra.mxu0 %v2268
    %2359 = vmatpush.bf16.msra.mxu0 %v2265
    %2360 = vmatmul.bf16.gmra.mxu0 %v1570
    %v2361 = vpop.f32.mrf.mxu0
    %v2362 = vadd.f32 0.0, %v2361
    %v2363 = vpop.f32.mrf.mxu0
    %v2364 = vadd.f32 0.0, %v2363
    %2365 = vmatmul.bf16.gmra.mxu0 %v1572
    %v2366 = vpop.f32.mrf.mxu0
    %v2367 = vadd.f32 0.0, %v2366
    %v2368 = vpop.f32.mrf.mxu0
    %v2369 = vadd.f32 0.0, %v2368
    %2370 = vmatmul.bf16.gmra.mxu0 %v1574
    %v2371 = vpop.f32.mrf.mxu0
    %v2372 = vadd.f32 0.0, %v2371
    %v2373 = vpop.f32.mrf.mxu0
    %v2374 = vadd.f32 0.0, %v2373
    %2375 = vmatmul.bf16.gmra.mxu0 %v1576
    %v2376 = vpop.f32.mrf.mxu0
    %v2377 = vadd.f32 0.0, %v2376
    %v2378 = vpop.f32.mrf.mxu0
    %v2379 = vadd.f32 0.0, %v2378
    %2380 = vmatmul.bf16.gmra.mxu0 %v1578
    %v2381 = vpop.f32.mrf.mxu0
    %v2382 = vadd.f32 0.0, %v2381
    %v2383 = vpop.f32.mrf.mxu0
    %v2384 = vadd.f32 0.0, %v2383
    %2385 = vmatmul.bf16.gmra.mxu0 %v2122
    %v2386 = vpop.f32.mrf.mxu0
    %v2387 = vadd.f32 0.0, %v2386
    %v2388 = vpop.f32.mrf.mxu0
    %v2389 = vadd.f32 0.0, %v2388
    %2390 = vdwg.mxu0
    %2391 = vmatpush.bf16.msra.mxu0 0
    %2392 = vmatpush.bf16.msra.mxu0 0
    %2393 = vmatpush.bf16.msra.mxu0 %v2304
    %2394 = vmatpush.bf16.msra.mxu0 %v2301
    %2395 = vmatpush.bf16.msra.mxu0 %v2298
    %2396 = vmatpush.bf16.msra.mxu0 %v2295
    %2397 = vmatpush.bf16.msra.mxu0 %v2292
    %2398 = vmatpush.bf16.msra.mxu0 %v2289
    %2399 = vmatmul.bf16.gmra.mxu0 %v1814
    %v2400 = vpop.f32.mrf.mxu0
    %v2401 = vadd.f32 %v2362, %v2400
    %v2402 = vpop.f32.mrf.mxu0
    %v2403 = vadd.f32 %v2364, %v2402
    %2404 = vmatmul.bf16.gmra.mxu0 %v1817
    %v2405 = vpop.f32.mrf.mxu0
    %v2406 = vadd.f32 %v2367, %v2405
    %v2407 = vpop.f32.mrf.mxu0
    %v2408 = vadd.f32 %v2369, %v2407
    %2409 = vmatmul.bf16.gmra.mxu0 %v1820
    %v2410 = vpop.f32.mrf.mxu0
    %v2411 = vadd.f32 %v2372, %v2410
    %v2412 = vpop.f32.mrf.mxu0
    %v2413 = vadd.f32 %v2374, %v2412
    %2414 = vmatmul.bf16.gmra.mxu0 %v1823
    %v2415 = vpop.f32.mrf.mxu0
    %v2416 = vadd.f32 %v2377, %v2415
    %v2417 = vpop.f32.mrf.mxu0
    %v2418 = vadd.f32 %v2379, %v2417
    %2419 = vmatmul.bf16.gmra.mxu0 %v1826
    %v2420 = vpop.f32.mrf.mxu0
    %v2421 = vadd.f32 %v2382, %v2420
    %v2422 = vpop.f32.mrf.mxu0
    %v2423 = vadd.f32 %v2384, %v2422
    %2424 = vmatmul.bf16.gmra.mxu0 %v2350
    %v2425 = vpop.f32.mrf.mxu0
    %v2426 = vadd.f32 %v2387, %v2425
    %v2427 = vpop.f32.mrf.mxu0
    %v2428 = vadd.f32 %v2389, %v2427
    %2429 = vdwg.mxu0
    %2430 = vmatpush.bf16.msra.mxu0 %v2287
    %2431 = vmatpush.bf16.msra.mxu0 %v2284
    %2432 = vmatpush.bf16.msra.mxu0 %v2281
    %2433 = vmatpush.bf16.msra.mxu0 %v2278
    %2434 = vmatpush.bf16.msra.mxu0 %v2275
    %2435 = vmatpush.bf16.msra.mxu0 %v2272
    %2436 = vmatpush.bf16.msra.mxu0 %v2269
    %2437 = vmatpush.bf16.msra.mxu0 %v2266
    %2438 = vmatmul.bf16.gmra.mxu0 %v1570
    %v2439 = vpop.f32.mrf.mxu0
    %v2440 = vadd.f32 0.0, %v2439
    %v2441 = vpop.f32.mrf.mxu0
    %v2442 = vadd.f32 0.0, %v2441
    %2443 = vmatmul.bf16.gmra.mxu0 %v1572
    %v2444 = vpop.f32.mrf.mxu0
    %v2445 = vadd.f32 0.0, %v2444
    %v2446 = vpop.f32.mrf.mxu0
    %v2447 = vadd.f32 0.0, %v2446
    %2448 = vmatmul.bf16.gmra.mxu0 %v1574
    %v2449 = vpop.f32.mrf.mxu0
    %v2450 = vadd.f32 0.0, %v2449
    %v2451 = vpop.f32.mrf.mxu0
    %v2452 = vadd.f32 0.0, %v2451
    %2453 = vmatmul.bf16.gmra.mxu0 %v1576
    %v2454 = vpop.f32.mrf.mxu0
    %v2455 = vadd.f32 0.0, %v2454
    %v2456 = vpop.f32.mrf.mxu0
    %v2457 = vadd.f32 0.0, %v2456
    %2458 = vmatmul.bf16.gmra.mxu0 %v1578
    %v2459 = vpop.f32.mrf.mxu0
    %v2460 = vadd.f32 0.0, %v2459
    %v2461 = vpop.f32.mrf.mxu0
    %v2462 = vadd.f32 0.0, %v2461
    %2463 = vmatmul.bf16.gmra.mxu0 %v2122
    %v2464 = vpop.f32.mrf.mxu0
    %v2465 = vadd.f32 0.0, %v2464
    %v2466 = vpop.f32.mrf.mxu0
    %v2467 = vadd.f32 0.0, %v2466
    %2468 = vdwg.mxu0
    %2469 = vmatpush.bf16.msra.mxu0 0
    %2470 = vmatpush.bf16.msra.mxu0 0
    %2471 = vmatpush.bf16.msra.mxu0 %v2305
    %2472 = vmatpush.bf16.msra.mxu0 %v2302
    %2473 = vmatpush.bf16.msra.mxu0 %v2299
    %2474 = vmatpush.bf16.msra.mxu0 %v2296
    %2475 = vmatpush.bf16.msra.mxu0 %v2293
    %2476 = vmatpush.bf16.msra.mxu0 %v2290
    %2477 = vmatmul.bf16.gmra.mxu0 %v1814
    %v2478 = vpop.f32.mrf.mxu0
    %v2479 = vadd.f32 %v2440, %v2478
    %v2480 = vpop.f32.mrf.mxu0
    %v2481 = vadd.f32 %v2442, %v2480
    %2482 = vmatmul.bf16.gmra.mxu0 %v1817
    %v2483 = vpop.f32.mrf.mxu0
    %v2484 = vadd.f32 %v2445, %v2483
    %v2485 = vpop.f32.mrf.mxu0
    %v2486 = vadd.f32 %v2447, %v2485
    %2487 = vmatmul.bf16.gmra.mxu0 %v1820
    %v2488 = vpop.f32.mrf.mxu0
    %v2489 = vadd.f32 %v2450, %v2488
    %v2490 = vpop.f32.mrf.mxu0
    %v2491 = vadd.f32 %v2452, %v2490
    %2492 = vmatmul.bf16.gmra.mxu0 %v1823
    %v2493 = vpop.f32.mrf.mxu0
    %v2494 = vadd.f32 %v2455, %v2493
    %v2495 = vpop.f32.mrf.mxu0
    %v2496 = vadd.f32 %v2457, %v2495
    %2497 = vmatmul.bf16.gmra.mxu0 %v1826
    %v2498 = vpop.f32.mrf.mxu0
    %v2499 = vadd.f32 %v2460, %v2498
    %v2500 = vpop.f32.mrf.mxu0
    %v2501 = vadd.f32 %v2462, %v2500
    %2502 = vmatmul.bf16.gmra.mxu0 %v2350
    %v2503 = vpop.f32.mrf.mxu0
    %v2504 = vadd.f32 %v2465, %v2503
    %v2505 = vpop.f32.mrf.mxu0
    %v2506 = vadd.f32 %v2467, %v2505
    %2507 = vdwg.mxu0
    %2508 = vmatpush.bf16.msra.mxu0 %v2288
    %2509 = vmatpush.bf16.msra.mxu0 %v2285
    %2510 = vmatpush.bf16.msra.mxu0 %v2282
    %2511 = vmatpush.bf16.msra.mxu0 %v2279
    %2512 = vmatpush.bf16.msra.mxu0 %v2276
    %2513 = vmatpush.bf16.msra.mxu0 %v2273
    %2514 = vmatpush.bf16.msra.mxu0 %v2270
    %2515 = vmatpush.bf16.msra.mxu0 %v2267
    %2516 = vmatmul.bf16.gmra.mxu0 %v1570
    %v2517 = vpop.f32.mrf.mxu0
    %v2518 = vadd.f32 0.0, %v2517
    %v2519 = vpop.f32.mrf.mxu0
    %v2520 = vadd.f32 0.0, %v2519
    %2521 = vmatmul.bf16.gmra.mxu0 %v1572
    %v2522 = vpop.f32.mrf.mxu0
    %v2523 = vadd.f32 0.0, %v2522
    %v2524 = vpop.f32.mrf.mxu0
    %v2525 = vadd.f32 0.0, %v2524
    %2526 = vmatmul.bf16.gmra.mxu0 %v1574
    %v2527 = vpop.f32.mrf.mxu0
    %v2528 = vadd.f32 0.0, %v2527
    %v2529 = vpop.f32.mrf.mxu0
    %v2530 = vadd.f32 0.0, %v2529
    %2531 = vmatmul.bf16.gmra.mxu0 %v1576
    %v2532 = vpop.f32.mrf.mxu0
    %v2533 = vadd.f32 0.0, %v2532
    %v2534 = vpop.f32.mrf.mxu0
    %v2535 = vadd.f32 0.0, %v2534
    %2536 = vmatmul.bf16.gmra.mxu0 %v1578
    %v2537 = vpop.f32.mrf.mxu0
    %v2538 = vadd.f32 0.0, %v2537
    %v2539 = vpop.f32.mrf.mxu0
    %v2540 = vadd.f32 0.0, %v2539
    %2541 = vmatmul.bf16.gmra.mxu0 %v2122
    %v2542 = vpop.f32.mrf.mxu0
    %v2543 = vadd.f32 0.0, %v2542
    %v2544 = vpop.f32.mrf.mxu0
    %v2545 = vadd.f32 0.0, %v2544
    %2546 = vdwg.mxu0
    %2547 = vmatpush.bf16.msra.mxu0 0
    %2548 = vmatpush.bf16.msra.mxu0 0
    %2549 = vmatpush.bf16.msra.mxu0 %v2306
    %2550 = vmatpush.bf16.msra.mxu0 %v2303
    %2551 = vmatpush.bf16.msra.mxu0 %v2300
    %2552 = vmatpush.bf16.msra.mxu0 %v2297
    %2553 = vmatpush.bf16.msra.mxu0 %v2294
    %2554 = vmatpush.bf16.msra.mxu0 %v2291
    %2555 = vmatmul.bf16.gmra.mxu0 %v1814
    %v2556 = vpop.f32.mrf.mxu0
    %v2557 = vadd.f32 %v2518, %v2556
    %v2558 = vpop.f32.mrf.mxu0
    %v2559 = vadd.f32 %v2520, %v2558
    %2560 = vmatmul.bf16.gmra.mxu0 %v1817
    %v2561 = vpop.f32.mrf.mxu0
    %v2562 = vadd.f32 %v2523, %v2561
    %v2563 = vpop.f32.mrf.mxu0
    %v2564 = vadd.f32 %v2525, %v2563
    %2565 = vmatmul.bf16.gmra.mxu0 %v1820
    %v2566 = vpop.f32.mrf.mxu0
    %v2567 = vadd.f32 %v2528, %v2566
    %v2568 = vpop.f32.mrf.mxu0
    %v2569 = vadd.f32 %v2530, %v2568
    %2570 = vmatmul.bf16.gmra.mxu0 %v1823
    %v2571 = vpop.f32.mrf.mxu0
    %v2572 = vadd.f32 %v2533, %v2571
    %v2573 = vpop.f32.mrf.mxu0
    %v2574 = vadd.f32 %v2535, %v2573
    %2575 = vmatmul.bf16.gmra.mxu0 %v1826
    %v2576 = vpop.f32.mrf.mxu0
    %v2577 = vadd.f32 %v2538, %v2576
    %v2578 = vpop.f32.mrf.mxu0
    %v2579 = vadd.f32 %v2540, %v2578
    %2580 = vmatmul.bf16.gmra.mxu0 %v2350
    %v2581 = vpop.f32.mrf.mxu0
    %v2582 = vadd.f32 %v2543, %v2581
    %v2583 = vpop.f32.mrf.mxu0
    %v2584 = vadd.f32 %v2545, %v2583
    %2585 = vdwg.mxu0
    %v2586 = vadd.f32 %v1877, %v2401
    %v2587 = vadd.f32 %v1955, %v2479
    %v2588 = vadd.f32 %v2033, %v2557
    %v2589 = vadd.f32 %v1879, %v2403
    %v2590 = vadd.f32 %v1957, %v2481
    %v2591 = vadd.f32 %v2035, %v2559
    %v2592 = vadd.f32 %v1882, %v2406
    %v2593 = vadd.f32 %v1960, %v2484
    %v2594 = vadd.f32 %v2038, %v2562
    %v2595 = vadd.f32 %v1884, %v2408
    %v2596 = vadd.f32 %v1962, %v2486
    %v2597 = vadd.f32 %v2040, %v2564
    %v2598 = vadd.f32 %v1887, %v2411
    %v2599 = vadd.f32 %v1965, %v2489
    %v2600 = vadd.f32 %v2043, %v2567
    %v2601 = vadd.f32 %v1889, %v2413
    %v2602 = vadd.f32 %v1967, %v2491
    %v2603 = vadd.f32 %v2045, %v2569
    %v2604 = vadd.f32 %v1892, %v2416
    %v2605 = vadd.f32 %v1970, %v2494
    %v2606 = vadd.f32 %v2048, %v2572
    %v2607 = vadd.f32 %v1894, %v2418
    %v2608 = vadd.f32 %v1972, %v2496
    %v2609 = vadd.f32 %v2050, %v2574
    %v2610 = vadd.f32 %v1897, %v2421
    %v2611 = vadd.f32 %v1975, %v2499
    %v2612 = vadd.f32 %v2053, %v2577
    %v2613 = vadd.f32 %v1899, %v2423
    %v2614 = vadd.f32 %v1977, %v2501
    %v2615 = vadd.f32 %v2055, %v2579
    %v2616 = vadd.f32 %v1902, %v2426
    %v2617 = vadd.f32 %v1980, %v2504
    %v2618 = vadd.f32 %v2058, %v2582
    %v2619 = vadd.f32 %v1904, %v2428
    %v2620 = vadd.f32 %v1982, %v2506
    %v2621 = vadd.f32 %v2060, %v2584
    %v2622 = vld [vmem:[#allocation6] sm:$0x7]
    %v2624 = vperm.slane %v2622, 0
    %v2625 = vperm.slane %v2622, 1
    %v2626 = vperm.slane %v2622, 2
    %v2630 = vadd.f32 %v2586, %v2624
    %v2631 = vadd.f32 %v2587, %v2625
    %v2632 = vadd.f32 %v2588, %v2626
    %v2633 = vadd.f32 %v2589, %v2624
    %v2634 = vadd.f32 %v2590, %v2625
    %v2635 = vadd.f32 %v2591, %v2626
    %v2636 = vadd.f32 %v2592, %v2624
    %v2637 = vadd.f32 %v2593, %v2625
    %v2638 = vadd.f32 %v2594, %v2626
    %v2639 = vadd.f32 %v2595, %v2624
    %v2640 = vadd.f32 %v2596, %v2625
    %v2641 = vadd.f32 %v2597, %v2626
    %v2642 = vadd.f32 %v2598, %v2624
    %v2643 = vadd.f32 %v2599, %v2625
    %v2644 = vadd.f32 %v2600, %v2626
    %v2645 = vadd.f32 %v2601, %v2624
    %v2646 = vadd.f32 %v2602, %v2625
    %v2647 = vadd.f32 %v2603, %v2626
    %v2648 = vadd.f32 %v2604, %v2624
    %v2649 = vadd.f32 %v2605, %v2625
    %v2650 = vadd.f32 %v2606, %v2626
    %v2651 = vadd.f32 %v2607, %v2624
    %v2652 = vadd.f32 %v2608, %v2625
    %v2653 = vadd.f32 %v2609, %v2626
    %v2654 = vadd.f32 %v2610, %v2624
    %v2655 = vadd.f32 %v2611, %v2625
    %v2656 = vadd.f32 %v2612, %v2626
    %v2657 = vadd.f32 %v2613, %v2624
    %v2658 = vadd.f32 %v2614, %v2625
    %v2659 = vadd.f32 %v2615, %v2626
    %v2660 = vadd.f32 %v2616, %v2624
    %v2661 = vadd.f32 %v2617, %v2625
    %v2662 = vadd.f32 %v2618, %v2626
    %v2663 = vadd.f32 %v2619, %v2624
    %v2664 = vadd.f32 %v2620, %v2625
    %v2665 = vadd.f32 %v2621, %v2626
    %v2666 = vmax.f32 %v2630, 0.0
    %v2667 = vmax.f32 %v2631, 0.0
    %v2668 = vmax.f32 %v2632, 0.0
    %v2669 = vmax.f32 %v2633, 0.0
    %v2670 = vmax.f32 %v2634, 0.0
    %v2671 = vmax.f32 %v2635, 0.0
    %v2672 = vmax.f32 %v2636, 0.0
    %v2673 = vmax.f32 %v2637, 0.0
    %v2674 = vmax.f32 %v2638, 0.0
    %v2675 = vmax.f32 %v2639, 0.0
    %v2676 = vmax.f32 %v2640, 0.0
    %v2677 = vmax.f32 %v2641, 0.0
    %v2678 = vmax.f32 %v2642, 0.0
    %v2679 = vmax.f32 %v2643, 0.0
    %v2680 = vmax.f32 %v2644, 0.0
    %v2681 = vmax.f32 %v2645, 0.0
    %v2682 = vmax.f32 %v2646, 0.0
    %v2683 = vmax.f32 %v2647, 0.0
    %v2684 = vmax.f32 %v2648, 0.0
    %v2685 = vmax.f32 %v2649, 0.0
    %v2686 = vmax.f32 %v2650, 0.0
    %v2687 = vmax.f32 %v2651, 0.0
    %v2688 = vmax.f32 %v2652, 0.0
    %v2689 = vmax.f32 %v2653, 0.0
    %v2690 = vmax.f32 %v2654, 0.0
    %v2691 = vmax.f32 %v2655, 0.0
    %v2692 = vmax.f32 %v2656, 0.0
    %v2693 = vmax.f32 %v2657, 0.0
    %v2694 = vmax.f32 %v2658, 0.0
    %v2695 = vmax.f32 %v2659, 0.0
    %v2696 = vmax.f32 %v2660, 0.0
    %v2697 = vmax.f32 %v2661, 0.0
    %v2698 = vmax.f32 %v2662, 0.0
    %v2699 = vmax.f32 %v2663, 0.0
    %v2700 = vmax.f32 %v2664, 0.0
    %v2701 = vmax.f32 %v2665, 0.0
    %v2702 = vpack.c.bf16 %v2667, %v2666
    %v2703 = vpack.c.bf16 %v2668, %v2668
    %v2704 = vpack.c.bf16 %v2670, %v2669
    %v2705 = vpack.c.bf16 %v2671, %v2671
    %v2706 = vpack.c.bf16 %v2673, %v2672
    %v2707 = vpack.c.bf16 %v2674, %v2674
    %v2708 = vpack.c.bf16 %v2676, %v2675
    %v2709 = vpack.c.bf16 %v2677, %v2677
    %v2710 = vpack.c.bf16 %v2679, %v2678
    %v2711 = vpack.c.bf16 %v2680, %v2680
    %v2712 = vpack.c.bf16 %v2682, %v2681
    %v2713 = vpack.c.bf16 %v2683, %v2683
    %v2714 = vpack.c.bf16 %v2685, %v2684
    %v2715 = vpack.c.bf16 %v2686, %v2686
    %v2716 = vpack.c.bf16 %v2688, %v2687
    %v2717 = vpack.c.bf16 %v2689, %v2689
    %v2718 = vpack.c.bf16 %v2691, %v2690
    %v2719 = vpack.c.bf16 %v2692, %v2692
    %v2720 = vpack.c.bf16 %v2694, %v2693
    %v2721 = vpack.c.bf16 %v2695, %v2695
    %v2722 = vpack.c.bf16 %v2697, %v2696
    %v2723 = vpack.c.bf16 %v2698, %v2698
    %v2724 = vpack.c.bf16 %v2700, %v2699
    %v2725 = vpack.c.bf16 %v2701, %v2701
    %v2726 = vld [vmem:[#allocation7] sm:$0xff]
    %v2727 = vld [vmem:[#allocation7 + $0x8] sm:$0xff]
    %v2728 = vld [vmem:[#allocation7 + $0x10] sm:$0xf]
    %v2729 = vld [vmem:[#allocation7 + $0x14] sm:$0xff]
    %v2730 = vld [vmem:[#allocation7 + $0x1c] sm:$0xff]
    %v2731 = vld [vmem:[#allocation7 + $0x24] sm:$0xf]
    %v2732 = vld [vmem:[#allocation7 + $0x28] sm:$0xff]
    %v2733 = vld [vmem:[#allocation7 + $0x30] sm:$0xff]
    %v2734 = vld [vmem:[#allocation7 + $0x38] sm:$0xf]
    %v2735 = vld [vmem:[#allocation7 + $0x3c] sm:$0xff]
    %v2736 = vld [vmem:[#allocation7 + $0x44] sm:$0xff]
    %v2737 = vld [vmem:[#allocation7 + $0x4c] sm:$0xf]
    %v2738 = vld [vmem:[#allocation7 + $0x50] sm:$0xff]
    %v2739 = vld [vmem:[#allocation7 + $0x58] sm:$0xff]
    %v2740 = vld [vmem:[#allocation7 + $0x60] sm:$0xf]
    %v2741 = vld [vmem:[#allocation7 + $0x64] sm:$0xff]
    %v2742 = vld [vmem:[#allocation7 + $0x6c] sm:$0xff]
    %v2743 = vld [vmem:[#allocation7 + $0x74] sm:$0xf]
    %v2744 = vld [vmem:[#allocation7 + $0x78] sm:$0xff]
    %v2745 = vld [vmem:[#allocation7 + $0x80] sm:$0xff]
    %v2746 = vld [vmem:[#allocation7 + $0x88] sm:$0xf]
    %v2747 = vld [vmem:[#allocation7 + $0x8c] sm:$0xff]
    %v2748 = vld [vmem:[#allocation7 + $0x94] sm:$0xff]
    %v2749 = vld [vmem:[#allocation7 + $0x9c] sm:$0xf]
    %v2750 = vld [vmem:[#allocation7 + $0xa0] sm:$0xff]
    %v2751 = vld [vmem:[#allocation7 + $0xa8] sm:$0xff]
    %v2752 = vld [vmem:[#allocation7 + $0xb0] sm:$0xf]
    %v2753 = vld [vmem:[#allocation7 + $0xb4] sm:$0xff]
    %v2754 = vld [vmem:[#allocation7 + $0xbc] sm:$0xff]
    %v2755 = vld [vmem:[#allocation7 + $0xc4] sm:$0xf]
    %v2756 = vld [vmem:[#allocation7 + $0xc8] sm:$0xff]
    %v2757 = vld [vmem:[#allocation7 + $0xd0] sm:$0xff]
    %v2758 = vld [vmem:[#allocation7 + $0xd8] sm:$0xf]
    %v2759 = vld [vmem:[#allocation7 + $0xdc] sm:$0xff]
    %v2760 = vld [vmem:[#allocation7 + $0xe4] sm:$0xff]
    %v2761 = vld [vmem:[#allocation7 + $0xec] sm:$0xf]
    %v2762 = vld [vmem:[#allocation7 + $0xf0] sm:$0xff]
    %v2763 = vld [vmem:[#allocation7 + $0xf8] sm:$0xff]
    %v2764 = vld [vmem:[#allocation7 + $0x100] sm:$0xf]
    %v2765 = vld [vmem:[#allocation7 + $0x104] sm:$0xff]
    %v2766 = vld [vmem:[#allocation7 + $0x10c] sm:$0xff]
    %v2767 = vld [vmem:[#allocation7 + $0x114] sm:$0xf]
    %v2768 = vld [vmem:[#allocation7 + $0x118] sm:$0xff]
    %v2769 = vld [vmem:[#allocation7 + $0x120] sm:$0xff]
    %v2770 = vld [vmem:[#allocation7 + $0x128] sm:$0xf]
    %v2771 = vld [vmem:[#allocation7 + $0x12c] sm:$0xff]
    %v2772 = vld [vmem:[#allocation7 + $0x134] sm:$0xff]
    %v2773 = vld [vmem:[#allocation7 + $0x13c] sm:$0xf]
    %v2774 = vld [vmem:[#allocation7 + $0x140] sm:$0xff]
    %v2775 = vld [vmem:[#allocation7 + $0x148] sm:$0xff]
    %v2776 = vld [vmem:[#allocation7 + $0x150] sm:$0xf]
    %v2777 = vld [vmem:[#allocation7 + $0x154] sm:$0xff]
    %v2778 = vld [vmem:[#allocation7 + $0x15c] sm:$0xff]
    %v2779 = vld [vmem:[#allocation7 + $0x164] sm:$0xf]
    %v2780 = vld [vmem:[#allocation7 + $0x168] sm:$0xff]
    %v2781 = vld [vmem:[#allocation7 + $0x170] sm:$0xff]
    %v2782 = vld [vmem:[#allocation7 + $0x178] sm:$0xf]
    %v2783 = vld [vmem:[#allocation7 + $0x17c] sm:$0xff]
    %v2784 = vld [vmem:[#allocation7 + $0x184] sm:$0xff]
    %v2785 = vld [vmem:[#allocation7 + $0x18c] sm:$0xf]
    %v2786 = vld [vmem:[#allocation7 + $0x190] sm:$0xff]
    %v2787 = vld [vmem:[#allocation7 + $0x198] sm:$0xff]
    %v2788 = vld [vmem:[#allocation7 + $0x1a0] sm:$0xf]
    %v2789 = vld [vmem:[#allocation7 + $0x1a4] sm:$0xff]
    %v2790 = vld [vmem:[#allocation7 + $0x1ac] sm:$0xff]
    %v2791 = vld [vmem:[#allocation7 + $0x1b4] sm:$0xf]
    %v2792 = vld [vmem:[#allocation7 + $0x1b8] sm:$0xff]
    %v2793 = vld [vmem:[#allocation7 + $0x1c0] sm:$0xff]
    %v2794 = vld [vmem:[#allocation7 + $0x1c8] sm:$0xf]
    %v2795 = vld [vmem:[#allocation7 + $0x1cc] sm:$0xff]
    %v2796 = vld [vmem:[#allocation7 + $0x1d4] sm:$0xff]
    %v2797 = vld [vmem:[#allocation7 + $0x1dc] sm:$0xf]
    %v2798 = vld [vmem:[#allocation7 + $0x1e0] sm:$0xff]
    %v2799 = vld [vmem:[#allocation7 + $0x1e8] sm:$0xff]
    %v2800 = vld [vmem:[#allocation7 + $0x1f0] sm:$0xf]
    %v2801 = vld [vmem:[#allocation7 + $0x1f4] sm:$0xff]
    %v2802 = vld [vmem:[#allocation7 + $0x1fc] sm:$0xff]
    %v2803 = vld [vmem:[#allocation7 + $0x204] sm:$0xf]
    %v2804 = vld [vmem:[#allocation7 + $0x208] sm:$0xff]
    %v2805 = vld [vmem:[#allocation7 + $0x210] sm:$0xff]
    %v2806 = vld [vmem:[#allocation7 + $0x218] sm:$0xf]
    %v2807 = vld [vmem:[#allocation7 + $0x21c] sm:$0xff]
    %v2808 = vld [vmem:[#allocation7 + $0x224] sm:$0xff]
    %v2809 = vld [vmem:[#allocation7 + $0x22c] sm:$0xf]
    %v2810 = vld [vmem:[#allocation7 + $0x230] sm:$0xff]
    %v2811 = vld [vmem:[#allocation7 + $0x238] sm:$0xff]
    %v2812 = vld [vmem:[#allocation7 + $0x240] sm:$0xf]
    %v2813 = vld [vmem:[#allocation7 + $0x244] sm:$0xff]
    %v2814 = vld [vmem:[#allocation7 + $0x24c] sm:$0xff]
    %v2815 = vld [vmem:[#allocation7 + $0x254] sm:$0xf]
    %v2816 = vld [vmem:[#allocation7 + $0x258] sm:$0xff]
    %v2817 = vld [vmem:[#allocation7 + $0x260] sm:$0xff]
    %v2818 = vld [vmem:[#allocation7 + $0x268] sm:$0xf]
    %v2819 = vld [vmem:[#allocation7 + $0x26c] sm:$0xff]
    %v2820 = vld [vmem:[#allocation7 + $0x274] sm:$0xff]
    %v2821 = vld [vmem:[#allocation7 + $0x27c] sm:$0xf]
    %v2822 = vld [vmem:[#allocation7 + $0x280] sm:$0xff]
    %v2823 = vld [vmem:[#allocation7 + $0x288] sm:$0xff]
    %v2824 = vld [vmem:[#allocation7 + $0x290] sm:$0xf]
    %v2825 = vld [vmem:[#allocation7 + $0x294] sm:$0xff]
    %v2826 = vld [vmem:[#allocation7 + $0x29c] sm:$0xff]
    %v2827 = vld [vmem:[#allocation7 + $0x2a4] sm:$0xf]
    %v2828 = vld [vmem:[#allocation7 + $0x2a8] sm:$0xff]
    %v2829 = vld [vmem:[#allocation7 + $0x2b0] sm:$0xff]
    %v2830 = vld [vmem:[#allocation7 + $0x2b8] sm:$0xf]
    %v2831 = vld [vmem:[#allocation7 + $0x2bc] sm:$0xff]
    %v2832 = vld [vmem:[#allocation7 + $0x2c4] sm:$0xff]
    %v2833 = vld [vmem:[#allocation7 + $0x2cc] sm:$0xf]
    %v2834 = vld [vmem:[#allocation7 + $0x2d0] sm:$0xff]
    %v2835 = vld [vmem:[#allocation7 + $0x2d8] sm:$0xff]
    %v2836 = vld [vmem:[#allocation7 + $0x2e0] sm:$0xf]
    %v2837 = vld [vmem:[#allocation7 + $0x2e4] sm:$0xff]
    %v2838 = vld [vmem:[#allocation7 + $0x2ec] sm:$0xff]
    %v2839 = vld [vmem:[#allocation7 + $0x2f4] sm:$0xf]
    %v2840 = vld [vmem:[#allocation7 + $0x2f8] sm:$0xff]
    %v2841 = vld [vmem:[#allocation7 + $0x300] sm:$0xff]
    %v2842 = vld [vmem:[#allocation7 + $0x308] sm:$0xf]
    %v2843 = vld [vmem:[#allocation7 + $0x30c] sm:$0xff]
    %v2844 = vld [vmem:[#allocation7 + $0x314] sm:$0xff]
    %v2845 = vld [vmem:[#allocation7 + $0x31c] sm:$0xf]
    %v2846 = vld [vmem:[#allocation7 + $0x320] sm:$0xff]
    %v2847 = vld [vmem:[#allocation7 + $0x328] sm:$0xff]
    %v2848 = vld [vmem:[#allocation7 + $0x330] sm:$0xf]
    %v2849 = vld [vmem:[#allocation7 + $0x334] sm:$0xff]
    %v2850 = vld [vmem:[#allocation7 + $0x33c] sm:$0xff]
    %v2851 = vld [vmem:[#allocation7 + $0x344] sm:$0xf]
    %v2852 = vld [vmem:[#allocation7 + $0x348] sm:$0xff]
    %v2853 = vld [vmem:[#allocation7 + $0x350] sm:$0xff]
    %v2854 = vld [vmem:[#allocation7 + $0x358] sm:$0xf]
    %v2855 = vld [vmem:[#allocation7 + $0x35c] sm:$0xff]
    %v2856 = vld [vmem:[#allocation7 + $0x364] sm:$0xff]
    %v2857 = vld [vmem:[#allocation7 + $0x36c] sm:$0xf]
    %v2858 = vld [vmem:[#allocation7 + $0x370] sm:$0xff]
    %v2859 = vld [vmem:[#allocation7 + $0x378] sm:$0xff]
    %v2860 = vld [vmem:[#allocation7 + $0x380] sm:$0xf]
    %v2861 = vld [vmem:[#allocation7 + $0x384] sm:$0xff]
    %v2862 = vld [vmem:[#allocation7 + $0x38c] sm:$0xff]
    %v2863 = vld [vmem:[#allocation7 + $0x394] sm:$0xf]
    %v2864 = vld [vmem:[#allocation7 + $0x398] sm:$0xff]
    %v2865 = vld [vmem:[#allocation7 + $0x3a0] sm:$0xff]
    %v2866 = vld [vmem:[#allocation7 + $0x3a8] sm:$0xf]
    %v2867 = vld [vmem:[#allocation7 + $0x3ac] sm:$0xff]
    %v2868 = vld [vmem:[#allocation7 + $0x3b4] sm:$0xff]
    %v2869 = vld [vmem:[#allocation7 + $0x3bc] sm:$0xf]
    %s2870 = scalar_lea.vmem [#allocation7], 960
    %v2871 = vld [vmem:[%s2870] sm:$0xff]
    %v2872 = vld [vmem:[%s2870 + $0x8] sm:$0xff]
    %v2873 = vld [vmem:[%s2870 + $0x10] sm:$0xf]
    %v2874 = vld [vmem:[%s2870 + $0x14] sm:$0xff]
    %v2875 = vld [vmem:[%s2870 + $0x1c] sm:$0xff]
    %v2876 = vld [vmem:[%s2870 + $0x24] sm:$0xf]
    %v2877 = vld [vmem:[%s2870 + $0x28] sm:$0xff]
    %v2878 = vld [vmem:[%s2870 + $0x30] sm:$0xff]
    %v2879 = vld [vmem:[%s2870 + $0x38] sm:$0xf]
    %v2880 = vld [vmem:[%s2870 + $0x3c] sm:$0xff]
    %v2881 = vld [vmem:[%s2870 + $0x44] sm:$0xff]
    %v2882 = vld [vmem:[%s2870 + $0x4c] sm:$0xf]
    %v2883 = vld [vmem:[%s2870 + $0x50] sm:$0xff]
    %v2884 = vld [vmem:[%s2870 + $0x58] sm:$0xff]
    %v2885 = vld [vmem:[%s2870 + $0x60] sm:$0xf]
    %v2886 = vld [vmem:[%s2870 + $0x64] sm:$0xff]
    %v2887 = vld [vmem:[%s2870 + $0x6c] sm:$0xff]
    %v2888 = vld [vmem:[%s2870 + $0x74] sm:$0xf]
    %v2889 = vld [vmem:[%s2870 + $0x78] sm:$0xff]
    %v2890 = vld [vmem:[%s2870 + $0x80] sm:$0xff]
    %v2891 = vld [vmem:[%s2870 + $0x88] sm:$0xf]
    %v2892 = vld [vmem:[%s2870 + $0x8c] sm:$0xff]
    %v2893 = vld [vmem:[%s2870 + $0x94] sm:$0xff]
    %v2894 = vld [vmem:[%s2870 + $0x9c] sm:$0xf]
    %v2895 = vld [vmem:[%s2870 + $0xa0] sm:$0xff]
    %v2896 = vld [vmem:[%s2870 + $0xa8] sm:$0xff]
    %v2897 = vld [vmem:[%s2870 + $0xb0] sm:$0xf]
    %v2898 = vld [vmem:[%s2870 + $0xb4] sm:$0xff]
    %v2899 = vld [vmem:[%s2870 + $0xbc] sm:$0xff]
    %v2900 = vld [vmem:[%s2870 + $0xc4] sm:$0xf]
    %v2901 = vld [vmem:[%s2870 + $0xc8] sm:$0xff]
    %v2902 = vld [vmem:[%s2870 + $0xd0] sm:$0xff]
    %v2903 = vld [vmem:[%s2870 + $0xd8] sm:$0xf]
    %v2904 = vld [vmem:[%s2870 + $0xdc] sm:$0xff]
    %v2905 = vld [vmem:[%s2870 + $0xe4] sm:$0xff]
    %v2906 = vld [vmem:[%s2870 + $0xec] sm:$0xf]
    %v2907 = vld [vmem:[%s2870 + $0xf0] sm:$0xff]
    %v2908 = vld [vmem:[%s2870 + $0xf8] sm:$0xff]
    %v2909 = vld [vmem:[%s2870 + $0x100] sm:$0xf]
    %v2910 = vld [vmem:[%s2870 + $0x104] sm:$0xff]
    %v2911 = vld [vmem:[%s2870 + $0x10c] sm:$0xff]
    %v2912 = vld [vmem:[%s2870 + $0x114] sm:$0xf]
    %v2913 = vld [vmem:[%s2870 + $0x118] sm:$0xff]
    %v2914 = vld [vmem:[%s2870 + $0x120] sm:$0xff]
    %v2915 = vld [vmem:[%s2870 + $0x128] sm:$0xf]
    %v2916 = vld [vmem:[%s2870 + $0x12c] sm:$0xff]
    %v2917 = vld [vmem:[%s2870 + $0x134] sm:$0xff]
    %v2918 = vld [vmem:[%s2870 + $0x13c] sm:$0xf]
    %v2919 = vld [vmem:[%s2870 + $0x140] sm:$0xff]
    %v2920 = vld [vmem:[%s2870 + $0x148] sm:$0xff]
    %v2921 = vld [vmem:[%s2870 + $0x150] sm:$0xf]
    %v2922 = vld [vmem:[%s2870 + $0x154] sm:$0xff]
    %v2923 = vld [vmem:[%s2870 + $0x15c] sm:$0xff]
    %v2924 = vld [vmem:[%s2870 + $0x164] sm:$0xf]
    %v2925 = vld [vmem:[%s2870 + $0x168] sm:$0xff]
    %v2926 = vld [vmem:[%s2870 + $0x170] sm:$0xff]
    %v2927 = vld [vmem:[%s2870 + $0x178] sm:$0xf]
    %v2928 = vld [vmem:[%s2870 + $0x17c] sm:$0xff]
    %v2929 = vld [vmem:[%s2870 + $0x184] sm:$0xff]
    %v2930 = vld [vmem:[%s2870 + $0x18c] sm:$0xf]
    %v2931 = vld [vmem:[%s2870 + $0x190] sm:$0xff]
    %v2932 = vld [vmem:[%s2870 + $0x198] sm:$0xff]
    %v2933 = vld [vmem:[%s2870 + $0x1a0] sm:$0xf]
    %v2934 = vld [vmem:[%s2870 + $0x1a4] sm:$0xff]
    %v2935 = vld [vmem:[%s2870 + $0x1ac] sm:$0xff]
    %v2936 = vld [vmem:[%s2870 + $0x1b4] sm:$0xf]
    %v2937 = vld [vmem:[%s2870 + $0x1b8] sm:$0xff]
    %v2938 = vld [vmem:[%s2870 + $0x1c0] sm:$0xff]
    %v2939 = vld [vmem:[%s2870 + $0x1c8] sm:$0xf]
    %v2940 = vld [vmem:[%s2870 + $0x1cc] sm:$0xff]
    %v2941 = vld [vmem:[%s2870 + $0x1d4] sm:$0xff]
    %v2942 = vld [vmem:[%s2870 + $0x1dc] sm:$0xf]
    %v2943 = vld [vmem:[%s2870 + $0x1e0] sm:$0xff]
    %v2944 = vld [vmem:[%s2870 + $0x1e8] sm:$0xff]
    %v2945 = vld [vmem:[%s2870 + $0x1f0] sm:$0xf]
    %v2946 = vld [vmem:[%s2870 + $0x1f4] sm:$0xff]
    %v2947 = vld [vmem:[%s2870 + $0x1fc] sm:$0xff]
    %v2948 = vld [vmem:[%s2870 + $0x204] sm:$0xf]
    %v2949 = vld [vmem:[%s2870 + $0x208] sm:$0xff]
    %v2950 = vld [vmem:[%s2870 + $0x210] sm:$0xff]
    %v2951 = vld [vmem:[%s2870 + $0x218] sm:$0xf]
    %v2952 = vld [vmem:[%s2870 + $0x21c] sm:$0xff]
    %v2953 = vld [vmem:[%s2870 + $0x224] sm:$0xff]
    %v2954 = vld [vmem:[%s2870 + $0x22c] sm:$0xf]
    %v2955 = vld [vmem:[%s2870 + $0x230] sm:$0xff]
    %v2956 = vld [vmem:[%s2870 + $0x238] sm:$0xff]
    %v2957 = vld [vmem:[%s2870 + $0x240] sm:$0xf]
    %v2958 = vld [vmem:[%s2870 + $0x244] sm:$0xff]
    %v2959 = vld [vmem:[%s2870 + $0x24c] sm:$0xff]
    %v2960 = vld [vmem:[%s2870 + $0x254] sm:$0xf]
    %v2961 = vld [vmem:[%s2870 + $0x258] sm:$0xff]
    %v2962 = vld [vmem:[%s2870 + $0x260] sm:$0xff]
    %v2963 = vld [vmem:[%s2870 + $0x268] sm:$0xf]
    %v2964 = vld [vmem:[%s2870 + $0x26c] sm:$0xff]
    %v2965 = vld [vmem:[%s2870 + $0x274] sm:$0xff]
    %v2966 = vld [vmem:[%s2870 + $0x27c] sm:$0xf]
    %v2967 = vld [vmem:[%s2870 + $0x280] sm:$0xff]
    %v2968 = vld [vmem:[%s2870 + $0x288] sm:$0xff]
    %v2969 = vld [vmem:[%s2870 + $0x290] sm:$0xf]
    %v2970 = vld [vmem:[%s2870 + $0x294] sm:$0xff]
    %v2971 = vld [vmem:[%s2870 + $0x29c] sm:$0xff]
    %v2972 = vld [vmem:[%s2870 + $0x2a4] sm:$0xf]
    %v2973 = vld [vmem:[%s2870 + $0x2a8] sm:$0xff]
    %v2974 = vld [vmem:[%s2870 + $0x2b0] sm:$0xff]
    %v2975 = vld [vmem:[%s2870 + $0x2b8] sm:$0xf]
    %v2976 = vld [vmem:[%s2870 + $0x2bc] sm:$0xff]
    %v2977 = vld [vmem:[%s2870 + $0x2c4] sm:$0xff]
    %v2978 = vld [vmem:[%s2870 + $0x2cc] sm:$0xf]
    %v2979 = vld [vmem:[%s2870 + $0x2d0] sm:$0xff]
    %v2980 = vld [vmem:[%s2870 + $0x2d8] sm:$0xff]
    %v2981 = vld [vmem:[%s2870 + $0x2e0] sm:$0xf]
    %v2982 = vld [vmem:[%s2870 + $0x2e4] sm:$0xff]
    %v2983 = vld [vmem:[%s2870 + $0x2ec] sm:$0xff]
    %v2984 = vld [vmem:[%s2870 + $0x2f4] sm:$0xf]
    %v2985 = vld [vmem:[%s2870 + $0x2f8] sm:$0xff]
    %v2986 = vld [vmem:[%s2870 + $0x300] sm:$0xff]
    %v2987 = vld [vmem:[%s2870 + $0x308] sm:$0xf]
    %v2988 = vld [vmem:[%s2870 + $0x30c] sm:$0xff]
    %v2989 = vld [vmem:[%s2870 + $0x314] sm:$0xff]
    %v2990 = vld [vmem:[%s2870 + $0x31c] sm:$0xf]
    %v2991 = vld [vmem:[%s2870 + $0x320] sm:$0xff]
    %v2992 = vld [vmem:[%s2870 + $0x328] sm:$0xff]
    %v2993 = vld [vmem:[%s2870 + $0x330] sm:$0xf]
    %v2994 = vld [vmem:[%s2870 + $0x334] sm:$0xff]
    %v2995 = vld [vmem:[%s2870 + $0x33c] sm:$0xff]
    %v2996 = vld [vmem:[%s2870 + $0x344] sm:$0xf]
    %v2997 = vld [vmem:[%s2870 + $0x348] sm:$0xff]
    %v2998 = vld [vmem:[%s2870 + $0x350] sm:$0xff]
    %v2999 = vld [vmem:[%s2870 + $0x358] sm:$0xf]
    %v3000 = vld [vmem:[%s2870 + $0x35c] sm:$0xff]
    %v3001 = vld [vmem:[%s2870 + $0x364] sm:$0xff]
    %v3002 = vld [vmem:[%s2870 + $0x36c] sm:$0xf]
    %v3003 = vld [vmem:[%s2870 + $0x370] sm:$0xff]
    %v3004 = vld [vmem:[%s2870 + $0x378] sm:$0xff]
    %v3005 = vld [vmem:[%s2870 + $0x380] sm:$0xf]
    %v3006 = vld [vmem:[%s2870 + $0x384] sm:$0xff]
    %v3007 = vld [vmem:[%s2870 + $0x38c] sm:$0xff]
    %v3008 = vld [vmem:[%s2870 + $0x394] sm:$0xf]
    %v3009 = vld [vmem:[%s2870 + $0x398] sm:$0xff]
    %v3010 = vld [vmem:[%s2870 + $0x3a0] sm:$0xff]
    %v3011 = vld [vmem:[%s2870 + $0x3a8] sm:$0xf]
    %v3012 = vld [vmem:[%s2870 + $0x3ac] sm:$0xff]
    %v3013 = vld [vmem:[%s2870 + $0x3b4] sm:$0xff]
    %v3014 = vld [vmem:[%s2870 + $0x3bc] sm:$0xf]
    %v3035 = vunpack.c.l.b16 %v2704
    %v3036 = vunpack.c.h.b16 %v2704
    %v3037 = vunpack.c.l.b16 %v2705
    %v3038 = vunpack.c.l.b16 %v2706
    %v3039 = vunpack.c.h.b16 %v2706
    %v3040 = vunpack.c.l.b16 %v2707
    %v3041 = vunpack.c.l.b16 %v2708
    %v3042 = vunpack.c.h.b16 %v2708
    %v3043 = vunpack.c.l.b16 %v2709
    %v3044 = vunpack.c.l.b16 %v2710
    %v3045 = vunpack.c.h.b16 %v2710
    %v3046 = vunpack.c.l.b16 %v2711
    %v3047 = vunpack.c.l.b16 %v2712
    %v3048 = vunpack.c.h.b16 %v2712
    %v3049 = vunpack.c.l.b16 %v2713
    %v3050 = vunpack.c.l.b16 %v2714
    %v3051 = vunpack.c.h.b16 %v2714
    %v3052 = vunpack.c.l.b16 %v2715
    %v3053 = vunpack.c.l.b16 %v2716
    %v3054 = vunpack.c.h.b16 %v2716
    %v3055 = vunpack.c.l.b16 %v2717
    %v3056 = vunpack.c.l.b16 %v2718
    %v3057 = vunpack.c.h.b16 %v2718
    %v3058 = vunpack.c.l.b16 %v2719
    %v3059 = vunpack.c.l.b16 %v2720
    %v3060 = vunpack.c.h.b16 %v2720
    %v3061 = vunpack.c.l.b16 %v2721
    %v3062 = vunpack.c.l.b16 %v2722
    %v3063 = vunpack.c.h.b16 %v2722
    %v3064 = vunpack.c.l.b16 %v2723
    %v3065 = vpack.c.b16 %v3038, %v3035
    %v3066 = vpack.c.b16 %v3039, %v3036
    %v3067 = vpack.c.b16 %v3040, %v3037
    %v3068 = vpack.c.b16 %v3044, %v3041
    %v3069 = vpack.c.b16 %v3045, %v3042
    %v3070 = vpack.c.b16 %v3046, %v3043
    %v3071 = vpack.c.b16 %v3050, %v3047
    %v3072 = vpack.c.b16 %v3051, %v3048
    %v3073 = vpack.c.b16 %v3052, %v3049
    %v3074 = vpack.c.b16 %v3056, %v3053
    %v3075 = vpack.c.b16 %v3057, %v3054
    %v3076 = vpack.c.b16 %v3058, %v3055
    %v3077 = vpack.c.b16 %v3062, %v3059
    %v3078 = vpack.c.b16 %v3063, %v3060
    %v3079 = vpack.c.b16 %v3064, %v3061
    %v3239 = vunpack.c.l.b16 %v2871
    %v3240 = vunpack.c.h.b16 %v2871
    %v3241 = vunpack.c.l.b16 %v2872
    %v3242 = vunpack.c.h.b16 %v2872
    %v3243 = vunpack.c.l.b16 %v2873
    %v3244 = vunpack.c.l.b16 %v2874
    %v3245 = vunpack.c.h.b16 %v2874
    %v3246 = vunpack.c.l.b16 %v2875
    %v3247 = vunpack.c.h.b16 %v2875
    %v3248 = vunpack.c.l.b16 %v2876
    %v3249 = vunpack.c.l.b16 %v2877
    %v3250 = vunpack.c.h.b16 %v2877
    %v3251 = vunpack.c.l.b16 %v2878
    %v3252 = vunpack.c.h.b16 %v2878
    %v3253 = vunpack.c.l.b16 %v2879
    %v3254 = vunpack.c.l.b16 %v2880
    %v3255 = vunpack.c.h.b16 %v2880
    %v3256 = vunpack.c.l.b16 %v2881
    %v3257 = vunpack.c.h.b16 %v2881
    %v3258 = vunpack.c.l.b16 %v2882
    %v3259 = vunpack.c.l.b16 %v2883
    %v3260 = vunpack.c.h.b16 %v2883
    %v3261 = vunpack.c.l.b16 %v2884
    %v3262 = vunpack.c.h.b16 %v2884
    %v3263 = vunpack.c.l.b16 %v2885
    %v3264 = vunpack.c.l.b16 %v2886
    %v3265 = vunpack.c.h.b16 %v2886
    %v3266 = vunpack.c.l.b16 %v2887
    %v3267 = vunpack.c.h.b16 %v2887
    %v3268 = vunpack.c.l.b16 %v2888
    %v3269 = vunpack.c.l.b16 %v2889
    %v3270 = vunpack.c.h.b16 %v2889
    %v3271 = vunpack.c.l.b16 %v2890
    %v3272 = vunpack.c.h.b16 %v2890
    %v3273 = vunpack.c.l.b16 %v2891
    %v3274 = vunpack.c.l.b16 %v2892
    %v3275 = vunpack.c.h.b16 %v2892
    %v3276 = vunpack.c.l.b16 %v2893
    %v3277 = vunpack.c.h.b16 %v2893
    %v3278 = vunpack.c.l.b16 %v2894
    %v3279 = vunpack.c.l.b16 %v2895
    %v3280 = vunpack.c.h.b16 %v2895
    %v3281 = vunpack.c.l.b16 %v2896
    %v3282 = vunpack.c.h.b16 %v2896
    %v3283 = vunpack.c.l.b16 %v2897
    %v3284 = vunpack.c.l.b16 %v2898
    %v3285 = vunpack.c.h.b16 %v2898
    %v3286 = vunpack.c.l.b16 %v2899
    %v3287 = vunpack.c.h.b16 %v2899
    %v3288 = vunpack.c.l.b16 %v2900
    %v3289 = vunpack.c.l.b16 %v2901
    %v3290 = vunpack.c.h.b16 %v2901
    %v3291 = vunpack.c.l.b16 %v2902
    %v3292 = vunpack.c.h.b16 %v2902
    %v3293 = vunpack.c.l.b16 %v2903
    %v3294 = vunpack.c.l.b16 %v2904
    %v3295 = vunpack.c.h.b16 %v2904
    %v3296 = vunpack.c.l.b16 %v2905
    %v3297 = vunpack.c.h.b16 %v2905
    %v3298 = vunpack.c.l.b16 %v2906
    %v3299 = vunpack.c.l.b16 %v2907
    %v3300 = vunpack.c.h.b16 %v2907
    %v3301 = vunpack.c.l.b16 %v2908
    %v3302 = vunpack.c.h.b16 %v2908
    %v3303 = vunpack.c.l.b16 %v2909
    %v3304 = vunpack.c.l.b16 %v2910
    %v3305 = vunpack.c.h.b16 %v2910
    %v3306 = vunpack.c.l.b16 %v2911
    %v3307 = vunpack.c.h.b16 %v2911
    %v3308 = vunpack.c.l.b16 %v2912
    %v3309 = vunpack.c.l.b16 %v2913
    %v3310 = vunpack.c.h.b16 %v2913
    %v3311 = vunpack.c.l.b16 %v2914
    %v3312 = vunpack.c.h.b16 %v2914
    %v3313 = vunpack.c.l.b16 %v2915
    %v3314 = vunpack.c.l.b16 %v2916
    %v3315 = vunpack.c.h.b16 %v2916
    %v3316 = vunpack.c.l.b16 %v2917
    %v3317 = vunpack.c.h.b16 %v2917
    %v3318 = vunpack.c.l.b16 %v2918
    %v3319 = vunpack.c.l.b16 %v2919
    %v3320 = vunpack.c.h.b16 %v2919
    %v3321 = vunpack.c.l.b16 %v2920
    %v3322 = vunpack.c.h.b16 %v2920
    %v3323 = vunpack.c.l.b16 %v2921
    %v3324 = vunpack.c.l.b16 %v2922
    %v3325 = vunpack.c.h.b16 %v2922
    %v3326 = vunpack.c.l.b16 %v2923
    %v3327 = vunpack.c.h.b16 %v2923
    %v3328 = vunpack.c.l.b16 %v2924
    %v3329 = vunpack.c.l.b16 %v2925
    %v3330 = vunpack.c.h.b16 %v2925
    %v3331 = vunpack.c.l.b16 %v2926
    %v3332 = vunpack.c.h.b16 %v2926
    %v3333 = vunpack.c.l.b16 %v2927
    %v3334 = vunpack.c.l.b16 %v2928
    %v3335 = vunpack.c.h.b16 %v2928
    %v3336 = vunpack.c.l.b16 %v2929
    %v3337 = vunpack.c.h.b16 %v2929
    %v3338 = vunpack.c.l.b16 %v2930
    %v3339 = vunpack.c.l.b16 %v2931
    %v3340 = vunpack.c.h.b16 %v2931
    %v3341 = vunpack.c.l.b16 %v2932
    %v3342 = vunpack.c.h.b16 %v2932
    %v3343 = vunpack.c.l.b16 %v2933
    %v3344 = vunpack.c.l.b16 %v2934
    %v3345 = vunpack.c.h.b16 %v2934
    %v3346 = vunpack.c.l.b16 %v2935
    %v3347 = vunpack.c.h.b16 %v2935
    %v3348 = vunpack.c.l.b16 %v2936
    %v3349 = vunpack.c.l.b16 %v2937
    %v3350 = vunpack.c.h.b16 %v2937
    %v3351 = vunpack.c.l.b16 %v2938
    %v3352 = vunpack.c.h.b16 %v2938
    %v3353 = vunpack.c.l.b16 %v2939
    %v3354 = vunpack.c.l.b16 %v2940
    %v3355 = vunpack.c.h.b16 %v2940
    %v3356 = vunpack.c.l.b16 %v2941
    %v3357 = vunpack.c.h.b16 %v2941
    %v3358 = vunpack.c.l.b16 %v2942
    %v3359 = vunpack.c.l.b16 %v2943
    %v3360 = vunpack.c.h.b16 %v2943
    %v3361 = vunpack.c.l.b16 %v2944
    %v3362 = vunpack.c.h.b16 %v2944
    %v3363 = vunpack.c.l.b16 %v2945
    %v3364 = vunpack.c.l.b16 %v2946
    %v3365 = vunpack.c.h.b16 %v2946
    %v3366 = vunpack.c.l.b16 %v2947
    %v3367 = vunpack.c.h.b16 %v2947
    %v3368 = vunpack.c.l.b16 %v2948
    %v3369 = vunpack.c.l.b16 %v2949
    %v3370 = vunpack.c.h.b16 %v2949
    %v3371 = vunpack.c.l.b16 %v2950
    %v3372 = vunpack.c.h.b16 %v2950
    %v3373 = vunpack.c.l.b16 %v2951
    %v3374 = vunpack.c.l.b16 %v2952
    %v3375 = vunpack.c.h.b16 %v2952
    %v3376 = vunpack.c.l.b16 %v2953
    %v3377 = vunpack.c.h.b16 %v2953
    %v3378 = vunpack.c.l.b16 %v2954
    %v3379 = vunpack.c.l.b16 %v2955
    %v3380 = vunpack.c.h.b16 %v2955
    %v3381 = vunpack.c.l.b16 %v2956
    %v3382 = vunpack.c.h.b16 %v2956
    %v3383 = vunpack.c.l.b16 %v2957
    %v3384 = vunpack.c.l.b16 %v2958
    %v3385 = vunpack.c.h.b16 %v2958
    %v3386 = vunpack.c.l.b16 %v2959
    %v3387 = vunpack.c.h.b16 %v2959
    %v3388 = vunpack.c.l.b16 %v2960
    %v3389 = vunpack.c.l.b16 %v2961
    %v3390 = vunpack.c.h.b16 %v2961
    %v3391 = vunpack.c.l.b16 %v2962
    %v3392 = vunpack.c.h.b16 %v2962
    %v3393 = vunpack.c.l.b16 %v2963
    %v3394 = vunpack.c.l.b16 %v2964
    %v3395 = vunpack.c.h.b16 %v2964
    %v3396 = vunpack.c.l.b16 %v2965
    %v3397 = vunpack.c.h.b16 %v2965
    %v3398 = vunpack.c.l.b16 %v2966
    %v3399 = vunpack.c.l.b16 %v2967
    %v3400 = vunpack.c.h.b16 %v2967
    %v3401 = vunpack.c.l.b16 %v2968
    %v3402 = vunpack.c.h.b16 %v2968
    %v3403 = vunpack.c.l.b16 %v2969
    %v3404 = vunpack.c.l.b16 %v2970
    %v3405 = vunpack.c.h.b16 %v2970
    %v3406 = vunpack.c.l.b16 %v2971
    %v3407 = vunpack.c.h.b16 %v2971
    %v3408 = vunpack.c.l.b16 %v2972
    %v3409 = vunpack.c.l.b16 %v2973
    %v3410 = vunpack.c.h.b16 %v2973
    %v3411 = vunpack.c.l.b16 %v2974
    %v3412 = vunpack.c.h.b16 %v2974
    %v3413 = vunpack.c.l.b16 %v2975
    %v3414 = vunpack.c.l.b16 %v2976
    %v3415 = vunpack.c.h.b16 %v2976
    %v3416 = vunpack.c.l.b16 %v2977
    %v3417 = vunpack.c.h.b16 %v2977
    %v3418 = vunpack.c.l.b16 %v2978
    %v3419 = vunpack.c.l.b16 %v2979
    %v3420 = vunpack.c.h.b16 %v2979
    %v3421 = vunpack.c.l.b16 %v2980
    %v3422 = vunpack.c.h.b16 %v2980
    %v3423 = vunpack.c.l.b16 %v2981
    %v3424 = vunpack.c.l.b16 %v2982
    %v3425 = vunpack.c.h.b16 %v2982
    %v3426 = vunpack.c.l.b16 %v2983
    %v3427 = vunpack.c.h.b16 %v2983
    %v3428 = vunpack.c.l.b16 %v2984
    %v3429 = vunpack.c.l.b16 %v2985
    %v3430 = vunpack.c.h.b16 %v2985
    %v3431 = vunpack.c.l.b16 %v2986
    %v3432 = vunpack.c.h.b16 %v2986
    %v3433 = vunpack.c.l.b16 %v2987
    %v3434 = vunpack.c.l.b16 %v2988
    %v3435 = vunpack.c.h.b16 %v2988
    %v3436 = vunpack.c.l.b16 %v2989
    %v3437 = vunpack.c.h.b16 %v2989
    %v3438 = vunpack.c.l.b16 %v2990
    %v3439 = vunpack.c.l.b16 %v2991
    %v3440 = vunpack.c.h.b16 %v2991
    %v3441 = vunpack.c.l.b16 %v2992
    %v3442 = vunpack.c.h.b16 %v2992
    %v3443 = vunpack.c.l.b16 %v2993
    %v3444 = vunpack.c.l.b16 %v2994
    %v3445 = vunpack.c.h.b16 %v2994
    %v3446 = vunpack.c.l.b16 %v2995
    %v3447 = vunpack.c.h.b16 %v2995
    %v3448 = vunpack.c.l.b16 %v2996
    %v3449 = vunpack.c.l.b16 %v2997
    %v3450 = vunpack.c.h.b16 %v2997
    %v3451 = vunpack.c.l.b16 %v2998
    %v3452 = vunpack.c.h.b16 %v2998
    %v3453 = vunpack.c.l.b16 %v2999
    %v3454 = vunpack.c.l.b16 %v3000
    %v3455 = vunpack.c.h.b16 %v3000
    %v3456 = vunpack.c.l.b16 %v3001
    %v3457 = vunpack.c.h.b16 %v3001
    %v3458 = vunpack.c.l.b16 %v3002
    %v3459 = vunpack.c.l.b16 %v3003
    %v3460 = vunpack.c.h.b16 %v3003
    %v3461 = vunpack.c.l.b16 %v3004
    %v3462 = vunpack.c.h.b16 %v3004
    %v3463 = vunpack.c.l.b16 %v3005
    %v3464 = vunpack.c.l.b16 %v3006
    %v3465 = vunpack.c.h.b16 %v3006
    %v3466 = vunpack.c.l.b16 %v3007
    %v3467 = vunpack.c.h.b16 %v3007
    %v3468 = vunpack.c.l.b16 %v3008
    %v3469 = vunpack.c.l.b16 %v3009
    %v3470 = vunpack.c.h.b16 %v3009
    %v3471 = vunpack.c.l.b16 %v3010
    %v3472 = vunpack.c.h.b16 %v3010
    %v3473 = vunpack.c.l.b16 %v3011
    %v3474 = vunpack.c.l.b16 %v3012
    %v3475 = vunpack.c.h.b16 %v3012
    %v3476 = vunpack.c.l.b16 %v3013
    %v3477 = vunpack.c.h.b16 %v3013
    %v3478 = vunpack.c.l.b16 %v3014
    %v3479 = vpack.c.b16 %v3244, %v3239
    %v3480 = vpack.c.b16 %v3245, %v3240
    %v3481 = vpack.c.b16 %v3246, %v3241
    %v3482 = vpack.c.b16 %v3247, %v3242
    %v3483 = vpack.c.b16 %v3248, %v3243
    %v3484 = vpack.c.b16 %v3254, %v3249
    %v3485 = vpack.c.b16 %v3255, %v3250
    %v3486 = vpack.c.b16 %v3256, %v3251
    %v3487 = vpack.c.b16 %v3257, %v3252
    %v3488 = vpack.c.b16 %v3258, %v3253
    %v3489 = vpack.c.b16 %v3264, %v3259
    %v3490 = vpack.c.b16 %v3265, %v3260
    %v3491 = vpack.c.b16 %v3266, %v3261
    %v3492 = vpack.c.b16 %v3267, %v3262
    %v3493 = vpack.c.b16 %v3268, %v3263
    %v3494 = vpack.c.b16 %v3274, %v3269
    %v3495 = vpack.c.b16 %v3275, %v3270
    %v3496 = vpack.c.b16 %v3276, %v3271
    %v3497 = vpack.c.b16 %v3277, %v3272
    %v3498 = vpack.c.b16 %v3278, %v3273
    %v3499 = vpack.c.b16 %v3284, %v3279
    %v3500 = vpack.c.b16 %v3285, %v3280
    %v3501 = vpack.c.b16 %v3286, %v3281
    %v3502 = vpack.c.b16 %v3287, %v3282
    %v3503 = vpack.c.b16 %v3288, %v3283
    %v3504 = vpack.c.b16 %v3294, %v3289
    %v3505 = vpack.c.b16 %v3295, %v3290
    %v3506 = vpack.c.b16 %v3296, %v3291
    %v3507 = vpack.c.b16 %v3297, %v3292
    %v3508 = vpack.c.b16 %v3298, %v3293
    %v3509 = vpack.c.b16 %v3304, %v3299
    %v3510 = vpack.c.b16 %v3305, %v3300
    %v3511 = vpack.c.b16 %v3306, %v3301
    %v3512 = vpack.c.b16 %v3307, %v3302
    %v3513 = vpack.c.b16 %v3308, %v3303
    %v3514 = vpack.c.b16 %v3314, %v3309
    %v3515 = vpack.c.b16 %v3315, %v3310
    %v3516 = vpack.c.b16 %v3316, %v3311
    %v3517 = vpack.c.b16 %v3317, %v3312
    %v3518 = vpack.c.b16 %v3318, %v3313
    %v3519 = vpack.c.b16 %v3324, %v3319
    %v3520 = vpack.c.b16 %v3325, %v3320
    %v3521 = vpack.c.b16 %v3326, %v3321
    %v3522 = vpack.c.b16 %v3327, %v3322
    %v3523 = vpack.c.b16 %v3328, %v3323
    %v3524 = vpack.c.b16 %v3334, %v3329
    %v3525 = vpack.c.b16 %v3335, %v3330
    %v3526 = vpack.c.b16 %v3336, %v3331
    %v3527 = vpack.c.b16 %v3337, %v3332
    %v3528 = vpack.c.b16 %v3338, %v3333
    %v3529 = vpack.c.b16 %v3344, %v3339
    %v3530 = vpack.c.b16 %v3345, %v3340
    %v3531 = vpack.c.b16 %v3346, %v3341
    %v3532 = vpack.c.b16 %v3347, %v3342
    %v3533 = vpack.c.b16 %v3348, %v3343
    %v3534 = vpack.c.b16 %v3354, %v3349
    %v3535 = vpack.c.b16 %v3355, %v3350
    %v3536 = vpack.c.b16 %v3356, %v3351
    %v3537 = vpack.c.b16 %v3357, %v3352
    %v3538 = vpack.c.b16 %v3358, %v3353
    %v3539 = vpack.c.b16 %v3364, %v3359
    %v3540 = vpack.c.b16 %v3365, %v3360
    %v3541 = vpack.c.b16 %v3366, %v3361
    %v3542 = vpack.c.b16 %v3367, %v3362
    %v3543 = vpack.c.b16 %v3368, %v3363
    %v3544 = vpack.c.b16 %v3374, %v3369
    %v3545 = vpack.c.b16 %v3375, %v3370
    %v3546 = vpack.c.b16 %v3376, %v3371
    %v3547 = vpack.c.b16 %v3377, %v3372
    %v3548 = vpack.c.b16 %v3378, %v3373
    %v3549 = vpack.c.b16 %v3384, %v3379
    %v3550 = vpack.c.b16 %v3385, %v3380
    %v3551 = vpack.c.b16 %v3386, %v3381
    %v3552 = vpack.c.b16 %v3387, %v3382
    %v3553 = vpack.c.b16 %v3388, %v3383
    %v3554 = vpack.c.b16 %v3394, %v3389
    %v3555 = vpack.c.b16 %v3395, %v3390
    %v3556 = vpack.c.b16 %v3396, %v3391
    %v3557 = vpack.c.b16 %v3397, %v3392
    %v3558 = vpack.c.b16 %v3398, %v3393
    %v3559 = vpack.c.b16 %v3404, %v3399
    %v3560 = vpack.c.b16 %v3405, %v3400
    %v3561 = vpack.c.b16 %v3406, %v3401
    %v3562 = vpack.c.b16 %v3407, %v3402
    %v3563 = vpack.c.b16 %v3408, %v3403
    %v3564 = vpack.c.b16 %v3414, %v3409
    %v3565 = vpack.c.b16 %v3415, %v3410
    %v3566 = vpack.c.b16 %v3416, %v3411
    %v3567 = vpack.c.b16 %v3417, %v3412
    %v3568 = vpack.c.b16 %v3418, %v3413
    %v3569 = vpack.c.b16 %v3424, %v3419
    %v3570 = vpack.c.b16 %v3425, %v3420
    %v3571 = vpack.c.b16 %v3426, %v3421
    %v3572 = vpack.c.b16 %v3427, %v3422
    %v3573 = vpack.c.b16 %v3428, %v3423
    %v3574 = vpack.c.b16 %v3434, %v3429
    %v3575 = vpack.c.b16 %v3435, %v3430
    %v3576 = vpack.c.b16 %v3436, %v3431
    %v3577 = vpack.c.b16 %v3437, %v3432
    %v3578 = vpack.c.b16 %v3438, %v3433
    %v3579 = vpack.c.b16 %v3444, %v3439
    %v3580 = vpack.c.b16 %v3445, %v3440
    %v3581 = vpack.c.b16 %v3446, %v3441
    %v3582 = vpack.c.b16 %v3447, %v3442
    %v3583 = vpack.c.b16 %v3448, %v3443
    %v3584 = vpack.c.b16 %v3454, %v3449
    %v3585 = vpack.c.b16 %v3455, %v3450
    %v3586 = vpack.c.b16 %v3456, %v3451
    %v3587 = vpack.c.b16 %v3457, %v3452
    %v3588 = vpack.c.b16 %v3458, %v3453
    %v3589 = vpack.c.b16 %v3464, %v3459
    %v3590 = vpack.c.b16 %v3465, %v3460
    %v3591 = vpack.c.b16 %v3466, %v3461
    %v3592 = vpack.c.b16 %v3467, %v3462
    %v3593 = vpack.c.b16 %v3468, %v3463
    %v3594 = vpack.c.b16 %v3474, %v3469
    %v3595 = vpack.c.b16 %v3475, %v3470
    %v3596 = vpack.c.b16 %v3476, %v3471
    %v3597 = vpack.c.b16 %v3477, %v3472
    %v3598 = vpack.c.b16 %v3478, %v3473
    %3719 = vmatpush.bf16.msra.mxu0 %v3514
    %3720 = vmatpush.bf16.msra.mxu0 %v3509
    %3721 = vmatpush.bf16.msra.mxu0 %v3504
    %3722 = vmatpush.bf16.msra.mxu0 %v3499
    %3723 = vmatpush.bf16.msra.mxu0 %v3494
    %3724 = vmatpush.bf16.msra.mxu0 %v3489
    %3725 = vmatpush.bf16.msra.mxu0 %v3484
    %3726 = vmatpush.bf16.msra.mxu0 %v3479
    %3727 = vmatmul.bf16.gmra.mxu0 %v3065
    %v3728 = vpop.f32.mrf.mxu0
    %v3729 = vadd.f32 0.0, %v3728
    %v3730 = vpop.f32.mrf.mxu0
    %v3731 = vadd.f32 0.0, %v3730
    %3732 = vmatmul.bf16.gmra.mxu0 %v3068
    %v3733 = vpop.f32.mrf.mxu0
    %v3734 = vadd.f32 0.0, %v3733
    %v3735 = vpop.f32.mrf.mxu0
    %v3736 = vadd.f32 0.0, %v3735
    %3737 = vmatmul.bf16.gmra.mxu0 %v3071
    %v3738 = vpop.f32.mrf.mxu0
    %v3739 = vadd.f32 0.0, %v3738
    %v3740 = vpop.f32.mrf.mxu0
    %v3741 = vadd.f32 0.0, %v3740
    %3742 = vmatmul.bf16.gmra.mxu0 %v3074
    %v3743 = vpop.f32.mrf.mxu0
    %v3744 = vadd.f32 0.0, %v3743
    %v3745 = vpop.f32.mrf.mxu0
    %v3746 = vadd.f32 0.0, %v3745
    %3747 = vmatmul.bf16.gmra.mxu0 %v3077
    %v3748 = vpop.f32.mrf.mxu0
    %v3749 = vadd.f32 0.0, %v3748
    %v3750 = vpop.f32.mrf.mxu0
    %v3751 = vadd.f32 0.0, %v3750
    %3752 = vdwg.mxu0
    %3753 = vmatpush.bf16.msra.mxu0 %v3554
    %3754 = vmatpush.bf16.msra.mxu0 %v3549
    %3755 = vmatpush.bf16.msra.mxu0 %v3544
    %3756 = vmatpush.bf16.msra.mxu0 %v3539
    %3757 = vmatpush.bf16.msra.mxu0 %v3534
    %3758 = vmatpush.bf16.msra.mxu0 %v3529
    %3759 = vmatpush.bf16.msra.mxu0 %v3524
    %3760 = vmatpush.bf16.msra.mxu0 %v3519
    %3761 = vmatmul.bf16.gmra.mxu0 %v3066
    %v3762 = vpop.f32.mrf.mxu0
    %v3763 = vadd.f32 %v3729, %v3762
    %v3764 = vpop.f32.mrf.mxu0
    %v3765 = vadd.f32 %v3731, %v3764
    %3766 = vmatmul.bf16.gmra.mxu0 %v3069
    %v3767 = vpop.f32.mrf.mxu0
    %v3768 = vadd.f32 %v3734, %v3767
    %v3769 = vpop.f32.mrf.mxu0
    %v3770 = vadd.f32 %v3736, %v3769
    %3771 = vmatmul.bf16.gmra.mxu0 %v3072
    %v3772 = vpop.f32.mrf.mxu0
    %v3773 = vadd.f32 %v3739, %v3772
    %v3774 = vpop.f32.mrf.mxu0
    %v3775 = vadd.f32 %v3741, %v3774
    %3776 = vmatmul.bf16.gmra.mxu0 %v3075
    %v3777 = vpop.f32.mrf.mxu0
    %v3778 = vadd.f32 %v3744, %v3777
    %v3779 = vpop.f32.mrf.mxu0
    %v3780 = vadd.f32 %v3746, %v3779
    %3781 = vmatmul.bf16.gmra.mxu0 %v3078
    %v3782 = vpop.f32.mrf.mxu0
    %v3783 = vadd.f32 %v3749, %v3782
    %v3784 = vpop.f32.mrf.mxu0
    %v3785 = vadd.f32 %v3751, %v3784
    %3786 = vdwg.mxu0
    %3787 = vmatpush.bf16.msra.mxu0 %v3594
    %3788 = vmatpush.bf16.msra.mxu0 %v3589
    %3789 = vmatpush.bf16.msra.mxu0 %v3584
    %3790 = vmatpush.bf16.msra.mxu0 %v3579
    %3791 = vmatpush.bf16.msra.mxu0 %v3574
    %3792 = vmatpush.bf16.msra.mxu0 %v3569
    %3793 = vmatpush.bf16.msra.mxu0 %v3564
    %3794 = vmatpush.bf16.msra.mxu0 %v3559
    %3795 = vmatmul.bf16.gmra.mxu0 %v3067
    %v3796 = vpop.f32.mrf.mxu0
    %v3797 = vadd.f32 %v3763, %v3796
    %v3798 = vpop.f32.mrf.mxu0
    %v3799 = vadd.f32 %v3765, %v3798
    %3800 = vmatmul.bf16.gmra.mxu0 %v3070
    %v3801 = vpop.f32.mrf.mxu0
    %v3802 = vadd.f32 %v3768, %v3801
    %v3803 = vpop.f32.mrf.mxu0
    %v3804 = vadd.f32 %v3770, %v3803
    %3805 = vmatmul.bf16.gmra.mxu0 %v3073
    %v3806 = vpop.f32.mrf.mxu0
    %v3807 = vadd.f32 %v3773, %v3806
    %v3808 = vpop.f32.mrf.mxu0
    %v3809 = vadd.f32 %v3775, %v3808
    %3810 = vmatmul.bf16.gmra.mxu0 %v3076
    %v3811 = vpop.f32.mrf.mxu0
    %v3812 = vadd.f32 %v3778, %v3811
    %v3813 = vpop.f32.mrf.mxu0
    %v3814 = vadd.f32 %v3780, %v3813
    %3815 = vmatmul.bf16.gmra.mxu0 %v3079
    %v3816 = vpop.f32.mrf.mxu0
    %v3817 = vadd.f32 %v3783, %v3816
    %v3818 = vpop.f32.mrf.mxu0
    %v3819 = vadd.f32 %v3785, %v3818
    %3820 = vdwg.mxu0
    %3821 = vmatpush.bf16.msra.mxu0 %v3515
    %3822 = vmatpush.bf16.msra.mxu0 %v3510
    %3823 = vmatpush.bf16.msra.mxu0 %v3505
    %3824 = vmatpush.bf16.msra.mxu0 %v3500
    %3825 = vmatpush.bf16.msra.mxu0 %v3495
    %3826 = vmatpush.bf16.msra.mxu0 %v3490
    %3827 = vmatpush.bf16.msra.mxu0 %v3485
    %3828 = vmatpush.bf16.msra.mxu0 %v3480
    %3829 = vmatmul.bf16.gmra.mxu0 %v3065
    %v3830 = vpop.f32.mrf.mxu0
    %v3831 = vadd.f32 0.0, %v3830
    %v3832 = vpop.f32.mrf.mxu0
    %v3833 = vadd.f32 0.0, %v3832
    %3834 = vmatmul.bf16.gmra.mxu0 %v3068
    %v3835 = vpop.f32.mrf.mxu0
    %v3836 = vadd.f32 0.0, %v3835
    %v3837 = vpop.f32.mrf.mxu0
    %v3838 = vadd.f32 0.0, %v3837
    %3839 = vmatmul.bf16.gmra.mxu0 %v3071
    %v3840 = vpop.f32.mrf.mxu0
    %v3841 = vadd.f32 0.0, %v3840
    %v3842 = vpop.f32.mrf.mxu0
    %v3843 = vadd.f32 0.0, %v3842
    %3844 = vmatmul.bf16.gmra.mxu0 %v3074
    %v3845 = vpop.f32.mrf.mxu0
    %v3846 = vadd.f32 0.0, %v3845
    %v3847 = vpop.f32.mrf.mxu0
    %v3848 = vadd.f32 0.0, %v3847
    %3849 = vmatmul.bf16.gmra.mxu0 %v3077
    %v3850 = vpop.f32.mrf.mxu0
    %v3851 = vadd.f32 0.0, %v3850
    %v3852 = vpop.f32.mrf.mxu0
    %v3853 = vadd.f32 0.0, %v3852
    %3854 = vdwg.mxu0
    %3855 = vmatpush.bf16.msra.mxu0 %v3555
    %3856 = vmatpush.bf16.msra.mxu0 %v3550
    %3857 = vmatpush.bf16.msra.mxu0 %v3545
    %3858 = vmatpush.bf16.msra.mxu0 %v3540
    %3859 = vmatpush.bf16.msra.mxu0 %v3535
    %3860 = vmatpush.bf16.msra.mxu0 %v3530
    %3861 = vmatpush.bf16.msra.mxu0 %v3525
    %3862 = vmatpush.bf16.msra.mxu0 %v3520
    %3863 = vmatmul.bf16.gmra.mxu0 %v3066
    %v3864 = vpop.f32.mrf.mxu0
    %v3865 = vadd.f32 %v3831, %v3864
    %v3866 = vpop.f32.mrf.mxu0
    %v3867 = vadd.f32 %v3833, %v3866
    %3868 = vmatmul.bf16.gmra.mxu0 %v3069
    %v3869 = vpop.f32.mrf.mxu0
    %v3870 = vadd.f32 %v3836, %v3869
    %v3871 = vpop.f32.mrf.mxu0
    %v3872 = vadd.f32 %v3838, %v3871
    %3873 = vmatmul.bf16.gmra.mxu0 %v3072
    %v3874 = vpop.f32.mrf.mxu0
    %v3875 = vadd.f32 %v3841, %v3874
    %v3876 = vpop.f32.mrf.mxu0
    %v3877 = vadd.f32 %v3843, %v3876
    %3878 = vmatmul.bf16.gmra.mxu0 %v3075
    %v3879 = vpop.f32.mrf.mxu0
    %v3880 = vadd.f32 %v3846, %v3879
    %v3881 = vpop.f32.mrf.mxu0
    %v3882 = vadd.f32 %v3848, %v3881
    %3883 = vmatmul.bf16.gmra.mxu0 %v3078
    %v3884 = vpop.f32.mrf.mxu0
    %v3885 = vadd.f32 %v3851, %v3884
    %v3886 = vpop.f32.mrf.mxu0
    %v3887 = vadd.f32 %v3853, %v3886
    %3888 = vdwg.mxu0
    %3889 = vmatpush.bf16.msra.mxu0 %v3595
    %3890 = vmatpush.bf16.msra.mxu0 %v3590
    %3891 = vmatpush.bf16.msra.mxu0 %v3585
    %3892 = vmatpush.bf16.msra.mxu0 %v3580
    %3893 = vmatpush.bf16.msra.mxu0 %v3575
    %3894 = vmatpush.bf16.msra.mxu0 %v3570
    %3895 = vmatpush.bf16.msra.mxu0 %v3565
    %3896 = vmatpush.bf16.msra.mxu0 %v3560
    %3897 = vmatmul.bf16.gmra.mxu0 %v3067
    %v3898 = vpop.f32.mrf.mxu0
    %v3899 = vadd.f32 %v3865, %v3898
    %v3900 = vpop.f32.mrf.mxu0
    %v3901 = vadd.f32 %v3867, %v3900
    %3902 = vmatmul.bf16.gmra.mxu0 %v3070
    %v3903 = vpop.f32.mrf.mxu0
    %v3904 = vadd.f32 %v3870, %v3903
    %v3905 = vpop.f32.mrf.mxu0
    %v3906 = vadd.f32 %v3872, %v3905
    %3907 = vmatmul.bf16.gmra.mxu0 %v3073
    %v3908 = vpop.f32.mrf.mxu0
    %v3909 = vadd.f32 %v3875, %v3908
    %v3910 = vpop.f32.mrf.mxu0
    %v3911 = vadd.f32 %v3877, %v3910
    %3912 = vmatmul.bf16.gmra.mxu0 %v3076
    %v3913 = vpop.f32.mrf.mxu0
    %v3914 = vadd.f32 %v3880, %v3913
    %v3915 = vpop.f32.mrf.mxu0
    %v3916 = vadd.f32 %v3882, %v3915
    %3917 = vmatmul.bf16.gmra.mxu0 %v3079
    %v3918 = vpop.f32.mrf.mxu0
    %v3919 = vadd.f32 %v3885, %v3918
    %v3920 = vpop.f32.mrf.mxu0
    %v3921 = vadd.f32 %v3887, %v3920
    %3922 = vdwg.mxu0
    %3923 = vmatpush.bf16.msra.mxu0 %v3516
    %3924 = vmatpush.bf16.msra.mxu0 %v3511
    %3925 = vmatpush.bf16.msra.mxu0 %v3506
    %3926 = vmatpush.bf16.msra.mxu0 %v3501
    %3927 = vmatpush.bf16.msra.mxu0 %v3496
    %3928 = vmatpush.bf16.msra.mxu0 %v3491
    %3929 = vmatpush.bf16.msra.mxu0 %v3486
    %3930 = vmatpush.bf16.msra.mxu0 %v3481
    %3931 = vmatmul.bf16.gmra.mxu0 %v3065
    %v3932 = vpop.f32.mrf.mxu0
    %v3933 = vadd.f32 0.0, %v3932
    %v3934 = vpop.f32.mrf.mxu0
    %v3935 = vadd.f32 0.0, %v3934
    %3936 = vmatmul.bf16.gmra.mxu0 %v3068
    %v3937 = vpop.f32.mrf.mxu0
    %v3938 = vadd.f32 0.0, %v3937
    %v3939 = vpop.f32.mrf.mxu0
    %v3940 = vadd.f32 0.0, %v3939
    %3941 = vmatmul.bf16.gmra.mxu0 %v3071
    %v3942 = vpop.f32.mrf.mxu0
    %v3943 = vadd.f32 0.0, %v3942
    %v3944 = vpop.f32.mrf.mxu0
    %v3945 = vadd.f32 0.0, %v3944
    %3946 = vmatmul.bf16.gmra.mxu0 %v3074
    %v3947 = vpop.f32.mrf.mxu0
    %v3948 = vadd.f32 0.0, %v3947
    %v3949 = vpop.f32.mrf.mxu0
    %v3950 = vadd.f32 0.0, %v3949
    %3951 = vmatmul.bf16.gmra.mxu0 %v3077
    %v3952 = vpop.f32.mrf.mxu0
    %v3953 = vadd.f32 0.0, %v3952
    %v3954 = vpop.f32.mrf.mxu0
    %v3955 = vadd.f32 0.0, %v3954
    %3956 = vdwg.mxu0
    %3957 = vmatpush.bf16.msra.mxu0 %v3556
    %3958 = vmatpush.bf16.msra.mxu0 %v3551
    %3959 = vmatpush.bf16.msra.mxu0 %v3546
    %3960 = vmatpush.bf16.msra.mxu0 %v3541
    %3961 = vmatpush.bf16.msra.mxu0 %v3536
    %3962 = vmatpush.bf16.msra.mxu0 %v3531
    %3963 = vmatpush.bf16.msra.mxu0 %v3526
    %3964 = vmatpush.bf16.msra.mxu0 %v3521
    %3965 = vmatmul.bf16.gmra.mxu0 %v3066
    %v3966 = vpop.f32.mrf.mxu0
    %v3967 = vadd.f32 %v3933, %v3966
    %v3968 = vpop.f32.mrf.mxu0
    %v3969 = vadd.f32 %v3935, %v3968
    %3970 = vmatmul.bf16.gmra.mxu0 %v3069
    %v3971 = vpop.f32.mrf.mxu0
    %v3972 = vadd.f32 %v3938, %v3971
    %v3973 = vpop.f32.mrf.mxu0
    %v3974 = vadd.f32 %v3940, %v3973
    %3975 = vmatmul.bf16.gmra.mxu0 %v3072
    %v3976 = vpop.f32.mrf.mxu0
    %v3977 = vadd.f32 %v3943, %v3976
    %v3978 = vpop.f32.mrf.mxu0
    %v3979 = vadd.f32 %v3945, %v3978
    %3980 = vmatmul.bf16.gmra.mxu0 %v3075
    %v3981 = vpop.f32.mrf.mxu0
    %v3982 = vadd.f32 %v3948, %v3981
    %v3983 = vpop.f32.mrf.mxu0
    %v3984 = vadd.f32 %v3950, %v3983
    %3985 = vmatmul.bf16.gmra.mxu0 %v3078
    %v3986 = vpop.f32.mrf.mxu0
    %v3987 = vadd.f32 %v3953, %v3986
    %v3988 = vpop.f32.mrf.mxu0
    %v3989 = vadd.f32 %v3955, %v3988
    %3990 = vdwg.mxu0
    %3991 = vmatpush.bf16.msra.mxu0 %v3596
    %3992 = vmatpush.bf16.msra.mxu0 %v3591
    %3993 = vmatpush.bf16.msra.mxu0 %v3586
    %3994 = vmatpush.bf16.msra.mxu0 %v3581
    %3995 = vmatpush.bf16.msra.mxu0 %v3576
    %3996 = vmatpush.bf16.msra.mxu0 %v3571
    %3997 = vmatpush.bf16.msra.mxu0 %v3566
    %3998 = vmatpush.bf16.msra.mxu0 %v3561
    %3999 = vmatmul.bf16.gmra.mxu0 %v3067
    %v4000 = vpop.f32.mrf.mxu0
    %v4001 = vadd.f32 %v3967, %v4000
    %v4002 = vpop.f32.mrf.mxu0
    %v4003 = vadd.f32 %v3969, %v4002
    %4004 = vmatmul.bf16.gmra.mxu0 %v3070
    %v4005 = vpop.f32.mrf.mxu0
    %v4006 = vadd.f32 %v3972, %v4005
    %v4007 = vpop.f32.mrf.mxu0
    %v4008 = vadd.f32 %v3974, %v4007
    %4009 = vmatmul.bf16.gmra.mxu0 %v3073
    %v4010 = vpop.f32.mrf.mxu0
    %v4011 = vadd.f32 %v3977, %v4010
    %v4012 = vpop.f32.mrf.mxu0
    %v4013 = vadd.f32 %v3979, %v4012
    %4014 = vmatmul.bf16.gmra.mxu0 %v3076
    %v4015 = vpop.f32.mrf.mxu0
    %v4016 = vadd.f32 %v3982, %v4015
    %v4017 = vpop.f32.mrf.mxu0
    %v4018 = vadd.f32 %v3984, %v4017
    %4019 = vmatmul.bf16.gmra.mxu0 %v3079
    %v4020 = vpop.f32.mrf.mxu0
    %v4021 = vadd.f32 %v3987, %v4020
    %v4022 = vpop.f32.mrf.mxu0
    %v4023 = vadd.f32 %v3989, %v4022
    %4024 = vdwg.mxu0
    %4025 = vmatpush.bf16.msra.mxu0 %v3517
    %4026 = vmatpush.bf16.msra.mxu0 %v3512
    %4027 = vmatpush.bf16.msra.mxu0 %v3507
    %4028 = vmatpush.bf16.msra.mxu0 %v3502
    %4029 = vmatpush.bf16.msra.mxu0 %v3497
    %4030 = vmatpush.bf16.msra.mxu0 %v3492
    %4031 = vmatpush.bf16.msra.mxu0 %v3487
    %4032 = vmatpush.bf16.msra.mxu0 %v3482
    %4033 = vmatmul.bf16.gmra.mxu0 %v3065
    %v4034 = vpop.f32.mrf.mxu0
    %v4035 = vadd.f32 0.0, %v4034
    %v4036 = vpop.f32.mrf.mxu0
    %v4037 = vadd.f32 0.0, %v4036
    %4038 = vmatmul.bf16.gmra.mxu0 %v3068
    %v4039 = vpop.f32.mrf.mxu0
    %v4040 = vadd.f32 0.0, %v4039
    %v4041 = vpop.f32.mrf.mxu0
    %v4042 = vadd.f32 0.0, %v4041
    %4043 = vmatmul.bf16.gmra.mxu0 %v3071
    %v4044 = vpop.f32.mrf.mxu0
    %v4045 = vadd.f32 0.0, %v4044
    %v4046 = vpop.f32.mrf.mxu0
    %v4047 = vadd.f32 0.0, %v4046
    %4048 = vmatmul.bf16.gmra.mxu0 %v3074
    %v4049 = vpop.f32.mrf.mxu0
    %v4050 = vadd.f32 0.0, %v4049
    %v4051 = vpop.f32.mrf.mxu0
    %v4052 = vadd.f32 0.0, %v4051
    %4053 = vmatmul.bf16.gmra.mxu0 %v3077
    %v4054 = vpop.f32.mrf.mxu0
    %v4055 = vadd.f32 0.0, %v4054
    %v4056 = vpop.f32.mrf.mxu0
    %v4057 = vadd.f32 0.0, %v4056
    %4058 = vdwg.mxu0
    %4059 = vmatpush.bf16.msra.mxu0 %v3557
    %4060 = vmatpush.bf16.msra.mxu0 %v3552
    %4061 = vmatpush.bf16.msra.mxu0 %v3547
    %4062 = vmatpush.bf16.msra.mxu0 %v3542
    %4063 = vmatpush.bf16.msra.mxu0 %v3537
    %4064 = vmatpush.bf16.msra.mxu0 %v3532
    %4065 = vmatpush.bf16.msra.mxu0 %v3527
    %4066 = vmatpush.bf16.msra.mxu0 %v3522
    %4067 = vmatmul.bf16.gmra.mxu0 %v3066
    %v4068 = vpop.f32.mrf.mxu0
    %v4069 = vadd.f32 %v4035, %v4068
    %v4070 = vpop.f32.mrf.mxu0
    %v4071 = vadd.f32 %v4037, %v4070
    %4072 = vmatmul.bf16.gmra.mxu0 %v3069
    %v4073 = vpop.f32.mrf.mxu0
    %v4074 = vadd.f32 %v4040, %v4073
    %v4075 = vpop.f32.mrf.mxu0
    %v4076 = vadd.f32 %v4042, %v4075
    %4077 = vmatmul.bf16.gmra.mxu0 %v3072
    %v4078 = vpop.f32.mrf.mxu0
    %v4079 = vadd.f32 %v4045, %v4078
    %v4080 = vpop.f32.mrf.mxu0
    %v4081 = vadd.f32 %v4047, %v4080
    %4082 = vmatmul.bf16.gmra.mxu0 %v3075
    %v4083 = vpop.f32.mrf.mxu0
    %v4084 = vadd.f32 %v4050, %v4083
    %v4085 = vpop.f32.mrf.mxu0
    %v4086 = vadd.f32 %v4052, %v4085
    %4087 = vmatmul.bf16.gmra.mxu0 %v3078
    %v4088 = vpop.f32.mrf.mxu0
    %v4089 = vadd.f32 %v4055, %v4088
    %v4090 = vpop.f32.mrf.mxu0
    %v4091 = vadd.f32 %v4057, %v4090
    %4092 = vdwg.mxu0
    %4093 = vmatpush.bf16.msra.mxu0 %v3597
    %4094 = vmatpush.bf16.msra.mxu0 %v3592
    %4095 = vmatpush.bf16.msra.mxu0 %v3587
    %4096 = vmatpush.bf16.msra.mxu0 %v3582
    %4097 = vmatpush.bf16.msra.mxu0 %v3577
    %4098 = vmatpush.bf16.msra.mxu0 %v3572
    %4099 = vmatpush.bf16.msra.mxu0 %v3567
    %4100 = vmatpush.bf16.msra.mxu0 %v3562
    %4101 = vmatmul.bf16.gmra.mxu0 %v3067
    %v4102 = vpop.f32.mrf.mxu0
    %v4103 = vadd.f32 %v4069, %v4102
    %v4104 = vpop.f32.mrf.mxu0
    %v4105 = vadd.f32 %v4071, %v4104
    %4106 = vmatmul.bf16.gmra.mxu0 %v3070
    %v4107 = vpop.f32.mrf.mxu0
    %v4108 = vadd.f32 %v4074, %v4107
    %v4109 = vpop.f32.mrf.mxu0
    %v4110 = vadd.f32 %v4076, %v4109
    %4111 = vmatmul.bf16.gmra.mxu0 %v3073
    %v4112 = vpop.f32.mrf.mxu0
    %v4113 = vadd.f32 %v4079, %v4112
    %v4114 = vpop.f32.mrf.mxu0
    %v4115 = vadd.f32 %v4081, %v4114
    %4116 = vmatmul.bf16.gmra.mxu0 %v3076
    %v4117 = vpop.f32.mrf.mxu0
    %v4118 = vadd.f32 %v4084, %v4117
    %v4119 = vpop.f32.mrf.mxu0
    %v4120 = vadd.f32 %v4086, %v4119
    %4121 = vmatmul.bf16.gmra.mxu0 %v3079
    %v4122 = vpop.f32.mrf.mxu0
    %v4123 = vadd.f32 %v4089, %v4122
    %v4124 = vpop.f32.mrf.mxu0
    %v4125 = vadd.f32 %v4091, %v4124
    %4126 = vdwg.mxu0
    %4127 = vmatpush.bf16.msra.mxu0 %v3518
    %4128 = vmatpush.bf16.msra.mxu0 %v3513
    %4129 = vmatpush.bf16.msra.mxu0 %v3508
    %4130 = vmatpush.bf16.msra.mxu0 %v3503
    %4131 = vmatpush.bf16.msra.mxu0 %v3498
    %4132 = vmatpush.bf16.msra.mxu0 %v3493
    %4133 = vmatpush.bf16.msra.mxu0 %v3488
    %4134 = vmatpush.bf16.msra.mxu0 %v3483
    %4135 = vmatmul.bf16.gmra.mxu0 %v3065
    %v4136 = vpop.f32.mrf.mxu0
    %v4137 = vadd.f32 0.0, %v4136
    %v4138 = vpop.f32.mrf.mxu0
    %v4139 = vadd.f32 0.0, %v4138
    %4140 = vmatmul.bf16.gmra.mxu0 %v3068
    %v4141 = vpop.f32.mrf.mxu0
    %v4142 = vadd.f32 0.0, %v4141
    %v4143 = vpop.f32.mrf.mxu0
    %v4144 = vadd.f32 0.0, %v4143
    %4145 = vmatmul.bf16.gmra.mxu0 %v3071
    %v4146 = vpop.f32.mrf.mxu0
    %v4147 = vadd.f32 0.0, %v4146
    %v4148 = vpop.f32.mrf.mxu0
    %v4149 = vadd.f32 0.0, %v4148
    %4150 = vmatmul.bf16.gmra.mxu0 %v3074
    %v4151 = vpop.f32.mrf.mxu0
    %v4152 = vadd.f32 0.0, %v4151
    %v4153 = vpop.f32.mrf.mxu0
    %v4154 = vadd.f32 0.0, %v4153
    %4155 = vmatmul.bf16.gmra.mxu0 %v3077
    %v4156 = vpop.f32.mrf.mxu0
    %v4157 = vadd.f32 0.0, %v4156
    %v4158 = vpop.f32.mrf.mxu0
    %v4159 = vadd.f32 0.0, %v4158
    %4160 = vdwg.mxu0
    %4161 = vmatpush.bf16.msra.mxu0 %v3558
    %4162 = vmatpush.bf16.msra.mxu0 %v3553
    %4163 = vmatpush.bf16.msra.mxu0 %v3548
    %4164 = vmatpush.bf16.msra.mxu0 %v3543
    %4165 = vmatpush.bf16.msra.mxu0 %v3538
    %4166 = vmatpush.bf16.msra.mxu0 %v3533
    %4167 = vmatpush.bf16.msra.mxu0 %v3528
    %4168 = vmatpush.bf16.msra.mxu0 %v3523
    %4169 = vmatmul.bf16.gmra.mxu0 %v3066
    %v4170 = vpop.f32.mrf.mxu0
    %v4171 = vadd.f32 %v4137, %v4170
    %v4172 = vpop.f32.mrf.mxu0
    %v4173 = vadd.f32 %v4139, %v4172
    %4174 = vmatmul.bf16.gmra.mxu0 %v3069
    %v4175 = vpop.f32.mrf.mxu0
    %v4176 = vadd.f32 %v4142, %v4175
    %v4177 = vpop.f32.mrf.mxu0
    %v4178 = vadd.f32 %v4144, %v4177
    %4179 = vmatmul.bf16.gmra.mxu0 %v3072
    %v4180 = vpop.f32.mrf.mxu0
    %v4181 = vadd.f32 %v4147, %v4180
    %v4182 = vpop.f32.mrf.mxu0
    %v4183 = vadd.f32 %v4149, %v4182
    %4184 = vmatmul.bf16.gmra.mxu0 %v3075
    %v4185 = vpop.f32.mrf.mxu0
    %v4186 = vadd.f32 %v4152, %v4185
    %v4187 = vpop.f32.mrf.mxu0
    %v4188 = vadd.f32 %v4154, %v4187
    %4189 = vmatmul.bf16.gmra.mxu0 %v3078
    %v4190 = vpop.f32.mrf.mxu0
    %v4191 = vadd.f32 %v4157, %v4190
    %v4192 = vpop.f32.mrf.mxu0
    %v4193 = vadd.f32 %v4159, %v4192
    %4194 = vdwg.mxu0
    %4195 = vmatpush.bf16.msra.mxu0 %v3598
    %4196 = vmatpush.bf16.msra.mxu0 %v3593
    %4197 = vmatpush.bf16.msra.mxu0 %v3588
    %4198 = vmatpush.bf16.msra.mxu0 %v3583
    %4199 = vmatpush.bf16.msra.mxu0 %v3578
    %4200 = vmatpush.bf16.msra.mxu0 %v3573
    %4201 = vmatpush.bf16.msra.mxu0 %v3568
    %4202 = vmatpush.bf16.msra.mxu0 %v3563
    %4203 = vmatmul.bf16.gmra.mxu0 %v3067
    %v4204 = vpop.f32.mrf.mxu0
    %v4205 = vadd.f32 %v4171, %v4204
    %v4206 = vpop.f32.mrf.mxu0
    %v4207 = vadd.f32 %v4173, %v4206
    %4208 = vmatmul.bf16.gmra.mxu0 %v3070
    %v4209 = vpop.f32.mrf.mxu0
    %v4210 = vadd.f32 %v4176, %v4209
    %v4211 = vpop.f32.mrf.mxu0
    %v4212 = vadd.f32 %v4178, %v4211
    %4213 = vmatmul.bf16.gmra.mxu0 %v3073
    %v4214 = vpop.f32.mrf.mxu0
    %v4215 = vadd.f32 %v4181, %v4214
    %v4216 = vpop.f32.mrf.mxu0
    %v4217 = vadd.f32 %v4183, %v4216
    %4218 = vmatmul.bf16.gmra.mxu0 %v3076
    %v4219 = vpop.f32.mrf.mxu0
    %v4220 = vadd.f32 %v4186, %v4219
    %v4221 = vpop.f32.mrf.mxu0
    %v4222 = vadd.f32 %v4188, %v4221
    %4223 = vmatmul.bf16.gmra.mxu0 %v3079
    %v4224 = vpop.f32.mrf.mxu0
    %v4225 = vadd.f32 %v4191, %v4224
    %v4226 = vpop.f32.mrf.mxu0
    %v4227 = vadd.f32 %v4193, %v4226
    %4228 = vdwg.mxu0
    %v4231 = vunpack.c.l.b16 %v2702
    %v4232 = vunpack.c.h.b16 %v2702
    %v4233 = vunpack.c.l.b16 %v2703
    %v4234 = vpack.c.b16 %v3035, %v4231
    %v4235 = vpack.c.b16 %v3036, %v4232
    %v4236 = vpack.c.b16 %v3037, %v4233
    %v4237 = vpack.c.b16 %v3041, %v3038
    %v4238 = vpack.c.b16 %v3042, %v3039
    %v4239 = vpack.c.b16 %v3043, %v3040
    %v4240 = vpack.c.b16 %v3047, %v3044
    %v4241 = vpack.c.b16 %v3048, %v3045
    %v4242 = vpack.c.b16 %v3049, %v3046
    %v4243 = vpack.c.b16 %v3053, %v3050
    %v4244 = vpack.c.b16 %v3054, %v3051
    %v4245 = vpack.c.b16 %v3055, %v3052
    %v4246 = vpack.c.b16 %v3059, %v3056
    %v4247 = vpack.c.b16 %v3060, %v3057
    %v4248 = vpack.c.b16 %v3061, %v3058
    %v4408 = vunpack.c.l.b16 %v2726
    %v4409 = vunpack.c.h.b16 %v2726
    %v4410 = vunpack.c.l.b16 %v2727
    %v4411 = vunpack.c.h.b16 %v2727
    %v4412 = vunpack.c.l.b16 %v2728
    %v4413 = vunpack.c.l.b16 %v2729
    %v4414 = vunpack.c.h.b16 %v2729
    %v4415 = vunpack.c.l.b16 %v2730
    %v4416 = vunpack.c.h.b16 %v2730
    %v4417 = vunpack.c.l.b16 %v2731
    %v4418 = vunpack.c.l.b16 %v2732
    %v4419 = vunpack.c.h.b16 %v2732
    %v4420 = vunpack.c.l.b16 %v2733
    %v4421 = vunpack.c.h.b16 %v2733
    %v4422 = vunpack.c.l.b16 %v2734
    %v4423 = vunpack.c.l.b16 %v2735
    %v4424 = vunpack.c.h.b16 %v2735
    %v4425 = vunpack.c.l.b16 %v2736
    %v4426 = vunpack.c.h.b16 %v2736
    %v4427 = vunpack.c.l.b16 %v2737
    %v4428 = vunpack.c.l.b16 %v2738
    %v4429 = vunpack.c.h.b16 %v2738
    %v4430 = vunpack.c.l.b16 %v2739
    %v4431 = vunpack.c.h.b16 %v2739
    %v4432 = vunpack.c.l.b16 %v2740
    %v4433 = vunpack.c.l.b16 %v2741
    %v4434 = vunpack.c.h.b16 %v2741
    %v4435 = vunpack.c.l.b16 %v2742
    %v4436 = vunpack.c.h.b16 %v2742
    %v4437 = vunpack.c.l.b16 %v2743
    %v4438 = vunpack.c.l.b16 %v2744
    %v4439 = vunpack.c.h.b16 %v2744
    %v4440 = vunpack.c.l.b16 %v2745
    %v4441 = vunpack.c.h.b16 %v2745
    %v4442 = vunpack.c.l.b16 %v2746
    %v4443 = vunpack.c.l.b16 %v2747
    %v4444 = vunpack.c.h.b16 %v2747
    %v4445 = vunpack.c.l.b16 %v2748
    %v4446 = vunpack.c.h.b16 %v2748
    %v4447 = vunpack.c.l.b16 %v2749
    %v4448 = vunpack.c.l.b16 %v2750
    %v4449 = vunpack.c.h.b16 %v2750
    %v4450 = vunpack.c.l.b16 %v2751
    %v4451 = vunpack.c.h.b16 %v2751
    %v4452 = vunpack.c.l.b16 %v2752
    %v4453 = vunpack.c.l.b16 %v2753
    %v4454 = vunpack.c.h.b16 %v2753
    %v4455 = vunpack.c.l.b16 %v2754
    %v4456 = vunpack.c.h.b16 %v2754
    %v4457 = vunpack.c.l.b16 %v2755
    %v4458 = vunpack.c.l.b16 %v2756
    %v4459 = vunpack.c.h.b16 %v2756
    %v4460 = vunpack.c.l.b16 %v2757
    %v4461 = vunpack.c.h.b16 %v2757
    %v4462 = vunpack.c.l.b16 %v2758
    %v4463 = vunpack.c.l.b16 %v2759
    %v4464 = vunpack.c.h.b16 %v2759
    %v4465 = vunpack.c.l.b16 %v2760
    %v4466 = vunpack.c.h.b16 %v2760
    %v4467 = vunpack.c.l.b16 %v2761
    %v4468 = vunpack.c.l.b16 %v2762
    %v4469 = vunpack.c.h.b16 %v2762
    %v4470 = vunpack.c.l.b16 %v2763
    %v4471 = vunpack.c.h.b16 %v2763
    %v4472 = vunpack.c.l.b16 %v2764
    %v4473 = vunpack.c.l.b16 %v2765
    %v4474 = vunpack.c.h.b16 %v2765
    %v4475 = vunpack.c.l.b16 %v2766
    %v4476 = vunpack.c.h.b16 %v2766
    %v4477 = vunpack.c.l.b16 %v2767
    %v4478 = vunpack.c.l.b16 %v2768
    %v4479 = vunpack.c.h.b16 %v2768
    %v4480 = vunpack.c.l.b16 %v2769
    %v4481 = vunpack.c.h.b16 %v2769
    %v4482 = vunpack.c.l.b16 %v2770
    %v4483 = vunpack.c.l.b16 %v2771
    %v4484 = vunpack.c.h.b16 %v2771
    %v4485 = vunpack.c.l.b16 %v2772
    %v4486 = vunpack.c.h.b16 %v2772
    %v4487 = vunpack.c.l.b16 %v2773
    %v4488 = vunpack.c.l.b16 %v2774
    %v4489 = vunpack.c.h.b16 %v2774
    %v4490 = vunpack.c.l.b16 %v2775
    %v4491 = vunpack.c.h.b16 %v2775
    %v4492 = vunpack.c.l.b16 %v2776
    %v4493 = vunpack.c.l.b16 %v2777
    %v4494 = vunpack.c.h.b16 %v2777
    %v4495 = vunpack.c.l.b16 %v2778
    %v4496 = vunpack.c.h.b16 %v2778
    %v4497 = vunpack.c.l.b16 %v2779
    %v4498 = vunpack.c.l.b16 %v2780
    %v4499 = vunpack.c.h.b16 %v2780
    %v4500 = vunpack.c.l.b16 %v2781
    %v4501 = vunpack.c.h.b16 %v2781
    %v4502 = vunpack.c.l.b16 %v2782
    %v4503 = vunpack.c.l.b16 %v2783
    %v4504 = vunpack.c.h.b16 %v2783
    %v4505 = vunpack.c.l.b16 %v2784
    %v4506 = vunpack.c.h.b16 %v2784
    %v4507 = vunpack.c.l.b16 %v2785
    %v4508 = vunpack.c.l.b16 %v2786
    %v4509 = vunpack.c.h.b16 %v2786
    %v4510 = vunpack.c.l.b16 %v2787
    %v4511 = vunpack.c.h.b16 %v2787
    %v4512 = vunpack.c.l.b16 %v2788
    %v4513 = vunpack.c.l.b16 %v2789
    %v4514 = vunpack.c.h.b16 %v2789
    %v4515 = vunpack.c.l.b16 %v2790
    %v4516 = vunpack.c.h.b16 %v2790
    %v4517 = vunpack.c.l.b16 %v2791
    %v4518 = vunpack.c.l.b16 %v2792
    %v4519 = vunpack.c.h.b16 %v2792
    %v4520 = vunpack.c.l.b16 %v2793
    %v4521 = vunpack.c.h.b16 %v2793
    %v4522 = vunpack.c.l.b16 %v2794
    %v4523 = vunpack.c.l.b16 %v2795
    %v4524 = vunpack.c.h.b16 %v2795
    %v4525 = vunpack.c.l.b16 %v2796
    %v4526 = vunpack.c.h.b16 %v2796
    %v4527 = vunpack.c.l.b16 %v2797
    %v4528 = vunpack.c.l.b16 %v2798
    %v4529 = vunpack.c.h.b16 %v2798
    %v4530 = vunpack.c.l.b16 %v2799
    %v4531 = vunpack.c.h.b16 %v2799
    %v4532 = vunpack.c.l.b16 %v2800
    %v4533 = vunpack.c.l.b16 %v2801
    %v4534 = vunpack.c.h.b16 %v2801
    %v4535 = vunpack.c.l.b16 %v2802
    %v4536 = vunpack.c.h.b16 %v2802
    %v4537 = vunpack.c.l.b16 %v2803
    %v4538 = vunpack.c.l.b16 %v2804
    %v4539 = vunpack.c.h.b16 %v2804
    %v4540 = vunpack.c.l.b16 %v2805
    %v4541 = vunpack.c.h.b16 %v2805
    %v4542 = vunpack.c.l.b16 %v2806
    %v4543 = vunpack.c.l.b16 %v2807
    %v4544 = vunpack.c.h.b16 %v2807
    %v4545 = vunpack.c.l.b16 %v2808
    %v4546 = vunpack.c.h.b16 %v2808
    %v4547 = vunpack.c.l.b16 %v2809
    %v4548 = vunpack.c.l.b16 %v2810
    %v4549 = vunpack.c.h.b16 %v2810
    %v4550 = vunpack.c.l.b16 %v2811
    %v4551 = vunpack.c.h.b16 %v2811
    %v4552 = vunpack.c.l.b16 %v2812
    %v4553 = vunpack.c.l.b16 %v2813
    %v4554 = vunpack.c.h.b16 %v2813
    %v4555 = vunpack.c.l.b16 %v2814
    %v4556 = vunpack.c.h.b16 %v2814
    %v4557 = vunpack.c.l.b16 %v2815
    %v4558 = vunpack.c.l.b16 %v2816
    %v4559 = vunpack.c.h.b16 %v2816
    %v4560 = vunpack.c.l.b16 %v2817
    %v4561 = vunpack.c.h.b16 %v2817
    %v4562 = vunpack.c.l.b16 %v2818
    %v4563 = vunpack.c.l.b16 %v2819
    %v4564 = vunpack.c.h.b16 %v2819
    %v4565 = vunpack.c.l.b16 %v2820
    %v4566 = vunpack.c.h.b16 %v2820
    %v4567 = vunpack.c.l.b16 %v2821
    %v4568 = vunpack.c.l.b16 %v2822
    %v4569 = vunpack.c.h.b16 %v2822
    %v4570 = vunpack.c.l.b16 %v2823
    %v4571 = vunpack.c.h.b16 %v2823
    %v4572 = vunpack.c.l.b16 %v2824
    %v4573 = vunpack.c.l.b16 %v2825
    %v4574 = vunpack.c.h.b16 %v2825
    %v4575 = vunpack.c.l.b16 %v2826
    %v4576 = vunpack.c.h.b16 %v2826
    %v4577 = vunpack.c.l.b16 %v2827
    %v4578 = vunpack.c.l.b16 %v2828
    %v4579 = vunpack.c.h.b16 %v2828
    %v4580 = vunpack.c.l.b16 %v2829
    %v4581 = vunpack.c.h.b16 %v2829
    %v4582 = vunpack.c.l.b16 %v2830
    %v4583 = vunpack.c.l.b16 %v2831
    %v4584 = vunpack.c.h.b16 %v2831
    %v4585 = vunpack.c.l.b16 %v2832
    %v4586 = vunpack.c.h.b16 %v2832
    %v4587 = vunpack.c.l.b16 %v2833
    %v4588 = vunpack.c.l.b16 %v2834
    %v4589 = vunpack.c.h.b16 %v2834
    %v4590 = vunpack.c.l.b16 %v2835
    %v4591 = vunpack.c.h.b16 %v2835
    %v4592 = vunpack.c.l.b16 %v2836
    %v4593 = vunpack.c.l.b16 %v2837
    %v4594 = vunpack.c.h.b16 %v2837
    %v4595 = vunpack.c.l.b16 %v2838
    %v4596 = vunpack.c.h.b16 %v2838
    %v4597 = vunpack.c.l.b16 %v2839
    %v4598 = vunpack.c.l.b16 %v2840
    %v4599 = vunpack.c.h.b16 %v2840
    %v4600 = vunpack.c.l.b16 %v2841
    %v4601 = vunpack.c.h.b16 %v2841
    %v4602 = vunpack.c.l.b16 %v2842
    %v4603 = vunpack.c.l.b16 %v2843
    %v4604 = vunpack.c.h.b16 %v2843
    %v4605 = vunpack.c.l.b16 %v2844
    %v4606 = vunpack.c.h.b16 %v2844
    %v4607 = vunpack.c.l.b16 %v2845
    %v4608 = vunpack.c.l.b16 %v2846
    %v4609 = vunpack.c.h.b16 %v2846
    %v4610 = vunpack.c.l.b16 %v2847
    %v4611 = vunpack.c.h.b16 %v2847
    %v4612 = vunpack.c.l.b16 %v2848
    %v4613 = vunpack.c.l.b16 %v2849
    %v4614 = vunpack.c.h.b16 %v2849
    %v4615 = vunpack.c.l.b16 %v2850
    %v4616 = vunpack.c.h.b16 %v2850
    %v4617 = vunpack.c.l.b16 %v2851
    %v4618 = vunpack.c.l.b16 %v2852
    %v4619 = vunpack.c.h.b16 %v2852
    %v4620 = vunpack.c.l.b16 %v2853
    %v4621 = vunpack.c.h.b16 %v2853
    %v4622 = vunpack.c.l.b16 %v2854
    %v4623 = vunpack.c.l.b16 %v2855
    %v4624 = vunpack.c.h.b16 %v2855
    %v4625 = vunpack.c.l.b16 %v2856
    %v4626 = vunpack.c.h.b16 %v2856
    %v4627 = vunpack.c.l.b16 %v2857
    %v4628 = vunpack.c.l.b16 %v2858
    %v4629 = vunpack.c.h.b16 %v2858
    %v4630 = vunpack.c.l.b16 %v2859
    %v4631 = vunpack.c.h.b16 %v2859
    %v4632 = vunpack.c.l.b16 %v2860
    %v4633 = vunpack.c.l.b16 %v2861
    %v4634 = vunpack.c.h.b16 %v2861
    %v4635 = vunpack.c.l.b16 %v2862
    %v4636 = vunpack.c.h.b16 %v2862
    %v4637 = vunpack.c.l.b16 %v2863
    %v4638 = vunpack.c.l.b16 %v2864
    %v4639 = vunpack.c.h.b16 %v2864
    %v4640 = vunpack.c.l.b16 %v2865
    %v4641 = vunpack.c.h.b16 %v2865
    %v4642 = vunpack.c.l.b16 %v2866
    %v4643 = vunpack.c.l.b16 %v2867
    %v4644 = vunpack.c.h.b16 %v2867
    %v4645 = vunpack.c.l.b16 %v2868
    %v4646 = vunpack.c.h.b16 %v2868
    %v4647 = vunpack.c.l.b16 %v2869
    %v4648 = vpack.c.b16 %v4413, %v4408
    %v4649 = vpack.c.b16 %v4414, %v4409
    %v4650 = vpack.c.b16 %v4415, %v4410
    %v4651 = vpack.c.b16 %v4416, %v4411
    %v4652 = vpack.c.b16 %v4417, %v4412
    %v4653 = vpack.c.b16 %v4423, %v4418
    %v4654 = vpack.c.b16 %v4424, %v4419
    %v4655 = vpack.c.b16 %v4425, %v4420
    %v4656 = vpack.c.b16 %v4426, %v4421
    %v4657 = vpack.c.b16 %v4427, %v4422
    %v4658 = vpack.c.b16 %v4433, %v4428
    %v4659 = vpack.c.b16 %v4434, %v4429
    %v4660 = vpack.c.b16 %v4435, %v4430
    %v4661 = vpack.c.b16 %v4436, %v4431
    %v4662 = vpack.c.b16 %v4437, %v4432
    %v4663 = vpack.c.b16 %v4443, %v4438
    %v4664 = vpack.c.b16 %v4444, %v4439
    %v4665 = vpack.c.b16 %v4445, %v4440
    %v4666 = vpack.c.b16 %v4446, %v4441
    %v4667 = vpack.c.b16 %v4447, %v4442
    %v4668 = vpack.c.b16 %v4453, %v4448
    %v4669 = vpack.c.b16 %v4454, %v4449
    %v4670 = vpack.c.b16 %v4455, %v4450
    %v4671 = vpack.c.b16 %v4456, %v4451
    %v4672 = vpack.c.b16 %v4457, %v4452
    %v4673 = vpack.c.b16 %v4463, %v4458
    %v4674 = vpack.c.b16 %v4464, %v4459
    %v4675 = vpack.c.b16 %v4465, %v4460
    %v4676 = vpack.c.b16 %v4466, %v4461
    %v4677 = vpack.c.b16 %v4467, %v4462
    %v4678 = vpack.c.b16 %v4473, %v4468
    %v4679 = vpack.c.b16 %v4474, %v4469
    %v4680 = vpack.c.b16 %v4475, %v4470
    %v4681 = vpack.c.b16 %v4476, %v4471
    %v4682 = vpack.c.b16 %v4477, %v4472
    %v4683 = vpack.c.b16 %v4483, %v4478
    %v4684 = vpack.c.b16 %v4484, %v4479
    %v4685 = vpack.c.b16 %v4485, %v4480
    %v4686 = vpack.c.b16 %v4486, %v4481
    %v4687 = vpack.c.b16 %v4487, %v4482
    %v4688 = vpack.c.b16 %v4493, %v4488
    %v4689 = vpack.c.b16 %v4494, %v4489
    %v4690 = vpack.c.b16 %v4495, %v4490
    %v4691 = vpack.c.b16 %v4496, %v4491
    %v4692 = vpack.c.b16 %v4497, %v4492
    %v4693 = vpack.c.b16 %v4503, %v4498
    %v4694 = vpack.c.b16 %v4504, %v4499
    %v4695 = vpack.c.b16 %v4505, %v4500
    %v4696 = vpack.c.b16 %v4506, %v4501
    %v4697 = vpack.c.b16 %v4507, %v4502
    %v4698 = vpack.c.b16 %v4513, %v4508
    %v4699 = vpack.c.b16 %v4514, %v4509
    %v4700 = vpack.c.b16 %v4515, %v4510
    %v4701 = vpack.c.b16 %v4516, %v4511
    %v4702 = vpack.c.b16 %v4517, %v4512
    %v4703 = vpack.c.b16 %v4523, %v4518
    %v4704 = vpack.c.b16 %v4524, %v4519
    %v4705 = vpack.c.b16 %v4525, %v4520
    %v4706 = vpack.c.b16 %v4526, %v4521
    %v4707 = vpack.c.b16 %v4527, %v4522
    %v4708 = vpack.c.b16 %v4533, %v4528
    %v4709 = vpack.c.b16 %v4534, %v4529
    %v4710 = vpack.c.b16 %v4535, %v4530
    %v4711 = vpack.c.b16 %v4536, %v4531
    %v4712 = vpack.c.b16 %v4537, %v4532
    %v4713 = vpack.c.b16 %v4543, %v4538
    %v4714 = vpack.c.b16 %v4544, %v4539
    %v4715 = vpack.c.b16 %v4545, %v4540
    %v4716 = vpack.c.b16 %v4546, %v4541
    %v4717 = vpack.c.b16 %v4547, %v4542
    %v4718 = vpack.c.b16 %v4553, %v4548
    %v4719 = vpack.c.b16 %v4554, %v4549
    %v4720 = vpack.c.b16 %v4555, %v4550
    %v4721 = vpack.c.b16 %v4556, %v4551
    %v4722 = vpack.c.b16 %v4557, %v4552
    %v4723 = vpack.c.b16 %v4563, %v4558
    %v4724 = vpack.c.b16 %v4564, %v4559
    %v4725 = vpack.c.b16 %v4565, %v4560
    %v4726 = vpack.c.b16 %v4566, %v4561
    %v4727 = vpack.c.b16 %v4567, %v4562
    %v4728 = vpack.c.b16 %v4573, %v4568
    %v4729 = vpack.c.b16 %v4574, %v4569
    %v4730 = vpack.c.b16 %v4575, %v4570
    %v4731 = vpack.c.b16 %v4576, %v4571
    %v4732 = vpack.c.b16 %v4577, %v4572
    %v4733 = vpack.c.b16 %v4583, %v4578
    %v4734 = vpack.c.b16 %v4584, %v4579
    %v4735 = vpack.c.b16 %v4585, %v4580
    %v4736 = vpack.c.b16 %v4586, %v4581
    %v4737 = vpack.c.b16 %v4587, %v4582
    %v4738 = vpack.c.b16 %v4593, %v4588
    %v4739 = vpack.c.b16 %v4594, %v4589
    %v4740 = vpack.c.b16 %v4595, %v4590
    %v4741 = vpack.c.b16 %v4596, %v4591
    %v4742 = vpack.c.b16 %v4597, %v4592
    %v4743 = vpack.c.b16 %v4603, %v4598
    %v4744 = vpack.c.b16 %v4604, %v4599
    %v4745 = vpack.c.b16 %v4605, %v4600
    %v4746 = vpack.c.b16 %v4606, %v4601
    %v4747 = vpack.c.b16 %v4607, %v4602
    %v4748 = vpack.c.b16 %v4613, %v4608
    %v4749 = vpack.c.b16 %v4614, %v4609
    %v4750 = vpack.c.b16 %v4615, %v4610
    %v4751 = vpack.c.b16 %v4616, %v4611
    %v4752 = vpack.c.b16 %v4617, %v4612
    %v4753 = vpack.c.b16 %v4623, %v4618
    %v4754 = vpack.c.b16 %v4624, %v4619
    %v4755 = vpack.c.b16 %v4625, %v4620
    %v4756 = vpack.c.b16 %v4626, %v4621
    %v4757 = vpack.c.b16 %v4627, %v4622
    %v4758 = vpack.c.b16 %v4633, %v4628
    %v4759 = vpack.c.b16 %v4634, %v4629
    %v4760 = vpack.c.b16 %v4635, %v4630
    %v4761 = vpack.c.b16 %v4636, %v4631
    %v4762 = vpack.c.b16 %v4637, %v4632
    %v4763 = vpack.c.b16 %v4643, %v4638
    %v4764 = vpack.c.b16 %v4644, %v4639
    %v4765 = vpack.c.b16 %v4645, %v4640
    %v4766 = vpack.c.b16 %v4646, %v4641
    %v4767 = vpack.c.b16 %v4647, %v4642
    %4888 = vmatpush.bf16.msra.mxu0 %v4683
    %4889 = vmatpush.bf16.msra.mxu0 %v4678
    %4890 = vmatpush.bf16.msra.mxu0 %v4673
    %4891 = vmatpush.bf16.msra.mxu0 %v4668
    %4892 = vmatpush.bf16.msra.mxu0 %v4663
    %4893 = vmatpush.bf16.msra.mxu0 %v4658
    %4894 = vmatpush.bf16.msra.mxu0 %v4653
    %4895 = vmatpush.bf16.msra.mxu0 %v4648
    %4896 = vmatmul.bf16.gmra.mxu0 %v4234
    %v4897 = vpop.f32.mrf.mxu0
    %v4898 = vadd.f32 %v3797, %v4897
    %v4899 = vpop.f32.mrf.mxu0
    %v4900 = vadd.f32 %v3799, %v4899
    %4901 = vmatmul.bf16.gmra.mxu0 %v4237
    %v4902 = vpop.f32.mrf.mxu0
    %v4903 = vadd.f32 %v3802, %v4902
    %v4904 = vpop.f32.mrf.mxu0
    %v4905 = vadd.f32 %v3804, %v4904
    %4906 = vmatmul.bf16.gmra.mxu0 %v4240
    %v4907 = vpop.f32.mrf.mxu0
    %v4908 = vadd.f32 %v3807, %v4907
    %v4909 = vpop.f32.mrf.mxu0
    %v4910 = vadd.f32 %v3809, %v4909
    %4911 = vmatmul.bf16.gmra.mxu0 %v4243
    %v4912 = vpop.f32.mrf.mxu0
    %v4913 = vadd.f32 %v3812, %v4912
    %v4914 = vpop.f32.mrf.mxu0
    %v4915 = vadd.f32 %v3814, %v4914
    %4916 = vmatmul.bf16.gmra.mxu0 %v4246
    %v4917 = vpop.f32.mrf.mxu0
    %v4918 = vadd.f32 %v3817, %v4917
    %v4919 = vpop.f32.mrf.mxu0
    %v4920 = vadd.f32 %v3819, %v4919
    %4921 = vdwg.mxu0
    %4922 = vmatpush.bf16.msra.mxu0 %v4723
    %4923 = vmatpush.bf16.msra.mxu0 %v4718
    %4924 = vmatpush.bf16.msra.mxu0 %v4713
    %4925 = vmatpush.bf16.msra.mxu0 %v4708
    %4926 = vmatpush.bf16.msra.mxu0 %v4703
    %4927 = vmatpush.bf16.msra.mxu0 %v4698
    %4928 = vmatpush.bf16.msra.mxu0 %v4693
    %4929 = vmatpush.bf16.msra.mxu0 %v4688
    %4930 = vmatmul.bf16.gmra.mxu0 %v4235
    %v4931 = vpop.f32.mrf.mxu0
    %v4932 = vadd.f32 %v4898, %v4931
    %v4933 = vpop.f32.mrf.mxu0
    %v4934 = vadd.f32 %v4900, %v4933
    %4935 = vmatmul.bf16.gmra.mxu0 %v4238
    %v4936 = vpop.f32.mrf.mxu0
    %v4937 = vadd.f32 %v4903, %v4936
    %v4938 = vpop.f32.mrf.mxu0
    %v4939 = vadd.f32 %v4905, %v4938
    %4940 = vmatmul.bf16.gmra.mxu0 %v4241
    %v4941 = vpop.f32.mrf.mxu0
    %v4942 = vadd.f32 %v4908, %v4941
    %v4943 = vpop.f32.mrf.mxu0
    %v4944 = vadd.f32 %v4910, %v4943
    %4945 = vmatmul.bf16.gmra.mxu0 %v4244
    %v4946 = vpop.f32.mrf.mxu0
    %v4947 = vadd.f32 %v4913, %v4946
    %v4948 = vpop.f32.mrf.mxu0
    %v4949 = vadd.f32 %v4915, %v4948
    %4950 = vmatmul.bf16.gmra.mxu0 %v4247
    %v4951 = vpop.f32.mrf.mxu0
    %v4952 = vadd.f32 %v4918, %v4951
    %v4953 = vpop.f32.mrf.mxu0
    %v4954 = vadd.f32 %v4920, %v4953
    %4955 = vdwg.mxu0
    %4956 = vmatpush.bf16.msra.mxu0 %v4763
    %4957 = vmatpush.bf16.msra.mxu0 %v4758
    %4958 = vmatpush.bf16.msra.mxu0 %v4753
    %4959 = vmatpush.bf16.msra.mxu0 %v4748
    %4960 = vmatpush.bf16.msra.mxu0 %v4743
    %4961 = vmatpush.bf16.msra.mxu0 %v4738
    %4962 = vmatpush.bf16.msra.mxu0 %v4733
    %4963 = vmatpush.bf16.msra.mxu0 %v4728
    %4964 = vmatmul.bf16.gmra.mxu0 %v4236
    %v4965 = vpop.f32.mrf.mxu0
    %v4966 = vadd.f32 %v4932, %v4965
    %v4967 = vpop.f32.mrf.mxu0
    %v4968 = vadd.f32 %v4934, %v4967
    %4969 = vmatmul.bf16.gmra.mxu0 %v4239
    %v4970 = vpop.f32.mrf.mxu0
    %v4971 = vadd.f32 %v4937, %v4970
    %v4972 = vpop.f32.mrf.mxu0
    %v4973 = vadd.f32 %v4939, %v4972
    %4974 = vmatmul.bf16.gmra.mxu0 %v4242
    %v4975 = vpop.f32.mrf.mxu0
    %v4976 = vadd.f32 %v4942, %v4975
    %v4977 = vpop.f32.mrf.mxu0
    %v4978 = vadd.f32 %v4944, %v4977
    %4979 = vmatmul.bf16.gmra.mxu0 %v4245
    %v4980 = vpop.f32.mrf.mxu0
    %v4981 = vadd.f32 %v4947, %v4980
    %v4982 = vpop.f32.mrf.mxu0
    %v4983 = vadd.f32 %v4949, %v4982
    %4984 = vmatmul.bf16.gmra.mxu0 %v4248
    %v4985 = vpop.f32.mrf.mxu0
    %v4986 = vadd.f32 %v4952, %v4985
    %v4987 = vpop.f32.mrf.mxu0
    %v4988 = vadd.f32 %v4954, %v4987
    %4989 = vdwg.mxu0
    %4990 = vmatpush.bf16.msra.mxu0 %v4684
    %4991 = vmatpush.bf16.msra.mxu0 %v4679
    %4992 = vmatpush.bf16.msra.mxu0 %v4674
    %4993 = vmatpush.bf16.msra.mxu0 %v4669
    %4994 = vmatpush.bf16.msra.mxu0 %v4664
    %4995 = vmatpush.bf16.msra.mxu0 %v4659
    %4996 = vmatpush.bf16.msra.mxu0 %v4654
    %4997 = vmatpush.bf16.msra.mxu0 %v4649
    %4998 = vmatmul.bf16.gmra.mxu0 %v4234
    %v4999 = vpop.f32.mrf.mxu0
    %v5000 = vadd.f32 %v3899, %v4999
    %v5001 = vpop.f32.mrf.mxu0
    %v5002 = vadd.f32 %v3901, %v5001
    %5003 = vmatmul.bf16.gmra.mxu0 %v4237
    %v5004 = vpop.f32.mrf.mxu0
    %v5005 = vadd.f32 %v3904, %v5004
    %v5006 = vpop.f32.mrf.mxu0
    %v5007 = vadd.f32 %v3906, %v5006
    %5008 = vmatmul.bf16.gmra.mxu0 %v4240
    %v5009 = vpop.f32.mrf.mxu0
    %v5010 = vadd.f32 %v3909, %v5009
    %v5011 = vpop.f32.mrf.mxu0
    %v5012 = vadd.f32 %v3911, %v5011
    %5013 = vmatmul.bf16.gmra.mxu0 %v4243
    %v5014 = vpop.f32.mrf.mxu0
    %v5015 = vadd.f32 %v3914, %v5014
    %v5016 = vpop.f32.mrf.mxu0
    %v5017 = vadd.f32 %v3916, %v5016
    %5018 = vmatmul.bf16.gmra.mxu0 %v4246
    %v5019 = vpop.f32.mrf.mxu0
    %v5020 = vadd.f32 %v3919, %v5019
    %v5021 = vpop.f32.mrf.mxu0
    %v5022 = vadd.f32 %v3921, %v5021
    %5023 = vdwg.mxu0
    %5024 = vmatpush.bf16.msra.mxu0 %v4724
    %5025 = vmatpush.bf16.msra.mxu0 %v4719
    %5026 = vmatpush.bf16.msra.mxu0 %v4714
    %5027 = vmatpush.bf16.msra.mxu0 %v4709
    %5028 = vmatpush.bf16.msra.mxu0 %v4704
    %5029 = vmatpush.bf16.msra.mxu0 %v4699
    %5030 = vmatpush.bf16.msra.mxu0 %v4694
    %5031 = vmatpush.bf16.msra.mxu0 %v4689
    %5032 = vmatmul.bf16.gmra.mxu0 %v4235
    %v5033 = vpop.f32.mrf.mxu0
    %v5034 = vadd.f32 %v5000, %v5033
    %v5035 = vpop.f32.mrf.mxu0
    %v5036 = vadd.f32 %v5002, %v5035
    %5037 = vmatmul.bf16.gmra.mxu0 %v4238
    %v5038 = vpop.f32.mrf.mxu0
    %v5039 = vadd.f32 %v5005, %v5038
    %v5040 = vpop.f32.mrf.mxu0
    %v5041 = vadd.f32 %v5007, %v5040
    %5042 = vmatmul.bf16.gmra.mxu0 %v4241
    %v5043 = vpop.f32.mrf.mxu0
    %v5044 = vadd.f32 %v5010, %v5043
    %v5045 = vpop.f32.mrf.mxu0
    %v5046 = vadd.f32 %v5012, %v5045
    %5047 = vmatmul.bf16.gmra.mxu0 %v4244
    %v5048 = vpop.f32.mrf.mxu0
    %v5049 = vadd.f32 %v5015, %v5048
    %v5050 = vpop.f32.mrf.mxu0
    %v5051 = vadd.f32 %v5017, %v5050
    %5052 = vmatmul.bf16.gmra.mxu0 %v4247
    %v5053 = vpop.f32.mrf.mxu0
    %v5054 = vadd.f32 %v5020, %v5053
    %v5055 = vpop.f32.mrf.mxu0
    %v5056 = vadd.f32 %v5022, %v5055
    %5057 = vdwg.mxu0
    %5058 = vmatpush.bf16.msra.mxu0 %v4764
    %5059 = vmatpush.bf16.msra.mxu0 %v4759
    %5060 = vmatpush.bf16.msra.mxu0 %v4754
    %5061 = vmatpush.bf16.msra.mxu0 %v4749
    %5062 = vmatpush.bf16.msra.mxu0 %v4744
    %5063 = vmatpush.bf16.msra.mxu0 %v4739
    %5064 = vmatpush.bf16.msra.mxu0 %v4734
    %5065 = vmatpush.bf16.msra.mxu0 %v4729
    %5066 = vmatmul.bf16.gmra.mxu0 %v4236
    %v5067 = vpop.f32.mrf.mxu0
    %v5068 = vadd.f32 %v5034, %v5067
    %v5069 = vpop.f32.mrf.mxu0
    %v5070 = vadd.f32 %v5036, %v5069
    %5071 = vmatmul.bf16.gmra.mxu0 %v4239
    %v5072 = vpop.f32.mrf.mxu0
    %v5073 = vadd.f32 %v5039, %v5072
    %v5074 = vpop.f32.mrf.mxu0
    %v5075 = vadd.f32 %v5041, %v5074
    %5076 = vmatmul.bf16.gmra.mxu0 %v4242
    %v5077 = vpop.f32.mrf.mxu0
    %v5078 = vadd.f32 %v5044, %v5077
    %v5079 = vpop.f32.mrf.mxu0
    %v5080 = vadd.f32 %v5046, %v5079
    %5081 = vmatmul.bf16.gmra.mxu0 %v4245
    %v5082 = vpop.f32.mrf.mxu0
    %v5083 = vadd.f32 %v5049, %v5082
    %v5084 = vpop.f32.mrf.mxu0
    %v5085 = vadd.f32 %v5051, %v5084
    %5086 = vmatmul.bf16.gmra.mxu0 %v4248
    %v5087 = vpop.f32.mrf.mxu0
    %v5088 = vadd.f32 %v5054, %v5087
    %v5089 = vpop.f32.mrf.mxu0
    %v5090 = vadd.f32 %v5056, %v5089
    %5091 = vdwg.mxu0
    %5092 = vmatpush.bf16.msra.mxu0 %v4685
    %5093 = vmatpush.bf16.msra.mxu0 %v4680
    %5094 = vmatpush.bf16.msra.mxu0 %v4675
    %5095 = vmatpush.bf16.msra.mxu0 %v4670
    %5096 = vmatpush.bf16.msra.mxu0 %v4665
    %5097 = vmatpush.bf16.msra.mxu0 %v4660
    %5098 = vmatpush.bf16.msra.mxu0 %v4655
    %5099 = vmatpush.bf16.msra.mxu0 %v4650
    %5100 = vmatmul.bf16.gmra.mxu0 %v4234
    %v5101 = vpop.f32.mrf.mxu0
    %v5102 = vadd.f32 %v4001, %v5101
    %v5103 = vpop.f32.mrf.mxu0
    %v5104 = vadd.f32 %v4003, %v5103
    %5105 = vmatmul.bf16.gmra.mxu0 %v4237
    %v5106 = vpop.f32.mrf.mxu0
    %v5107 = vadd.f32 %v4006, %v5106
    %v5108 = vpop.f32.mrf.mxu0
    %v5109 = vadd.f32 %v4008, %v5108
    %5110 = vmatmul.bf16.gmra.mxu0 %v4240
    %v5111 = vpop.f32.mrf.mxu0
    %v5112 = vadd.f32 %v4011, %v5111
    %v5113 = vpop.f32.mrf.mxu0
    %v5114 = vadd.f32 %v4013, %v5113
    %5115 = vmatmul.bf16.gmra.mxu0 %v4243
    %v5116 = vpop.f32.mrf.mxu0
    %v5117 = vadd.f32 %v4016, %v5116
    %v5118 = vpop.f32.mrf.mxu0
    %v5119 = vadd.f32 %v4018, %v5118
    %5120 = vmatmul.bf16.gmra.mxu0 %v4246
    %v5121 = vpop.f32.mrf.mxu0
    %v5122 = vadd.f32 %v4021, %v5121
    %v5123 = vpop.f32.mrf.mxu0
    %v5124 = vadd.f32 %v4023, %v5123
    %5125 = vdwg.mxu0
    %5126 = vmatpush.bf16.msra.mxu0 %v4725
    %5127 = vmatpush.bf16.msra.mxu0 %v4720
    %5128 = vmatpush.bf16.msra.mxu0 %v4715
    %5129 = vmatpush.bf16.msra.mxu0 %v4710
    %5130 = vmatpush.bf16.msra.mxu0 %v4705
    %5131 = vmatpush.bf16.msra.mxu0 %v4700
    %5132 = vmatpush.bf16.msra.mxu0 %v4695
    %5133 = vmatpush.bf16.msra.mxu0 %v4690
    %5134 = vmatmul.bf16.gmra.mxu0 %v4235
    %v5135 = vpop.f32.mrf.mxu0
    %v5136 = vadd.f32 %v5102, %v5135
    %v5137 = vpop.f32.mrf.mxu0
    %v5138 = vadd.f32 %v5104, %v5137
    %5139 = vmatmul.bf16.gmra.mxu0 %v4238
    %v5140 = vpop.f32.mrf.mxu0
    %v5141 = vadd.f32 %v5107, %v5140
    %v5142 = vpop.f32.mrf.mxu0
    %v5143 = vadd.f32 %v5109, %v5142
    %5144 = vmatmul.bf16.gmra.mxu0 %v4241
    %v5145 = vpop.f32.mrf.mxu0
    %v5146 = vadd.f32 %v5112, %v5145
    %v5147 = vpop.f32.mrf.mxu0
    %v5148 = vadd.f32 %v5114, %v5147
    %5149 = vmatmul.bf16.gmra.mxu0 %v4244
    %v5150 = vpop.f32.mrf.mxu0
    %v5151 = vadd.f32 %v5117, %v5150
    %v5152 = vpop.f32.mrf.mxu0
    %v5153 = vadd.f32 %v5119, %v5152
    %5154 = vmatmul.bf16.gmra.mxu0 %v4247
    %v5155 = vpop.f32.mrf.mxu0
    %v5156 = vadd.f32 %v5122, %v5155
    %v5157 = vpop.f32.mrf.mxu0
    %v5158 = vadd.f32 %v5124, %v5157
    %5159 = vdwg.mxu0
    %5160 = vmatpush.bf16.msra.mxu0 %v4765
    %5161 = vmatpush.bf16.msra.mxu0 %v4760
    %5162 = vmatpush.bf16.msra.mxu0 %v4755
    %5163 = vmatpush.bf16.msra.mxu0 %v4750
    %5164 = vmatpush.bf16.msra.mxu0 %v4745
    %5165 = vmatpush.bf16.msra.mxu0 %v4740
    %5166 = vmatpush.bf16.msra.mxu0 %v4735
    %5167 = vmatpush.bf16.msra.mxu0 %v4730
    %5168 = vmatmul.bf16.gmra.mxu0 %v4236
    %v5169 = vpop.f32.mrf.mxu0
    %v5170 = vadd.f32 %v5136, %v5169
    %v5171 = vpop.f32.mrf.mxu0
    %v5172 = vadd.f32 %v5138, %v5171
    %5173 = vmatmul.bf16.gmra.mxu0 %v4239
    %v5174 = vpop.f32.mrf.mxu0
    %v5175 = vadd.f32 %v5141, %v5174
    %v5176 = vpop.f32.mrf.mxu0
    %v5177 = vadd.f32 %v5143, %v5176
    %5178 = vmatmul.bf16.gmra.mxu0 %v4242
    %v5179 = vpop.f32.mrf.mxu0
    %v5180 = vadd.f32 %v5146, %v5179
    %v5181 = vpop.f32.mrf.mxu0
    %v5182 = vadd.f32 %v5148, %v5181
    %5183 = vmatmul.bf16.gmra.mxu0 %v4245
    %v5184 = vpop.f32.mrf.mxu0
    %v5185 = vadd.f32 %v5151, %v5184
    %v5186 = vpop.f32.mrf.mxu0
    %v5187 = vadd.f32 %v5153, %v5186
    %5188 = vmatmul.bf16.gmra.mxu0 %v4248
    %v5189 = vpop.f32.mrf.mxu0
    %v5190 = vadd.f32 %v5156, %v5189
    %v5191 = vpop.f32.mrf.mxu0
    %v5192 = vadd.f32 %v5158, %v5191
    %5193 = vdwg.mxu0
    %5194 = vmatpush.bf16.msra.mxu0 %v4686
    %5195 = vmatpush.bf16.msra.mxu0 %v4681
    %5196 = vmatpush.bf16.msra.mxu0 %v4676
    %5197 = vmatpush.bf16.msra.mxu0 %v4671
    %5198 = vmatpush.bf16.msra.mxu0 %v4666
    %5199 = vmatpush.bf16.msra.mxu0 %v4661
    %5200 = vmatpush.bf16.msra.mxu0 %v4656
    %5201 = vmatpush.bf16.msra.mxu0 %v4651
    %5202 = vmatmul.bf16.gmra.mxu0 %v4234
    %v5203 = vpop.f32.mrf.mxu0
    %v5204 = vadd.f32 %v4103, %v5203
    %v5205 = vpop.f32.mrf.mxu0
    %v5206 = vadd.f32 %v4105, %v5205
    %5207 = vmatmul.bf16.gmra.mxu0 %v4237
    %v5208 = vpop.f32.mrf.mxu0
    %v5209 = vadd.f32 %v4108, %v5208
    %v5210 = vpop.f32.mrf.mxu0
    %v5211 = vadd.f32 %v4110, %v5210
    %5212 = vmatmul.bf16.gmra.mxu0 %v4240
    %v5213 = vpop.f32.mrf.mxu0
    %v5214 = vadd.f32 %v4113, %v5213
    %v5215 = vpop.f32.mrf.mxu0
    %v5216 = vadd.f32 %v4115, %v5215
    %5217 = vmatmul.bf16.gmra.mxu0 %v4243
    %v5218 = vpop.f32.mrf.mxu0
    %v5219 = vadd.f32 %v4118, %v5218
    %v5220 = vpop.f32.mrf.mxu0
    %v5221 = vadd.f32 %v4120, %v5220
    %5222 = vmatmul.bf16.gmra.mxu0 %v4246
    %v5223 = vpop.f32.mrf.mxu0
    %v5224 = vadd.f32 %v4123, %v5223
    %v5225 = vpop.f32.mrf.mxu0
    %v5226 = vadd.f32 %v4125, %v5225
    %5227 = vdwg.mxu0
    %5228 = vmatpush.bf16.msra.mxu0 %v4726
    %5229 = vmatpush.bf16.msra.mxu0 %v4721
    %5230 = vmatpush.bf16.msra.mxu0 %v4716
    %5231 = vmatpush.bf16.msra.mxu0 %v4711
    %5232 = vmatpush.bf16.msra.mxu0 %v4706
    %5233 = vmatpush.bf16.msra.mxu0 %v4701
    %5234 = vmatpush.bf16.msra.mxu0 %v4696
    %5235 = vmatpush.bf16.msra.mxu0 %v4691
    %5236 = vmatmul.bf16.gmra.mxu0 %v4235
    %v5237 = vpop.f32.mrf.mxu0
    %v5238 = vadd.f32 %v5204, %v5237
    %v5239 = vpop.f32.mrf.mxu0
    %v5240 = vadd.f32 %v5206, %v5239
    %5241 = vmatmul.bf16.gmra.mxu0 %v4238
    %v5242 = vpop.f32.mrf.mxu0
    %v5243 = vadd.f32 %v5209, %v5242
    %v5244 = vpop.f32.mrf.mxu0
    %v5245 = vadd.f32 %v5211, %v5244
    %5246 = vmatmul.bf16.gmra.mxu0 %v4241
    %v5247 = vpop.f32.mrf.mxu0
    %v5248 = vadd.f32 %v5214, %v5247
    %v5249 = vpop.f32.mrf.mxu0
    %v5250 = vadd.f32 %v5216, %v5249
    %5251 = vmatmul.bf16.gmra.mxu0 %v4244
    %v5252 = vpop.f32.mrf.mxu0
    %v5253 = vadd.f32 %v5219, %v5252
    %v5254 = vpop.f32.mrf.mxu0
    %v5255 = vadd.f32 %v5221, %v5254
    %5256 = vmatmul.bf16.gmra.mxu0 %v4247
    %v5257 = vpop.f32.mrf.mxu0
    %v5258 = vadd.f32 %v5224, %v5257
    %v5259 = vpop.f32.mrf.mxu0
    %v5260 = vadd.f32 %v5226, %v5259
    %5261 = vdwg.mxu0
    %5262 = vmatpush.bf16.msra.mxu0 %v4766
    %5263 = vmatpush.bf16.msra.mxu0 %v4761
    %5264 = vmatpush.bf16.msra.mxu0 %v4756
    %5265 = vmatpush.bf16.msra.mxu0 %v4751
    %5266 = vmatpush.bf16.msra.mxu0 %v4746
    %5267 = vmatpush.bf16.msra.mxu0 %v4741
    %5268 = vmatpush.bf16.msra.mxu0 %v4736
    %5269 = vmatpush.bf16.msra.mxu0 %v4731
    %5270 = vmatmul.bf16.gmra.mxu0 %v4236
    %v5271 = vpop.f32.mrf.mxu0
    %v5272 = vadd.f32 %v5238, %v5271
    %v5273 = vpop.f32.mrf.mxu0
    %v5274 = vadd.f32 %v5240, %v5273
    %5275 = vmatmul.bf16.gmra.mxu0 %v4239
    %v5276 = vpop.f32.mrf.mxu0
    %v5277 = vadd.f32 %v5243, %v5276
    %v5278 = vpop.f32.mrf.mxu0
    %v5279 = vadd.f32 %v5245, %v5278
    %5280 = vmatmul.bf16.gmra.mxu0 %v4242
    %v5281 = vpop.f32.mrf.mxu0
    %v5282 = vadd.f32 %v5248, %v5281
    %v5283 = vpop.f32.mrf.mxu0
    %v5284 = vadd.f32 %v5250, %v5283
    %5285 = vmatmul.bf16.gmra.mxu0 %v4245
    %v5286 = vpop.f32.mrf.mxu0
    %v5287 = vadd.f32 %v5253, %v5286
    %v5288 = vpop.f32.mrf.mxu0
    %v5289 = vadd.f32 %v5255, %v5288
    %5290 = vmatmul.bf16.gmra.mxu0 %v4248
    %v5291 = vpop.f32.mrf.mxu0
    %v5292 = vadd.f32 %v5258, %v5291
    %v5293 = vpop.f32.mrf.mxu0
    %v5294 = vadd.f32 %v5260, %v5293
    %5295 = vdwg.mxu0
    %5296 = vmatpush.bf16.msra.mxu0 %v4687
    %5297 = vmatpush.bf16.msra.mxu0 %v4682
    %5298 = vmatpush.bf16.msra.mxu0 %v4677
    %5299 = vmatpush.bf16.msra.mxu0 %v4672
    %5300 = vmatpush.bf16.msra.mxu0 %v4667
    %5301 = vmatpush.bf16.msra.mxu0 %v4662
    %5302 = vmatpush.bf16.msra.mxu0 %v4657
    %5303 = vmatpush.bf16.msra.mxu0 %v4652
    %5304 = vmatmul.bf16.gmra.mxu0 %v4234
    %v5305 = vpop.f32.mrf.mxu0
    %v5306 = vadd.f32 %v4205, %v5305
    %v5307 = vpop.f32.mrf.mxu0
    %v5308 = vadd.f32 %v4207, %v5307
    %5309 = vmatmul.bf16.gmra.mxu0 %v4237
    %v5310 = vpop.f32.mrf.mxu0
    %v5311 = vadd.f32 %v4210, %v5310
    %v5312 = vpop.f32.mrf.mxu0
    %v5313 = vadd.f32 %v4212, %v5312
    %5314 = vmatmul.bf16.gmra.mxu0 %v4240
    %v5315 = vpop.f32.mrf.mxu0
    %v5316 = vadd.f32 %v4215, %v5315
    %v5317 = vpop.f32.mrf.mxu0
    %v5318 = vadd.f32 %v4217, %v5317
    %5319 = vmatmul.bf16.gmra.mxu0 %v4243
    %v5320 = vpop.f32.mrf.mxu0
    %v5321 = vadd.f32 %v4220, %v5320
    %v5322 = vpop.f32.mrf.mxu0
    %v5323 = vadd.f32 %v4222, %v5322
    %5324 = vmatmul.bf16.gmra.mxu0 %v4246
    %v5325 = vpop.f32.mrf.mxu0
    %v5326 = vadd.f32 %v4225, %v5325
    %v5327 = vpop.f32.mrf.mxu0
    %v5328 = vadd.f32 %v4227, %v5327
    %5329 = vdwg.mxu0
    %5330 = vmatpush.bf16.msra.mxu0 %v4727
    %5331 = vmatpush.bf16.msra.mxu0 %v4722
    %5332 = vmatpush.bf16.msra.mxu0 %v4717
    %5333 = vmatpush.bf16.msra.mxu0 %v4712
    %5334 = vmatpush.bf16.msra.mxu0 %v4707
    %5335 = vmatpush.bf16.msra.mxu0 %v4702
    %5336 = vmatpush.bf16.msra.mxu0 %v4697
    %5337 = vmatpush.bf16.msra.mxu0 %v4692
    %5338 = vmatmul.bf16.gmra.mxu0 %v4235
    %v5339 = vpop.f32.mrf.mxu0
    %v5340 = vadd.f32 %v5306, %v5339
    %v5341 = vpop.f32.mrf.mxu0
    %v5342 = vadd.f32 %v5308, %v5341
    %5343 = vmatmul.bf16.gmra.mxu0 %v4238
    %v5344 = vpop.f32.mrf.mxu0
    %v5345 = vadd.f32 %v5311, %v5344
    %v5346 = vpop.f32.mrf.mxu0
    %v5347 = vadd.f32 %v5313, %v5346
    %5348 = vmatmul.bf16.gmra.mxu0 %v4241
    %v5349 = vpop.f32.mrf.mxu0
    %v5350 = vadd.f32 %v5316, %v5349
    %v5351 = vpop.f32.mrf.mxu0
    %v5352 = vadd.f32 %v5318, %v5351
    %5353 = vmatmul.bf16.gmra.mxu0 %v4244
    %v5354 = vpop.f32.mrf.mxu0
    %v5355 = vadd.f32 %v5321, %v5354
    %v5356 = vpop.f32.mrf.mxu0
    %v5357 = vadd.f32 %v5323, %v5356
    %5358 = vmatmul.bf16.gmra.mxu0 %v4247
    %v5359 = vpop.f32.mrf.mxu0
    %v5360 = vadd.f32 %v5326, %v5359
    %v5361 = vpop.f32.mrf.mxu0
    %v5362 = vadd.f32 %v5328, %v5361
    %5363 = vdwg.mxu0
    %5364 = vmatpush.bf16.msra.mxu0 %v4767
    %5365 = vmatpush.bf16.msra.mxu0 %v4762
    %5366 = vmatpush.bf16.msra.mxu0 %v4757
    %5367 = vmatpush.bf16.msra.mxu0 %v4752
    %5368 = vmatpush.bf16.msra.mxu0 %v4747
    %5369 = vmatpush.bf16.msra.mxu0 %v4742
    %5370 = vmatpush.bf16.msra.mxu0 %v4737
    %5371 = vmatpush.bf16.msra.mxu0 %v4732
    %5372 = vmatmul.bf16.gmra.mxu0 %v4236
    %v5373 = vpop.f32.mrf.mxu0
    %v5374 = vadd.f32 %v5340, %v5373
    %v5375 = vpop.f32.mrf.mxu0
    %v5376 = vadd.f32 %v5342, %v5375
    %5377 = vmatmul.bf16.gmra.mxu0 %v4239
    %v5378 = vpop.f32.mrf.mxu0
    %v5379 = vadd.f32 %v5345, %v5378
    %v5380 = vpop.f32.mrf.mxu0
    %v5381 = vadd.f32 %v5347, %v5380
    %5382 = vmatmul.bf16.gmra.mxu0 %v4242
    %v5383 = vpop.f32.mrf.mxu0
    %v5384 = vadd.f32 %v5350, %v5383
    %v5385 = vpop.f32.mrf.mxu0
    %v5386 = vadd.f32 %v5352, %v5385
    %5387 = vmatmul.bf16.gmra.mxu0 %v4245
    %v5388 = vpop.f32.mrf.mxu0
    %v5389 = vadd.f32 %v5355, %v5388
    %v5390 = vpop.f32.mrf.mxu0
    %v5391 = vadd.f32 %v5357, %v5390
    %5392 = vmatmul.bf16.gmra.mxu0 %v4248
    %v5393 = vpop.f32.mrf.mxu0
    %v5394 = vadd.f32 %v5360, %v5393
    %v5395 = vpop.f32.mrf.mxu0
    %v5396 = vadd.f32 %v5362, %v5395
    %5397 = vdwg.mxu0
    %s5398 = scalar_lea.vmem [#allocation7], 1920
    %v5399 = vld [vmem:[%s5398] sm:$0xff]
    %v5400 = vld [vmem:[%s5398 + $0x8] sm:$0xff]
    %v5401 = vld [vmem:[%s5398 + $0x10] sm:$0xf]
    %v5402 = vld [vmem:[%s5398 + $0x14] sm:$0xff]
    %v5403 = vld [vmem:[%s5398 + $0x1c] sm:$0xff]
    %v5404 = vld [vmem:[%s5398 + $0x24] sm:$0xf]
    %v5405 = vld [vmem:[%s5398 + $0x28] sm:$0xff]
    %v5406 = vld [vmem:[%s5398 + $0x30] sm:$0xff]
    %v5407 = vld [vmem:[%s5398 + $0x38] sm:$0xf]
    %v5408 = vld [vmem:[%s5398 + $0x3c] sm:$0xff]
    %v5409 = vld [vmem:[%s5398 + $0x44] sm:$0xff]
    %v5410 = vld [vmem:[%s5398 + $0x4c] sm:$0xf]
    %v5411 = vld [vmem:[%s5398 + $0x50] sm:$0xff]
    %v5412 = vld [vmem:[%s5398 + $0x58] sm:$0xff]
    %v5413 = vld [vmem:[%s5398 + $0x60] sm:$0xf]
    %v5414 = vld [vmem:[%s5398 + $0x64] sm:$0xff]
    %v5415 = vld [vmem:[%s5398 + $0x6c] sm:$0xff]
    %v5416 = vld [vmem:[%s5398 + $0x74] sm:$0xf]
    %v5417 = vld [vmem:[%s5398 + $0x78] sm:$0xff]
    %v5418 = vld [vmem:[%s5398 + $0x80] sm:$0xff]
    %v5419 = vld [vmem:[%s5398 + $0x88] sm:$0xf]
    %v5420 = vld [vmem:[%s5398 + $0x8c] sm:$0xff]
    %v5421 = vld [vmem:[%s5398 + $0x94] sm:$0xff]
    %v5422 = vld [vmem:[%s5398 + $0x9c] sm:$0xf]
    %v5423 = vld [vmem:[%s5398 + $0xa0] sm:$0xff]
    %v5424 = vld [vmem:[%s5398 + $0xa8] sm:$0xff]
    %v5425 = vld [vmem:[%s5398 + $0xb0] sm:$0xf]
    %v5426 = vld [vmem:[%s5398 + $0xb4] sm:$0xff]
    %v5427 = vld [vmem:[%s5398 + $0xbc] sm:$0xff]
    %v5428 = vld [vmem:[%s5398 + $0xc4] sm:$0xf]
    %v5429 = vld [vmem:[%s5398 + $0xc8] sm:$0xff]
    %v5430 = vld [vmem:[%s5398 + $0xd0] sm:$0xff]
    %v5431 = vld [vmem:[%s5398 + $0xd8] sm:$0xf]
    %v5432 = vld [vmem:[%s5398 + $0xdc] sm:$0xff]
    %v5433 = vld [vmem:[%s5398 + $0xe4] sm:$0xff]
    %v5434 = vld [vmem:[%s5398 + $0xec] sm:$0xf]
    %v5435 = vld [vmem:[%s5398 + $0xf0] sm:$0xff]
    %v5436 = vld [vmem:[%s5398 + $0xf8] sm:$0xff]
    %v5437 = vld [vmem:[%s5398 + $0x100] sm:$0xf]
    %v5438 = vld [vmem:[%s5398 + $0x104] sm:$0xff]
    %v5439 = vld [vmem:[%s5398 + $0x10c] sm:$0xff]
    %v5440 = vld [vmem:[%s5398 + $0x114] sm:$0xf]
    %v5441 = vld [vmem:[%s5398 + $0x118] sm:$0xff]
    %v5442 = vld [vmem:[%s5398 + $0x120] sm:$0xff]
    %v5443 = vld [vmem:[%s5398 + $0x128] sm:$0xf]
    %v5444 = vld [vmem:[%s5398 + $0x12c] sm:$0xff]
    %v5445 = vld [vmem:[%s5398 + $0x134] sm:$0xff]
    %v5446 = vld [vmem:[%s5398 + $0x13c] sm:$0xf]
    %v5447 = vld [vmem:[%s5398 + $0x140] sm:$0xff]
    %v5448 = vld [vmem:[%s5398 + $0x148] sm:$0xff]
    %v5449 = vld [vmem:[%s5398 + $0x150] sm:$0xf]
    %v5450 = vld [vmem:[%s5398 + $0x154] sm:$0xff]
    %v5451 = vld [vmem:[%s5398 + $0x15c] sm:$0xff]
    %v5452 = vld [vmem:[%s5398 + $0x164] sm:$0xf]
    %v5453 = vld [vmem:[%s5398 + $0x168] sm:$0xff]
    %v5454 = vld [vmem:[%s5398 + $0x170] sm:$0xff]
    %v5455 = vld [vmem:[%s5398 + $0x178] sm:$0xf]
    %v5456 = vld [vmem:[%s5398 + $0x17c] sm:$0xff]
    %v5457 = vld [vmem:[%s5398 + $0x184] sm:$0xff]
    %v5458 = vld [vmem:[%s5398 + $0x18c] sm:$0xf]
    %v5459 = vld [vmem:[%s5398 + $0x190] sm:$0xff]
    %v5460 = vld [vmem:[%s5398 + $0x198] sm:$0xff]
    %v5461 = vld [vmem:[%s5398 + $0x1a0] sm:$0xf]
    %v5462 = vld [vmem:[%s5398 + $0x1a4] sm:$0xff]
    %v5463 = vld [vmem:[%s5398 + $0x1ac] sm:$0xff]
    %v5464 = vld [vmem:[%s5398 + $0x1b4] sm:$0xf]
    %v5465 = vld [vmem:[%s5398 + $0x1b8] sm:$0xff]
    %v5466 = vld [vmem:[%s5398 + $0x1c0] sm:$0xff]
    %v5467 = vld [vmem:[%s5398 + $0x1c8] sm:$0xf]
    %v5468 = vld [vmem:[%s5398 + $0x1cc] sm:$0xff]
    %v5469 = vld [vmem:[%s5398 + $0x1d4] sm:$0xff]
    %v5470 = vld [vmem:[%s5398 + $0x1dc] sm:$0xf]
    %v5471 = vld [vmem:[%s5398 + $0x1e0] sm:$0xff]
    %v5472 = vld [vmem:[%s5398 + $0x1e8] sm:$0xff]
    %v5473 = vld [vmem:[%s5398 + $0x1f0] sm:$0xf]
    %v5474 = vld [vmem:[%s5398 + $0x1f4] sm:$0xff]
    %v5475 = vld [vmem:[%s5398 + $0x1fc] sm:$0xff]
    %v5476 = vld [vmem:[%s5398 + $0x204] sm:$0xf]
    %v5477 = vld [vmem:[%s5398 + $0x208] sm:$0xff]
    %v5478 = vld [vmem:[%s5398 + $0x210] sm:$0xff]
    %v5479 = vld [vmem:[%s5398 + $0x218] sm:$0xf]
    %v5480 = vld [vmem:[%s5398 + $0x21c] sm:$0xff]
    %v5481 = vld [vmem:[%s5398 + $0x224] sm:$0xff]
    %v5482 = vld [vmem:[%s5398 + $0x22c] sm:$0xf]
    %v5483 = vld [vmem:[%s5398 + $0x230] sm:$0xff]
    %v5484 = vld [vmem:[%s5398 + $0x238] sm:$0xff]
    %v5485 = vld [vmem:[%s5398 + $0x240] sm:$0xf]
    %v5486 = vld [vmem:[%s5398 + $0x244] sm:$0xff]
    %v5487 = vld [vmem:[%s5398 + $0x24c] sm:$0xff]
    %v5488 = vld [vmem:[%s5398 + $0x254] sm:$0xf]
    %v5489 = vld [vmem:[%s5398 + $0x258] sm:$0xff]
    %v5490 = vld [vmem:[%s5398 + $0x260] sm:$0xff]
    %v5491 = vld [vmem:[%s5398 + $0x268] sm:$0xf]
    %v5492 = vld [vmem:[%s5398 + $0x26c] sm:$0xff]
    %v5493 = vld [vmem:[%s5398 + $0x274] sm:$0xff]
    %v5494 = vld [vmem:[%s5398 + $0x27c] sm:$0xf]
    %v5495 = vld [vmem:[%s5398 + $0x280] sm:$0xff]
    %v5496 = vld [vmem:[%s5398 + $0x288] sm:$0xff]
    %v5497 = vld [vmem:[%s5398 + $0x290] sm:$0xf]
    %v5498 = vld [vmem:[%s5398 + $0x294] sm:$0xff]
    %v5499 = vld [vmem:[%s5398 + $0x29c] sm:$0xff]
    %v5500 = vld [vmem:[%s5398 + $0x2a4] sm:$0xf]
    %v5501 = vld [vmem:[%s5398 + $0x2a8] sm:$0xff]
    %v5502 = vld [vmem:[%s5398 + $0x2b0] sm:$0xff]
    %v5503 = vld [vmem:[%s5398 + $0x2b8] sm:$0xf]
    %v5504 = vld [vmem:[%s5398 + $0x2bc] sm:$0xff]
    %v5505 = vld [vmem:[%s5398 + $0x2c4] sm:$0xff]
    %v5506 = vld [vmem:[%s5398 + $0x2cc] sm:$0xf]
    %v5507 = vld [vmem:[%s5398 + $0x2d0] sm:$0xff]
    %v5508 = vld [vmem:[%s5398 + $0x2d8] sm:$0xff]
    %v5509 = vld [vmem:[%s5398 + $0x2e0] sm:$0xf]
    %v5510 = vld [vmem:[%s5398 + $0x2e4] sm:$0xff]
    %v5511 = vld [vmem:[%s5398 + $0x2ec] sm:$0xff]
    %v5512 = vld [vmem:[%s5398 + $0x2f4] sm:$0xf]
    %v5513 = vld [vmem:[%s5398 + $0x2f8] sm:$0xff]
    %v5514 = vld [vmem:[%s5398 + $0x300] sm:$0xff]
    %v5515 = vld [vmem:[%s5398 + $0x308] sm:$0xf]
    %v5516 = vld [vmem:[%s5398 + $0x30c] sm:$0xff]
    %v5517 = vld [vmem:[%s5398 + $0x314] sm:$0xff]
    %v5518 = vld [vmem:[%s5398 + $0x31c] sm:$0xf]
    %v5519 = vld [vmem:[%s5398 + $0x320] sm:$0xff]
    %v5520 = vld [vmem:[%s5398 + $0x328] sm:$0xff]
    %v5521 = vld [vmem:[%s5398 + $0x330] sm:$0xf]
    %v5522 = vld [vmem:[%s5398 + $0x334] sm:$0xff]
    %v5523 = vld [vmem:[%s5398 + $0x33c] sm:$0xff]
    %v5524 = vld [vmem:[%s5398 + $0x344] sm:$0xf]
    %v5525 = vld [vmem:[%s5398 + $0x348] sm:$0xff]
    %v5526 = vld [vmem:[%s5398 + $0x350] sm:$0xff]
    %v5527 = vld [vmem:[%s5398 + $0x358] sm:$0xf]
    %v5528 = vld [vmem:[%s5398 + $0x35c] sm:$0xff]
    %v5529 = vld [vmem:[%s5398 + $0x364] sm:$0xff]
    %v5530 = vld [vmem:[%s5398 + $0x36c] sm:$0xf]
    %v5531 = vld [vmem:[%s5398 + $0x370] sm:$0xff]
    %v5532 = vld [vmem:[%s5398 + $0x378] sm:$0xff]
    %v5533 = vld [vmem:[%s5398 + $0x380] sm:$0xf]
    %v5534 = vld [vmem:[%s5398 + $0x384] sm:$0xff]
    %v5535 = vld [vmem:[%s5398 + $0x38c] sm:$0xff]
    %v5536 = vld [vmem:[%s5398 + $0x394] sm:$0xf]
    %v5537 = vld [vmem:[%s5398 + $0x398] sm:$0xff]
    %v5538 = vld [vmem:[%s5398 + $0x3a0] sm:$0xff]
    %v5539 = vld [vmem:[%s5398 + $0x3a8] sm:$0xf]
    %v5540 = vld [vmem:[%s5398 + $0x3ac] sm:$0xff]
    %v5541 = vld [vmem:[%s5398 + $0x3b4] sm:$0xff]
    %v5542 = vld [vmem:[%s5398 + $0x3bc] sm:$0xf]
    %v5545 = vunpack.c.l.b16 %v2724
    %v5546 = vunpack.c.h.b16 %v2724
    %v5547 = vunpack.c.l.b16 %v2725
    %v5548 = vpack.c.b16 %v5545, %v3062
    %v5549 = vpack.c.b16 %v5546, %v3063
    %v5550 = vpack.c.b16 %v5547, %v3064
    %v5698 = vunpack.c.l.b16 %v5399
    %v5699 = vunpack.c.h.b16 %v5399
    %v5700 = vunpack.c.l.b16 %v5400
    %v5701 = vunpack.c.h.b16 %v5400
    %v5702 = vunpack.c.l.b16 %v5401
    %v5703 = vunpack.c.l.b16 %v5402
    %v5704 = vunpack.c.h.b16 %v5402
    %v5705 = vunpack.c.l.b16 %v5403
    %v5706 = vunpack.c.h.b16 %v5403
    %v5707 = vunpack.c.l.b16 %v5404
    %v5708 = vunpack.c.l.b16 %v5405
    %v5709 = vunpack.c.h.b16 %v5405
    %v5710 = vunpack.c.l.b16 %v5406
    %v5711 = vunpack.c.h.b16 %v5406
    %v5712 = vunpack.c.l.b16 %v5407
    %v5713 = vunpack.c.l.b16 %v5408
    %v5714 = vunpack.c.h.b16 %v5408
    %v5715 = vunpack.c.l.b16 %v5409
    %v5716 = vunpack.c.h.b16 %v5409
    %v5717 = vunpack.c.l.b16 %v5410
    %v5718 = vunpack.c.l.b16 %v5411
    %v5719 = vunpack.c.h.b16 %v5411
    %v5720 = vunpack.c.l.b16 %v5412
    %v5721 = vunpack.c.h.b16 %v5412
    %v5722 = vunpack.c.l.b16 %v5413
    %v5723 = vunpack.c.l.b16 %v5414
    %v5724 = vunpack.c.h.b16 %v5414
    %v5725 = vunpack.c.l.b16 %v5415
    %v5726 = vunpack.c.h.b16 %v5415
    %v5727 = vunpack.c.l.b16 %v5416
    %v5728 = vunpack.c.l.b16 %v5417
    %v5729 = vunpack.c.h.b16 %v5417
    %v5730 = vunpack.c.l.b16 %v5418
    %v5731 = vunpack.c.h.b16 %v5418
    %v5732 = vunpack.c.l.b16 %v5419
    %v5733 = vunpack.c.l.b16 %v5420
    %v5734 = vunpack.c.h.b16 %v5420
    %v5735 = vunpack.c.l.b16 %v5421
    %v5736 = vunpack.c.h.b16 %v5421
    %v5737 = vunpack.c.l.b16 %v5422
    %v5738 = vunpack.c.l.b16 %v5423
    %v5739 = vunpack.c.h.b16 %v5423
    %v5740 = vunpack.c.l.b16 %v5424
    %v5741 = vunpack.c.h.b16 %v5424
    %v5742 = vunpack.c.l.b16 %v5425
    %v5743 = vunpack.c.l.b16 %v5426
    %v5744 = vunpack.c.h.b16 %v5426
    %v5745 = vunpack.c.l.b16 %v5427
    %v5746 = vunpack.c.h.b16 %v5427
    %v5747 = vunpack.c.l.b16 %v5428
    %v5748 = vunpack.c.l.b16 %v5429
    %v5749 = vunpack.c.h.b16 %v5429
    %v5750 = vunpack.c.l.b16 %v5430
    %v5751 = vunpack.c.h.b16 %v5430
    %v5752 = vunpack.c.l.b16 %v5431
    %v5753 = vunpack.c.l.b16 %v5432
    %v5754 = vunpack.c.h.b16 %v5432
    %v5755 = vunpack.c.l.b16 %v5433
    %v5756 = vunpack.c.h.b16 %v5433
    %v5757 = vunpack.c.l.b16 %v5434
    %v5758 = vunpack.c.l.b16 %v5435
    %v5759 = vunpack.c.h.b16 %v5435
    %v5760 = vunpack.c.l.b16 %v5436
    %v5761 = vunpack.c.h.b16 %v5436
    %v5762 = vunpack.c.l.b16 %v5437
    %v5763 = vunpack.c.l.b16 %v5438
    %v5764 = vunpack.c.h.b16 %v5438
    %v5765 = vunpack.c.l.b16 %v5439
    %v5766 = vunpack.c.h.b16 %v5439
    %v5767 = vunpack.c.l.b16 %v5440
    %v5768 = vunpack.c.l.b16 %v5441
    %v5769 = vunpack.c.h.b16 %v5441
    %v5770 = vunpack.c.l.b16 %v5442
    %v5771 = vunpack.c.h.b16 %v5442
    %v5772 = vunpack.c.l.b16 %v5443
    %v5773 = vunpack.c.l.b16 %v5444
    %v5774 = vunpack.c.h.b16 %v5444
    %v5775 = vunpack.c.l.b16 %v5445
    %v5776 = vunpack.c.h.b16 %v5445
    %v5777 = vunpack.c.l.b16 %v5446
    %v5778 = vunpack.c.l.b16 %v5447
    %v5779 = vunpack.c.h.b16 %v5447
    %v5780 = vunpack.c.l.b16 %v5448
    %v5781 = vunpack.c.h.b16 %v5448
    %v5782 = vunpack.c.l.b16 %v5449
    %v5783 = vunpack.c.l.b16 %v5450
    %v5784 = vunpack.c.h.b16 %v5450
    %v5785 = vunpack.c.l.b16 %v5451
    %v5786 = vunpack.c.h.b16 %v5451
    %v5787 = vunpack.c.l.b16 %v5452
    %v5788 = vunpack.c.l.b16 %v5453
    %v5789 = vunpack.c.h.b16 %v5453
    %v5790 = vunpack.c.l.b16 %v5454
    %v5791 = vunpack.c.h.b16 %v5454
    %v5792 = vunpack.c.l.b16 %v5455
    %v5793 = vunpack.c.l.b16 %v5456
    %v5794 = vunpack.c.h.b16 %v5456
    %v5795 = vunpack.c.l.b16 %v5457
    %v5796 = vunpack.c.h.b16 %v5457
    %v5797 = vunpack.c.l.b16 %v5458
    %v5798 = vunpack.c.l.b16 %v5459
    %v5799 = vunpack.c.h.b16 %v5459
    %v5800 = vunpack.c.l.b16 %v5460
    %v5801 = vunpack.c.h.b16 %v5460
    %v5802 = vunpack.c.l.b16 %v5461
    %v5803 = vunpack.c.l.b16 %v5462
    %v5804 = vunpack.c.h.b16 %v5462
    %v5805 = vunpack.c.l.b16 %v5463
    %v5806 = vunpack.c.h.b16 %v5463
    %v5807 = vunpack.c.l.b16 %v5464
    %v5808 = vunpack.c.l.b16 %v5465
    %v5809 = vunpack.c.h.b16 %v5465
    %v5810 = vunpack.c.l.b16 %v5466
    %v5811 = vunpack.c.h.b16 %v5466
    %v5812 = vunpack.c.l.b16 %v5467
    %v5813 = vunpack.c.l.b16 %v5468
    %v5814 = vunpack.c.h.b16 %v5468
    %v5815 = vunpack.c.l.b16 %v5469
    %v5816 = vunpack.c.h.b16 %v5469
    %v5817 = vunpack.c.l.b16 %v5470
    %v5818 = vunpack.c.l.b16 %v5471
    %v5819 = vunpack.c.h.b16 %v5471
    %v5820 = vunpack.c.l.b16 %v5472
    %v5821 = vunpack.c.h.b16 %v5472
    %v5822 = vunpack.c.l.b16 %v5473
    %v5823 = vunpack.c.l.b16 %v5474
    %v5824 = vunpack.c.h.b16 %v5474
    %v5825 = vunpack.c.l.b16 %v5475
    %v5826 = vunpack.c.h.b16 %v5475
    %v5827 = vunpack.c.l.b16 %v5476
    %v5828 = vunpack.c.l.b16 %v5477
    %v5829 = vunpack.c.h.b16 %v5477
    %v5830 = vunpack.c.l.b16 %v5478
    %v5831 = vunpack.c.h.b16 %v5478
    %v5832 = vunpack.c.l.b16 %v5479
    %v5833 = vunpack.c.l.b16 %v5480
    %v5834 = vunpack.c.h.b16 %v5480
    %v5835 = vunpack.c.l.b16 %v5481
    %v5836 = vunpack.c.h.b16 %v5481
    %v5837 = vunpack.c.l.b16 %v5482
    %v5838 = vunpack.c.l.b16 %v5483
    %v5839 = vunpack.c.h.b16 %v5483
    %v5840 = vunpack.c.l.b16 %v5484
    %v5841 = vunpack.c.h.b16 %v5484
    %v5842 = vunpack.c.l.b16 %v5485
    %v5843 = vunpack.c.l.b16 %v5486
    %v5844 = vunpack.c.h.b16 %v5486
    %v5845 = vunpack.c.l.b16 %v5487
    %v5846 = vunpack.c.h.b16 %v5487
    %v5847 = vunpack.c.l.b16 %v5488
    %v5848 = vunpack.c.l.b16 %v5489
    %v5849 = vunpack.c.h.b16 %v5489
    %v5850 = vunpack.c.l.b16 %v5490
    %v5851 = vunpack.c.h.b16 %v5490
    %v5852 = vunpack.c.l.b16 %v5491
    %v5853 = vunpack.c.l.b16 %v5492
    %v5854 = vunpack.c.h.b16 %v5492
    %v5855 = vunpack.c.l.b16 %v5493
    %v5856 = vunpack.c.h.b16 %v5493
    %v5857 = vunpack.c.l.b16 %v5494
    %v5858 = vunpack.c.l.b16 %v5495
    %v5859 = vunpack.c.h.b16 %v5495
    %v5860 = vunpack.c.l.b16 %v5496
    %v5861 = vunpack.c.h.b16 %v5496
    %v5862 = vunpack.c.l.b16 %v5497
    %v5863 = vunpack.c.l.b16 %v5498
    %v5864 = vunpack.c.h.b16 %v5498
    %v5865 = vunpack.c.l.b16 %v5499
    %v5866 = vunpack.c.h.b16 %v5499
    %v5867 = vunpack.c.l.b16 %v5500
    %v5868 = vunpack.c.l.b16 %v5501
    %v5869 = vunpack.c.h.b16 %v5501
    %v5870 = vunpack.c.l.b16 %v5502
    %v5871 = vunpack.c.h.b16 %v5502
    %v5872 = vunpack.c.l.b16 %v5503
    %v5873 = vunpack.c.l.b16 %v5504
    %v5874 = vunpack.c.h.b16 %v5504
    %v5875 = vunpack.c.l.b16 %v5505
    %v5876 = vunpack.c.h.b16 %v5505
    %v5877 = vunpack.c.l.b16 %v5506
    %v5878 = vunpack.c.l.b16 %v5507
    %v5879 = vunpack.c.h.b16 %v5507
    %v5880 = vunpack.c.l.b16 %v5508
    %v5881 = vunpack.c.h.b16 %v5508
    %v5882 = vunpack.c.l.b16 %v5509
    %v5883 = vunpack.c.l.b16 %v5510
    %v5884 = vunpack.c.h.b16 %v5510
    %v5885 = vunpack.c.l.b16 %v5511
    %v5886 = vunpack.c.h.b16 %v5511
    %v5887 = vunpack.c.l.b16 %v5512
    %v5888 = vunpack.c.l.b16 %v5513
    %v5889 = vunpack.c.h.b16 %v5513
    %v5890 = vunpack.c.l.b16 %v5514
    %v5891 = vunpack.c.h.b16 %v5514
    %v5892 = vunpack.c.l.b16 %v5515
    %v5893 = vunpack.c.l.b16 %v5516
    %v5894 = vunpack.c.h.b16 %v5516
    %v5895 = vunpack.c.l.b16 %v5517
    %v5896 = vunpack.c.h.b16 %v5517
    %v5897 = vunpack.c.l.b16 %v5518
    %v5898 = vunpack.c.l.b16 %v5519
    %v5899 = vunpack.c.h.b16 %v5519
    %v5900 = vunpack.c.l.b16 %v5520
    %v5901 = vunpack.c.h.b16 %v5520
    %v5902 = vunpack.c.l.b16 %v5521
    %v5903 = vunpack.c.l.b16 %v5522
    %v5904 = vunpack.c.h.b16 %v5522
    %v5905 = vunpack.c.l.b16 %v5523
    %v5906 = vunpack.c.h.b16 %v5523
    %v5907 = vunpack.c.l.b16 %v5524
    %v5908 = vunpack.c.l.b16 %v5525
    %v5909 = vunpack.c.h.b16 %v5525
    %v5910 = vunpack.c.l.b16 %v5526
    %v5911 = vunpack.c.h.b16 %v5526
    %v5912 = vunpack.c.l.b16 %v5527
    %v5913 = vunpack.c.l.b16 %v5528
    %v5914 = vunpack.c.h.b16 %v5528
    %v5915 = vunpack.c.l.b16 %v5529
    %v5916 = vunpack.c.h.b16 %v5529
    %v5917 = vunpack.c.l.b16 %v5530
    %v5918 = vunpack.c.l.b16 %v5531
    %v5919 = vunpack.c.h.b16 %v5531
    %v5920 = vunpack.c.l.b16 %v5532
    %v5921 = vunpack.c.h.b16 %v5532
    %v5922 = vunpack.c.l.b16 %v5533
    %v5923 = vunpack.c.l.b16 %v5534
    %v5924 = vunpack.c.h.b16 %v5534
    %v5925 = vunpack.c.l.b16 %v5535
    %v5926 = vunpack.c.h.b16 %v5535
    %v5927 = vunpack.c.l.b16 %v5536
    %v5928 = vunpack.c.l.b16 %v5537
    %v5929 = vunpack.c.h.b16 %v5537
    %v5930 = vunpack.c.l.b16 %v5538
    %v5931 = vunpack.c.h.b16 %v5538
    %v5932 = vunpack.c.l.b16 %v5539
    %v5933 = vunpack.c.l.b16 %v5540
    %v5934 = vunpack.c.h.b16 %v5540
    %v5935 = vunpack.c.l.b16 %v5541
    %v5936 = vunpack.c.h.b16 %v5541
    %v5937 = vunpack.c.l.b16 %v5542
    %v5938 = vpack.c.b16 %v5703, %v5698
    %v5939 = vpack.c.b16 %v5704, %v5699
    %v5940 = vpack.c.b16 %v5705, %v5700
    %v5941 = vpack.c.b16 %v5706, %v5701
    %v5942 = vpack.c.b16 %v5707, %v5702
    %v5943 = vpack.c.b16 %v5713, %v5708
    %v5944 = vpack.c.b16 %v5714, %v5709
    %v5945 = vpack.c.b16 %v5715, %v5710
    %v5946 = vpack.c.b16 %v5716, %v5711
    %v5947 = vpack.c.b16 %v5717, %v5712
    %v5948 = vpack.c.b16 %v5723, %v5718
    %v5949 = vpack.c.b16 %v5724, %v5719
    %v5950 = vpack.c.b16 %v5725, %v5720
    %v5951 = vpack.c.b16 %v5726, %v5721
    %v5952 = vpack.c.b16 %v5727, %v5722
    %v5953 = vpack.c.b16 %v5733, %v5728
    %v5954 = vpack.c.b16 %v5734, %v5729
    %v5955 = vpack.c.b16 %v5735, %v5730
    %v5956 = vpack.c.b16 %v5736, %v5731
    %v5957 = vpack.c.b16 %v5737, %v5732
    %v5958 = vpack.c.b16 %v5743, %v5738
    %v5959 = vpack.c.b16 %v5744, %v5739
    %v5960 = vpack.c.b16 %v5745, %v5740
    %v5961 = vpack.c.b16 %v5746, %v5741
    %v5962 = vpack.c.b16 %v5747, %v5742
    %v5963 = vpack.c.b16 %v5753, %v5748
    %v5964 = vpack.c.b16 %v5754, %v5749
    %v5965 = vpack.c.b16 %v5755, %v5750
    %v5966 = vpack.c.b16 %v5756, %v5751
    %v5967 = vpack.c.b16 %v5757, %v5752
    %v5968 = vpack.c.b16 %v5763, %v5758
    %v5969 = vpack.c.b16 %v5764, %v5759
    %v5970 = vpack.c.b16 %v5765, %v5760
    %v5971 = vpack.c.b16 %v5766, %v5761
    %v5972 = vpack.c.b16 %v5767, %v5762
    %v5973 = vpack.c.b16 %v5773, %v5768
    %v5974 = vpack.c.b16 %v5774, %v5769
    %v5975 = vpack.c.b16 %v5775, %v5770
    %v5976 = vpack.c.b16 %v5776, %v5771
    %v5977 = vpack.c.b16 %v5777, %v5772
    %v5978 = vpack.c.b16 %v5783, %v5778
    %v5979 = vpack.c.b16 %v5784, %v5779
    %v5980 = vpack.c.b16 %v5785, %v5780
    %v5981 = vpack.c.b16 %v5786, %v5781
    %v5982 = vpack.c.b16 %v5787, %v5782
    %v5983 = vpack.c.b16 %v5793, %v5788
    %v5984 = vpack.c.b16 %v5794, %v5789
    %v5985 = vpack.c.b16 %v5795, %v5790
    %v5986 = vpack.c.b16 %v5796, %v5791
    %v5987 = vpack.c.b16 %v5797, %v5792
    %v5988 = vpack.c.b16 %v5803, %v5798
    %v5989 = vpack.c.b16 %v5804, %v5799
    %v5990 = vpack.c.b16 %v5805, %v5800
    %v5991 = vpack.c.b16 %v5806, %v5801
    %v5992 = vpack.c.b16 %v5807, %v5802
    %v5993 = vpack.c.b16 %v5813, %v5808
    %v5994 = vpack.c.b16 %v5814, %v5809
    %v5995 = vpack.c.b16 %v5815, %v5810
    %v5996 = vpack.c.b16 %v5816, %v5811
    %v5997 = vpack.c.b16 %v5817, %v5812
    %v5998 = vpack.c.b16 %v5823, %v5818
    %v5999 = vpack.c.b16 %v5824, %v5819
    %v6000 = vpack.c.b16 %v5825, %v5820
    %v6001 = vpack.c.b16 %v5826, %v5821
    %v6002 = vpack.c.b16 %v5827, %v5822
    %v6003 = vpack.c.b16 %v5833, %v5828
    %v6004 = vpack.c.b16 %v5834, %v5829
    %v6005 = vpack.c.b16 %v5835, %v5830
    %v6006 = vpack.c.b16 %v5836, %v5831
    %v6007 = vpack.c.b16 %v5837, %v5832
    %v6008 = vpack.c.b16 %v5843, %v5838
    %v6009 = vpack.c.b16 %v5844, %v5839
    %v6010 = vpack.c.b16 %v5845, %v5840
    %v6011 = vpack.c.b16 %v5846, %v5841
    %v6012 = vpack.c.b16 %v5847, %v5842
    %v6013 = vpack.c.b16 %v5853, %v5848
    %v6014 = vpack.c.b16 %v5854, %v5849
    %v6015 = vpack.c.b16 %v5855, %v5850
    %v6016 = vpack.c.b16 %v5856, %v5851
    %v6017 = vpack.c.b16 %v5857, %v5852
    %v6018 = vpack.c.b16 %v5863, %v5858
    %v6019 = vpack.c.b16 %v5864, %v5859
    %v6020 = vpack.c.b16 %v5865, %v5860
    %v6021 = vpack.c.b16 %v5866, %v5861
    %v6022 = vpack.c.b16 %v5867, %v5862
    %v6023 = vpack.c.b16 %v5873, %v5868
    %v6024 = vpack.c.b16 %v5874, %v5869
    %v6025 = vpack.c.b16 %v5875, %v5870
    %v6026 = vpack.c.b16 %v5876, %v5871
    %v6027 = vpack.c.b16 %v5877, %v5872
    %v6028 = vpack.c.b16 %v5883, %v5878
    %v6029 = vpack.c.b16 %v5884, %v5879
    %v6030 = vpack.c.b16 %v5885, %v5880
    %v6031 = vpack.c.b16 %v5886, %v5881
    %v6032 = vpack.c.b16 %v5887, %v5882
    %v6033 = vpack.c.b16 %v5893, %v5888
    %v6034 = vpack.c.b16 %v5894, %v5889
    %v6035 = vpack.c.b16 %v5895, %v5890
    %v6036 = vpack.c.b16 %v5896, %v5891
    %v6037 = vpack.c.b16 %v5897, %v5892
    %v6038 = vpack.c.b16 %v5903, %v5898
    %v6039 = vpack.c.b16 %v5904, %v5899
    %v6040 = vpack.c.b16 %v5905, %v5900
    %v6041 = vpack.c.b16 %v5906, %v5901
    %v6042 = vpack.c.b16 %v5907, %v5902
    %v6043 = vpack.c.b16 %v5913, %v5908
    %v6044 = vpack.c.b16 %v5914, %v5909
    %v6045 = vpack.c.b16 %v5915, %v5910
    %v6046 = vpack.c.b16 %v5916, %v5911
    %v6047 = vpack.c.b16 %v5917, %v5912
    %v6048 = vpack.c.b16 %v5923, %v5918
    %v6049 = vpack.c.b16 %v5924, %v5919
    %v6050 = vpack.c.b16 %v5925, %v5920
    %v6051 = vpack.c.b16 %v5926, %v5921
    %v6052 = vpack.c.b16 %v5927, %v5922
    %v6053 = vpack.c.b16 %v5933, %v5928
    %v6054 = vpack.c.b16 %v5934, %v5929
    %v6055 = vpack.c.b16 %v5935, %v5930
    %v6056 = vpack.c.b16 %v5936, %v5931
    %v6057 = vpack.c.b16 %v5937, %v5932
    %6178 = vmatpush.bf16.msra.mxu0 %v5973
    %6179 = vmatpush.bf16.msra.mxu0 %v5968
    %6180 = vmatpush.bf16.msra.mxu0 %v5963
    %6181 = vmatpush.bf16.msra.mxu0 %v5958
    %6182 = vmatpush.bf16.msra.mxu0 %v5953
    %6183 = vmatpush.bf16.msra.mxu0 %v5948
    %6184 = vmatpush.bf16.msra.mxu0 %v5943
    %6185 = vmatpush.bf16.msra.mxu0 %v5938
    %6186 = vmatmul.bf16.gmra.mxu0 %v4237
    %v6187 = vpop.f32.mrf.mxu0
    %v6188 = vadd.f32 0.0, %v6187
    %v6189 = vpop.f32.mrf.mxu0
    %v6190 = vadd.f32 0.0, %v6189
    %6191 = vmatmul.bf16.gmra.mxu0 %v4240
    %v6192 = vpop.f32.mrf.mxu0
    %v6193 = vadd.f32 0.0, %v6192
    %v6194 = vpop.f32.mrf.mxu0
    %v6195 = vadd.f32 0.0, %v6194
    %6196 = vmatmul.bf16.gmra.mxu0 %v4243
    %v6197 = vpop.f32.mrf.mxu0
    %v6198 = vadd.f32 0.0, %v6197
    %v6199 = vpop.f32.mrf.mxu0
    %v6200 = vadd.f32 0.0, %v6199
    %6201 = vmatmul.bf16.gmra.mxu0 %v4246
    %v6202 = vpop.f32.mrf.mxu0
    %v6203 = vadd.f32 0.0, %v6202
    %v6204 = vpop.f32.mrf.mxu0
    %v6205 = vadd.f32 0.0, %v6204
    %6206 = vmatmul.bf16.gmra.mxu0 %v5548
    %v6207 = vpop.f32.mrf.mxu0
    %v6208 = vadd.f32 0.0, %v6207
    %v6209 = vpop.f32.mrf.mxu0
    %v6210 = vadd.f32 0.0, %v6209
    %6211 = vdwg.mxu0
    %6212 = vmatpush.bf16.msra.mxu0 %v6013
    %6213 = vmatpush.bf16.msra.mxu0 %v6008
    %6214 = vmatpush.bf16.msra.mxu0 %v6003
    %6215 = vmatpush.bf16.msra.mxu0 %v5998
    %6216 = vmatpush.bf16.msra.mxu0 %v5993
    %6217 = vmatpush.bf16.msra.mxu0 %v5988
    %6218 = vmatpush.bf16.msra.mxu0 %v5983
    %6219 = vmatpush.bf16.msra.mxu0 %v5978
    %6220 = vmatmul.bf16.gmra.mxu0 %v4238
    %v6221 = vpop.f32.mrf.mxu0
    %v6222 = vadd.f32 %v6188, %v6221
    %v6223 = vpop.f32.mrf.mxu0
    %v6224 = vadd.f32 %v6190, %v6223
    %6225 = vmatmul.bf16.gmra.mxu0 %v4241
    %v6226 = vpop.f32.mrf.mxu0
    %v6227 = vadd.f32 %v6193, %v6226
    %v6228 = vpop.f32.mrf.mxu0
    %v6229 = vadd.f32 %v6195, %v6228
    %6230 = vmatmul.bf16.gmra.mxu0 %v4244
    %v6231 = vpop.f32.mrf.mxu0
    %v6232 = vadd.f32 %v6198, %v6231
    %v6233 = vpop.f32.mrf.mxu0
    %v6234 = vadd.f32 %v6200, %v6233
    %6235 = vmatmul.bf16.gmra.mxu0 %v4247
    %v6236 = vpop.f32.mrf.mxu0
    %v6237 = vadd.f32 %v6203, %v6236
    %v6238 = vpop.f32.mrf.mxu0
    %v6239 = vadd.f32 %v6205, %v6238
    %6240 = vmatmul.bf16.gmra.mxu0 %v5549
    %v6241 = vpop.f32.mrf.mxu0
    %v6242 = vadd.f32 %v6208, %v6241
    %v6243 = vpop.f32.mrf.mxu0
    %v6244 = vadd.f32 %v6210, %v6243
    %6245 = vdwg.mxu0
    %6246 = vmatpush.bf16.msra.mxu0 %v6053
    %6247 = vmatpush.bf16.msra.mxu0 %v6048
    %6248 = vmatpush.bf16.msra.mxu0 %v6043
    %6249 = vmatpush.bf16.msra.mxu0 %v6038
    %6250 = vmatpush.bf16.msra.mxu0 %v6033
    %6251 = vmatpush.bf16.msra.mxu0 %v6028
    %6252 = vmatpush.bf16.msra.mxu0 %v6023
    %6253 = vmatpush.bf16.msra.mxu0 %v6018
    %6254 = vmatmul.bf16.gmra.mxu0 %v4239
    %v6255 = vpop.f32.mrf.mxu0
    %v6256 = vadd.f32 %v6222, %v6255
    %v6257 = vpop.f32.mrf.mxu0
    %v6258 = vadd.f32 %v6224, %v6257
    %6259 = vmatmul.bf16.gmra.mxu0 %v4242
    %v6260 = vpop.f32.mrf.mxu0
    %v6261 = vadd.f32 %v6227, %v6260
    %v6262 = vpop.f32.mrf.mxu0
    %v6263 = vadd.f32 %v6229, %v6262
    %6264 = vmatmul.bf16.gmra.mxu0 %v4245
    %v6265 = vpop.f32.mrf.mxu0
    %v6266 = vadd.f32 %v6232, %v6265
    %v6267 = vpop.f32.mrf.mxu0
    %v6268 = vadd.f32 %v6234, %v6267
    %6269 = vmatmul.bf16.gmra.mxu0 %v4248
    %v6270 = vpop.f32.mrf.mxu0
    %v6271 = vadd.f32 %v6237, %v6270
    %v6272 = vpop.f32.mrf.mxu0
    %v6273 = vadd.f32 %v6239, %v6272
    %6274 = vmatmul.bf16.gmra.mxu0 %v5550
    %v6275 = vpop.f32.mrf.mxu0
    %v6276 = vadd.f32 %v6242, %v6275
    %v6277 = vpop.f32.mrf.mxu0
    %v6278 = vadd.f32 %v6244, %v6277
    %6279 = vdwg.mxu0
    %6280 = vmatpush.bf16.msra.mxu0 %v5974
    %6281 = vmatpush.bf16.msra.mxu0 %v5969
    %6282 = vmatpush.bf16.msra.mxu0 %v5964
    %6283 = vmatpush.bf16.msra.mxu0 %v5959
    %6284 = vmatpush.bf16.msra.mxu0 %v5954
    %6285 = vmatpush.bf16.msra.mxu0 %v5949
    %6286 = vmatpush.bf16.msra.mxu0 %v5944
    %6287 = vmatpush.bf16.msra.mxu0 %v5939
    %6288 = vmatmul.bf16.gmra.mxu0 %v4237
    %v6289 = vpop.f32.mrf.mxu0
    %v6290 = vadd.f32 0.0, %v6289
    %v6291 = vpop.f32.mrf.mxu0
    %v6292 = vadd.f32 0.0, %v6291
    %6293 = vmatmul.bf16.gmra.mxu0 %v4240
    %v6294 = vpop.f32.mrf.mxu0
    %v6295 = vadd.f32 0.0, %v6294
    %v6296 = vpop.f32.mrf.mxu0
    %v6297 = vadd.f32 0.0, %v6296
    %6298 = vmatmul.bf16.gmra.mxu0 %v4243
    %v6299 = vpop.f32.mrf.mxu0
    %v6300 = vadd.f32 0.0, %v6299
    %v6301 = vpop.f32.mrf.mxu0
    %v6302 = vadd.f32 0.0, %v6301
    %6303 = vmatmul.bf16.gmra.mxu0 %v4246
    %v6304 = vpop.f32.mrf.mxu0
    %v6305 = vadd.f32 0.0, %v6304
    %v6306 = vpop.f32.mrf.mxu0
    %v6307 = vadd.f32 0.0, %v6306
    %6308 = vmatmul.bf16.gmra.mxu0 %v5548
    %v6309 = vpop.f32.mrf.mxu0
    %v6310 = vadd.f32 0.0, %v6309
    %v6311 = vpop.f32.mrf.mxu0
    %v6312 = vadd.f32 0.0, %v6311
    %6313 = vdwg.mxu0
    %6314 = vmatpush.bf16.msra.mxu0 %v6014
    %6315 = vmatpush.bf16.msra.mxu0 %v6009
    %6316 = vmatpush.bf16.msra.mxu0 %v6004
    %6317 = vmatpush.bf16.msra.mxu0 %v5999
    %6318 = vmatpush.bf16.msra.mxu0 %v5994
    %6319 = vmatpush.bf16.msra.mxu0 %v5989
    %6320 = vmatpush.bf16.msra.mxu0 %v5984
    %6321 = vmatpush.bf16.msra.mxu0 %v5979
    %6322 = vmatmul.bf16.gmra.mxu0 %v4238
    %v6323 = vpop.f32.mrf.mxu0
    %v6324 = vadd.f32 %v6290, %v6323
    %v6325 = vpop.f32.mrf.mxu0
    %v6326 = vadd.f32 %v6292, %v6325
    %6327 = vmatmul.bf16.gmra.mxu0 %v4241
    %v6328 = vpop.f32.mrf.mxu0
    %v6329 = vadd.f32 %v6295, %v6328
    %v6330 = vpop.f32.mrf.mxu0
    %v6331 = vadd.f32 %v6297, %v6330
    %6332 = vmatmul.bf16.gmra.mxu0 %v4244
    %v6333 = vpop.f32.mrf.mxu0
    %v6334 = vadd.f32 %v6300, %v6333
    %v6335 = vpop.f32.mrf.mxu0
    %v6336 = vadd.f32 %v6302, %v6335
    %6337 = vmatmul.bf16.gmra.mxu0 %v4247
    %v6338 = vpop.f32.mrf.mxu0
    %v6339 = vadd.f32 %v6305, %v6338
    %v6340 = vpop.f32.mrf.mxu0
    %v6341 = vadd.f32 %v6307, %v6340
    %6342 = vmatmul.bf16.gmra.mxu0 %v5549
    %v6343 = vpop.f32.mrf.mxu0
    %v6344 = vadd.f32 %v6310, %v6343
    %v6345 = vpop.f32.mrf.mxu0
    %v6346 = vadd.f32 %v6312, %v6345
    %6347 = vdwg.mxu0
    %6348 = vmatpush.bf16.msra.mxu0 %v6054
    %6349 = vmatpush.bf16.msra.mxu0 %v6049
    %6350 = vmatpush.bf16.msra.mxu0 %v6044
    %6351 = vmatpush.bf16.msra.mxu0 %v6039
    %6352 = vmatpush.bf16.msra.mxu0 %v6034
    %6353 = vmatpush.bf16.msra.mxu0 %v6029
    %6354 = vmatpush.bf16.msra.mxu0 %v6024
    %6355 = vmatpush.bf16.msra.mxu0 %v6019
    %6356 = vmatmul.bf16.gmra.mxu0 %v4239
    %v6357 = vpop.f32.mrf.mxu0
    %v6358 = vadd.f32 %v6324, %v6357
    %v6359 = vpop.f32.mrf.mxu0
    %v6360 = vadd.f32 %v6326, %v6359
    %6361 = vmatmul.bf16.gmra.mxu0 %v4242
    %v6362 = vpop.f32.mrf.mxu0
    %v6363 = vadd.f32 %v6329, %v6362
    %v6364 = vpop.f32.mrf.mxu0
    %v6365 = vadd.f32 %v6331, %v6364
    %6366 = vmatmul.bf16.gmra.mxu0 %v4245
    %v6367 = vpop.f32.mrf.mxu0
    %v6368 = vadd.f32 %v6334, %v6367
    %v6369 = vpop.f32.mrf.mxu0
    %v6370 = vadd.f32 %v6336, %v6369
    %6371 = vmatmul.bf16.gmra.mxu0 %v4248
    %v6372 = vpop.f32.mrf.mxu0
    %v6373 = vadd.f32 %v6339, %v6372
    %v6374 = vpop.f32.mrf.mxu0
    %v6375 = vadd.f32 %v6341, %v6374
    %6376 = vmatmul.bf16.gmra.mxu0 %v5550
    %v6377 = vpop.f32.mrf.mxu0
    %v6378 = vadd.f32 %v6344, %v6377
    %v6379 = vpop.f32.mrf.mxu0
    %v6380 = vadd.f32 %v6346, %v6379
    %6381 = vdwg.mxu0
    %6382 = vmatpush.bf16.msra.mxu0 %v5975
    %6383 = vmatpush.bf16.msra.mxu0 %v5970
    %6384 = vmatpush.bf16.msra.mxu0 %v5965
    %6385 = vmatpush.bf16.msra.mxu0 %v5960
    %6386 = vmatpush.bf16.msra.mxu0 %v5955
    %6387 = vmatpush.bf16.msra.mxu0 %v5950
    %6388 = vmatpush.bf16.msra.mxu0 %v5945
    %6389 = vmatpush.bf16.msra.mxu0 %v5940
    %6390 = vmatmul.bf16.gmra.mxu0 %v4237
    %v6391 = vpop.f32.mrf.mxu0
    %v6392 = vadd.f32 0.0, %v6391
    %v6393 = vpop.f32.mrf.mxu0
    %v6394 = vadd.f32 0.0, %v6393
    %6395 = vmatmul.bf16.gmra.mxu0 %v4240
    %v6396 = vpop.f32.mrf.mxu0
    %v6397 = vadd.f32 0.0, %v6396
    %v6398 = vpop.f32.mrf.mxu0
    %v6399 = vadd.f32 0.0, %v6398
    %6400 = vmatmul.bf16.gmra.mxu0 %v4243
    %v6401 = vpop.f32.mrf.mxu0
    %v6402 = vadd.f32 0.0, %v6401
    %v6403 = vpop.f32.mrf.mxu0
    %v6404 = vadd.f32 0.0, %v6403
    %6405 = vmatmul.bf16.gmra.mxu0 %v4246
    %v6406 = vpop.f32.mrf.mxu0
    %v6407 = vadd.f32 0.0, %v6406
    %v6408 = vpop.f32.mrf.mxu0
    %v6409 = vadd.f32 0.0, %v6408
    %6410 = vmatmul.bf16.gmra.mxu0 %v5548
    %v6411 = vpop.f32.mrf.mxu0
    %v6412 = vadd.f32 0.0, %v6411
    %v6413 = vpop.f32.mrf.mxu0
    %v6414 = vadd.f32 0.0, %v6413
    %6415 = vdwg.mxu0
    %6416 = vmatpush.bf16.msra.mxu0 %v6015
    %6417 = vmatpush.bf16.msra.mxu0 %v6010
    %6418 = vmatpush.bf16.msra.mxu0 %v6005
    %6419 = vmatpush.bf16.msra.mxu0 %v6000
    %6420 = vmatpush.bf16.msra.mxu0 %v5995
    %6421 = vmatpush.bf16.msra.mxu0 %v5990
    %6422 = vmatpush.bf16.msra.mxu0 %v5985
    %6423 = vmatpush.bf16.msra.mxu0 %v5980
    %6424 = vmatmul.bf16.gmra.mxu0 %v4238
    %v6425 = vpop.f32.mrf.mxu0
    %v6426 = vadd.f32 %v6392, %v6425
    %v6427 = vpop.f32.mrf.mxu0
    %v6428 = vadd.f32 %v6394, %v6427
    %6429 = vmatmul.bf16.gmra.mxu0 %v4241
    %v6430 = vpop.f32.mrf.mxu0
    %v6431 = vadd.f32 %v6397, %v6430
    %v6432 = vpop.f32.mrf.mxu0
    %v6433 = vadd.f32 %v6399, %v6432
    %6434 = vmatmul.bf16.gmra.mxu0 %v4244
    %v6435 = vpop.f32.mrf.mxu0
    %v6436 = vadd.f32 %v6402, %v6435
    %v6437 = vpop.f32.mrf.mxu0
    %v6438 = vadd.f32 %v6404, %v6437
    %6439 = vmatmul.bf16.gmra.mxu0 %v4247
    %v6440 = vpop.f32.mrf.mxu0
    %v6441 = vadd.f32 %v6407, %v6440
    %v6442 = vpop.f32.mrf.mxu0
    %v6443 = vadd.f32 %v6409, %v6442
    %6444 = vmatmul.bf16.gmra.mxu0 %v5549
    %v6445 = vpop.f32.mrf.mxu0
    %v6446 = vadd.f32 %v6412, %v6445
    %v6447 = vpop.f32.mrf.mxu0
    %v6448 = vadd.f32 %v6414, %v6447
    %6449 = vdwg.mxu0
    %6450 = vmatpush.bf16.msra.mxu0 %v6055
    %6451 = vmatpush.bf16.msra.mxu0 %v6050
    %6452 = vmatpush.bf16.msra.mxu0 %v6045
    %6453 = vmatpush.bf16.msra.mxu0 %v6040
    %6454 = vmatpush.bf16.msra.mxu0 %v6035
    %6455 = vmatpush.bf16.msra.mxu0 %v6030
    %6456 = vmatpush.bf16.msra.mxu0 %v6025
    %6457 = vmatpush.bf16.msra.mxu0 %v6020
    %6458 = vmatmul.bf16.gmra.mxu0 %v4239
    %v6459 = vpop.f32.mrf.mxu0
    %v6460 = vadd.f32 %v6426, %v6459
    %v6461 = vpop.f32.mrf.mxu0
    %v6462 = vadd.f32 %v6428, %v6461
    %6463 = vmatmul.bf16.gmra.mxu0 %v4242
    %v6464 = vpop.f32.mrf.mxu0
    %v6465 = vadd.f32 %v6431, %v6464
    %v6466 = vpop.f32.mrf.mxu0
    %v6467 = vadd.f32 %v6433, %v6466
    %6468 = vmatmul.bf16.gmra.mxu0 %v4245
    %v6469 = vpop.f32.mrf.mxu0
    %v6470 = vadd.f32 %v6436, %v6469
    %v6471 = vpop.f32.mrf.mxu0
    %v6472 = vadd.f32 %v6438, %v6471
    %6473 = vmatmul.bf16.gmra.mxu0 %v4248
    %v6474 = vpop.f32.mrf.mxu0
    %v6475 = vadd.f32 %v6441, %v6474
    %v6476 = vpop.f32.mrf.mxu0
    %v6477 = vadd.f32 %v6443, %v6476
    %6478 = vmatmul.bf16.gmra.mxu0 %v5550
    %v6479 = vpop.f32.mrf.mxu0
    %v6480 = vadd.f32 %v6446, %v6479
    %v6481 = vpop.f32.mrf.mxu0
    %v6482 = vadd.f32 %v6448, %v6481
    %6483 = vdwg.mxu0
    %6484 = vmatpush.bf16.msra.mxu0 %v5976
    %6485 = vmatpush.bf16.msra.mxu0 %v5971
    %6486 = vmatpush.bf16.msra.mxu0 %v5966
    %6487 = vmatpush.bf16.msra.mxu0 %v5961
    %6488 = vmatpush.bf16.msra.mxu0 %v5956
    %6489 = vmatpush.bf16.msra.mxu0 %v5951
    %6490 = vmatpush.bf16.msra.mxu0 %v5946
    %6491 = vmatpush.bf16.msra.mxu0 %v5941
    %6492 = vmatmul.bf16.gmra.mxu0 %v4237
    %v6493 = vpop.f32.mrf.mxu0
    %v6494 = vadd.f32 0.0, %v6493
    %v6495 = vpop.f32.mrf.mxu0
    %v6496 = vadd.f32 0.0, %v6495
    %6497 = vmatmul.bf16.gmra.mxu0 %v4240
    %v6498 = vpop.f32.mrf.mxu0
    %v6499 = vadd.f32 0.0, %v6498
    %v6500 = vpop.f32.mrf.mxu0
    %v6501 = vadd.f32 0.0, %v6500
    %6502 = vmatmul.bf16.gmra.mxu0 %v4243
    %v6503 = vpop.f32.mrf.mxu0
    %v6504 = vadd.f32 0.0, %v6503
    %v6505 = vpop.f32.mrf.mxu0
    %v6506 = vadd.f32 0.0, %v6505
    %6507 = vmatmul.bf16.gmra.mxu0 %v4246
    %v6508 = vpop.f32.mrf.mxu0
    %v6509 = vadd.f32 0.0, %v6508
    %v6510 = vpop.f32.mrf.mxu0
    %v6511 = vadd.f32 0.0, %v6510
    %6512 = vmatmul.bf16.gmra.mxu0 %v5548
    %v6513 = vpop.f32.mrf.mxu0
    %v6514 = vadd.f32 0.0, %v6513
    %v6515 = vpop.f32.mrf.mxu0
    %v6516 = vadd.f32 0.0, %v6515
    %6517 = vdwg.mxu0
    %6518 = vmatpush.bf16.msra.mxu0 %v6016
    %6519 = vmatpush.bf16.msra.mxu0 %v6011
    %6520 = vmatpush.bf16.msra.mxu0 %v6006
    %6521 = vmatpush.bf16.msra.mxu0 %v6001
    %6522 = vmatpush.bf16.msra.mxu0 %v5996
    %6523 = vmatpush.bf16.msra.mxu0 %v5991
    %6524 = vmatpush.bf16.msra.mxu0 %v5986
    %6525 = vmatpush.bf16.msra.mxu0 %v5981
    %6526 = vmatmul.bf16.gmra.mxu0 %v4238
    %v6527 = vpop.f32.mrf.mxu0
    %v6528 = vadd.f32 %v6494, %v6527
    %v6529 = vpop.f32.mrf.mxu0
    %v6530 = vadd.f32 %v6496, %v6529
    %6531 = vmatmul.bf16.gmra.mxu0 %v4241
    %v6532 = vpop.f32.mrf.mxu0
    %v6533 = vadd.f32 %v6499, %v6532
    %v6534 = vpop.f32.mrf.mxu0
    %v6535 = vadd.f32 %v6501, %v6534
    %6536 = vmatmul.bf16.gmra.mxu0 %v4244
    %v6537 = vpop.f32.mrf.mxu0
    %v6538 = vadd.f32 %v6504, %v6537
    %v6539 = vpop.f32.mrf.mxu0
    %v6540 = vadd.f32 %v6506, %v6539
    %6541 = vmatmul.bf16.gmra.mxu0 %v4247
    %v6542 = vpop.f32.mrf.mxu0
    %v6543 = vadd.f32 %v6509, %v6542
    %v6544 = vpop.f32.mrf.mxu0
    %v6545 = vadd.f32 %v6511, %v6544
    %6546 = vmatmul.bf16.gmra.mxu0 %v5549
    %v6547 = vpop.f32.mrf.mxu0
    %v6548 = vadd.f32 %v6514, %v6547
    %v6549 = vpop.f32.mrf.mxu0
    %v6550 = vadd.f32 %v6516, %v6549
    %6551 = vdwg.mxu0
    %6552 = vmatpush.bf16.msra.mxu0 %v6056
    %6553 = vmatpush.bf16.msra.mxu0 %v6051
    %6554 = vmatpush.bf16.msra.mxu0 %v6046
    %6555 = vmatpush.bf16.msra.mxu0 %v6041
    %6556 = vmatpush.bf16.msra.mxu0 %v6036
    %6557 = vmatpush.bf16.msra.mxu0 %v6031
    %6558 = vmatpush.bf16.msra.mxu0 %v6026
    %6559 = vmatpush.bf16.msra.mxu0 %v6021
    %6560 = vmatmul.bf16.gmra.mxu0 %v4239
    %v6561 = vpop.f32.mrf.mxu0
    %v6562 = vadd.f32 %v6528, %v6561
    %v6563 = vpop.f32.mrf.mxu0
    %v6564 = vadd.f32 %v6530, %v6563
    %6565 = vmatmul.bf16.gmra.mxu0 %v4242
    %v6566 = vpop.f32.mrf.mxu0
    %v6567 = vadd.f32 %v6533, %v6566
    %v6568 = vpop.f32.mrf.mxu0
    %v6569 = vadd.f32 %v6535, %v6568
    %6570 = vmatmul.bf16.gmra.mxu0 %v4245
    %v6571 = vpop.f32.mrf.mxu0
    %v6572 = vadd.f32 %v6538, %v6571
    %v6573 = vpop.f32.mrf.mxu0
    %v6574 = vadd.f32 %v6540, %v6573
    %6575 = vmatmul.bf16.gmra.mxu0 %v4248
    %v6576 = vpop.f32.mrf.mxu0
    %v6577 = vadd.f32 %v6543, %v6576
    %v6578 = vpop.f32.mrf.mxu0
    %v6579 = vadd.f32 %v6545, %v6578
    %6580 = vmatmul.bf16.gmra.mxu0 %v5550
    %v6581 = vpop.f32.mrf.mxu0
    %v6582 = vadd.f32 %v6548, %v6581
    %v6583 = vpop.f32.mrf.mxu0
    %v6584 = vadd.f32 %v6550, %v6583
    %6585 = vdwg.mxu0
    %6586 = vmatpush.bf16.msra.mxu0 %v5977
    %6587 = vmatpush.bf16.msra.mxu0 %v5972
    %6588 = vmatpush.bf16.msra.mxu0 %v5967
    %6589 = vmatpush.bf16.msra.mxu0 %v5962
    %6590 = vmatpush.bf16.msra.mxu0 %v5957
    %6591 = vmatpush.bf16.msra.mxu0 %v5952
    %6592 = vmatpush.bf16.msra.mxu0 %v5947
    %6593 = vmatpush.bf16.msra.mxu0 %v5942
    %6594 = vmatmul.bf16.gmra.mxu0 %v4237
    %v6595 = vpop.f32.mrf.mxu0
    %v6596 = vadd.f32 0.0, %v6595
    %v6597 = vpop.f32.mrf.mxu0
    %v6598 = vadd.f32 0.0, %v6597
    %6599 = vmatmul.bf16.gmra.mxu0 %v4240
    %v6600 = vpop.f32.mrf.mxu0
    %v6601 = vadd.f32 0.0, %v6600
    %v6602 = vpop.f32.mrf.mxu0
    %v6603 = vadd.f32 0.0, %v6602
    %6604 = vmatmul.bf16.gmra.mxu0 %v4243
    %v6605 = vpop.f32.mrf.mxu0
    %v6606 = vadd.f32 0.0, %v6605
    %v6607 = vpop.f32.mrf.mxu0
    %v6608 = vadd.f32 0.0, %v6607
    %6609 = vmatmul.bf16.gmra.mxu0 %v4246
    %v6610 = vpop.f32.mrf.mxu0
    %v6611 = vadd.f32 0.0, %v6610
    %v6612 = vpop.f32.mrf.mxu0
    %v6613 = vadd.f32 0.0, %v6612
    %6614 = vmatmul.bf16.gmra.mxu0 %v5548
    %v6615 = vpop.f32.mrf.mxu0
    %v6616 = vadd.f32 0.0, %v6615
    %v6617 = vpop.f32.mrf.mxu0
    %v6618 = vadd.f32 0.0, %v6617
    %6619 = vdwg.mxu0
    %6620 = vmatpush.bf16.msra.mxu0 %v6017
    %6621 = vmatpush.bf16.msra.mxu0 %v6012
    %6622 = vmatpush.bf16.msra.mxu0 %v6007
    %6623 = vmatpush.bf16.msra.mxu0 %v6002
    %6624 = vmatpush.bf16.msra.mxu0 %v5997
    %6625 = vmatpush.bf16.msra.mxu0 %v5992
    %6626 = vmatpush.bf16.msra.mxu0 %v5987
    %6627 = vmatpush.bf16.msra.mxu0 %v5982
    %6628 = vmatmul.bf16.gmra.mxu0 %v4238
    %v6629 = vpop.f32.mrf.mxu0
    %v6630 = vadd.f32 %v6596, %v6629
    %v6631 = vpop.f32.mrf.mxu0
    %v6632 = vadd.f32 %v6598, %v6631
    %6633 = vmatmul.bf16.gmra.mxu0 %v4241
    %v6634 = vpop.f32.mrf.mxu0
    %v6635 = vadd.f32 %v6601, %v6634
    %v6636 = vpop.f32.mrf.mxu0
    %v6637 = vadd.f32 %v6603, %v6636
    %6638 = vmatmul.bf16.gmra.mxu0 %v4244
    %v6639 = vpop.f32.mrf.mxu0
    %v6640 = vadd.f32 %v6606, %v6639
    %v6641 = vpop.f32.mrf.mxu0
    %v6642 = vadd.f32 %v6608, %v6641
    %6643 = vmatmul.bf16.gmra.mxu0 %v4247
    %v6644 = vpop.f32.mrf.mxu0
    %v6645 = vadd.f32 %v6611, %v6644
    %v6646 = vpop.f32.mrf.mxu0
    %v6647 = vadd.f32 %v6613, %v6646
    %6648 = vmatmul.bf16.gmra.mxu0 %v5549
    %v6649 = vpop.f32.mrf.mxu0
    %v6650 = vadd.f32 %v6616, %v6649
    %v6651 = vpop.f32.mrf.mxu0
    %v6652 = vadd.f32 %v6618, %v6651
    %6653 = vdwg.mxu0
    %6654 = vmatpush.bf16.msra.mxu0 %v6057
    %6655 = vmatpush.bf16.msra.mxu0 %v6052
    %6656 = vmatpush.bf16.msra.mxu0 %v6047
    %6657 = vmatpush.bf16.msra.mxu0 %v6042
    %6658 = vmatpush.bf16.msra.mxu0 %v6037
    %6659 = vmatpush.bf16.msra.mxu0 %v6032
    %6660 = vmatpush.bf16.msra.mxu0 %v6027
    %6661 = vmatpush.bf16.msra.mxu0 %v6022
    %6662 = vmatmul.bf16.gmra.mxu0 %v4239
    %v6663 = vpop.f32.mrf.mxu0
    %v6664 = vadd.f32 %v6630, %v6663
    %v6665 = vpop.f32.mrf.mxu0
    %v6666 = vadd.f32 %v6632, %v6665
    %6667 = vmatmul.bf16.gmra.mxu0 %v4242
    %v6668 = vpop.f32.mrf.mxu0
    %v6669 = vadd.f32 %v6635, %v6668
    %v6670 = vpop.f32.mrf.mxu0
    %v6671 = vadd.f32 %v6637, %v6670
    %6672 = vmatmul.bf16.gmra.mxu0 %v4245
    %v6673 = vpop.f32.mrf.mxu0
    %v6674 = vadd.f32 %v6640, %v6673
    %v6675 = vpop.f32.mrf.mxu0
    %v6676 = vadd.f32 %v6642, %v6675
    %6677 = vmatmul.bf16.gmra.mxu0 %v4248
    %v6678 = vpop.f32.mrf.mxu0
    %v6679 = vadd.f32 %v6645, %v6678
    %v6680 = vpop.f32.mrf.mxu0
    %v6681 = vadd.f32 %v6647, %v6680
    %6682 = vmatmul.bf16.gmra.mxu0 %v5550
    %v6683 = vpop.f32.mrf.mxu0
    %v6684 = vadd.f32 %v6650, %v6683
    %v6685 = vpop.f32.mrf.mxu0
    %v6686 = vadd.f32 %v6652, %v6685
    %6687 = vdwg.mxu0
    %v6688 = vadd.f32 %v4966, %v6256
    %v6689 = vadd.f32 %v5068, %v6358
    %v6690 = vadd.f32 %v5170, %v6460
    %v6691 = vadd.f32 %v5272, %v6562
    %v6692 = vadd.f32 %v5374, %v6664
    %v6693 = vadd.f32 %v4968, %v6258
    %v6694 = vadd.f32 %v5070, %v6360
    %v6695 = vadd.f32 %v5172, %v6462
    %v6696 = vadd.f32 %v5274, %v6564
    %v6697 = vadd.f32 %v5376, %v6666
    %v6698 = vadd.f32 %v4971, %v6261
    %v6699 = vadd.f32 %v5073, %v6363
    %v6700 = vadd.f32 %v5175, %v6465
    %v6701 = vadd.f32 %v5277, %v6567
    %v6702 = vadd.f32 %v5379, %v6669
    %v6703 = vadd.f32 %v4973, %v6263
    %v6704 = vadd.f32 %v5075, %v6365
    %v6705 = vadd.f32 %v5177, %v6467
    %v6706 = vadd.f32 %v5279, %v6569
    %v6707 = vadd.f32 %v5381, %v6671
    %v6708 = vadd.f32 %v4976, %v6266
    %v6709 = vadd.f32 %v5078, %v6368
    %v6710 = vadd.f32 %v5180, %v6470
    %v6711 = vadd.f32 %v5282, %v6572
    %v6712 = vadd.f32 %v5384, %v6674
    %v6713 = vadd.f32 %v4978, %v6268
    %v6714 = vadd.f32 %v5080, %v6370
    %v6715 = vadd.f32 %v5182, %v6472
    %v6716 = vadd.f32 %v5284, %v6574
    %v6717 = vadd.f32 %v5386, %v6676
    %v6718 = vadd.f32 %v4981, %v6271
    %v6719 = vadd.f32 %v5083, %v6373
    %v6720 = vadd.f32 %v5185, %v6475
    %v6721 = vadd.f32 %v5287, %v6577
    %v6722 = vadd.f32 %v5389, %v6679
    %v6723 = vadd.f32 %v4983, %v6273
    %v6724 = vadd.f32 %v5085, %v6375
    %v6725 = vadd.f32 %v5187, %v6477
    %v6726 = vadd.f32 %v5289, %v6579
    %v6727 = vadd.f32 %v5391, %v6681
    %v6728 = vadd.f32 %v4986, %v6276
    %v6729 = vadd.f32 %v5088, %v6378
    %v6730 = vadd.f32 %v5190, %v6480
    %v6731 = vadd.f32 %v5292, %v6582
    %v6732 = vadd.f32 %v5394, %v6684
    %v6733 = vadd.f32 %v4988, %v6278
    %v6734 = vadd.f32 %v5090, %v6380
    %v6735 = vadd.f32 %v5192, %v6482
    %v6736 = vadd.f32 %v5294, %v6584
    %v6737 = vadd.f32 %v5396, %v6686
    %v6738 = vld [vmem:[#allocation9] sm:$0x1f]
    %v6740 = vperm.slane %v6738, 0
    %v6741 = vperm.slane %v6738, 1
    %v6742 = vperm.slane %v6738, 2
    %v6743 = vperm.slane %v6738, 3
    %v6744 = vperm.slane %v6738, 4
    %v6750 = vadd.f32 %v6688, %v6740
    %v6751 = vadd.f32 %v6689, %v6741
    %v6752 = vadd.f32 %v6690, %v6742
    %v6753 = vadd.f32 %v6691, %v6743
    %v6754 = vadd.f32 %v6692, %v6744
    %v6755 = vadd.f32 %v6693, %v6740
    %v6756 = vadd.f32 %v6694, %v6741
    %v6757 = vadd.f32 %v6695, %v6742
    %v6758 = vadd.f32 %v6696, %v6743
    %v6759 = vadd.f32 %v6697, %v6744
    %v6760 = vadd.f32 %v6698, %v6740
    %v6761 = vadd.f32 %v6699, %v6741
    %v6762 = vadd.f32 %v6700, %v6742
    %v6763 = vadd.f32 %v6701, %v6743
    %v6764 = vadd.f32 %v6702, %v6744
    %v6765 = vadd.f32 %v6703, %v6740
    %v6766 = vadd.f32 %v6704, %v6741
    %v6767 = vadd.f32 %v6705, %v6742
    %v6768 = vadd.f32 %v6706, %v6743
    %v6769 = vadd.f32 %v6707, %v6744
    %v6770 = vadd.f32 %v6708, %v6740
    %v6771 = vadd.f32 %v6709, %v6741
    %v6772 = vadd.f32 %v6710, %v6742
    %v6773 = vadd.f32 %v6711, %v6743
    %v6774 = vadd.f32 %v6712, %v6744
    %v6775 = vadd.f32 %v6713, %v6740
    %v6776 = vadd.f32 %v6714, %v6741
    %v6777 = vadd.f32 %v6715, %v6742
    %v6778 = vadd.f32 %v6716, %v6743
    %v6779 = vadd.f32 %v6717, %v6744
    %v6780 = vadd.f32 %v6718, %v6740
    %v6781 = vadd.f32 %v6719, %v6741
    %v6782 = vadd.f32 %v6720, %v6742
    %v6783 = vadd.f32 %v6721, %v6743
    %v6784 = vadd.f32 %v6722, %v6744
    %v6785 = vadd.f32 %v6723, %v6740
    %v6786 = vadd.f32 %v6724, %v6741
    %v6787 = vadd.f32 %v6725, %v6742
    %v6788 = vadd.f32 %v6726, %v6743
    %v6789 = vadd.f32 %v6727, %v6744
    %v6790 = vadd.f32 %v6728, %v6740
    %v6791 = vadd.f32 %v6729, %v6741
    %v6792 = vadd.f32 %v6730, %v6742
    %v6793 = vadd.f32 %v6731, %v6743
    %v6794 = vadd.f32 %v6732, %v6744
    %v6795 = vadd.f32 %v6733, %v6740
    %v6796 = vadd.f32 %v6734, %v6741
    %v6797 = vadd.f32 %v6735, %v6742
    %v6798 = vadd.f32 %v6736, %v6743
    %v6799 = vadd.f32 %v6737, %v6744
    %v6800 = vmax.f32 %v6750, 0.0
    %v6801 = vmax.f32 %v6751, 0.0
    %v6802 = vmax.f32 %v6752, 0.0
    %v6803 = vmax.f32 %v6753, 0.0
    %v6804 = vmax.f32 %v6754, 0.0
    %v6805 = vmax.f32 %v6755, 0.0
    %v6806 = vmax.f32 %v6756, 0.0
    %v6807 = vmax.f32 %v6757, 0.0
    %v6808 = vmax.f32 %v6758, 0.0
    %v6809 = vmax.f32 %v6759, 0.0
    %v6810 = vmax.f32 %v6760, 0.0
    %v6811 = vmax.f32 %v6761, 0.0
    %v6812 = vmax.f32 %v6762, 0.0
    %v6813 = vmax.f32 %v6763, 0.0
    %v6814 = vmax.f32 %v6764, 0.0
    %v6815 = vmax.f32 %v6765, 0.0
    %v6816 = vmax.f32 %v6766, 0.0
    %v6817 = vmax.f32 %v6767, 0.0
    %v6818 = vmax.f32 %v6768, 0.0
    %v6819 = vmax.f32 %v6769, 0.0
    %v6820 = vmax.f32 %v6770, 0.0
    %v6821 = vmax.f32 %v6771, 0.0
    %v6822 = vmax.f32 %v6772, 0.0
    %v6823 = vmax.f32 %v6773, 0.0
    %v6824 = vmax.f32 %v6774, 0.0
    %v6825 = vmax.f32 %v6775, 0.0
    %v6826 = vmax.f32 %v6776, 0.0
    %v6827 = vmax.f32 %v6777, 0.0
    %v6828 = vmax.f32 %v6778, 0.0
    %v6829 = vmax.f32 %v6779, 0.0
    %v6830 = vmax.f32 %v6780, 0.0
    %v6831 = vmax.f32 %v6781, 0.0
    %v6832 = vmax.f32 %v6782, 0.0
    %v6833 = vmax.f32 %v6783, 0.0
    %v6834 = vmax.f32 %v6784, 0.0
    %v6835 = vmax.f32 %v6785, 0.0
    %v6836 = vmax.f32 %v6786, 0.0
    %v6837 = vmax.f32 %v6787, 0.0
    %v6838 = vmax.f32 %v6788, 0.0
    %v6839 = vmax.f32 %v6789, 0.0
    %v6840 = vmax.f32 %v6790, 0.0
    %v6841 = vmax.f32 %v6791, 0.0
    %v6842 = vmax.f32 %v6792, 0.0
    %v6843 = vmax.f32 %v6793, 0.0
    %v6844 = vmax.f32 %v6794, 0.0
    %v6845 = vmax.f32 %v6795, 0.0
    %v6846 = vmax.f32 %v6796, 0.0
    %v6847 = vmax.f32 %v6797, 0.0
    %v6848 = vmax.f32 %v6798, 0.0
    %v6849 = vmax.f32 %v6799, 0.0
    %v6850 = vadd.f32 %v6800, %v6805
    %v6851 = vadd.f32 %v6801, %v6806
    %v6852 = vadd.f32 %v6802, %v6807
    %v6853 = vadd.f32 %v6803, %v6808
    %v6854 = vadd.f32 %v6804, %v6809
    %v6855 = vadd.f32 %v6810, %v6815
    %v6856 = vadd.f32 %v6811, %v6816
    %v6857 = vadd.f32 %v6812, %v6817
    %v6858 = vadd.f32 %v6813, %v6818
    %v6859 = vadd.f32 %v6814, %v6819
    %v6860 = vadd.f32 %v6820, %v6825
    %v6861 = vadd.f32 %v6821, %v6826
    %v6862 = vadd.f32 %v6822, %v6827
    %v6863 = vadd.f32 %v6823, %v6828
    %v6864 = vadd.f32 %v6824, %v6829
    %v6865 = vadd.f32 %v6830, %v6835
    %v6866 = vadd.f32 %v6831, %v6836
    %v6867 = vadd.f32 %v6832, %v6837
    %v6868 = vadd.f32 %v6833, %v6838
    %v6869 = vadd.f32 %v6834, %v6839
    %v6870 = vadd.f32 %v6840, %v6845
    %v6871 = vadd.f32 %v6841, %v6846
    %v6872 = vadd.f32 %v6842, %v6847
    %v6873 = vadd.f32 %v6843, %v6848
    %v6874 = vadd.f32 %v6844, %v6849
    %v6875 = vpack.c.bf16 %v6850, %v6850
    %v6876 = vpack.c.bf16 %v6851, %v6851
    %v6877 = vpack.c.bf16 %v6852, %v6852
    %v6878 = vpack.c.bf16 %v6853, %v6853
    %v6879 = vpack.c.bf16 %v6854, %v6854
    %v6880 = vpack.c.bf16 %v6855, %v6855
    %v6881 = vpack.c.bf16 %v6856, %v6856
    %v6882 = vpack.c.bf16 %v6857, %v6857
    %v6883 = vpack.c.bf16 %v6858, %v6858
    %v6884 = vpack.c.bf16 %v6859, %v6859
    %v6885 = vpack.c.bf16 %v6860, %v6860
    %v6886 = vpack.c.bf16 %v6861, %v6861
    %v6887 = vpack.c.bf16 %v6862, %v6862
    %v6888 = vpack.c.bf16 %v6863, %v6863
    %v6889 = vpack.c.bf16 %v6864, %v6864
    %v6890 = vpack.c.bf16 %v6865, %v6865
    %v6891 = vpack.c.bf16 %v6866, %v6866
    %v6892 = vpack.c.bf16 %v6867, %v6867
    %v6893 = vpack.c.bf16 %v6868, %v6868
    %v6894 = vpack.c.bf16 %v6869, %v6869
    %v6895 = vpack.c.bf16 %v6870, %v6870
    %v6896 = vpack.c.bf16 %v6871, %v6871
    %v6897 = vpack.c.bf16 %v6872, %v6872
    %v6898 = vpack.c.bf16 %v6873, %v6873
    %v6899 = vpack.c.bf16 %v6874, %v6874
    %v6900 = vld [vmem:[#allocation10] sm:$0xff]
    %v6901 = vld [vmem:[#allocation10 + $0x8] sm:$0xff]
    %v6902 = vld [vmem:[#allocation10 + $0x10] sm:$0xff]
    %v6903 = vld [vmem:[#allocation10 + $0x18] sm:$0xff]
    %v6904 = vld [vmem:[#allocation10 + $0x20] sm:$0xff]
    %v6905 = vld [vmem:[#allocation10 + $0x28] sm:$0xff]
    %v6906 = vld [vmem:[#allocation10 + $0x30] sm:$0xff]
    %v6907 = vld [vmem:[#allocation10 + $0x38] sm:$0xff]
    %v6908 = vld [vmem:[#allocation10 + $0x40] sm:$0xff]
    %v6909 = vld [vmem:[#allocation10 + $0x48] sm:$0xff]
    %v6910 = vld [vmem:[#allocation10 + $0x50] sm:$0xff]
    %v6911 = vld [vmem:[#allocation10 + $0x58] sm:$0xff]
    %v6912 = vld [vmem:[#allocation10 + $0x60] sm:$0xff]
    %v6913 = vld [vmem:[#allocation10 + $0x68] sm:$0xff]
    %v6914 = vld [vmem:[#allocation10 + $0x70] sm:$0xff]
    %v6915 = vld [vmem:[#allocation10 + $0x78] sm:$0xff]
    %v6916 = vld [vmem:[#allocation10 + $0x80] sm:$0xff]
    %v6917 = vld [vmem:[#allocation10 + $0x88] sm:$0xff]
    %v6918 = vld [vmem:[#allocation10 + $0x90] sm:$0xff]
    %v6919 = vld [vmem:[#allocation10 + $0x98] sm:$0xff]
    %v6920 = vld [vmem:[#allocation10 + $0xa0] sm:$0xff]
    %v6921 = vld [vmem:[#allocation10 + $0xa8] sm:$0xff]
    %v6922 = vld [vmem:[#allocation10 + $0xb0] sm:$0xff]
    %v6923 = vld [vmem:[#allocation10 + $0xb8] sm:$0xff]
    %v6924 = vld [vmem:[#allocation10 + $0xc0] sm:$0xff]
    %v6925 = vld [vmem:[#allocation10 + $0xc8] sm:$0xff]
    %v6926 = vld [vmem:[#allocation10 + $0xd0] sm:$0xff]
    %v6927 = vld [vmem:[#allocation10 + $0xd8] sm:$0xff]
    %v6928 = vld [vmem:[#allocation10 + $0xe0] sm:$0xff]
    %v6929 = vld [vmem:[#allocation10 + $0xe8] sm:$0xff]
    %v6930 = vld [vmem:[#allocation10 + $0xf0] sm:$0xff]
    %v6931 = vld [vmem:[#allocation10 + $0xf8] sm:$0xff]
    %v6932 = vld [vmem:[#allocation10 + $0x100] sm:$0xff]
    %v6933 = vld [vmem:[#allocation10 + $0x108] sm:$0xff]
    %v6934 = vld [vmem:[#allocation10 + $0x110] sm:$0xff]
    %v6935 = vld [vmem:[#allocation10 + $0x118] sm:$0xff]
    %v6936 = vld [vmem:[#allocation10 + $0x120] sm:$0xff]
    %v6937 = vld [vmem:[#allocation10 + $0x128] sm:$0xff]
    %v6938 = vld [vmem:[#allocation10 + $0x130] sm:$0xff]
    %v6939 = vld [vmem:[#allocation10 + $0x138] sm:$0xff]
    %v6940 = vld [vmem:[#allocation10 + $0x140] sm:$0xff]
    %v6941 = vld [vmem:[#allocation10 + $0x148] sm:$0xff]
    %v6942 = vld [vmem:[#allocation10 + $0x150] sm:$0xff]
    %v6943 = vld [vmem:[#allocation10 + $0x158] sm:$0xff]
    %v6944 = vld [vmem:[#allocation10 + $0x160] sm:$0xff]
    %v6945 = vld [vmem:[#allocation10 + $0x168] sm:$0xff]
    %v6946 = vld [vmem:[#allocation10 + $0x170] sm:$0xff]
    %v6947 = vld [vmem:[#allocation10 + $0x178] sm:$0xff]
    %v6948 = vld [vmem:[#allocation10 + $0x180] sm:$0xff]
    %v6949 = vld [vmem:[#allocation10 + $0x188] sm:$0xff]
    %v6950 = vld [vmem:[#allocation10 + $0x190] sm:$0xff]
    %v6951 = vld [vmem:[#allocation10 + $0x198] sm:$0xff]
    %v6952 = vld [vmem:[#allocation10 + $0x1a0] sm:$0xff]
    %v6953 = vld [vmem:[#allocation10 + $0x1a8] sm:$0xff]
    %v6954 = vld [vmem:[#allocation10 + $0x1b0] sm:$0xff]
    %v6955 = vld [vmem:[#allocation10 + $0x1b8] sm:$0xff]
    %v6956 = vld [vmem:[#allocation10 + $0x1c0] sm:$0xff]
    %v6957 = vld [vmem:[#allocation10 + $0x1c8] sm:$0xff]
    %v6958 = vld [vmem:[#allocation10 + $0x1d0] sm:$0xff]
    %v6959 = vld [vmem:[#allocation10 + $0x1d8] sm:$0xff]
    %v6960 = vld [vmem:[#allocation10 + $0x1e0] sm:$0xff]
    %v6961 = vld [vmem:[#allocation10 + $0x1e8] sm:$0xff]
    %v6962 = vld [vmem:[#allocation10 + $0x1f0] sm:$0xff]
    %v6963 = vld [vmem:[#allocation10 + $0x1f8] sm:$0xff]
    %v6964 = vld [vmem:[#allocation10 + $0x200] sm:$0xff]
    %v6965 = vld [vmem:[#allocation10 + $0x208] sm:$0xff]
    %v6966 = vld [vmem:[#allocation10 + $0x210] sm:$0xff]
    %v6967 = vld [vmem:[#allocation10 + $0x218] sm:$0xff]
    %v6968 = vld [vmem:[#allocation10 + $0x220] sm:$0xff]
    %v6969 = vld [vmem:[#allocation10 + $0x228] sm:$0xff]
    %v6970 = vld [vmem:[#allocation10 + $0x230] sm:$0xff]
    %v6971 = vld [vmem:[#allocation10 + $0x238] sm:$0xff]
    %v6972 = vld [vmem:[#allocation10 + $0x240] sm:$0xff]
    %v6973 = vld [vmem:[#allocation10 + $0x248] sm:$0xff]
    %v6974 = vld [vmem:[#allocation10 + $0x250] sm:$0xff]
    %v6975 = vld [vmem:[#allocation10 + $0x258] sm:$0xff]
    %v6976 = vld [vmem:[#allocation10 + $0x260] sm:$0xff]
    %v6977 = vld [vmem:[#allocation10 + $0x268] sm:$0xff]
    %v6978 = vld [vmem:[#allocation10 + $0x270] sm:$0xff]
    %v6979 = vld [vmem:[#allocation10 + $0x278] sm:$0xff]
    %v6980 = vld [vmem:[#allocation10 + $0x280] sm:$0xff]
    %v6981 = vld [vmem:[#allocation10 + $0x288] sm:$0xff]
    %v6982 = vld [vmem:[#allocation10 + $0x290] sm:$0xff]
    %v6983 = vld [vmem:[#allocation10 + $0x298] sm:$0xff]
    %v6984 = vld [vmem:[#allocation10 + $0x2a0] sm:$0xff]
    %v6985 = vld [vmem:[#allocation10 + $0x2a8] sm:$0xff]
    %v6986 = vld [vmem:[#allocation10 + $0x2b0] sm:$0xff]
    %v6987 = vld [vmem:[#allocation10 + $0x2b8] sm:$0xff]
    %v6988 = vld [vmem:[#allocation10 + $0x2c0] sm:$0xff]
    %v6989 = vld [vmem:[#allocation10 + $0x2c8] sm:$0xff]
    %v6990 = vld [vmem:[#allocation10 + $0x2d0] sm:$0xff]
    %v6991 = vld [vmem:[#allocation10 + $0x2d8] sm:$0xff]
    %v6992 = vld [vmem:[#allocation10 + $0x2e0] sm:$0xff]
    %v6993 = vld [vmem:[#allocation10 + $0x2e8] sm:$0xff]
    %v6994 = vld [vmem:[#allocation10 + $0x2f0] sm:$0xff]
    %v6995 = vld [vmem:[#allocation10 + $0x2f8] sm:$0xff]
    %v6996 = vld [vmem:[#allocation10 + $0x300] sm:$0xff]
    %v6997 = vld [vmem:[#allocation10 + $0x308] sm:$0xff]
    %v6998 = vld [vmem:[#allocation10 + $0x310] sm:$0xff]
    %v6999 = vld [vmem:[#allocation10 + $0x318] sm:$0xff]
    %v7000 = vld [vmem:[#allocation10 + $0x320] sm:$0xff]
    %v7001 = vld [vmem:[#allocation10 + $0x328] sm:$0xff]
    %v7002 = vld [vmem:[#allocation10 + $0x330] sm:$0xff]
    %v7003 = vld [vmem:[#allocation10 + $0x338] sm:$0xff]
    %v7004 = vld [vmem:[#allocation10 + $0x340] sm:$0xff]
    %v7005 = vld [vmem:[#allocation10 + $0x348] sm:$0xff]
    %v7006 = vld [vmem:[#allocation10 + $0x350] sm:$0xff]
    %v7007 = vld [vmem:[#allocation10 + $0x358] sm:$0xff]
    %v7008 = vld [vmem:[#allocation10 + $0x360] sm:$0xff]
    %v7009 = vld [vmem:[#allocation10 + $0x368] sm:$0xff]
    %v7010 = vld [vmem:[#allocation10 + $0x370] sm:$0xff]
    %v7011 = vld [vmem:[#allocation10 + $0x378] sm:$0xff]
    %v7012 = vld [vmem:[#allocation10 + $0x380] sm:$0xff]
    %v7013 = vld [vmem:[#allocation10 + $0x388] sm:$0xff]
    %v7014 = vld [vmem:[#allocation10 + $0x390] sm:$0xff]
    %v7015 = vld [vmem:[#allocation10 + $0x398] sm:$0xff]
    %v7016 = vld [vmem:[#allocation10 + $0x3a0] sm:$0xff]
    %v7017 = vld [vmem:[#allocation10 + $0x3a8] sm:$0xff]
    %v7018 = vld [vmem:[#allocation10 + $0x3b0] sm:$0xff]
    %v7019 = vld [vmem:[#allocation10 + $0x3b8] sm:$0xff]
    %v7020 = vld [vmem:[#allocation10 + $0x3c0] sm:$0xff]
    %v7021 = vld [vmem:[#allocation10 + $0x3c8] sm:$0xff]
    %v7022 = vld [vmem:[#allocation10 + $0x3d0] sm:$0xff]
    %v7023 = vld [vmem:[#allocation10 + $0x3d8] sm:$0xff]
    %v7024 = vld [vmem:[#allocation10 + $0x3e0] sm:$0xff]
    %v7025 = vld [vmem:[#allocation10 + $0x3e8] sm:$0xff]
    %v7026 = vld [vmem:[#allocation10 + $0x3f0] sm:$0xff]
    %v7027 = vld [vmem:[#allocation10 + $0x3f8] sm:$0xff]
    %v7028 = vld [vmem:[#allocation10 + $0x400] sm:$0xff]
    %v7029 = vld [vmem:[#allocation10 + $0x408] sm:$0xff]
    %v7030 = vld [vmem:[#allocation10 + $0x410] sm:$0xff]
    %v7031 = vld [vmem:[#allocation10 + $0x418] sm:$0xff]
    %v7032 = vld [vmem:[#allocation10 + $0x420] sm:$0xff]
    %v7033 = vld [vmem:[#allocation10 + $0x428] sm:$0xff]
    %v7034 = vld [vmem:[#allocation10 + $0x430] sm:$0xff]
    %v7035 = vld [vmem:[#allocation10 + $0x438] sm:$0xff]
    %v7036 = vld [vmem:[#allocation10 + $0x440] sm:$0xff]
    %v7037 = vld [vmem:[#allocation10 + $0x448] sm:$0xff]
    %v7038 = vld [vmem:[#allocation10 + $0x450] sm:$0xff]
    %v7039 = vld [vmem:[#allocation10 + $0x458] sm:$0xff]
    %v7040 = vld [vmem:[#allocation10 + $0x460] sm:$0xff]
    %v7041 = vld [vmem:[#allocation10 + $0x468] sm:$0xff]
    %v7042 = vld [vmem:[#allocation10 + $0x470] sm:$0xff]
    %v7043 = vld [vmem:[#allocation10 + $0x478] sm:$0xff]
    %v7044 = vld [vmem:[#allocation10 + $0x480] sm:$0xff]
    %v7045 = vld [vmem:[#allocation10 + $0x488] sm:$0xff]
    %v7046 = vld [vmem:[#allocation10 + $0x490] sm:$0xff]
    %v7047 = vld [vmem:[#allocation10 + $0x498] sm:$0xff]
    %v7048 = vld [vmem:[#allocation10 + $0x4a0] sm:$0xff]
    %v7049 = vld [vmem:[#allocation10 + $0x4a8] sm:$0xff]
    %v7050 = vld [vmem:[#allocation10 + $0x4b0] sm:$0xff]
    %v7051 = vld [vmem:[#allocation10 + $0x4b8] sm:$0xff]
    %v7052 = vld [vmem:[#allocation10 + $0x4c0] sm:$0xff]
    %v7053 = vld [vmem:[#allocation10 + $0x4c8] sm:$0xff]
    %v7054 = vld [vmem:[#allocation10 + $0x4d0] sm:$0xff]
    %v7055 = vld [vmem:[#allocation10 + $0x4d8] sm:$0xff]
    %v7056 = vld [vmem:[#allocation10 + $0x4e0] sm:$0xff]
    %v7057 = vld [vmem:[#allocation10 + $0x4e8] sm:$0xff]
    %v7058 = vld [vmem:[#allocation10 + $0x4f0] sm:$0xff]
    %v7059 = vld [vmem:[#allocation10 + $0x4f8] sm:$0xff]
    %v7060 = vld [vmem:[#allocation10 + $0x500] sm:$0xff]
    %v7061 = vld [vmem:[#allocation10 + $0x508] sm:$0xff]
    %v7062 = vld [vmem:[#allocation10 + $0x510] sm:$0xff]
    %v7063 = vld [vmem:[#allocation10 + $0x518] sm:$0xff]
    %v7064 = vld [vmem:[#allocation10 + $0x520] sm:$0xff]
    %v7065 = vld [vmem:[#allocation10 + $0x528] sm:$0xff]
    %v7066 = vld [vmem:[#allocation10 + $0x530] sm:$0xff]
    %v7067 = vld [vmem:[#allocation10 + $0x538] sm:$0xff]
    %v7068 = vld [vmem:[#allocation10 + $0x540] sm:$0xff]
    %v7069 = vld [vmem:[#allocation10 + $0x548] sm:$0xff]
    %v7070 = vld [vmem:[#allocation10 + $0x550] sm:$0xff]
    %v7071 = vld [vmem:[#allocation10 + $0x558] sm:$0xff]
    %v7072 = vld [vmem:[#allocation10 + $0x560] sm:$0xff]
    %v7073 = vld [vmem:[#allocation10 + $0x568] sm:$0xff]
    %v7074 = vld [vmem:[#allocation10 + $0x570] sm:$0xff]
    %v7075 = vld [vmem:[#allocation10 + $0x578] sm:$0xff]
    %v7076 = vld [vmem:[#allocation10 + $0x580] sm:$0xff]
    %v7077 = vld [vmem:[#allocation10 + $0x588] sm:$0xff]
    %v7078 = vld [vmem:[#allocation10 + $0x590] sm:$0xff]
    %v7079 = vld [vmem:[#allocation10 + $0x598] sm:$0xff]
    %v7080 = vld [vmem:[#allocation10 + $0x5a0] sm:$0xff]
    %v7081 = vld [vmem:[#allocation10 + $0x5a8] sm:$0xff]
    %v7082 = vld [vmem:[#allocation10 + $0x5b0] sm:$0xff]
    %v7083 = vld [vmem:[#allocation10 + $0x5b8] sm:$0xff]
    %v7084 = vld [vmem:[#allocation10 + $0x5c0] sm:$0xff]
    %v7085 = vld [vmem:[#allocation10 + $0x5c8] sm:$0xff]
    %v7086 = vld [vmem:[#allocation10 + $0x5d0] sm:$0xff]
    %v7087 = vld [vmem:[#allocation10 + $0x5d8] sm:$0xff]
    %v7088 = vld [vmem:[#allocation10 + $0x5e0] sm:$0xff]
    %v7089 = vld [vmem:[#allocation10 + $0x5e8] sm:$0xff]
    %v7090 = vld [vmem:[#allocation10 + $0x5f0] sm:$0xff]
    %v7091 = vld [vmem:[#allocation10 + $0x5f8] sm:$0xff]
    %v7092 = vld [vmem:[#allocation10 + $0x600] sm:$0xff]
    %v7093 = vld [vmem:[#allocation10 + $0x608] sm:$0xff]
    %v7094 = vld [vmem:[#allocation10 + $0x610] sm:$0xff]
    %v7095 = vld [vmem:[#allocation10 + $0x618] sm:$0xff]
    %v7096 = vld [vmem:[#allocation10 + $0x620] sm:$0xff]
    %v7097 = vld [vmem:[#allocation10 + $0x628] sm:$0xff]
    %v7098 = vld [vmem:[#allocation10 + $0x630] sm:$0xff]
    %v7099 = vld [vmem:[#allocation10 + $0x638] sm:$0xff]
    %v7100 = vld [vmem:[#allocation10 + $0x640] sm:$0xff]
    %v7101 = vld [vmem:[#allocation10 + $0x648] sm:$0xff]
    %v7102 = vld [vmem:[#allocation10 + $0x650] sm:$0xff]
    %v7103 = vld [vmem:[#allocation10 + $0x658] sm:$0xff]
    %v7104 = vld [vmem:[#allocation10 + $0x660] sm:$0xff]
    %v7105 = vld [vmem:[#allocation10 + $0x668] sm:$0xff]
    %v7106 = vld [vmem:[#allocation10 + $0x670] sm:$0xff]
    %v7107 = vld [vmem:[#allocation10 + $0x678] sm:$0xff]
    %v7108 = vld [vmem:[#allocation10 + $0x680] sm:$0xff]
    %v7109 = vld [vmem:[#allocation10 + $0x688] sm:$0xff]
    %v7110 = vld [vmem:[#allocation10 + $0x690] sm:$0xff]
    %v7111 = vld [vmem:[#allocation10 + $0x698] sm:$0xff]
    %v7112 = vld [vmem:[#allocation10 + $0x6a0] sm:$0xff]
    %v7113 = vld [vmem:[#allocation10 + $0x6a8] sm:$0xff]
    %v7114 = vld [vmem:[#allocation10 + $0x6b0] sm:$0xff]
    %v7115 = vld [vmem:[#allocation10 + $0x6b8] sm:$0xff]
    %v7116 = vld [vmem:[#allocation10 + $0x6c0] sm:$0xff]
    %v7117 = vld [vmem:[#allocation10 + $0x6c8] sm:$0xff]
    %v7118 = vld [vmem:[#allocation10 + $0x6d0] sm:$0xff]
    %v7119 = vld [vmem:[#allocation10 + $0x6d8] sm:$0xff]
    %v7120 = vld [vmem:[#allocation10 + $0x6e0] sm:$0xff]
    %v7121 = vld [vmem:[#allocation10 + $0x6e8] sm:$0xff]
    %v7122 = vld [vmem:[#allocation10 + $0x6f0] sm:$0xff]
    %v7123 = vld [vmem:[#allocation10 + $0x6f8] sm:$0xff]
    %v7124 = vld [vmem:[#allocation10 + $0x700] sm:$0xff]
    %v7125 = vld [vmem:[#allocation10 + $0x708] sm:$0xff]
    %v7126 = vld [vmem:[#allocation10 + $0x710] sm:$0xff]
    %v7127 = vld [vmem:[#allocation10 + $0x718] sm:$0xff]
    %v7128 = vld [vmem:[#allocation10 + $0x720] sm:$0xff]
    %v7129 = vld [vmem:[#allocation10 + $0x728] sm:$0xff]
    %v7130 = vld [vmem:[#allocation10 + $0x730] sm:$0xff]
    %v7131 = vld [vmem:[#allocation10 + $0x738] sm:$0xff]
    %v7132 = vld [vmem:[#allocation10 + $0x740] sm:$0xff]
    %v7133 = vld [vmem:[#allocation10 + $0x748] sm:$0xff]
    %v7134 = vld [vmem:[#allocation10 + $0x750] sm:$0xff]
    %v7135 = vld [vmem:[#allocation10 + $0x758] sm:$0xff]
    %v7136 = vld [vmem:[#allocation10 + $0x760] sm:$0xff]
    %v7137 = vld [vmem:[#allocation10 + $0x768] sm:$0xff]
    %v7138 = vld [vmem:[#allocation10 + $0x770] sm:$0xff]
    %v7139 = vld [vmem:[#allocation10 + $0x778] sm:$0xff]
    %v7140 = vld [vmem:[#allocation10 + $0x780] sm:$0xff]
    %v7141 = vld [vmem:[#allocation10 + $0x788] sm:$0xff]
    %v7142 = vld [vmem:[#allocation10 + $0x790] sm:$0xff]
    %v7143 = vld [vmem:[#allocation10 + $0x798] sm:$0xff]
    %v7144 = vld [vmem:[#allocation10 + $0x7a0] sm:$0xff]
    %v7145 = vld [vmem:[#allocation10 + $0x7a8] sm:$0xff]
    %v7146 = vld [vmem:[#allocation10 + $0x7b0] sm:$0xff]
    %v7147 = vld [vmem:[#allocation10 + $0x7b8] sm:$0xff]
    %v7148 = vld [vmem:[#allocation10 + $0x7c0] sm:$0xff]
    %v7149 = vld [vmem:[#allocation10 + $0x7c8] sm:$0xff]
    %v7150 = vld [vmem:[#allocation10 + $0x7d0] sm:$0xff]
    %v7151 = vld [vmem:[#allocation10 + $0x7d8] sm:$0xff]
    %v7152 = vld [vmem:[#allocation10 + $0x7e0] sm:$0xff]
    %v7153 = vld [vmem:[#allocation10 + $0x7e8] sm:$0xff]
    %v7154 = vld [vmem:[#allocation10 + $0x7f0] sm:$0xff]
    %v7155 = vld [vmem:[#allocation10 + $0x7f8] sm:$0xff]
    %v7156 = vld [vmem:[#allocation10 + $0x800] sm:$0xff]
    %v7157 = vld [vmem:[#allocation10 + $0x808] sm:$0xff]
    %v7158 = vld [vmem:[#allocation10 + $0x810] sm:$0xff]
    %v7159 = vld [vmem:[#allocation10 + $0x818] sm:$0xff]
    %v7160 = vld [vmem:[#allocation10 + $0x820] sm:$0xff]
    %v7161 = vld [vmem:[#allocation10 + $0x828] sm:$0xff]
    %v7162 = vld [vmem:[#allocation10 + $0x830] sm:$0xff]
    %v7163 = vld [vmem:[#allocation10 + $0x838] sm:$0xff]
    %v7164 = vld [vmem:[#allocation10 + $0x840] sm:$0xff]
    %v7165 = vld [vmem:[#allocation10 + $0x848] sm:$0xff]
    %v7166 = vld [vmem:[#allocation10 + $0x850] sm:$0xff]
    %v7167 = vld [vmem:[#allocation10 + $0x858] sm:$0xff]
    %v7168 = vld [vmem:[#allocation10 + $0x860] sm:$0xff]
    %v7169 = vld [vmem:[#allocation10 + $0x868] sm:$0xff]
    %v7170 = vld [vmem:[#allocation10 + $0x870] sm:$0xff]
    %v7171 = vld [vmem:[#allocation10 + $0x878] sm:$0xff]
    %v7172 = vld [vmem:[#allocation10 + $0x880] sm:$0xff]
    %v7173 = vld [vmem:[#allocation10 + $0x888] sm:$0xff]
    %v7174 = vld [vmem:[#allocation10 + $0x890] sm:$0xff]
    %v7175 = vld [vmem:[#allocation10 + $0x898] sm:$0xff]
    %v7176 = vld [vmem:[#allocation10 + $0x8a0] sm:$0xff]
    %v7177 = vld [vmem:[#allocation10 + $0x8a8] sm:$0xff]
    %v7178 = vld [vmem:[#allocation10 + $0x8b0] sm:$0xff]
    %v7179 = vld [vmem:[#allocation10 + $0x8b8] sm:$0xff]
    %v7180 = vld [vmem:[#allocation10 + $0x8c0] sm:$0xff]
    %v7181 = vld [vmem:[#allocation10 + $0x8c8] sm:$0xff]
    %v7182 = vld [vmem:[#allocation10 + $0x8d0] sm:$0xff]
    %v7183 = vld [vmem:[#allocation10 + $0x8d8] sm:$0xff]
    %v7184 = vld [vmem:[#allocation10 + $0x8e0] sm:$0xff]
    %v7185 = vld [vmem:[#allocation10 + $0x8e8] sm:$0xff]
    %v7186 = vld [vmem:[#allocation10 + $0x8f0] sm:$0xff]
    %v7187 = vld [vmem:[#allocation10 + $0x8f8] sm:$0xff]
    %v7188 = vld [vmem:[#allocation10 + $0x900] sm:$0xff]
    %v7189 = vld [vmem:[#allocation10 + $0x908] sm:$0xff]
    %v7190 = vld [vmem:[#allocation10 + $0x910] sm:$0xff]
    %v7191 = vld [vmem:[#allocation10 + $0x918] sm:$0xff]
    %v7192 = vld [vmem:[#allocation10 + $0x920] sm:$0xff]
    %v7193 = vld [vmem:[#allocation10 + $0x928] sm:$0xff]
    %v7194 = vld [vmem:[#allocation10 + $0x930] sm:$0xff]
    %v7195 = vld [vmem:[#allocation10 + $0x938] sm:$0xff]
    %v7196 = vld [vmem:[#allocation10 + $0x940] sm:$0xff]
    %v7197 = vld [vmem:[#allocation10 + $0x948] sm:$0xff]
    %v7198 = vld [vmem:[#allocation10 + $0x950] sm:$0xff]
    %v7199 = vld [vmem:[#allocation10 + $0x958] sm:$0xff]
    %v7200 = vld [vmem:[#allocation10 + $0x960] sm:$0xff]
    %v7201 = vld [vmem:[#allocation10 + $0x968] sm:$0xff]
    %v7202 = vld [vmem:[#allocation10 + $0x970] sm:$0xff]
    %v7203 = vld [vmem:[#allocation10 + $0x978] sm:$0xff]
    %v7204 = vld [vmem:[#allocation10 + $0x980] sm:$0xff]
    %v7205 = vld [vmem:[#allocation10 + $0x988] sm:$0xff]
    %v7206 = vld [vmem:[#allocation10 + $0x990] sm:$0xff]
    %v7207 = vld [vmem:[#allocation10 + $0x998] sm:$0xff]
    %v7208 = vld [vmem:[#allocation10 + $0x9a0] sm:$0xff]
    %v7209 = vld [vmem:[#allocation10 + $0x9a8] sm:$0xff]
    %v7210 = vld [vmem:[#allocation10 + $0x9b0] sm:$0xff]
    %v7211 = vld [vmem:[#allocation10 + $0x9b8] sm:$0xff]
    %v7212 = vld [vmem:[#allocation10 + $0x9c0] sm:$0xff]
    %v7213 = vld [vmem:[#allocation10 + $0x9c8] sm:$0xff]
    %v7214 = vld [vmem:[#allocation10 + $0x9d0] sm:$0xff]
    %v7215 = vld [vmem:[#allocation10 + $0x9d8] sm:$0xff]
    %v7216 = vld [vmem:[#allocation10 + $0x9e0] sm:$0xff]
    %v7217 = vld [vmem:[#allocation10 + $0x9e8] sm:$0xff]
    %v7218 = vld [vmem:[#allocation10 + $0x9f0] sm:$0xff]
    %v7219 = vld [vmem:[#allocation10 + $0x9f8] sm:$0xff]
    %v7220 = vld [vmem:[#allocation10 + $0xa00] sm:$0xff]
    %v7221 = vld [vmem:[#allocation10 + $0xa08] sm:$0xff]
    %v7222 = vld [vmem:[#allocation10 + $0xa10] sm:$0xff]
    %v7223 = vld [vmem:[#allocation10 + $0xa18] sm:$0xff]
    %v7224 = vld [vmem:[#allocation10 + $0xa20] sm:$0xff]
    %v7225 = vld [vmem:[#allocation10 + $0xa28] sm:$0xff]
    %v7226 = vld [vmem:[#allocation10 + $0xa30] sm:$0xff]
    %v7227 = vld [vmem:[#allocation10 + $0xa38] sm:$0xff]
    %v7228 = vld [vmem:[#allocation10 + $0xa40] sm:$0xff]
    %v7229 = vld [vmem:[#allocation10 + $0xa48] sm:$0xff]
    %v7230 = vld [vmem:[#allocation10 + $0xa50] sm:$0xff]
    %v7231 = vld [vmem:[#allocation10 + $0xa58] sm:$0xff]
    %v7232 = vld [vmem:[#allocation10 + $0xa60] sm:$0xff]
    %v7233 = vld [vmem:[#allocation10 + $0xa68] sm:$0xff]
    %v7234 = vld [vmem:[#allocation10 + $0xa70] sm:$0xff]
    %v7235 = vld [vmem:[#allocation10 + $0xa78] sm:$0xff]
    %v7236 = vld [vmem:[#allocation10 + $0xa80] sm:$0xff]
    %v7237 = vld [vmem:[#allocation10 + $0xa88] sm:$0xff]
    %v7238 = vld [vmem:[#allocation10 + $0xa90] sm:$0xff]
    %v7239 = vld [vmem:[#allocation10 + $0xa98] sm:$0xff]
    %v7240 = vld [vmem:[#allocation10 + $0xaa0] sm:$0xff]
    %v7241 = vld [vmem:[#allocation10 + $0xaa8] sm:$0xff]
    %v7242 = vld [vmem:[#allocation10 + $0xab0] sm:$0xff]
    %v7243 = vld [vmem:[#allocation10 + $0xab8] sm:$0xff]
    %v7244 = vld [vmem:[#allocation10 + $0xac0] sm:$0xff]
    %v7245 = vld [vmem:[#allocation10 + $0xac8] sm:$0xff]
    %v7246 = vld [vmem:[#allocation10 + $0xad0] sm:$0xff]
    %v7247 = vld [vmem:[#allocation10 + $0xad8] sm:$0xff]
    %v7248 = vld [vmem:[#allocation10 + $0xae0] sm:$0xff]
    %v7249 = vld [vmem:[#allocation10 + $0xae8] sm:$0xff]
    %v7250 = vld [vmem:[#allocation10 + $0xaf0] sm:$0xff]
    %v7251 = vld [vmem:[#allocation10 + $0xaf8] sm:$0xff]
    %v7252 = vld [vmem:[#allocation10 + $0xb00] sm:$0xff]
    %v7253 = vld [vmem:[#allocation10 + $0xb08] sm:$0xff]
    %v7254 = vld [vmem:[#allocation10 + $0xb10] sm:$0xff]
    %v7255 = vld [vmem:[#allocation10 + $0xb18] sm:$0xff]
    %v7256 = vld [vmem:[#allocation10 + $0xb20] sm:$0xff]
    %v7257 = vld [vmem:[#allocation10 + $0xb28] sm:$0xff]
    %v7258 = vld [vmem:[#allocation10 + $0xb30] sm:$0xff]
    %v7259 = vld [vmem:[#allocation10 + $0xb38] sm:$0xff]
    %v7260 = vld [vmem:[#allocation10 + $0xb40] sm:$0xff]
    %v7261 = vld [vmem:[#allocation10 + $0xb48] sm:$0xff]
    %v7262 = vld [vmem:[#allocation10 + $0xb50] sm:$0xff]
    %v7263 = vld [vmem:[#allocation10 + $0xb58] sm:$0xff]
    %v7264 = vld [vmem:[#allocation10 + $0xb60] sm:$0xff]
    %v7265 = vld [vmem:[#allocation10 + $0xb68] sm:$0xff]
    %v7266 = vld [vmem:[#allocation10 + $0xb70] sm:$0xff]
    %v7267 = vld [vmem:[#allocation10 + $0xb78] sm:$0xff]
    %v7268 = vld [vmem:[#allocation10 + $0xb80] sm:$0xff]
    %v7269 = vld [vmem:[#allocation10 + $0xb88] sm:$0xff]
    %v7270 = vld [vmem:[#allocation10 + $0xb90] sm:$0xff]
    %v7271 = vld [vmem:[#allocation10 + $0xb98] sm:$0xff]
    %v7272 = vld [vmem:[#allocation10 + $0xba0] sm:$0xff]
    %v7273 = vld [vmem:[#allocation10 + $0xba8] sm:$0xff]
    %v7274 = vld [vmem:[#allocation10 + $0xbb0] sm:$0xff]
    %v7275 = vld [vmem:[#allocation10 + $0xbb8] sm:$0xff]
    %v7276 = vld [vmem:[#allocation10 + $0xbc0] sm:$0xff]
    %v7277 = vld [vmem:[#allocation10 + $0xbc8] sm:$0xff]
    %v7278 = vld [vmem:[#allocation10 + $0xbd0] sm:$0xff]
    %v7279 = vld [vmem:[#allocation10 + $0xbd8] sm:$0xff]
    %v7280 = vld [vmem:[#allocation10 + $0xbe0] sm:$0xff]
    %v7281 = vld [vmem:[#allocation10 + $0xbe8] sm:$0xff]
    %v7282 = vld [vmem:[#allocation10 + $0xbf0] sm:$0xff]
    %v7283 = vld [vmem:[#allocation10 + $0xbf8] sm:$0xff]
    %v7284 = vld [vmem:[#allocation10 + $0xc00] sm:$0xff]
    %v7285 = vld [vmem:[#allocation10 + $0xc08] sm:$0xff]
    %v7286 = vld [vmem:[#allocation10 + $0xc10] sm:$0xff]
    %v7287 = vld [vmem:[#allocation10 + $0xc18] sm:$0xff]
    %v7288 = vld [vmem:[#allocation10 + $0xc20] sm:$0xff]
    %v7289 = vld [vmem:[#allocation10 + $0xc28] sm:$0xff]
    %v7290 = vld [vmem:[#allocation10 + $0xc30] sm:$0xff]
    %v7291 = vld [vmem:[#allocation10 + $0xc38] sm:$0xff]
    %v7292 = vld [vmem:[#allocation10 + $0xc40] sm:$0xff]
    %v7293 = vld [vmem:[#allocation10 + $0xc48] sm:$0xff]
    %v7294 = vld [vmem:[#allocation10 + $0xc50] sm:$0xff]
    %v7295 = vld [vmem:[#allocation10 + $0xc58] sm:$0xff]
    %v7296 = vld [vmem:[#allocation10 + $0xc60] sm:$0xff]
    %v7297 = vld [vmem:[#allocation10 + $0xc68] sm:$0xff]
    %v7298 = vld [vmem:[#allocation10 + $0xc70] sm:$0xff]
    %v7299 = vld [vmem:[#allocation10 + $0xc78] sm:$0xff]
    %v7300 = vld [vmem:[#allocation10 + $0xc80] sm:$0xff]
    %v7301 = vld [vmem:[#allocation10 + $0xc88] sm:$0xff]
    %v7302 = vld [vmem:[#allocation10 + $0xc90] sm:$0xff]
    %v7303 = vld [vmem:[#allocation10 + $0xc98] sm:$0xff]
    %v7304 = vld [vmem:[#allocation10 + $0xca0] sm:$0xff]
    %v7305 = vld [vmem:[#allocation10 + $0xca8] sm:$0xff]
    %v7306 = vld [vmem:[#allocation10 + $0xcb0] sm:$0xff]
    %v7307 = vld [vmem:[#allocation10 + $0xcb8] sm:$0xff]
    %v7308 = vld [vmem:[#allocation10 + $0xcc0] sm:$0xff]
    %v7309 = vld [vmem:[#allocation10 + $0xcc8] sm:$0xff]
    %v7310 = vld [vmem:[#allocation10 + $0xcd0] sm:$0xff]
    %v7311 = vld [vmem:[#allocation10 + $0xcd8] sm:$0xff]
    %v7312 = vld [vmem:[#allocation10 + $0xce0] sm:$0xff]
    %v7313 = vld [vmem:[#allocation10 + $0xce8] sm:$0xff]
    %v7314 = vld [vmem:[#allocation10 + $0xcf0] sm:$0xff]
    %v7315 = vld [vmem:[#allocation10 + $0xcf8] sm:$0xff]
    %v7316 = vld [vmem:[#allocation10 + $0xd00] sm:$0xff]
    %v7317 = vld [vmem:[#allocation10 + $0xd08] sm:$0xff]
    %v7318 = vld [vmem:[#allocation10 + $0xd10] sm:$0xff]
    %v7319 = vld [vmem:[#allocation10 + $0xd18] sm:$0xff]
    %v7320 = vld [vmem:[#allocation10 + $0xd20] sm:$0xff]
    %v7321 = vld [vmem:[#allocation10 + $0xd28] sm:$0xff]
    %v7322 = vld [vmem:[#allocation10 + $0xd30] sm:$0xff]
    %v7323 = vld [vmem:[#allocation10 + $0xd38] sm:$0xff]
    %v7324 = vld [vmem:[#allocation10 + $0xd40] sm:$0xff]
    %v7325 = vld [vmem:[#allocation10 + $0xd48] sm:$0xff]
    %v7326 = vld [vmem:[#allocation10 + $0xd50] sm:$0xff]
    %v7327 = vld [vmem:[#allocation10 + $0xd58] sm:$0xff]
    %v7328 = vld [vmem:[#allocation10 + $0xd60] sm:$0xff]
    %v7329 = vld [vmem:[#allocation10 + $0xd68] sm:$0xff]
    %v7330 = vld [vmem:[#allocation10 + $0xd70] sm:$0xff]
    %v7331 = vld [vmem:[#allocation10 + $0xd78] sm:$0xff]
    %v7332 = vld [vmem:[#allocation10 + $0xd80] sm:$0xff]
    %v7333 = vld [vmem:[#allocation10 + $0xd88] sm:$0xff]
    %v7334 = vld [vmem:[#allocation10 + $0xd90] sm:$0xff]
    %v7335 = vld [vmem:[#allocation10 + $0xd98] sm:$0xff]
    %v7336 = vld [vmem:[#allocation10 + $0xda0] sm:$0xff]
    %v7337 = vld [vmem:[#allocation10 + $0xda8] sm:$0xff]
    %v7338 = vld [vmem:[#allocation10 + $0xdb0] sm:$0xff]
    %v7339 = vld [vmem:[#allocation10 + $0xdb8] sm:$0xff]
    %v7340 = vld [vmem:[#allocation10 + $0xdc0] sm:$0xff]
    %v7341 = vld [vmem:[#allocation10 + $0xdc8] sm:$0xff]
    %v7342 = vld [vmem:[#allocation10 + $0xdd0] sm:$0xff]
    %v7343 = vld [vmem:[#allocation10 + $0xdd8] sm:$0xff]
    %v7344 = vld [vmem:[#allocation10 + $0xde0] sm:$0xff]
    %v7345 = vld [vmem:[#allocation10 + $0xde8] sm:$0xff]
    %v7346 = vld [vmem:[#allocation10 + $0xdf0] sm:$0xff]
    %v7347 = vld [vmem:[#allocation10 + $0xdf8] sm:$0xff]
    %v7348 = vld [vmem:[#allocation10 + $0xe00] sm:$0xff]
    %v7349 = vld [vmem:[#allocation10 + $0xe08] sm:$0xff]
    %v7350 = vld [vmem:[#allocation10 + $0xe10] sm:$0xff]
    %v7351 = vld [vmem:[#allocation10 + $0xe18] sm:$0xff]
    %v7352 = vld [vmem:[#allocation10 + $0xe20] sm:$0xff]
    %v7353 = vld [vmem:[#allocation10 + $0xe28] sm:$0xff]
    %v7354 = vld [vmem:[#allocation10 + $0xe30] sm:$0xff]
    %v7355 = vld [vmem:[#allocation10 + $0xe38] sm:$0xff]
    %v7356 = vld [vmem:[#allocation10 + $0xe40] sm:$0xff]
    %v7357 = vld [vmem:[#allocation10 + $0xe48] sm:$0xff]
    %v7358 = vld [vmem:[#allocation10 + $0xe50] sm:$0xff]
    %v7359 = vld [vmem:[#allocation10 + $0xe58] sm:$0xff]
    %v7360 = vld [vmem:[#allocation10 + $0xe60] sm:$0xff]
    %v7361 = vld [vmem:[#allocation10 + $0xe68] sm:$0xff]
    %v7362 = vld [vmem:[#allocation10 + $0xe70] sm:$0xff]
    %v7363 = vld [vmem:[#allocation10 + $0xe78] sm:$0xff]
    %v7364 = vld [vmem:[#allocation10 + $0xe80] sm:$0xff]
    %v7365 = vld [vmem:[#allocation10 + $0xe88] sm:$0xff]
    %v7366 = vld [vmem:[#allocation10 + $0xe90] sm:$0xff]
    %v7367 = vld [vmem:[#allocation10 + $0xe98] sm:$0xff]
    %v7368 = vld [vmem:[#allocation10 + $0xea0] sm:$0xff]
    %v7369 = vld [vmem:[#allocation10 + $0xea8] sm:$0xff]
    %v7370 = vld [vmem:[#allocation10 + $0xeb0] sm:$0xff]
    %v7371 = vld [vmem:[#allocation10 + $0xeb8] sm:$0xff]
    %v7372 = vld [vmem:[#allocation10 + $0xec0] sm:$0xff]
    %v7373 = vld [vmem:[#allocation10 + $0xec8] sm:$0xff]
    %v7374 = vld [vmem:[#allocation10 + $0xed0] sm:$0xff]
    %v7375 = vld [vmem:[#allocation10 + $0xed8] sm:$0xff]
    %v7376 = vld [vmem:[#allocation10 + $0xee0] sm:$0xff]
    %v7377 = vld [vmem:[#allocation10 + $0xee8] sm:$0xff]
    %v7378 = vld [vmem:[#allocation10 + $0xef0] sm:$0xff]
    %v7379 = vld [vmem:[#allocation10 + $0xef8] sm:$0xff]
    %v7380 = vld [vmem:[#allocation10 + $0xf00] sm:$0xff]
    %v7381 = vld [vmem:[#allocation10 + $0xf08] sm:$0xff]
    %v7382 = vld [vmem:[#allocation10 + $0xf10] sm:$0xff]
    %v7383 = vld [vmem:[#allocation10 + $0xf18] sm:$0xff]
    %v7384 = vld [vmem:[#allocation10 + $0xf20] sm:$0xff]
    %v7385 = vld [vmem:[#allocation10 + $0xf28] sm:$0xff]
    %v7386 = vld [vmem:[#allocation10 + $0xf30] sm:$0xff]
    %v7387 = vld [vmem:[#allocation10 + $0xf38] sm:$0xff]
    %v7388 = vld [vmem:[#allocation10 + $0xf40] sm:$0xff]
    %v7389 = vld [vmem:[#allocation10 + $0xf48] sm:$0xff]
    %v7390 = vld [vmem:[#allocation10 + $0xf50] sm:$0xff]
    %v7391 = vld [vmem:[#allocation10 + $0xf58] sm:$0xff]
    %v7392 = vld [vmem:[#allocation10 + $0xf60] sm:$0xff]
    %v7393 = vld [vmem:[#allocation10 + $0xf68] sm:$0xff]
    %v7394 = vld [vmem:[#allocation10 + $0xf70] sm:$0xff]
    %v7395 = vld [vmem:[#allocation10 + $0xf78] sm:$0xff]
    %v7396 = vld [vmem:[#allocation10 + $0xf80] sm:$0xff]
    %v7397 = vld [vmem:[#allocation10 + $0xf88] sm:$0xff]
    %v7398 = vld [vmem:[#allocation10 + $0xf90] sm:$0xff]
    %v7399 = vld [vmem:[#allocation10 + $0xf98] sm:$0xff]
    %v7400 = vld [vmem:[#allocation10 + $0xfa0] sm:$0xff]
    %v7401 = vld [vmem:[#allocation10 + $0xfa8] sm:$0xff]
    %v7402 = vld [vmem:[#allocation10 + $0xfb0] sm:$0xff]
    %v7403 = vld [vmem:[#allocation10 + $0xfb8] sm:$0xff]
    %v7404 = vld [vmem:[#allocation10 + $0xfc0] sm:$0xff]
    %v7405 = vld [vmem:[#allocation10 + $0xfc8] sm:$0xff]
    %v7406 = vld [vmem:[#allocation10 + $0xfd0] sm:$0xff]
    %v7407 = vld [vmem:[#allocation10 + $0xfd8] sm:$0xff]
    %v7408 = vld [vmem:[#allocation10 + $0xfe0] sm:$0xff]
    %v7409 = vld [vmem:[#allocation10 + $0xfe8] sm:$0xff]
    %v7410 = vld [vmem:[#allocation10 + $0xff0] sm:$0xff]
    %v7411 = vld [vmem:[#allocation10 + $0xff8] sm:$0xff]
    %v7412 = vld [vmem:[#allocation10 + $0x1000] sm:$0xff]
    %v7413 = vld [vmem:[#allocation10 + $0x1008] sm:$0xff]
    %v7414 = vld [vmem:[#allocation10 + $0x1010] sm:$0xff]
    %v7415 = vld [vmem:[#allocation10 + $0x1018] sm:$0xff]
    %v7416 = vld [vmem:[#allocation10 + $0x1020] sm:$0xff]
    %v7417 = vld [vmem:[#allocation10 + $0x1028] sm:$0xff]
    %v7418 = vld [vmem:[#allocation10 + $0x1030] sm:$0xff]
    %v7419 = vld [vmem:[#allocation10 + $0x1038] sm:$0xff]
    %v7420 = vld [vmem:[#allocation10 + $0x1040] sm:$0xff]
    %v7421 = vld [vmem:[#allocation10 + $0x1048] sm:$0xff]
    %v7422 = vld [vmem:[#allocation10 + $0x1050] sm:$0xff]
    %v7423 = vld [vmem:[#allocation10 + $0x1058] sm:$0xff]
    %v7424 = vld [vmem:[#allocation10 + $0x1060] sm:$0xff]
    %v7425 = vld [vmem:[#allocation10 + $0x1068] sm:$0xff]
    %v7426 = vld [vmem:[#allocation10 + $0x1070] sm:$0xff]
    %v7427 = vld [vmem:[#allocation10 + $0x1078] sm:$0xff]
    %v7428 = vld [vmem:[#allocation10 + $0x1080] sm:$0xff]
    %v7429 = vld [vmem:[#allocation10 + $0x1088] sm:$0xff]
    %v7430 = vld [vmem:[#allocation10 + $0x1090] sm:$0xff]
    %v7431 = vld [vmem:[#allocation10 + $0x1098] sm:$0xff]
    %v7432 = vld [vmem:[#allocation10 + $0x10a0] sm:$0xff]
    %v7433 = vld [vmem:[#allocation10 + $0x10a8] sm:$0xff]
    %v7434 = vld [vmem:[#allocation10 + $0x10b0] sm:$0xff]
    %v7435 = vld [vmem:[#allocation10 + $0x10b8] sm:$0xff]
    %v7436 = vld [vmem:[#allocation10 + $0x10c0] sm:$0xff]
    %v7437 = vld [vmem:[#allocation10 + $0x10c8] sm:$0xff]
    %v7438 = vld [vmem:[#allocation10 + $0x10d0] sm:$0xff]
    %v7439 = vld [vmem:[#allocation10 + $0x10d8] sm:$0xff]
    %v7440 = vld [vmem:[#allocation10 + $0x10e0] sm:$0xff]
    %v7441 = vld [vmem:[#allocation10 + $0x10e8] sm:$0xff]
    %v7442 = vld [vmem:[#allocation10 + $0x10f0] sm:$0xff]
    %v7443 = vld [vmem:[#allocation10 + $0x10f8] sm:$0xff]
    %v7444 = vld [vmem:[#allocation10 + $0x1100] sm:$0xff]
    %v7445 = vld [vmem:[#allocation10 + $0x1108] sm:$0xff]
    %v7446 = vld [vmem:[#allocation10 + $0x1110] sm:$0xff]
    %v7447 = vld [vmem:[#allocation10 + $0x1118] sm:$0xff]
    %v7448 = vld [vmem:[#allocation10 + $0x1120] sm:$0xff]
    %v7449 = vld [vmem:[#allocation10 + $0x1128] sm:$0xff]
    %v7450 = vld [vmem:[#allocation10 + $0x1130] sm:$0xff]
    %v7451 = vld [vmem:[#allocation10 + $0x1138] sm:$0xff]
    %v7452 = vld [vmem:[#allocation10 + $0x1140] sm:$0xff]
    %v7453 = vld [vmem:[#allocation10 + $0x1148] sm:$0xff]
    %v7454 = vld [vmem:[#allocation10 + $0x1150] sm:$0xff]
    %v7455 = vld [vmem:[#allocation10 + $0x1158] sm:$0xff]
    %v7456 = vld [vmem:[#allocation10 + $0x1160] sm:$0xff]
    %v7457 = vld [vmem:[#allocation10 + $0x1168] sm:$0xff]
    %v7458 = vld [vmem:[#allocation10 + $0x1170] sm:$0xff]
    %v7459 = vld [vmem:[#allocation10 + $0x1178] sm:$0xff]
    %v7460 = vld [vmem:[#allocation10 + $0x1180] sm:$0xff]
    %v7461 = vld [vmem:[#allocation10 + $0x1188] sm:$0xff]
    %v7462 = vld [vmem:[#allocation10 + $0x1190] sm:$0xff]
    %v7463 = vld [vmem:[#allocation10 + $0x1198] sm:$0xff]
    %v7464 = vld [vmem:[#allocation10 + $0x11a0] sm:$0xff]
    %v7465 = vld [vmem:[#allocation10 + $0x11a8] sm:$0xff]
    %v7466 = vld [vmem:[#allocation10 + $0x11b0] sm:$0xff]
    %v7467 = vld [vmem:[#allocation10 + $0x11b8] sm:$0xff]
    %v7468 = vld [vmem:[#allocation10 + $0x11c0] sm:$0xff]
    %v7469 = vld [vmem:[#allocation10 + $0x11c8] sm:$0xff]
    %v7470 = vld [vmem:[#allocation10 + $0x11d0] sm:$0xff]
    %v7471 = vld [vmem:[#allocation10 + $0x11d8] sm:$0xff]
    %v7472 = vld [vmem:[#allocation10 + $0x11e0] sm:$0xff]
    %v7473 = vld [vmem:[#allocation10 + $0x11e8] sm:$0xff]
    %v7474 = vld [vmem:[#allocation10 + $0x11f0] sm:$0xff]
    %v7475 = vld [vmem:[#allocation10 + $0x11f8] sm:$0xff]
    %v7476 = vld [vmem:[#allocation10 + $0x1200] sm:$0xff]
    %v7477 = vld [vmem:[#allocation10 + $0x1208] sm:$0xff]
    %v7478 = vld [vmem:[#allocation10 + $0x1210] sm:$0xff]
    %v7479 = vld [vmem:[#allocation10 + $0x1218] sm:$0xff]
    %v7480 = vld [vmem:[#allocation10 + $0x1220] sm:$0xff]
    %v7481 = vld [vmem:[#allocation10 + $0x1228] sm:$0xff]
    %v7482 = vld [vmem:[#allocation10 + $0x1230] sm:$0xff]
    %v7483 = vld [vmem:[#allocation10 + $0x1238] sm:$0xff]
    %v7484 = vld [vmem:[#allocation10 + $0x1240] sm:$0xff]
    %v7485 = vld [vmem:[#allocation10 + $0x1248] sm:$0xff]
    %v7486 = vld [vmem:[#allocation10 + $0x1250] sm:$0xff]
    %v7487 = vld [vmem:[#allocation10 + $0x1258] sm:$0xff]
    %v7488 = vld [vmem:[#allocation10 + $0x1260] sm:$0xff]
    %v7489 = vld [vmem:[#allocation10 + $0x1268] sm:$0xff]
    %v7490 = vld [vmem:[#allocation10 + $0x1270] sm:$0xff]
    %v7491 = vld [vmem:[#allocation10 + $0x1278] sm:$0xff]
    %v7492 = vld [vmem:[#allocation10 + $0x1280] sm:$0xff]
    %v7493 = vld [vmem:[#allocation10 + $0x1288] sm:$0xff]
    %v7494 = vld [vmem:[#allocation10 + $0x1290] sm:$0xff]
    %v7495 = vld [vmem:[#allocation10 + $0x1298] sm:$0xff]
    %v7496 = vld [vmem:[#allocation10 + $0x12a0] sm:$0xff]
    %v7497 = vld [vmem:[#allocation10 + $0x12a8] sm:$0xff]
    %v7498 = vld [vmem:[#allocation10 + $0x12b0] sm:$0xff]
    %v7499 = vld [vmem:[#allocation10 + $0x12b8] sm:$0xff]
    %v7500 = vld [vmem:[#allocation10 + $0x12c0] sm:$0xff]
    %v7501 = vld [vmem:[#allocation10 + $0x12c8] sm:$0xff]
    %v7502 = vld [vmem:[#allocation10 + $0x12d0] sm:$0xff]
    %v7503 = vld [vmem:[#allocation10 + $0x12d8] sm:$0xff]
    %v7504 = vld [vmem:[#allocation10 + $0x12e0] sm:$0xff]
    %v7505 = vld [vmem:[#allocation10 + $0x12e8] sm:$0xff]
    %v7506 = vld [vmem:[#allocation10 + $0x12f0] sm:$0xff]
    %v7507 = vld [vmem:[#allocation10 + $0x12f8] sm:$0xff]
    %v7508 = vld [vmem:[#allocation10 + $0x1300] sm:$0xff]
    %v7509 = vld [vmem:[#allocation10 + $0x1308] sm:$0xff]
    %v7510 = vld [vmem:[#allocation10 + $0x1310] sm:$0xff]
    %v7511 = vld [vmem:[#allocation10 + $0x1318] sm:$0xff]
    %v7512 = vld [vmem:[#allocation10 + $0x1320] sm:$0xff]
    %v7513 = vld [vmem:[#allocation10 + $0x1328] sm:$0xff]
    %v7514 = vld [vmem:[#allocation10 + $0x1330] sm:$0xff]
    %v7515 = vld [vmem:[#allocation10 + $0x1338] sm:$0xff]
    %v7516 = vld [vmem:[#allocation10 + $0x1340] sm:$0xff]
    %v7517 = vld [vmem:[#allocation10 + $0x1348] sm:$0xff]
    %v7518 = vld [vmem:[#allocation10 + $0x1350] sm:$0xff]
    %v7519 = vld [vmem:[#allocation10 + $0x1358] sm:$0xff]
    %v7520 = vld [vmem:[#allocation10 + $0x1360] sm:$0xff]
    %v7521 = vld [vmem:[#allocation10 + $0x1368] sm:$0xff]
    %v7522 = vld [vmem:[#allocation10 + $0x1370] sm:$0xff]
    %v7523 = vld [vmem:[#allocation10 + $0x1378] sm:$0xff]
    %v7524 = vld [vmem:[#allocation10 + $0x1380] sm:$0xff]
    %v7525 = vld [vmem:[#allocation10 + $0x1388] sm:$0xff]
    %v7526 = vld [vmem:[#allocation10 + $0x1390] sm:$0xff]
    %v7527 = vld [vmem:[#allocation10 + $0x1398] sm:$0xff]
    %v7528 = vld [vmem:[#allocation10 + $0x13a0] sm:$0xff]
    %v7529 = vld [vmem:[#allocation10 + $0x13a8] sm:$0xff]
    %v7530 = vld [vmem:[#allocation10 + $0x13b0] sm:$0xff]
    %v7531 = vld [vmem:[#allocation10 + $0x13b8] sm:$0xff]
    %v7532 = vld [vmem:[#allocation10 + $0x13c0] sm:$0xff]
    %v7533 = vld [vmem:[#allocation10 + $0x13c8] sm:$0xff]
    %v7534 = vld [vmem:[#allocation10 + $0x13d0] sm:$0xff]
    %v7535 = vld [vmem:[#allocation10 + $0x13d8] sm:$0xff]
    %v7536 = vld [vmem:[#allocation10 + $0x13e0] sm:$0xff]
    %v7537 = vld [vmem:[#allocation10 + $0x13e8] sm:$0xff]
    %v7538 = vld [vmem:[#allocation10 + $0x13f0] sm:$0xff]
    %v7539 = vld [vmem:[#allocation10 + $0x13f8] sm:$0xff]
    %v7540 = vld [vmem:[#allocation10 + $0x1400] sm:$0xff]
    %v7541 = vld [vmem:[#allocation10 + $0x1408] sm:$0xff]
    %v7542 = vld [vmem:[#allocation10 + $0x1410] sm:$0xff]
    %v7543 = vld [vmem:[#allocation10 + $0x1418] sm:$0xff]
    %v7544 = vld [vmem:[#allocation10 + $0x1420] sm:$0xff]
    %v7545 = vld [vmem:[#allocation10 + $0x1428] sm:$0xff]
    %v7546 = vld [vmem:[#allocation10 + $0x1430] sm:$0xff]
    %v7547 = vld [vmem:[#allocation10 + $0x1438] sm:$0xff]
    %v7548 = vld [vmem:[#allocation10 + $0x1440] sm:$0xff]
    %v7549 = vld [vmem:[#allocation10 + $0x1448] sm:$0xff]
    %v7550 = vld [vmem:[#allocation10 + $0x1450] sm:$0xff]
    %v7551 = vld [vmem:[#allocation10 + $0x1458] sm:$0xff]
    %v7552 = vld [vmem:[#allocation10 + $0x1460] sm:$0xff]
    %v7553 = vld [vmem:[#allocation10 + $0x1468] sm:$0xff]
    %v7554 = vld [vmem:[#allocation10 + $0x1470] sm:$0xff]
    %v7555 = vld [vmem:[#allocation10 + $0x1478] sm:$0xff]
    %v7556 = vld [vmem:[#allocation10 + $0x1480] sm:$0xff]
    %v7557 = vld [vmem:[#allocation10 + $0x1488] sm:$0xff]
    %v7558 = vld [vmem:[#allocation10 + $0x1490] sm:$0xff]
    %v7559 = vld [vmem:[#allocation10 + $0x1498] sm:$0xff]
    %v7560 = vld [vmem:[#allocation10 + $0x14a0] sm:$0xff]
    %v7561 = vld [vmem:[#allocation10 + $0x14a8] sm:$0xff]
    %v7562 = vld [vmem:[#allocation10 + $0x14b0] sm:$0xff]
    %v7563 = vld [vmem:[#allocation10 + $0x14b8] sm:$0xff]
    %v7564 = vld [vmem:[#allocation10 + $0x14c0] sm:$0xff]
    %v7565 = vld [vmem:[#allocation10 + $0x14c8] sm:$0xff]
    %v7566 = vld [vmem:[#allocation10 + $0x14d0] sm:$0xff]
    %v7567 = vld [vmem:[#allocation10 + $0x14d8] sm:$0xff]
    %v7568 = vld [vmem:[#allocation10 + $0x14e0] sm:$0xff]
    %v7569 = vld [vmem:[#allocation10 + $0x14e8] sm:$0xff]
    %v7570 = vld [vmem:[#allocation10 + $0x14f0] sm:$0xff]
    %v7571 = vld [vmem:[#allocation10 + $0x14f8] sm:$0xff]
    %v7572 = vld [vmem:[#allocation10 + $0x1500] sm:$0xff]
    %v7573 = vld [vmem:[#allocation10 + $0x1508] sm:$0xff]
    %v7574 = vld [vmem:[#allocation10 + $0x1510] sm:$0xff]
    %v7575 = vld [vmem:[#allocation10 + $0x1518] sm:$0xff]
    %v7576 = vld [vmem:[#allocation10 + $0x1520] sm:$0xff]
    %v7577 = vld [vmem:[#allocation10 + $0x1528] sm:$0xff]
    %v7578 = vld [vmem:[#allocation10 + $0x1530] sm:$0xff]
    %v7579 = vld [vmem:[#allocation10 + $0x1538] sm:$0xff]
    %v7580 = vld [vmem:[#allocation10 + $0x1540] sm:$0xff]
    %v7581 = vld [vmem:[#allocation10 + $0x1548] sm:$0xff]
    %v7582 = vld [vmem:[#allocation10 + $0x1550] sm:$0xff]
    %v7583 = vld [vmem:[#allocation10 + $0x1558] sm:$0xff]
    %v7584 = vld [vmem:[#allocation10 + $0x1560] sm:$0xff]
    %v7585 = vld [vmem:[#allocation10 + $0x1568] sm:$0xff]
    %v7586 = vld [vmem:[#allocation10 + $0x1570] sm:$0xff]
    %v7587 = vld [vmem:[#allocation10 + $0x1578] sm:$0xff]
    %v7588 = vld [vmem:[#allocation10 + $0x1580] sm:$0xff]
    %v7589 = vld [vmem:[#allocation10 + $0x1588] sm:$0xff]
    %v7590 = vld [vmem:[#allocation10 + $0x1590] sm:$0xff]
    %v7591 = vld [vmem:[#allocation10 + $0x1598] sm:$0xff]
    %v7592 = vld [vmem:[#allocation10 + $0x15a0] sm:$0xff]
    %v7593 = vld [vmem:[#allocation10 + $0x15a8] sm:$0xff]
    %v7594 = vld [vmem:[#allocation10 + $0x15b0] sm:$0xff]
    %v7595 = vld [vmem:[#allocation10 + $0x15b8] sm:$0xff]
    %v7596 = vld [vmem:[#allocation10 + $0x15c0] sm:$0xff]
    %v7597 = vld [vmem:[#allocation10 + $0x15c8] sm:$0xff]
    %v7598 = vld [vmem:[#allocation10 + $0x15d0] sm:$0xff]
    %v7599 = vld [vmem:[#allocation10 + $0x15d8] sm:$0xff]
    %v7600 = vld [vmem:[#allocation10 + $0x15e0] sm:$0xff]
    %v7601 = vld [vmem:[#allocation10 + $0x15e8] sm:$0xff]
    %v7602 = vld [vmem:[#allocation10 + $0x15f0] sm:$0xff]
    %v7603 = vld [vmem:[#allocation10 + $0x15f8] sm:$0xff]
    %v7604 = vld [vmem:[#allocation10 + $0x1600] sm:$0xff]
    %v7605 = vld [vmem:[#allocation10 + $0x1608] sm:$0xff]
    %v7606 = vld [vmem:[#allocation10 + $0x1610] sm:$0xff]
    %v7607 = vld [vmem:[#allocation10 + $0x1618] sm:$0xff]
    %v7608 = vld [vmem:[#allocation10 + $0x1620] sm:$0xff]
    %v7609 = vld [vmem:[#allocation10 + $0x1628] sm:$0xff]
    %v7610 = vld [vmem:[#allocation10 + $0x1630] sm:$0xff]
    %v7611 = vld [vmem:[#allocation10 + $0x1638] sm:$0xff]
    %v7612 = vld [vmem:[#allocation10 + $0x1640] sm:$0xff]
    %v7613 = vld [vmem:[#allocation10 + $0x1648] sm:$0xff]
    %v7614 = vld [vmem:[#allocation10 + $0x1650] sm:$0xff]
    %v7615 = vld [vmem:[#allocation10 + $0x1658] sm:$0xff]
    %v7616 = vld [vmem:[#allocation10 + $0x1660] sm:$0xff]
    %v7617 = vld [vmem:[#allocation10 + $0x1668] sm:$0xff]
    %v7618 = vld [vmem:[#allocation10 + $0x1670] sm:$0xff]
    %v7619 = vld [vmem:[#allocation10 + $0x1678] sm:$0xff]
    %v7620 = vld [vmem:[#allocation10 + $0x1680] sm:$0xff]
    %v7621 = vld [vmem:[#allocation10 + $0x1688] sm:$0xff]
    %v7622 = vld [vmem:[#allocation10 + $0x1690] sm:$0xff]
    %v7623 = vld [vmem:[#allocation10 + $0x1698] sm:$0xff]
    %v7624 = vld [vmem:[#allocation10 + $0x16a0] sm:$0xff]
    %v7625 = vld [vmem:[#allocation10 + $0x16a8] sm:$0xff]
    %v7626 = vld [vmem:[#allocation10 + $0x16b0] sm:$0xff]
    %v7627 = vld [vmem:[#allocation10 + $0x16b8] sm:$0xff]
    %v7628 = vld [vmem:[#allocation10 + $0x16c0] sm:$0xff]
    %v7629 = vld [vmem:[#allocation10 + $0x16c8] sm:$0xff]
    %v7630 = vld [vmem:[#allocation10 + $0x16d0] sm:$0xff]
    %v7631 = vld [vmem:[#allocation10 + $0x16d8] sm:$0xff]
    %v7632 = vld [vmem:[#allocation10 + $0x16e0] sm:$0xff]
    %v7633 = vld [vmem:[#allocation10 + $0x16e8] sm:$0xff]
    %v7634 = vld [vmem:[#allocation10 + $0x16f0] sm:$0xff]
    %v7635 = vld [vmem:[#allocation10 + $0x16f8] sm:$0xff]
    %v7636 = vld [vmem:[#allocation10 + $0x1700] sm:$0xff]
    %v7637 = vld [vmem:[#allocation10 + $0x1708] sm:$0xff]
    %v7638 = vld [vmem:[#allocation10 + $0x1710] sm:$0xff]
    %v7639 = vld [vmem:[#allocation10 + $0x1718] sm:$0xff]
    %v7640 = vld [vmem:[#allocation10 + $0x1720] sm:$0xff]
    %v7641 = vld [vmem:[#allocation10 + $0x1728] sm:$0xff]
    %v7642 = vld [vmem:[#allocation10 + $0x1730] sm:$0xff]
    %v7643 = vld [vmem:[#allocation10 + $0x1738] sm:$0xff]
    %v7644 = vld [vmem:[#allocation10 + $0x1740] sm:$0xff]
    %v7645 = vld [vmem:[#allocation10 + $0x1748] sm:$0xff]
    %v7646 = vld [vmem:[#allocation10 + $0x1750] sm:$0xff]
    %v7647 = vld [vmem:[#allocation10 + $0x1758] sm:$0xff]
    %v7648 = vld [vmem:[#allocation10 + $0x1760] sm:$0xff]
    %v7649 = vld [vmem:[#allocation10 + $0x1768] sm:$0xff]
    %v7650 = vld [vmem:[#allocation10 + $0x1770] sm:$0xff]
    %v7651 = vld [vmem:[#allocation10 + $0x1778] sm:$0xff]
    %v7652 = vld [vmem:[#allocation10 + $0x1780] sm:$0xff]
    %v7653 = vld [vmem:[#allocation10 + $0x1788] sm:$0xff]
    %v7654 = vld [vmem:[#allocation10 + $0x1790] sm:$0xff]
    %v7655 = vld [vmem:[#allocation10 + $0x1798] sm:$0xff]
    %v7656 = vld [vmem:[#allocation10 + $0x17a0] sm:$0xff]
    %v7657 = vld [vmem:[#allocation10 + $0x17a8] sm:$0xff]
    %v7658 = vld [vmem:[#allocation10 + $0x17b0] sm:$0xff]
    %v7659 = vld [vmem:[#allocation10 + $0x17b8] sm:$0xff]
    %v7660 = vld [vmem:[#allocation10 + $0x17c0] sm:$0xff]
    %v7661 = vld [vmem:[#allocation10 + $0x17c8] sm:$0xff]
    %v7662 = vld [vmem:[#allocation10 + $0x17d0] sm:$0xff]
    %v7663 = vld [vmem:[#allocation10 + $0x17d8] sm:$0xff]
    %v7664 = vld [vmem:[#allocation10 + $0x17e0] sm:$0xff]
    %v7665 = vld [vmem:[#allocation10 + $0x17e8] sm:$0xff]
    %v7666 = vld [vmem:[#allocation10 + $0x17f0] sm:$0xff]
    %v7667 = vld [vmem:[#allocation10 + $0x17f8] sm:$0xff]
    %v7668 = vld [vmem:[#allocation10 + $0x1800] sm:$0xff]
    %v7669 = vld [vmem:[#allocation10 + $0x1808] sm:$0xff]
    %v7670 = vld [vmem:[#allocation10 + $0x1810] sm:$0xff]
    %v7671 = vld [vmem:[#allocation10 + $0x1818] sm:$0xff]
    %v7672 = vld [vmem:[#allocation10 + $0x1820] sm:$0xff]
    %v7673 = vld [vmem:[#allocation10 + $0x1828] sm:$0xff]
    %v7674 = vld [vmem:[#allocation10 + $0x1830] sm:$0xff]
    %v7675 = vld [vmem:[#allocation10 + $0x1838] sm:$0xff]
    %v7676 = vld [vmem:[#allocation10 + $0x1840] sm:$0xff]
    %v7677 = vld [vmem:[#allocation10 + $0x1848] sm:$0xff]
    %v7678 = vld [vmem:[#allocation10 + $0x1850] sm:$0xff]
    %v7679 = vld [vmem:[#allocation10 + $0x1858] sm:$0xff]
    %v7680 = vld [vmem:[#allocation10 + $0x1860] sm:$0xff]
    %v7681 = vld [vmem:[#allocation10 + $0x1868] sm:$0xff]
    %v7682 = vld [vmem:[#allocation10 + $0x1870] sm:$0xff]
    %v7683 = vld [vmem:[#allocation10 + $0x1878] sm:$0xff]
    %v7684 = vld [vmem:[#allocation10 + $0x1880] sm:$0xff]
    %v7685 = vld [vmem:[#allocation10 + $0x1888] sm:$0xff]
    %v7686 = vld [vmem:[#allocation10 + $0x1890] sm:$0xff]
    %v7687 = vld [vmem:[#allocation10 + $0x1898] sm:$0xff]
    %v7688 = vld [vmem:[#allocation10 + $0x18a0] sm:$0xff]
    %v7689 = vld [vmem:[#allocation10 + $0x18a8] sm:$0xff]
    %v7690 = vld [vmem:[#allocation10 + $0x18b0] sm:$0xff]
    %v7691 = vld [vmem:[#allocation10 + $0x18b8] sm:$0xff]
    %v7692 = vld [vmem:[#allocation10 + $0x18c0] sm:$0xff]
    %v7693 = vld [vmem:[#allocation10 + $0x18c8] sm:$0xff]
    %v7694 = vld [vmem:[#allocation10 + $0x18d0] sm:$0xff]
    %v7695 = vld [vmem:[#allocation10 + $0x18d8] sm:$0xff]
    %v7696 = vld [vmem:[#allocation10 + $0x18e0] sm:$0xff]
    %v7697 = vld [vmem:[#allocation10 + $0x18e8] sm:$0xff]
    %v7698 = vld [vmem:[#allocation10 + $0x18f0] sm:$0xff]
    %v7699 = vld [vmem:[#allocation10 + $0x18f8] sm:$0xff]
    %v7700 = vld [vmem:[#allocation12] sm:$0xf]
    %v7702 = vperm.slane %v7700, 0
    %v7703 = vperm.slane %v7700, 1
    %v7704 = vperm.slane %v7700, 2
    %v7705 = vperm.slane %v7700, 3
    %v8510 = vunpack.c.l.b16 %v6900
    %v8511 = vunpack.c.h.b16 %v6900
    %v8512 = vunpack.c.l.b16 %v6901
    %v8513 = vunpack.c.h.b16 %v6901
    %v8514 = vunpack.c.l.b16 %v6902
    %v8515 = vunpack.c.h.b16 %v6902
    %v8516 = vunpack.c.l.b16 %v6903
    %v8517 = vunpack.c.h.b16 %v6903
    %v8518 = vunpack.c.l.b16 %v6904
    %v8519 = vunpack.c.h.b16 %v6904
    %v8520 = vunpack.c.l.b16 %v6905
    %v8521 = vunpack.c.h.b16 %v6905
    %v8522 = vunpack.c.l.b16 %v6906
    %v8523 = vunpack.c.h.b16 %v6906
    %v8524 = vunpack.c.l.b16 %v6907
    %v8525 = vunpack.c.h.b16 %v6907
    %v8526 = vunpack.c.l.b16 %v6908
    %v8527 = vunpack.c.h.b16 %v6908
    %v8528 = vunpack.c.l.b16 %v6909
    %v8529 = vunpack.c.h.b16 %v6909
    %v8530 = vunpack.c.l.b16 %v6910
    %v8531 = vunpack.c.h.b16 %v6910
    %v8532 = vunpack.c.l.b16 %v6911
    %v8533 = vunpack.c.h.b16 %v6911
    %v8534 = vunpack.c.l.b16 %v6912
    %v8535 = vunpack.c.h.b16 %v6912
    %v8536 = vunpack.c.l.b16 %v6913
    %v8537 = vunpack.c.h.b16 %v6913
    %v8538 = vunpack.c.l.b16 %v6914
    %v8539 = vunpack.c.h.b16 %v6914
    %v8540 = vunpack.c.l.b16 %v6915
    %v8541 = vunpack.c.h.b16 %v6915
    %v8542 = vunpack.c.l.b16 %v6916
    %v8543 = vunpack.c.h.b16 %v6916
    %v8544 = vunpack.c.l.b16 %v6917
    %v8545 = vunpack.c.h.b16 %v6917
    %v8546 = vunpack.c.l.b16 %v6918
    %v8547 = vunpack.c.h.b16 %v6918
    %v8548 = vunpack.c.l.b16 %v6919
    %v8549 = vunpack.c.h.b16 %v6919
    %v8550 = vunpack.c.l.b16 %v6920
    %v8551 = vunpack.c.h.b16 %v6920
    %v8552 = vunpack.c.l.b16 %v6921
    %v8553 = vunpack.c.h.b16 %v6921
    %v8554 = vunpack.c.l.b16 %v6922
    %v8555 = vunpack.c.h.b16 %v6922
    %v8556 = vunpack.c.l.b16 %v6923
    %v8557 = vunpack.c.h.b16 %v6923
    %v8558 = vunpack.c.l.b16 %v6924
    %v8559 = vunpack.c.h.b16 %v6924
    %v8560 = vunpack.c.l.b16 %v6925
    %v8561 = vunpack.c.h.b16 %v6925
    %v8562 = vunpack.c.l.b16 %v6926
    %v8563 = vunpack.c.h.b16 %v6926
    %v8564 = vunpack.c.l.b16 %v6927
    %v8565 = vunpack.c.h.b16 %v6927
    %v8566 = vunpack.c.l.b16 %v6928
    %v8567 = vunpack.c.h.b16 %v6928
    %v8568 = vunpack.c.l.b16 %v6929
    %v8569 = vunpack.c.h.b16 %v6929
    %v8570 = vunpack.c.l.b16 %v6930
    %v8571 = vunpack.c.h.b16 %v6930
    %v8572 = vunpack.c.l.b16 %v6931
    %v8573 = vunpack.c.h.b16 %v6931
    %v8574 = vunpack.c.l.b16 %v6932
    %v8575 = vunpack.c.h.b16 %v6932
    %v8576 = vunpack.c.l.b16 %v6933
    %v8577 = vunpack.c.h.b16 %v6933
    %v8578 = vunpack.c.l.b16 %v6934
    %v8579 = vunpack.c.h.b16 %v6934
    %v8580 = vunpack.c.l.b16 %v6935
    %v8581 = vunpack.c.h.b16 %v6935
    %v8582 = vunpack.c.l.b16 %v6936
    %v8583 = vunpack.c.h.b16 %v6936
    %v8584 = vunpack.c.l.b16 %v6937
    %v8585 = vunpack.c.h.b16 %v6937
    %v8586 = vunpack.c.l.b16 %v6938
    %v8587 = vunpack.c.h.b16 %v6938
    %v8588 = vunpack.c.l.b16 %v6939
    %v8589 = vunpack.c.h.b16 %v6939
    %v8590 = vunpack.c.l.b16 %v6940
    %v8591 = vunpack.c.h.b16 %v6940
    %v8592 = vunpack.c.l.b16 %v6941
    %v8593 = vunpack.c.h.b16 %v6941
    %v8594 = vunpack.c.l.b16 %v6942
    %v8595 = vunpack.c.h.b16 %v6942
    %v8596 = vunpack.c.l.b16 %v6943
    %v8597 = vunpack.c.h.b16 %v6943
    %v8598 = vunpack.c.l.b16 %v6944
    %v8599 = vunpack.c.h.b16 %v6944
    %v8600 = vunpack.c.l.b16 %v6945
    %v8601 = vunpack.c.h.b16 %v6945
    %v8602 = vunpack.c.l.b16 %v6946
    %v8603 = vunpack.c.h.b16 %v6946
    %v8604 = vunpack.c.l.b16 %v6947
    %v8605 = vunpack.c.h.b16 %v6947
    %v8606 = vunpack.c.l.b16 %v6948
    %v8607 = vunpack.c.h.b16 %v6948
    %v8608 = vunpack.c.l.b16 %v6949
    %v8609 = vunpack.c.h.b16 %v6949
    %v8610 = vunpack.c.l.b16 %v6950
    %v8611 = vunpack.c.h.b16 %v6950
    %v8612 = vunpack.c.l.b16 %v6951
    %v8613 = vunpack.c.h.b16 %v6951
    %v8614 = vunpack.c.l.b16 %v6952
    %v8615 = vunpack.c.h.b16 %v6952
    %v8616 = vunpack.c.l.b16 %v6953
    %v8617 = vunpack.c.h.b16 %v6953
    %v8618 = vunpack.c.l.b16 %v6954
    %v8619 = vunpack.c.h.b16 %v6954
    %v8620 = vunpack.c.l.b16 %v6955
    %v8621 = vunpack.c.h.b16 %v6955
    %v8622 = vunpack.c.l.b16 %v6956
    %v8623 = vunpack.c.h.b16 %v6956
    %v8624 = vunpack.c.l.b16 %v6957
    %v8625 = vunpack.c.h.b16 %v6957
    %v8626 = vunpack.c.l.b16 %v6958
    %v8627 = vunpack.c.h.b16 %v6958
    %v8628 = vunpack.c.l.b16 %v6959
    %v8629 = vunpack.c.h.b16 %v6959
    %v8630 = vunpack.c.l.b16 %v6960
    %v8631 = vunpack.c.h.b16 %v6960
    %v8632 = vunpack.c.l.b16 %v6961
    %v8633 = vunpack.c.h.b16 %v6961
    %v8634 = vunpack.c.l.b16 %v6962
    %v8635 = vunpack.c.h.b16 %v6962
    %v8636 = vunpack.c.l.b16 %v6963
    %v8637 = vunpack.c.h.b16 %v6963
    %v8638 = vunpack.c.l.b16 %v6964
    %v8639 = vunpack.c.h.b16 %v6964
    %v8640 = vunpack.c.l.b16 %v6965
    %v8641 = vunpack.c.h.b16 %v6965
    %v8642 = vunpack.c.l.b16 %v6966
    %v8643 = vunpack.c.h.b16 %v6966
    %v8644 = vunpack.c.l.b16 %v6967
    %v8645 = vunpack.c.h.b16 %v6967
    %v8646 = vunpack.c.l.b16 %v6968
    %v8647 = vunpack.c.h.b16 %v6968
    %v8648 = vunpack.c.l.b16 %v6969
    %v8649 = vunpack.c.h.b16 %v6969
    %v8650 = vunpack.c.l.b16 %v6970
    %v8651 = vunpack.c.h.b16 %v6970
    %v8652 = vunpack.c.l.b16 %v6971
    %v8653 = vunpack.c.h.b16 %v6971
    %v8654 = vunpack.c.l.b16 %v6972
    %v8655 = vunpack.c.h.b16 %v6972
    %v8656 = vunpack.c.l.b16 %v6973
    %v8657 = vunpack.c.h.b16 %v6973
    %v8658 = vunpack.c.l.b16 %v6974
    %v8659 = vunpack.c.h.b16 %v6974
    %v8660 = vunpack.c.l.b16 %v6975
    %v8661 = vunpack.c.h.b16 %v6975
    %v8662 = vunpack.c.l.b16 %v6976
    %v8663 = vunpack.c.h.b16 %v6976
    %v8664 = vunpack.c.l.b16 %v6977
    %v8665 = vunpack.c.h.b16 %v6977
    %v8666 = vunpack.c.l.b16 %v6978
    %v8667 = vunpack.c.h.b16 %v6978
    %v8668 = vunpack.c.l.b16 %v6979
    %v8669 = vunpack.c.h.b16 %v6979
    %v8670 = vunpack.c.l.b16 %v6980
    %v8671 = vunpack.c.h.b16 %v6980
    %v8672 = vunpack.c.l.b16 %v6981
    %v8673 = vunpack.c.h.b16 %v6981
    %v8674 = vunpack.c.l.b16 %v6982
    %v8675 = vunpack.c.h.b16 %v6982
    %v8676 = vunpack.c.l.b16 %v6983
    %v8677 = vunpack.c.h.b16 %v6983
    %v8678 = vunpack.c.l.b16 %v6984
    %v8679 = vunpack.c.h.b16 %v6984
    %v8680 = vunpack.c.l.b16 %v6985
    %v8681 = vunpack.c.h.b16 %v6985
    %v8682 = vunpack.c.l.b16 %v6986
    %v8683 = vunpack.c.h.b16 %v6986
    %v8684 = vunpack.c.l.b16 %v6987
    %v8685 = vunpack.c.h.b16 %v6987
    %v8686 = vunpack.c.l.b16 %v6988
    %v8687 = vunpack.c.h.b16 %v6988
    %v8688 = vunpack.c.l.b16 %v6989
    %v8689 = vunpack.c.h.b16 %v6989
    %v8690 = vunpack.c.l.b16 %v6990
    %v8691 = vunpack.c.h.b16 %v6990
    %v8692 = vunpack.c.l.b16 %v6991
    %v8693 = vunpack.c.h.b16 %v6991
    %v8694 = vunpack.c.l.b16 %v6992
    %v8695 = vunpack.c.h.b16 %v6992
    %v8696 = vunpack.c.l.b16 %v6993
    %v8697 = vunpack.c.h.b16 %v6993
    %v8698 = vunpack.c.l.b16 %v6994
    %v8699 = vunpack.c.h.b16 %v6994
    %v8700 = vunpack.c.l.b16 %v6995
    %v8701 = vunpack.c.h.b16 %v6995
    %v8702 = vunpack.c.l.b16 %v6996
    %v8703 = vunpack.c.h.b16 %v6996
    %v8704 = vunpack.c.l.b16 %v6997
    %v8705 = vunpack.c.h.b16 %v6997
    %v8706 = vunpack.c.l.b16 %v6998
    %v8707 = vunpack.c.h.b16 %v6998
    %v8708 = vunpack.c.l.b16 %v6999
    %v8709 = vunpack.c.h.b16 %v6999
    %v8710 = vunpack.c.l.b16 %v7000
    %v8711 = vunpack.c.h.b16 %v7000
    %v8712 = vunpack.c.l.b16 %v7001
    %v8713 = vunpack.c.h.b16 %v7001
    %v8714 = vunpack.c.l.b16 %v7002
    %v8715 = vunpack.c.h.b16 %v7002
    %v8716 = vunpack.c.l.b16 %v7003
    %v8717 = vunpack.c.h.b16 %v7003
    %v8718 = vunpack.c.l.b16 %v7004
    %v8719 = vunpack.c.h.b16 %v7004
    %v8720 = vunpack.c.l.b16 %v7005
    %v8721 = vunpack.c.h.b16 %v7005
    %v8722 = vunpack.c.l.b16 %v7006
    %v8723 = vunpack.c.h.b16 %v7006
    %v8724 = vunpack.c.l.b16 %v7007
    %v8725 = vunpack.c.h.b16 %v7007
    %v8726 = vunpack.c.l.b16 %v7008
    %v8727 = vunpack.c.h.b16 %v7008
    %v8728 = vunpack.c.l.b16 %v7009
    %v8729 = vunpack.c.h.b16 %v7009
    %v8730 = vunpack.c.l.b16 %v7010
    %v8731 = vunpack.c.h.b16 %v7010
    %v8732 = vunpack.c.l.b16 %v7011
    %v8733 = vunpack.c.h.b16 %v7011
    %v8734 = vunpack.c.l.b16 %v7012
    %v8735 = vunpack.c.h.b16 %v7012
    %v8736 = vunpack.c.l.b16 %v7013
    %v8737 = vunpack.c.h.b16 %v7013
    %v8738 = vunpack.c.l.b16 %v7014
    %v8739 = vunpack.c.h.b16 %v7014
    %v8740 = vunpack.c.l.b16 %v7015
    %v8741 = vunpack.c.h.b16 %v7015
    %v8742 = vunpack.c.l.b16 %v7016
    %v8743 = vunpack.c.h.b16 %v7016
    %v8744 = vunpack.c.l.b16 %v7017
    %v8745 = vunpack.c.h.b16 %v7017
    %v8746 = vunpack.c.l.b16 %v7018
    %v8747 = vunpack.c.h.b16 %v7018
    %v8748 = vunpack.c.l.b16 %v7019
    %v8749 = vunpack.c.h.b16 %v7019
    %v8750 = vunpack.c.l.b16 %v7020
    %v8751 = vunpack.c.h.b16 %v7020
    %v8752 = vunpack.c.l.b16 %v7021
    %v8753 = vunpack.c.h.b16 %v7021
    %v8754 = vunpack.c.l.b16 %v7022
    %v8755 = vunpack.c.h.b16 %v7022
    %v8756 = vunpack.c.l.b16 %v7023
    %v8757 = vunpack.c.h.b16 %v7023
    %v8758 = vunpack.c.l.b16 %v7024
    %v8759 = vunpack.c.h.b16 %v7024
    %v8760 = vunpack.c.l.b16 %v7025
    %v8761 = vunpack.c.h.b16 %v7025
    %v8762 = vunpack.c.l.b16 %v7026
    %v8763 = vunpack.c.h.b16 %v7026
    %v8764 = vunpack.c.l.b16 %v7027
    %v8765 = vunpack.c.h.b16 %v7027
    %v8766 = vunpack.c.l.b16 %v7028
    %v8767 = vunpack.c.h.b16 %v7028
    %v8768 = vunpack.c.l.b16 %v7029
    %v8769 = vunpack.c.h.b16 %v7029
    %v8770 = vunpack.c.l.b16 %v7030
    %v8771 = vunpack.c.h.b16 %v7030
    %v8772 = vunpack.c.l.b16 %v7031
    %v8773 = vunpack.c.h.b16 %v7031
    %v8774 = vunpack.c.l.b16 %v7032
    %v8775 = vunpack.c.h.b16 %v7032
    %v8776 = vunpack.c.l.b16 %v7033
    %v8777 = vunpack.c.h.b16 %v7033
    %v8778 = vunpack.c.l.b16 %v7034
    %v8779 = vunpack.c.h.b16 %v7034
    %v8780 = vunpack.c.l.b16 %v7035
    %v8781 = vunpack.c.h.b16 %v7035
    %v8782 = vunpack.c.l.b16 %v7036
    %v8783 = vunpack.c.h.b16 %v7036
    %v8784 = vunpack.c.l.b16 %v7037
    %v8785 = vunpack.c.h.b16 %v7037
    %v8786 = vunpack.c.l.b16 %v7038
    %v8787 = vunpack.c.h.b16 %v7038
    %v8788 = vunpack.c.l.b16 %v7039
    %v8789 = vunpack.c.h.b16 %v7039
    %v8790 = vunpack.c.l.b16 %v7040
    %v8791 = vunpack.c.h.b16 %v7040
    %v8792 = vunpack.c.l.b16 %v7041
    %v8793 = vunpack.c.h.b16 %v7041
    %v8794 = vunpack.c.l.b16 %v7042
    %v8795 = vunpack.c.h.b16 %v7042
    %v8796 = vunpack.c.l.b16 %v7043
    %v8797 = vunpack.c.h.b16 %v7043
    %v8798 = vunpack.c.l.b16 %v7044
    %v8799 = vunpack.c.h.b16 %v7044
    %v8800 = vunpack.c.l.b16 %v7045
    %v8801 = vunpack.c.h.b16 %v7045
    %v8802 = vunpack.c.l.b16 %v7046
    %v8803 = vunpack.c.h.b16 %v7046
    %v8804 = vunpack.c.l.b16 %v7047
    %v8805 = vunpack.c.h.b16 %v7047
    %v8806 = vunpack.c.l.b16 %v7048
    %v8807 = vunpack.c.h.b16 %v7048
    %v8808 = vunpack.c.l.b16 %v7049
    %v8809 = vunpack.c.h.b16 %v7049
    %v8810 = vunpack.c.l.b16 %v7050
    %v8811 = vunpack.c.h.b16 %v7050
    %v8812 = vunpack.c.l.b16 %v7051
    %v8813 = vunpack.c.h.b16 %v7051
    %v8814 = vunpack.c.l.b16 %v7052
    %v8815 = vunpack.c.h.b16 %v7052
    %v8816 = vunpack.c.l.b16 %v7053
    %v8817 = vunpack.c.h.b16 %v7053
    %v8818 = vunpack.c.l.b16 %v7054
    %v8819 = vunpack.c.h.b16 %v7054
    %v8820 = vunpack.c.l.b16 %v7055
    %v8821 = vunpack.c.h.b16 %v7055
    %v8822 = vunpack.c.l.b16 %v7056
    %v8823 = vunpack.c.h.b16 %v7056
    %v8824 = vunpack.c.l.b16 %v7057
    %v8825 = vunpack.c.h.b16 %v7057
    %v8826 = vunpack.c.l.b16 %v7058
    %v8827 = vunpack.c.h.b16 %v7058
    %v8828 = vunpack.c.l.b16 %v7059
    %v8829 = vunpack.c.h.b16 %v7059
    %v8830 = vunpack.c.l.b16 %v7060
    %v8831 = vunpack.c.h.b16 %v7060
    %v8832 = vunpack.c.l.b16 %v7061
    %v8833 = vunpack.c.h.b16 %v7061
    %v8834 = vunpack.c.l.b16 %v7062
    %v8835 = vunpack.c.h.b16 %v7062
    %v8836 = vunpack.c.l.b16 %v7063
    %v8837 = vunpack.c.h.b16 %v7063
    %v8838 = vunpack.c.l.b16 %v7064
    %v8839 = vunpack.c.h.b16 %v7064
    %v8840 = vunpack.c.l.b16 %v7065
    %v8841 = vunpack.c.h.b16 %v7065
    %v8842 = vunpack.c.l.b16 %v7066
    %v8843 = vunpack.c.h.b16 %v7066
    %v8844 = vunpack.c.l.b16 %v7067
    %v8845 = vunpack.c.h.b16 %v7067
    %v8846 = vunpack.c.l.b16 %v7068
    %v8847 = vunpack.c.h.b16 %v7068
    %v8848 = vunpack.c.l.b16 %v7069
    %v8849 = vunpack.c.h.b16 %v7069
    %v8850 = vunpack.c.l.b16 %v7070
    %v8851 = vunpack.c.h.b16 %v7070
    %v8852 = vunpack.c.l.b16 %v7071
    %v8853 = vunpack.c.h.b16 %v7071
    %v8854 = vunpack.c.l.b16 %v7072
    %v8855 = vunpack.c.h.b16 %v7072
    %v8856 = vunpack.c.l.b16 %v7073
    %v8857 = vunpack.c.h.b16 %v7073
    %v8858 = vunpack.c.l.b16 %v7074
    %v8859 = vunpack.c.h.b16 %v7074
    %v8860 = vunpack.c.l.b16 %v7075
    %v8861 = vunpack.c.h.b16 %v7075
    %v8862 = vunpack.c.l.b16 %v7076
    %v8863 = vunpack.c.h.b16 %v7076
    %v8864 = vunpack.c.l.b16 %v7077
    %v8865 = vunpack.c.h.b16 %v7077
    %v8866 = vunpack.c.l.b16 %v7078
    %v8867 = vunpack.c.h.b16 %v7078
    %v8868 = vunpack.c.l.b16 %v7079
    %v8869 = vunpack.c.h.b16 %v7079
    %v8870 = vunpack.c.l.b16 %v7080
    %v8871 = vunpack.c.h.b16 %v7080
    %v8872 = vunpack.c.l.b16 %v7081
    %v8873 = vunpack.c.h.b16 %v7081
    %v8874 = vunpack.c.l.b16 %v7082
    %v8875 = vunpack.c.h.b16 %v7082
    %v8876 = vunpack.c.l.b16 %v7083
    %v8877 = vunpack.c.h.b16 %v7083
    %v8878 = vunpack.c.l.b16 %v7084
    %v8879 = vunpack.c.h.b16 %v7084
    %v8880 = vunpack.c.l.b16 %v7085
    %v8881 = vunpack.c.h.b16 %v7085
    %v8882 = vunpack.c.l.b16 %v7086
    %v8883 = vunpack.c.h.b16 %v7086
    %v8884 = vunpack.c.l.b16 %v7087
    %v8885 = vunpack.c.h.b16 %v7087
    %v8886 = vunpack.c.l.b16 %v7088
    %v8887 = vunpack.c.h.b16 %v7088
    %v8888 = vunpack.c.l.b16 %v7089
    %v8889 = vunpack.c.h.b16 %v7089
    %v8890 = vunpack.c.l.b16 %v7090
    %v8891 = vunpack.c.h.b16 %v7090
    %v8892 = vunpack.c.l.b16 %v7091
    %v8893 = vunpack.c.h.b16 %v7091
    %v8894 = vunpack.c.l.b16 %v7092
    %v8895 = vunpack.c.h.b16 %v7092
    %v8896 = vunpack.c.l.b16 %v7093
    %v8897 = vunpack.c.h.b16 %v7093
    %v8898 = vunpack.c.l.b16 %v7094
    %v8899 = vunpack.c.h.b16 %v7094
    %v8900 = vunpack.c.l.b16 %v7095
    %v8901 = vunpack.c.h.b16 %v7095
    %v8902 = vunpack.c.l.b16 %v7096
    %v8903 = vunpack.c.h.b16 %v7096
    %v8904 = vunpack.c.l.b16 %v7097
    %v8905 = vunpack.c.h.b16 %v7097
    %v8906 = vunpack.c.l.b16 %v7098
    %v8907 = vunpack.c.h.b16 %v7098
    %v8908 = vunpack.c.l.b16 %v7099
    %v8909 = vunpack.c.h.b16 %v7099
    %v8910 = vunpack.c.l.b16 %v7100
    %v8911 = vunpack.c.h.b16 %v7100
    %v8912 = vunpack.c.l.b16 %v7101
    %v8913 = vunpack.c.h.b16 %v7101
    %v8914 = vunpack.c.l.b16 %v7102
    %v8915 = vunpack.c.h.b16 %v7102
    %v8916 = vunpack.c.l.b16 %v7103
    %v8917 = vunpack.c.h.b16 %v7103
    %v8918 = vunpack.c.l.b16 %v7104
    %v8919 = vunpack.c.h.b16 %v7104
    %v8920 = vunpack.c.l.b16 %v7105
    %v8921 = vunpack.c.h.b16 %v7105
    %v8922 = vunpack.c.l.b16 %v7106
    %v8923 = vunpack.c.h.b16 %v7106
    %v8924 = vunpack.c.l.b16 %v7107
    %v8925 = vunpack.c.h.b16 %v7107
    %v8926 = vunpack.c.l.b16 %v7108
    %v8927 = vunpack.c.h.b16 %v7108
    %v8928 = vunpack.c.l.b16 %v7109
    %v8929 = vunpack.c.h.b16 %v7109
    %v8930 = vunpack.c.l.b16 %v7110
    %v8931 = vunpack.c.h.b16 %v7110
    %v8932 = vunpack.c.l.b16 %v7111
    %v8933 = vunpack.c.h.b16 %v7111
    %v8934 = vunpack.c.l.b16 %v7112
    %v8935 = vunpack.c.h.b16 %v7112
    %v8936 = vunpack.c.l.b16 %v7113
    %v8937 = vunpack.c.h.b16 %v7113
    %v8938 = vunpack.c.l.b16 %v7114
    %v8939 = vunpack.c.h.b16 %v7114
    %v8940 = vunpack.c.l.b16 %v7115
    %v8941 = vunpack.c.h.b16 %v7115
    %v8942 = vunpack.c.l.b16 %v7116
    %v8943 = vunpack.c.h.b16 %v7116
    %v8944 = vunpack.c.l.b16 %v7117
    %v8945 = vunpack.c.h.b16 %v7117
    %v8946 = vunpack.c.l.b16 %v7118
    %v8947 = vunpack.c.h.b16 %v7118
    %v8948 = vunpack.c.l.b16 %v7119
    %v8949 = vunpack.c.h.b16 %v7119
    %v8950 = vunpack.c.l.b16 %v7120
    %v8951 = vunpack.c.h.b16 %v7120
    %v8952 = vunpack.c.l.b16 %v7121
    %v8953 = vunpack.c.h.b16 %v7121
    %v8954 = vunpack.c.l.b16 %v7122
    %v8955 = vunpack.c.h.b16 %v7122
    %v8956 = vunpack.c.l.b16 %v7123
    %v8957 = vunpack.c.h.b16 %v7123
    %v8958 = vunpack.c.l.b16 %v7124
    %v8959 = vunpack.c.h.b16 %v7124
    %v8960 = vunpack.c.l.b16 %v7125
    %v8961 = vunpack.c.h.b16 %v7125
    %v8962 = vunpack.c.l.b16 %v7126
    %v8963 = vunpack.c.h.b16 %v7126
    %v8964 = vunpack.c.l.b16 %v7127
    %v8965 = vunpack.c.h.b16 %v7127
    %v8966 = vunpack.c.l.b16 %v7128
    %v8967 = vunpack.c.h.b16 %v7128
    %v8968 = vunpack.c.l.b16 %v7129
    %v8969 = vunpack.c.h.b16 %v7129
    %v8970 = vunpack.c.l.b16 %v7130
    %v8971 = vunpack.c.h.b16 %v7130
    %v8972 = vunpack.c.l.b16 %v7131
    %v8973 = vunpack.c.h.b16 %v7131
    %v8974 = vunpack.c.l.b16 %v7132
    %v8975 = vunpack.c.h.b16 %v7132
    %v8976 = vunpack.c.l.b16 %v7133
    %v8977 = vunpack.c.h.b16 %v7133
    %v8978 = vunpack.c.l.b16 %v7134
    %v8979 = vunpack.c.h.b16 %v7134
    %v8980 = vunpack.c.l.b16 %v7135
    %v8981 = vunpack.c.h.b16 %v7135
    %v8982 = vunpack.c.l.b16 %v7136
    %v8983 = vunpack.c.h.b16 %v7136
    %v8984 = vunpack.c.l.b16 %v7137
    %v8985 = vunpack.c.h.b16 %v7137
    %v8986 = vunpack.c.l.b16 %v7138
    %v8987 = vunpack.c.h.b16 %v7138
    %v8988 = vunpack.c.l.b16 %v7139
    %v8989 = vunpack.c.h.b16 %v7139
    %v8990 = vunpack.c.l.b16 %v7140
    %v8991 = vunpack.c.h.b16 %v7140
    %v8992 = vunpack.c.l.b16 %v7141
    %v8993 = vunpack.c.h.b16 %v7141
    %v8994 = vunpack.c.l.b16 %v7142
    %v8995 = vunpack.c.h.b16 %v7142
    %v8996 = vunpack.c.l.b16 %v7143
    %v8997 = vunpack.c.h.b16 %v7143
    %v8998 = vunpack.c.l.b16 %v7144
    %v8999 = vunpack.c.h.b16 %v7144
    %v9000 = vunpack.c.l.b16 %v7145
    %v9001 = vunpack.c.h.b16 %v7145
    %v9002 = vunpack.c.l.b16 %v7146
    %v9003 = vunpack.c.h.b16 %v7146
    %v9004 = vunpack.c.l.b16 %v7147
    %v9005 = vunpack.c.h.b16 %v7147
    %v9006 = vunpack.c.l.b16 %v7148
    %v9007 = vunpack.c.h.b16 %v7148
    %v9008 = vunpack.c.l.b16 %v7149
    %v9009 = vunpack.c.h.b16 %v7149
    %v9010 = vunpack.c.l.b16 %v7150
    %v9011 = vunpack.c.h.b16 %v7150
    %v9012 = vunpack.c.l.b16 %v7151
    %v9013 = vunpack.c.h.b16 %v7151
    %v9014 = vunpack.c.l.b16 %v7152
    %v9015 = vunpack.c.h.b16 %v7152
    %v9016 = vunpack.c.l.b16 %v7153
    %v9017 = vunpack.c.h.b16 %v7153
    %v9018 = vunpack.c.l.b16 %v7154
    %v9019 = vunpack.c.h.b16 %v7154
    %v9020 = vunpack.c.l.b16 %v7155
    %v9021 = vunpack.c.h.b16 %v7155
    %v9022 = vunpack.c.l.b16 %v7156
    %v9023 = vunpack.c.h.b16 %v7156
    %v9024 = vunpack.c.l.b16 %v7157
    %v9025 = vunpack.c.h.b16 %v7157
    %v9026 = vunpack.c.l.b16 %v7158
    %v9027 = vunpack.c.h.b16 %v7158
    %v9028 = vunpack.c.l.b16 %v7159
    %v9029 = vunpack.c.h.b16 %v7159
    %v9030 = vunpack.c.l.b16 %v7160
    %v9031 = vunpack.c.h.b16 %v7160
    %v9032 = vunpack.c.l.b16 %v7161
    %v9033 = vunpack.c.h.b16 %v7161
    %v9034 = vunpack.c.l.b16 %v7162
    %v9035 = vunpack.c.h.b16 %v7162
    %v9036 = vunpack.c.l.b16 %v7163
    %v9037 = vunpack.c.h.b16 %v7163
    %v9038 = vunpack.c.l.b16 %v7164
    %v9039 = vunpack.c.h.b16 %v7164
    %v9040 = vunpack.c.l.b16 %v7165
    %v9041 = vunpack.c.h.b16 %v7165
    %v9042 = vunpack.c.l.b16 %v7166
    %v9043 = vunpack.c.h.b16 %v7166
    %v9044 = vunpack.c.l.b16 %v7167
    %v9045 = vunpack.c.h.b16 %v7167
    %v9046 = vunpack.c.l.b16 %v7168
    %v9047 = vunpack.c.h.b16 %v7168
    %v9048 = vunpack.c.l.b16 %v7169
    %v9049 = vunpack.c.h.b16 %v7169
    %v9050 = vunpack.c.l.b16 %v7170
    %v9051 = vunpack.c.h.b16 %v7170
    %v9052 = vunpack.c.l.b16 %v7171
    %v9053 = vunpack.c.h.b16 %v7171
    %v9054 = vunpack.c.l.b16 %v7172
    %v9055 = vunpack.c.h.b16 %v7172
    %v9056 = vunpack.c.l.b16 %v7173
    %v9057 = vunpack.c.h.b16 %v7173
    %v9058 = vunpack.c.l.b16 %v7174
    %v9059 = vunpack.c.h.b16 %v7174
    %v9060 = vunpack.c.l.b16 %v7175
    %v9061 = vunpack.c.h.b16 %v7175
    %v9062 = vunpack.c.l.b16 %v7176
    %v9063 = vunpack.c.h.b16 %v7176
    %v9064 = vunpack.c.l.b16 %v7177
    %v9065 = vunpack.c.h.b16 %v7177
    %v9066 = vunpack.c.l.b16 %v7178
    %v9067 = vunpack.c.h.b16 %v7178
    %v9068 = vunpack.c.l.b16 %v7179
    %v9069 = vunpack.c.h.b16 %v7179
    %v9070 = vunpack.c.l.b16 %v7180
    %v9071 = vunpack.c.h.b16 %v7180
    %v9072 = vunpack.c.l.b16 %v7181
    %v9073 = vunpack.c.h.b16 %v7181
    %v9074 = vunpack.c.l.b16 %v7182
    %v9075 = vunpack.c.h.b16 %v7182
    %v9076 = vunpack.c.l.b16 %v7183
    %v9077 = vunpack.c.h.b16 %v7183
    %v9078 = vunpack.c.l.b16 %v7184
    %v9079 = vunpack.c.h.b16 %v7184
    %v9080 = vunpack.c.l.b16 %v7185
    %v9081 = vunpack.c.h.b16 %v7185
    %v9082 = vunpack.c.l.b16 %v7186
    %v9083 = vunpack.c.h.b16 %v7186
    %v9084 = vunpack.c.l.b16 %v7187
    %v9085 = vunpack.c.h.b16 %v7187
    %v9086 = vunpack.c.l.b16 %v7188
    %v9087 = vunpack.c.h.b16 %v7188
    %v9088 = vunpack.c.l.b16 %v7189
    %v9089 = vunpack.c.h.b16 %v7189
    %v9090 = vunpack.c.l.b16 %v7190
    %v9091 = vunpack.c.h.b16 %v7190
    %v9092 = vunpack.c.l.b16 %v7191
    %v9093 = vunpack.c.h.b16 %v7191
    %v9094 = vunpack.c.l.b16 %v7192
    %v9095 = vunpack.c.h.b16 %v7192
    %v9096 = vunpack.c.l.b16 %v7193
    %v9097 = vunpack.c.h.b16 %v7193
    %v9098 = vunpack.c.l.b16 %v7194
    %v9099 = vunpack.c.h.b16 %v7194
    %v9100 = vunpack.c.l.b16 %v7195
    %v9101 = vunpack.c.h.b16 %v7195
    %v9102 = vunpack.c.l.b16 %v7196
    %v9103 = vunpack.c.h.b16 %v7196
    %v9104 = vunpack.c.l.b16 %v7197
    %v9105 = vunpack.c.h.b16 %v7197
    %v9106 = vunpack.c.l.b16 %v7198
    %v9107 = vunpack.c.h.b16 %v7198
    %v9108 = vunpack.c.l.b16 %v7199
    %v9109 = vunpack.c.h.b16 %v7199
    %v9110 = vunpack.c.l.b16 %v7200
    %v9111 = vunpack.c.h.b16 %v7200
    %v9112 = vunpack.c.l.b16 %v7201
    %v9113 = vunpack.c.h.b16 %v7201
    %v9114 = vunpack.c.l.b16 %v7202
    %v9115 = vunpack.c.h.b16 %v7202
    %v9116 = vunpack.c.l.b16 %v7203
    %v9117 = vunpack.c.h.b16 %v7203
    %v9118 = vunpack.c.l.b16 %v7204
    %v9119 = vunpack.c.h.b16 %v7204
    %v9120 = vunpack.c.l.b16 %v7205
    %v9121 = vunpack.c.h.b16 %v7205
    %v9122 = vunpack.c.l.b16 %v7206
    %v9123 = vunpack.c.h.b16 %v7206
    %v9124 = vunpack.c.l.b16 %v7207
    %v9125 = vunpack.c.h.b16 %v7207
    %v9126 = vunpack.c.l.b16 %v7208
    %v9127 = vunpack.c.h.b16 %v7208
    %v9128 = vunpack.c.l.b16 %v7209
    %v9129 = vunpack.c.h.b16 %v7209
    %v9130 = vunpack.c.l.b16 %v7210
    %v9131 = vunpack.c.h.b16 %v7210
    %v9132 = vunpack.c.l.b16 %v7211
    %v9133 = vunpack.c.h.b16 %v7211
    %v9134 = vunpack.c.l.b16 %v7212
    %v9135 = vunpack.c.h.b16 %v7212
    %v9136 = vunpack.c.l.b16 %v7213
    %v9137 = vunpack.c.h.b16 %v7213
    %v9138 = vunpack.c.l.b16 %v7214
    %v9139 = vunpack.c.h.b16 %v7214
    %v9140 = vunpack.c.l.b16 %v7215
    %v9141 = vunpack.c.h.b16 %v7215
    %v9142 = vunpack.c.l.b16 %v7216
    %v9143 = vunpack.c.h.b16 %v7216
    %v9144 = vunpack.c.l.b16 %v7217
    %v9145 = vunpack.c.h.b16 %v7217
    %v9146 = vunpack.c.l.b16 %v7218
    %v9147 = vunpack.c.h.b16 %v7218
    %v9148 = vunpack.c.l.b16 %v7219
    %v9149 = vunpack.c.h.b16 %v7219
    %v9150 = vunpack.c.l.b16 %v7220
    %v9151 = vunpack.c.h.b16 %v7220
    %v9152 = vunpack.c.l.b16 %v7221
    %v9153 = vunpack.c.h.b16 %v7221
    %v9154 = vunpack.c.l.b16 %v7222
    %v9155 = vunpack.c.h.b16 %v7222
    %v9156 = vunpack.c.l.b16 %v7223
    %v9157 = vunpack.c.h.b16 %v7223
    %v9158 = vunpack.c.l.b16 %v7224
    %v9159 = vunpack.c.h.b16 %v7224
    %v9160 = vunpack.c.l.b16 %v7225
    %v9161 = vunpack.c.h.b16 %v7225
    %v9162 = vunpack.c.l.b16 %v7226
    %v9163 = vunpack.c.h.b16 %v7226
    %v9164 = vunpack.c.l.b16 %v7227
    %v9165 = vunpack.c.h.b16 %v7227
    %v9166 = vunpack.c.l.b16 %v7228
    %v9167 = vunpack.c.h.b16 %v7228
    %v9168 = vunpack.c.l.b16 %v7229
    %v9169 = vunpack.c.h.b16 %v7229
    %v9170 = vunpack.c.l.b16 %v7230
    %v9171 = vunpack.c.h.b16 %v7230
    %v9172 = vunpack.c.l.b16 %v7231
    %v9173 = vunpack.c.h.b16 %v7231
    %v9174 = vunpack.c.l.b16 %v7232
    %v9175 = vunpack.c.h.b16 %v7232
    %v9176 = vunpack.c.l.b16 %v7233
    %v9177 = vunpack.c.h.b16 %v7233
    %v9178 = vunpack.c.l.b16 %v7234
    %v9179 = vunpack.c.h.b16 %v7234
    %v9180 = vunpack.c.l.b16 %v7235
    %v9181 = vunpack.c.h.b16 %v7235
    %v9182 = vunpack.c.l.b16 %v7236
    %v9183 = vunpack.c.h.b16 %v7236
    %v9184 = vunpack.c.l.b16 %v7237
    %v9185 = vunpack.c.h.b16 %v7237
    %v9186 = vunpack.c.l.b16 %v7238
    %v9187 = vunpack.c.h.b16 %v7238
    %v9188 = vunpack.c.l.b16 %v7239
    %v9189 = vunpack.c.h.b16 %v7239
    %v9190 = vunpack.c.l.b16 %v7240
    %v9191 = vunpack.c.h.b16 %v7240
    %v9192 = vunpack.c.l.b16 %v7241
    %v9193 = vunpack.c.h.b16 %v7241
    %v9194 = vunpack.c.l.b16 %v7242
    %v9195 = vunpack.c.h.b16 %v7242
    %v9196 = vunpack.c.l.b16 %v7243
    %v9197 = vunpack.c.h.b16 %v7243
    %v9198 = vunpack.c.l.b16 %v7244
    %v9199 = vunpack.c.h.b16 %v7244
    %v9200 = vunpack.c.l.b16 %v7245
    %v9201 = vunpack.c.h.b16 %v7245
    %v9202 = vunpack.c.l.b16 %v7246
    %v9203 = vunpack.c.h.b16 %v7246
    %v9204 = vunpack.c.l.b16 %v7247
    %v9205 = vunpack.c.h.b16 %v7247
    %v9206 = vunpack.c.l.b16 %v7248
    %v9207 = vunpack.c.h.b16 %v7248
    %v9208 = vunpack.c.l.b16 %v7249
    %v9209 = vunpack.c.h.b16 %v7249
    %v9210 = vunpack.c.l.b16 %v7250
    %v9211 = vunpack.c.h.b16 %v7250
    %v9212 = vunpack.c.l.b16 %v7251
    %v9213 = vunpack.c.h.b16 %v7251
    %v9214 = vunpack.c.l.b16 %v7252
    %v9215 = vunpack.c.h.b16 %v7252
    %v9216 = vunpack.c.l.b16 %v7253
    %v9217 = vunpack.c.h.b16 %v7253
    %v9218 = vunpack.c.l.b16 %v7254
    %v9219 = vunpack.c.h.b16 %v7254
    %v9220 = vunpack.c.l.b16 %v7255
    %v9221 = vunpack.c.h.b16 %v7255
    %v9222 = vunpack.c.l.b16 %v7256
    %v9223 = vunpack.c.h.b16 %v7256
    %v9224 = vunpack.c.l.b16 %v7257
    %v9225 = vunpack.c.h.b16 %v7257
    %v9226 = vunpack.c.l.b16 %v7258
    %v9227 = vunpack.c.h.b16 %v7258
    %v9228 = vunpack.c.l.b16 %v7259
    %v9229 = vunpack.c.h.b16 %v7259
    %v9230 = vunpack.c.l.b16 %v7260
    %v9231 = vunpack.c.h.b16 %v7260
    %v9232 = vunpack.c.l.b16 %v7261
    %v9233 = vunpack.c.h.b16 %v7261
    %v9234 = vunpack.c.l.b16 %v7262
    %v9235 = vunpack.c.h.b16 %v7262
    %v9236 = vunpack.c.l.b16 %v7263
    %v9237 = vunpack.c.h.b16 %v7263
    %v9238 = vunpack.c.l.b16 %v7264
    %v9239 = vunpack.c.h.b16 %v7264
    %v9240 = vunpack.c.l.b16 %v7265
    %v9241 = vunpack.c.h.b16 %v7265
    %v9242 = vunpack.c.l.b16 %v7266
    %v9243 = vunpack.c.h.b16 %v7266
    %v9244 = vunpack.c.l.b16 %v7267
    %v9245 = vunpack.c.h.b16 %v7267
    %v9246 = vunpack.c.l.b16 %v7268
    %v9247 = vunpack.c.h.b16 %v7268
    %v9248 = vunpack.c.l.b16 %v7269
    %v9249 = vunpack.c.h.b16 %v7269
    %v9250 = vunpack.c.l.b16 %v7270
    %v9251 = vunpack.c.h.b16 %v7270
    %v9252 = vunpack.c.l.b16 %v7271
    %v9253 = vunpack.c.h.b16 %v7271
    %v9254 = vunpack.c.l.b16 %v7272
    %v9255 = vunpack.c.h.b16 %v7272
    %v9256 = vunpack.c.l.b16 %v7273
    %v9257 = vunpack.c.h.b16 %v7273
    %v9258 = vunpack.c.l.b16 %v7274
    %v9259 = vunpack.c.h.b16 %v7274
    %v9260 = vunpack.c.l.b16 %v7275
    %v9261 = vunpack.c.h.b16 %v7275
    %v9262 = vunpack.c.l.b16 %v7276
    %v9263 = vunpack.c.h.b16 %v7276
    %v9264 = vunpack.c.l.b16 %v7277
    %v9265 = vunpack.c.h.b16 %v7277
    %v9266 = vunpack.c.l.b16 %v7278
    %v9267 = vunpack.c.h.b16 %v7278
    %v9268 = vunpack.c.l.b16 %v7279
    %v9269 = vunpack.c.h.b16 %v7279
    %v9270 = vunpack.c.l.b16 %v7280
    %v9271 = vunpack.c.h.b16 %v7280
    %v9272 = vunpack.c.l.b16 %v7281
    %v9273 = vunpack.c.h.b16 %v7281
    %v9274 = vunpack.c.l.b16 %v7282
    %v9275 = vunpack.c.h.b16 %v7282
    %v9276 = vunpack.c.l.b16 %v7283
    %v9277 = vunpack.c.h.b16 %v7283
    %v9278 = vunpack.c.l.b16 %v7284
    %v9279 = vunpack.c.h.b16 %v7284
    %v9280 = vunpack.c.l.b16 %v7285
    %v9281 = vunpack.c.h.b16 %v7285
    %v9282 = vunpack.c.l.b16 %v7286
    %v9283 = vunpack.c.h.b16 %v7286
    %v9284 = vunpack.c.l.b16 %v7287
    %v9285 = vunpack.c.h.b16 %v7287
    %v9286 = vunpack.c.l.b16 %v7288
    %v9287 = vunpack.c.h.b16 %v7288
    %v9288 = vunpack.c.l.b16 %v7289
    %v9289 = vunpack.c.h.b16 %v7289
    %v9290 = vunpack.c.l.b16 %v7290
    %v9291 = vunpack.c.h.b16 %v7290
    %v9292 = vunpack.c.l.b16 %v7291
    %v9293 = vunpack.c.h.b16 %v7291
    %v9294 = vunpack.c.l.b16 %v7292
    %v9295 = vunpack.c.h.b16 %v7292
    %v9296 = vunpack.c.l.b16 %v7293
    %v9297 = vunpack.c.h.b16 %v7293
    %v9298 = vunpack.c.l.b16 %v7294
    %v9299 = vunpack.c.h.b16 %v7294
    %v9300 = vunpack.c.l.b16 %v7295
    %v9301 = vunpack.c.h.b16 %v7295
    %v9302 = vunpack.c.l.b16 %v7296
    %v9303 = vunpack.c.h.b16 %v7296
    %v9304 = vunpack.c.l.b16 %v7297
    %v9305 = vunpack.c.h.b16 %v7297
    %v9306 = vunpack.c.l.b16 %v7298
    %v9307 = vunpack.c.h.b16 %v7298
    %v9308 = vunpack.c.l.b16 %v7299
    %v9309 = vunpack.c.h.b16 %v7299
    %v9310 = vunpack.c.l.b16 %v7300
    %v9311 = vunpack.c.h.b16 %v7300
    %v9312 = vunpack.c.l.b16 %v7301
    %v9313 = vunpack.c.h.b16 %v7301
    %v9314 = vunpack.c.l.b16 %v7302
    %v9315 = vunpack.c.h.b16 %v7302
    %v9316 = vunpack.c.l.b16 %v7303
    %v9317 = vunpack.c.h.b16 %v7303
    %v9318 = vunpack.c.l.b16 %v7304
    %v9319 = vunpack.c.h.b16 %v7304
    %v9320 = vunpack.c.l.b16 %v7305
    %v9321 = vunpack.c.h.b16 %v7305
    %v9322 = vunpack.c.l.b16 %v7306
    %v9323 = vunpack.c.h.b16 %v7306
    %v9324 = vunpack.c.l.b16 %v7307
    %v9325 = vunpack.c.h.b16 %v7307
    %v9326 = vunpack.c.l.b16 %v7308
    %v9327 = vunpack.c.h.b16 %v7308
    %v9328 = vunpack.c.l.b16 %v7309
    %v9329 = vunpack.c.h.b16 %v7309
    %v9330 = vunpack.c.l.b16 %v7310
    %v9331 = vunpack.c.h.b16 %v7310
    %v9332 = vunpack.c.l.b16 %v7311
    %v9333 = vunpack.c.h.b16 %v7311
    %v9334 = vunpack.c.l.b16 %v7312
    %v9335 = vunpack.c.h.b16 %v7312
    %v9336 = vunpack.c.l.b16 %v7313
    %v9337 = vunpack.c.h.b16 %v7313
    %v9338 = vunpack.c.l.b16 %v7314
    %v9339 = vunpack.c.h.b16 %v7314
    %v9340 = vunpack.c.l.b16 %v7315
    %v9341 = vunpack.c.h.b16 %v7315
    %v9342 = vunpack.c.l.b16 %v7316
    %v9343 = vunpack.c.h.b16 %v7316
    %v9344 = vunpack.c.l.b16 %v7317
    %v9345 = vunpack.c.h.b16 %v7317
    %v9346 = vunpack.c.l.b16 %v7318
    %v9347 = vunpack.c.h.b16 %v7318
    %v9348 = vunpack.c.l.b16 %v7319
    %v9349 = vunpack.c.h.b16 %v7319
    %v9350 = vunpack.c.l.b16 %v7320
    %v9351 = vunpack.c.h.b16 %v7320
    %v9352 = vunpack.c.l.b16 %v7321
    %v9353 = vunpack.c.h.b16 %v7321
    %v9354 = vunpack.c.l.b16 %v7322
    %v9355 = vunpack.c.h.b16 %v7322
    %v9356 = vunpack.c.l.b16 %v7323
    %v9357 = vunpack.c.h.b16 %v7323
    %v9358 = vunpack.c.l.b16 %v7324
    %v9359 = vunpack.c.h.b16 %v7324
    %v9360 = vunpack.c.l.b16 %v7325
    %v9361 = vunpack.c.h.b16 %v7325
    %v9362 = vunpack.c.l.b16 %v7326
    %v9363 = vunpack.c.h.b16 %v7326
    %v9364 = vunpack.c.l.b16 %v7327
    %v9365 = vunpack.c.h.b16 %v7327
    %v9366 = vunpack.c.l.b16 %v7328
    %v9367 = vunpack.c.h.b16 %v7328
    %v9368 = vunpack.c.l.b16 %v7329
    %v9369 = vunpack.c.h.b16 %v7329
    %v9370 = vunpack.c.l.b16 %v7330
    %v9371 = vunpack.c.h.b16 %v7330
    %v9372 = vunpack.c.l.b16 %v7331
    %v9373 = vunpack.c.h.b16 %v7331
    %v9374 = vunpack.c.l.b16 %v7332
    %v9375 = vunpack.c.h.b16 %v7332
    %v9376 = vunpack.c.l.b16 %v7333
    %v9377 = vunpack.c.h.b16 %v7333
    %v9378 = vunpack.c.l.b16 %v7334
    %v9379 = vunpack.c.h.b16 %v7334
    %v9380 = vunpack.c.l.b16 %v7335
    %v9381 = vunpack.c.h.b16 %v7335
    %v9382 = vunpack.c.l.b16 %v7336
    %v9383 = vunpack.c.h.b16 %v7336
    %v9384 = vunpack.c.l.b16 %v7337
    %v9385 = vunpack.c.h.b16 %v7337
    %v9386 = vunpack.c.l.b16 %v7338
    %v9387 = vunpack.c.h.b16 %v7338
    %v9388 = vunpack.c.l.b16 %v7339
    %v9389 = vunpack.c.h.b16 %v7339
    %v9390 = vunpack.c.l.b16 %v7340
    %v9391 = vunpack.c.h.b16 %v7340
    %v9392 = vunpack.c.l.b16 %v7341
    %v9393 = vunpack.c.h.b16 %v7341
    %v9394 = vunpack.c.l.b16 %v7342
    %v9395 = vunpack.c.h.b16 %v7342
    %v9396 = vunpack.c.l.b16 %v7343
    %v9397 = vunpack.c.h.b16 %v7343
    %v9398 = vunpack.c.l.b16 %v7344
    %v9399 = vunpack.c.h.b16 %v7344
    %v9400 = vunpack.c.l.b16 %v7345
    %v9401 = vunpack.c.h.b16 %v7345
    %v9402 = vunpack.c.l.b16 %v7346
    %v9403 = vunpack.c.h.b16 %v7346
    %v9404 = vunpack.c.l.b16 %v7347
    %v9405 = vunpack.c.h.b16 %v7347
    %v9406 = vunpack.c.l.b16 %v7348
    %v9407 = vunpack.c.h.b16 %v7348
    %v9408 = vunpack.c.l.b16 %v7349
    %v9409 = vunpack.c.h.b16 %v7349
    %v9410 = vunpack.c.l.b16 %v7350
    %v9411 = vunpack.c.h.b16 %v7350
    %v9412 = vunpack.c.l.b16 %v7351
    %v9413 = vunpack.c.h.b16 %v7351
    %v9414 = vunpack.c.l.b16 %v7352
    %v9415 = vunpack.c.h.b16 %v7352
    %v9416 = vunpack.c.l.b16 %v7353
    %v9417 = vunpack.c.h.b16 %v7353
    %v9418 = vunpack.c.l.b16 %v7354
    %v9419 = vunpack.c.h.b16 %v7354
    %v9420 = vunpack.c.l.b16 %v7355
    %v9421 = vunpack.c.h.b16 %v7355
    %v9422 = vunpack.c.l.b16 %v7356
    %v9423 = vunpack.c.h.b16 %v7356
    %v9424 = vunpack.c.l.b16 %v7357
    %v9425 = vunpack.c.h.b16 %v7357
    %v9426 = vunpack.c.l.b16 %v7358
    %v9427 = vunpack.c.h.b16 %v7358
    %v9428 = vunpack.c.l.b16 %v7359
    %v9429 = vunpack.c.h.b16 %v7359
    %v9430 = vunpack.c.l.b16 %v7360
    %v9431 = vunpack.c.h.b16 %v7360
    %v9432 = vunpack.c.l.b16 %v7361
    %v9433 = vunpack.c.h.b16 %v7361
    %v9434 = vunpack.c.l.b16 %v7362
    %v9435 = vunpack.c.h.b16 %v7362
    %v9436 = vunpack.c.l.b16 %v7363
    %v9437 = vunpack.c.h.b16 %v7363
    %v9438 = vunpack.c.l.b16 %v7364
    %v9439 = vunpack.c.h.b16 %v7364
    %v9440 = vunpack.c.l.b16 %v7365
    %v9441 = vunpack.c.h.b16 %v7365
    %v9442 = vunpack.c.l.b16 %v7366
    %v9443 = vunpack.c.h.b16 %v7366
    %v9444 = vunpack.c.l.b16 %v7367
    %v9445 = vunpack.c.h.b16 %v7367
    %v9446 = vunpack.c.l.b16 %v7368
    %v9447 = vunpack.c.h.b16 %v7368
    %v9448 = vunpack.c.l.b16 %v7369
    %v9449 = vunpack.c.h.b16 %v7369
    %v9450 = vunpack.c.l.b16 %v7370
    %v9451 = vunpack.c.h.b16 %v7370
    %v9452 = vunpack.c.l.b16 %v7371
    %v9453 = vunpack.c.h.b16 %v7371
    %v9454 = vunpack.c.l.b16 %v7372
    %v9455 = vunpack.c.h.b16 %v7372
    %v9456 = vunpack.c.l.b16 %v7373
    %v9457 = vunpack.c.h.b16 %v7373
    %v9458 = vunpack.c.l.b16 %v7374
    %v9459 = vunpack.c.h.b16 %v7374
    %v9460 = vunpack.c.l.b16 %v7375
    %v9461 = vunpack.c.h.b16 %v7375
    %v9462 = vunpack.c.l.b16 %v7376
    %v9463 = vunpack.c.h.b16 %v7376
    %v9464 = vunpack.c.l.b16 %v7377
    %v9465 = vunpack.c.h.b16 %v7377
    %v9466 = vunpack.c.l.b16 %v7378
    %v9467 = vunpack.c.h.b16 %v7378
    %v9468 = vunpack.c.l.b16 %v7379
    %v9469 = vunpack.c.h.b16 %v7379
    %v9470 = vunpack.c.l.b16 %v7380
    %v9471 = vunpack.c.h.b16 %v7380
    %v9472 = vunpack.c.l.b16 %v7381
    %v9473 = vunpack.c.h.b16 %v7381
    %v9474 = vunpack.c.l.b16 %v7382
    %v9475 = vunpack.c.h.b16 %v7382
    %v9476 = vunpack.c.l.b16 %v7383
    %v9477 = vunpack.c.h.b16 %v7383
    %v9478 = vunpack.c.l.b16 %v7384
    %v9479 = vunpack.c.h.b16 %v7384
    %v9480 = vunpack.c.l.b16 %v7385
    %v9481 = vunpack.c.h.b16 %v7385
    %v9482 = vunpack.c.l.b16 %v7386
    %v9483 = vunpack.c.h.b16 %v7386
    %v9484 = vunpack.c.l.b16 %v7387
    %v9485 = vunpack.c.h.b16 %v7387
    %v9486 = vunpack.c.l.b16 %v7388
    %v9487 = vunpack.c.h.b16 %v7388
    %v9488 = vunpack.c.l.b16 %v7389
    %v9489 = vunpack.c.h.b16 %v7389
    %v9490 = vunpack.c.l.b16 %v7390
    %v9491 = vunpack.c.h.b16 %v7390
    %v9492 = vunpack.c.l.b16 %v7391
    %v9493 = vunpack.c.h.b16 %v7391
    %v9494 = vunpack.c.l.b16 %v7392
    %v9495 = vunpack.c.h.b16 %v7392
    %v9496 = vunpack.c.l.b16 %v7393
    %v9497 = vunpack.c.h.b16 %v7393
    %v9498 = vunpack.c.l.b16 %v7394
    %v9499 = vunpack.c.h.b16 %v7394
    %v9500 = vunpack.c.l.b16 %v7395
    %v9501 = vunpack.c.h.b16 %v7395
    %v9502 = vunpack.c.l.b16 %v7396
    %v9503 = vunpack.c.h.b16 %v7396
    %v9504 = vunpack.c.l.b16 %v7397
    %v9505 = vunpack.c.h.b16 %v7397
    %v9506 = vunpack.c.l.b16 %v7398
    %v9507 = vunpack.c.h.b16 %v7398
    %v9508 = vunpack.c.l.b16 %v7399
    %v9509 = vunpack.c.h.b16 %v7399
    %v9510 = vunpack.c.l.b16 %v7400
    %v9511 = vunpack.c.h.b16 %v7400
    %v9512 = vunpack.c.l.b16 %v7401
    %v9513 = vunpack.c.h.b16 %v7401
    %v9514 = vunpack.c.l.b16 %v7402
    %v9515 = vunpack.c.h.b16 %v7402
    %v9516 = vunpack.c.l.b16 %v7403
    %v9517 = vunpack.c.h.b16 %v7403
    %v9518 = vunpack.c.l.b16 %v7404
    %v9519 = vunpack.c.h.b16 %v7404
    %v9520 = vunpack.c.l.b16 %v7405
    %v9521 = vunpack.c.h.b16 %v7405
    %v9522 = vunpack.c.l.b16 %v7406
    %v9523 = vunpack.c.h.b16 %v7406
    %v9524 = vunpack.c.l.b16 %v7407
    %v9525 = vunpack.c.h.b16 %v7407
    %v9526 = vunpack.c.l.b16 %v7408
    %v9527 = vunpack.c.h.b16 %v7408
    %v9528 = vunpack.c.l.b16 %v7409
    %v9529 = vunpack.c.h.b16 %v7409
    %v9530 = vunpack.c.l.b16 %v7410
    %v9531 = vunpack.c.h.b16 %v7410
    %v9532 = vunpack.c.l.b16 %v7411
    %v9533 = vunpack.c.h.b16 %v7411
    %v9534 = vunpack.c.l.b16 %v7412
    %v9535 = vunpack.c.h.b16 %v7412
    %v9536 = vunpack.c.l.b16 %v7413
    %v9537 = vunpack.c.h.b16 %v7413
    %v9538 = vunpack.c.l.b16 %v7414
    %v9539 = vunpack.c.h.b16 %v7414
    %v9540 = vunpack.c.l.b16 %v7415
    %v9541 = vunpack.c.h.b16 %v7415
    %v9542 = vunpack.c.l.b16 %v7416
    %v9543 = vunpack.c.h.b16 %v7416
    %v9544 = vunpack.c.l.b16 %v7417
    %v9545 = vunpack.c.h.b16 %v7417
    %v9546 = vunpack.c.l.b16 %v7418
    %v9547 = vunpack.c.h.b16 %v7418
    %v9548 = vunpack.c.l.b16 %v7419
    %v9549 = vunpack.c.h.b16 %v7419
    %v9550 = vunpack.c.l.b16 %v7420
    %v9551 = vunpack.c.h.b16 %v7420
    %v9552 = vunpack.c.l.b16 %v7421
    %v9553 = vunpack.c.h.b16 %v7421
    %v9554 = vunpack.c.l.b16 %v7422
    %v9555 = vunpack.c.h.b16 %v7422
    %v9556 = vunpack.c.l.b16 %v7423
    %v9557 = vunpack.c.h.b16 %v7423
    %v9558 = vunpack.c.l.b16 %v7424
    %v9559 = vunpack.c.h.b16 %v7424
    %v9560 = vunpack.c.l.b16 %v7425
    %v9561 = vunpack.c.h.b16 %v7425
    %v9562 = vunpack.c.l.b16 %v7426
    %v9563 = vunpack.c.h.b16 %v7426
    %v9564 = vunpack.c.l.b16 %v7427
    %v9565 = vunpack.c.h.b16 %v7427
    %v9566 = vunpack.c.l.b16 %v7428
    %v9567 = vunpack.c.h.b16 %v7428
    %v9568 = vunpack.c.l.b16 %v7429
    %v9569 = vunpack.c.h.b16 %v7429
    %v9570 = vunpack.c.l.b16 %v7430
    %v9571 = vunpack.c.h.b16 %v7430
    %v9572 = vunpack.c.l.b16 %v7431
    %v9573 = vunpack.c.h.b16 %v7431
    %v9574 = vunpack.c.l.b16 %v7432
    %v9575 = vunpack.c.h.b16 %v7432
    %v9576 = vunpack.c.l.b16 %v7433
    %v9577 = vunpack.c.h.b16 %v7433
    %v9578 = vunpack.c.l.b16 %v7434
    %v9579 = vunpack.c.h.b16 %v7434
    %v9580 = vunpack.c.l.b16 %v7435
    %v9581 = vunpack.c.h.b16 %v7435
    %v9582 = vunpack.c.l.b16 %v7436
    %v9583 = vunpack.c.h.b16 %v7436
    %v9584 = vunpack.c.l.b16 %v7437
    %v9585 = vunpack.c.h.b16 %v7437
    %v9586 = vunpack.c.l.b16 %v7438
    %v9587 = vunpack.c.h.b16 %v7438
    %v9588 = vunpack.c.l.b16 %v7439
    %v9589 = vunpack.c.h.b16 %v7439
    %v9590 = vunpack.c.l.b16 %v7440
    %v9591 = vunpack.c.h.b16 %v7440
    %v9592 = vunpack.c.l.b16 %v7441
    %v9593 = vunpack.c.h.b16 %v7441
    %v9594 = vunpack.c.l.b16 %v7442
    %v9595 = vunpack.c.h.b16 %v7442
    %v9596 = vunpack.c.l.b16 %v7443
    %v9597 = vunpack.c.h.b16 %v7443
    %v9598 = vunpack.c.l.b16 %v7444
    %v9599 = vunpack.c.h.b16 %v7444
    %v9600 = vunpack.c.l.b16 %v7445
    %v9601 = vunpack.c.h.b16 %v7445
    %v9602 = vunpack.c.l.b16 %v7446
    %v9603 = vunpack.c.h.b16 %v7446
    %v9604 = vunpack.c.l.b16 %v7447
    %v9605 = vunpack.c.h.b16 %v7447
    %v9606 = vunpack.c.l.b16 %v7448
    %v9607 = vunpack.c.h.b16 %v7448
    %v9608 = vunpack.c.l.b16 %v7449
    %v9609 = vunpack.c.h.b16 %v7449
    %v9610 = vunpack.c.l.b16 %v7450
    %v9611 = vunpack.c.h.b16 %v7450
    %v9612 = vunpack.c.l.b16 %v7451
    %v9613 = vunpack.c.h.b16 %v7451
    %v9614 = vunpack.c.l.b16 %v7452
    %v9615 = vunpack.c.h.b16 %v7452
    %v9616 = vunpack.c.l.b16 %v7453
    %v9617 = vunpack.c.h.b16 %v7453
    %v9618 = vunpack.c.l.b16 %v7454
    %v9619 = vunpack.c.h.b16 %v7454
    %v9620 = vunpack.c.l.b16 %v7455
    %v9621 = vunpack.c.h.b16 %v7455
    %v9622 = vunpack.c.l.b16 %v7456
    %v9623 = vunpack.c.h.b16 %v7456
    %v9624 = vunpack.c.l.b16 %v7457
    %v9625 = vunpack.c.h.b16 %v7457
    %v9626 = vunpack.c.l.b16 %v7458
    %v9627 = vunpack.c.h.b16 %v7458
    %v9628 = vunpack.c.l.b16 %v7459
    %v9629 = vunpack.c.h.b16 %v7459
    %v9630 = vunpack.c.l.b16 %v7460
    %v9631 = vunpack.c.h.b16 %v7460
    %v9632 = vunpack.c.l.b16 %v7461
    %v9633 = vunpack.c.h.b16 %v7461
    %v9634 = vunpack.c.l.b16 %v7462
    %v9635 = vunpack.c.h.b16 %v7462
    %v9636 = vunpack.c.l.b16 %v7463
    %v9637 = vunpack.c.h.b16 %v7463
    %v9638 = vunpack.c.l.b16 %v7464
    %v9639 = vunpack.c.h.b16 %v7464
    %v9640 = vunpack.c.l.b16 %v7465
    %v9641 = vunpack.c.h.b16 %v7465
    %v9642 = vunpack.c.l.b16 %v7466
    %v9643 = vunpack.c.h.b16 %v7466
    %v9644 = vunpack.c.l.b16 %v7467
    %v9645 = vunpack.c.h.b16 %v7467
    %v9646 = vunpack.c.l.b16 %v7468
    %v9647 = vunpack.c.h.b16 %v7468
    %v9648 = vunpack.c.l.b16 %v7469
    %v9649 = vunpack.c.h.b16 %v7469
    %v9650 = vunpack.c.l.b16 %v7470
    %v9651 = vunpack.c.h.b16 %v7470
    %v9652 = vunpack.c.l.b16 %v7471
    %v9653 = vunpack.c.h.b16 %v7471
    %v9654 = vunpack.c.l.b16 %v7472
    %v9655 = vunpack.c.h.b16 %v7472
    %v9656 = vunpack.c.l.b16 %v7473
    %v9657 = vunpack.c.h.b16 %v7473
    %v9658 = vunpack.c.l.b16 %v7474
    %v9659 = vunpack.c.h.b16 %v7474
    %v9660 = vunpack.c.l.b16 %v7475
    %v9661 = vunpack.c.h.b16 %v7475
    %v9662 = vunpack.c.l.b16 %v7476
    %v9663 = vunpack.c.h.b16 %v7476
    %v9664 = vunpack.c.l.b16 %v7477
    %v9665 = vunpack.c.h.b16 %v7477
    %v9666 = vunpack.c.l.b16 %v7478
    %v9667 = vunpack.c.h.b16 %v7478
    %v9668 = vunpack.c.l.b16 %v7479
    %v9669 = vunpack.c.h.b16 %v7479
    %v9670 = vunpack.c.l.b16 %v7480
    %v9671 = vunpack.c.h.b16 %v7480
    %v9672 = vunpack.c.l.b16 %v7481
    %v9673 = vunpack.c.h.b16 %v7481
    %v9674 = vunpack.c.l.b16 %v7482
    %v9675 = vunpack.c.h.b16 %v7482
    %v9676 = vunpack.c.l.b16 %v7483
    %v9677 = vunpack.c.h.b16 %v7483
    %v9678 = vunpack.c.l.b16 %v7484
    %v9679 = vunpack.c.h.b16 %v7484
    %v9680 = vunpack.c.l.b16 %v7485
    %v9681 = vunpack.c.h.b16 %v7485
    %v9682 = vunpack.c.l.b16 %v7486
    %v9683 = vunpack.c.h.b16 %v7486
    %v9684 = vunpack.c.l.b16 %v7487
    %v9685 = vunpack.c.h.b16 %v7487
    %v9686 = vunpack.c.l.b16 %v7488
    %v9687 = vunpack.c.h.b16 %v7488
    %v9688 = vunpack.c.l.b16 %v7489
    %v9689 = vunpack.c.h.b16 %v7489
    %v9690 = vunpack.c.l.b16 %v7490
    %v9691 = vunpack.c.h.b16 %v7490
    %v9692 = vunpack.c.l.b16 %v7491
    %v9693 = vunpack.c.h.b16 %v7491
    %v9694 = vunpack.c.l.b16 %v7492
    %v9695 = vunpack.c.h.b16 %v7492
    %v9696 = vunpack.c.l.b16 %v7493
    %v9697 = vunpack.c.h.b16 %v7493
    %v9698 = vunpack.c.l.b16 %v7494
    %v9699 = vunpack.c.h.b16 %v7494
    %v9700 = vunpack.c.l.b16 %v7495
    %v9701 = vunpack.c.h.b16 %v7495
    %v9702 = vunpack.c.l.b16 %v7496
    %v9703 = vunpack.c.h.b16 %v7496
    %v9704 = vunpack.c.l.b16 %v7497
    %v9705 = vunpack.c.h.b16 %v7497
    %v9706 = vunpack.c.l.b16 %v7498
    %v9707 = vunpack.c.h.b16 %v7498
    %v9708 = vunpack.c.l.b16 %v7499
    %v9709 = vunpack.c.h.b16 %v7499
    %v9710 = vunpack.c.l.b16 %v7500
    %v9711 = vunpack.c.h.b16 %v7500
    %v9712 = vunpack.c.l.b16 %v7501
    %v9713 = vunpack.c.h.b16 %v7501
    %v9714 = vunpack.c.l.b16 %v7502
    %v9715 = vunpack.c.h.b16 %v7502
    %v9716 = vunpack.c.l.b16 %v7503
    %v9717 = vunpack.c.h.b16 %v7503
    %v9718 = vunpack.c.l.b16 %v7504
    %v9719 = vunpack.c.h.b16 %v7504
    %v9720 = vunpack.c.l.b16 %v7505
    %v9721 = vunpack.c.h.b16 %v7505
    %v9722 = vunpack.c.l.b16 %v7506
    %v9723 = vunpack.c.h.b16 %v7506
    %v9724 = vunpack.c.l.b16 %v7507
    %v9725 = vunpack.c.h.b16 %v7507
    %v9726 = vunpack.c.l.b16 %v7508
    %v9727 = vunpack.c.h.b16 %v7508
    %v9728 = vunpack.c.l.b16 %v7509
    %v9729 = vunpack.c.h.b16 %v7509
    %v9730 = vunpack.c.l.b16 %v7510
    %v9731 = vunpack.c.h.b16 %v7510
    %v9732 = vunpack.c.l.b16 %v7511
    %v9733 = vunpack.c.h.b16 %v7511
    %v9734 = vunpack.c.l.b16 %v7512
    %v9735 = vunpack.c.h.b16 %v7512
    %v9736 = vunpack.c.l.b16 %v7513
    %v9737 = vunpack.c.h.b16 %v7513
    %v9738 = vunpack.c.l.b16 %v7514
    %v9739 = vunpack.c.h.b16 %v7514
    %v9740 = vunpack.c.l.b16 %v7515
    %v9741 = vunpack.c.h.b16 %v7515
    %v9742 = vunpack.c.l.b16 %v7516
    %v9743 = vunpack.c.h.b16 %v7516
    %v9744 = vunpack.c.l.b16 %v7517
    %v9745 = vunpack.c.h.b16 %v7517
    %v9746 = vunpack.c.l.b16 %v7518
    %v9747 = vunpack.c.h.b16 %v7518
    %v9748 = vunpack.c.l.b16 %v7519
    %v9749 = vunpack.c.h.b16 %v7519
    %v9750 = vunpack.c.l.b16 %v7520
    %v9751 = vunpack.c.h.b16 %v7520
    %v9752 = vunpack.c.l.b16 %v7521
    %v9753 = vunpack.c.h.b16 %v7521
    %v9754 = vunpack.c.l.b16 %v7522
    %v9755 = vunpack.c.h.b16 %v7522
    %v9756 = vunpack.c.l.b16 %v7523
    %v9757 = vunpack.c.h.b16 %v7523
    %v9758 = vunpack.c.l.b16 %v7524
    %v9759 = vunpack.c.h.b16 %v7524
    %v9760 = vunpack.c.l.b16 %v7525
    %v9761 = vunpack.c.h.b16 %v7525
    %v9762 = vunpack.c.l.b16 %v7526
    %v9763 = vunpack.c.h.b16 %v7526
    %v9764 = vunpack.c.l.b16 %v7527
    %v9765 = vunpack.c.h.b16 %v7527
    %v9766 = vunpack.c.l.b16 %v7528
    %v9767 = vunpack.c.h.b16 %v7528
    %v9768 = vunpack.c.l.b16 %v7529
    %v9769 = vunpack.c.h.b16 %v7529
    %v9770 = vunpack.c.l.b16 %v7530
    %v9771 = vunpack.c.h.b16 %v7530
    %v9772 = vunpack.c.l.b16 %v7531
    %v9773 = vunpack.c.h.b16 %v7531
    %v9774 = vunpack.c.l.b16 %v7532
    %v9775 = vunpack.c.h.b16 %v7532
    %v9776 = vunpack.c.l.b16 %v7533
    %v9777 = vunpack.c.h.b16 %v7533
    %v9778 = vunpack.c.l.b16 %v7534
    %v9779 = vunpack.c.h.b16 %v7534
    %v9780 = vunpack.c.l.b16 %v7535
    %v9781 = vunpack.c.h.b16 %v7535
    %v9782 = vunpack.c.l.b16 %v7536
    %v9783 = vunpack.c.h.b16 %v7536
    %v9784 = vunpack.c.l.b16 %v7537
    %v9785 = vunpack.c.h.b16 %v7537
    %v9786 = vunpack.c.l.b16 %v7538
    %v9787 = vunpack.c.h.b16 %v7538
    %v9788 = vunpack.c.l.b16 %v7539
    %v9789 = vunpack.c.h.b16 %v7539
    %v9790 = vunpack.c.l.b16 %v7540
    %v9791 = vunpack.c.h.b16 %v7540
    %v9792 = vunpack.c.l.b16 %v7541
    %v9793 = vunpack.c.h.b16 %v7541
    %v9794 = vunpack.c.l.b16 %v7542
    %v9795 = vunpack.c.h.b16 %v7542
    %v9796 = vunpack.c.l.b16 %v7543
    %v9797 = vunpack.c.h.b16 %v7543
    %v9798 = vunpack.c.l.b16 %v7544
    %v9799 = vunpack.c.h.b16 %v7544
    %v9800 = vunpack.c.l.b16 %v7545
    %v9801 = vunpack.c.h.b16 %v7545
    %v9802 = vunpack.c.l.b16 %v7546
    %v9803 = vunpack.c.h.b16 %v7546
    %v9804 = vunpack.c.l.b16 %v7547
    %v9805 = vunpack.c.h.b16 %v7547
    %v9806 = vunpack.c.l.b16 %v7548
    %v9807 = vunpack.c.h.b16 %v7548
    %v9808 = vunpack.c.l.b16 %v7549
    %v9809 = vunpack.c.h.b16 %v7549
    %v9810 = vunpack.c.l.b16 %v7550
    %v9811 = vunpack.c.h.b16 %v7550
    %v9812 = vunpack.c.l.b16 %v7551
    %v9813 = vunpack.c.h.b16 %v7551
    %v9814 = vunpack.c.l.b16 %v7552
    %v9815 = vunpack.c.h.b16 %v7552
    %v9816 = vunpack.c.l.b16 %v7553
    %v9817 = vunpack.c.h.b16 %v7553
    %v9818 = vunpack.c.l.b16 %v7554
    %v9819 = vunpack.c.h.b16 %v7554
    %v9820 = vunpack.c.l.b16 %v7555
    %v9821 = vunpack.c.h.b16 %v7555
    %v9822 = vunpack.c.l.b16 %v7556
    %v9823 = vunpack.c.h.b16 %v7556
    %v9824 = vunpack.c.l.b16 %v7557
    %v9825 = vunpack.c.h.b16 %v7557
    %v9826 = vunpack.c.l.b16 %v7558
    %v9827 = vunpack.c.h.b16 %v7558
    %v9828 = vunpack.c.l.b16 %v7559
    %v9829 = vunpack.c.h.b16 %v7559
    %v9830 = vunpack.c.l.b16 %v7560
    %v9831 = vunpack.c.h.b16 %v7560
    %v9832 = vunpack.c.l.b16 %v7561
    %v9833 = vunpack.c.h.b16 %v7561
    %v9834 = vunpack.c.l.b16 %v7562
    %v9835 = vunpack.c.h.b16 %v7562
    %v9836 = vunpack.c.l.b16 %v7563
    %v9837 = vunpack.c.h.b16 %v7563
    %v9838 = vunpack.c.l.b16 %v7564
    %v9839 = vunpack.c.h.b16 %v7564
    %v9840 = vunpack.c.l.b16 %v7565
    %v9841 = vunpack.c.h.b16 %v7565
    %v9842 = vunpack.c.l.b16 %v7566
    %v9843 = vunpack.c.h.b16 %v7566
    %v9844 = vunpack.c.l.b16 %v7567
    %v9845 = vunpack.c.h.b16 %v7567
    %v9846 = vunpack.c.l.b16 %v7568
    %v9847 = vunpack.c.h.b16 %v7568
    %v9848 = vunpack.c.l.b16 %v7569
    %v9849 = vunpack.c.h.b16 %v7569
    %v9850 = vunpack.c.l.b16 %v7570
    %v9851 = vunpack.c.h.b16 %v7570
    %v9852 = vunpack.c.l.b16 %v7571
    %v9853 = vunpack.c.h.b16 %v7571
    %v9854 = vunpack.c.l.b16 %v7572
    %v9855 = vunpack.c.h.b16 %v7572
    %v9856 = vunpack.c.l.b16 %v7573
    %v9857 = vunpack.c.h.b16 %v7573
    %v9858 = vunpack.c.l.b16 %v7574
    %v9859 = vunpack.c.h.b16 %v7574
    %v9860 = vunpack.c.l.b16 %v7575
    %v9861 = vunpack.c.h.b16 %v7575
    %v9862 = vunpack.c.l.b16 %v7576
    %v9863 = vunpack.c.h.b16 %v7576
    %v9864 = vunpack.c.l.b16 %v7577
    %v9865 = vunpack.c.h.b16 %v7577
    %v9866 = vunpack.c.l.b16 %v7578
    %v9867 = vunpack.c.h.b16 %v7578
    %v9868 = vunpack.c.l.b16 %v7579
    %v9869 = vunpack.c.h.b16 %v7579
    %v9870 = vunpack.c.l.b16 %v7580
    %v9871 = vunpack.c.h.b16 %v7580
    %v9872 = vunpack.c.l.b16 %v7581
    %v9873 = vunpack.c.h.b16 %v7581
    %v9874 = vunpack.c.l.b16 %v7582
    %v9875 = vunpack.c.h.b16 %v7582
    %v9876 = vunpack.c.l.b16 %v7583
    %v9877 = vunpack.c.h.b16 %v7583
    %v9878 = vunpack.c.l.b16 %v7584
    %v9879 = vunpack.c.h.b16 %v7584
    %v9880 = vunpack.c.l.b16 %v7585
    %v9881 = vunpack.c.h.b16 %v7585
    %v9882 = vunpack.c.l.b16 %v7586
    %v9883 = vunpack.c.h.b16 %v7586
    %v9884 = vunpack.c.l.b16 %v7587
    %v9885 = vunpack.c.h.b16 %v7587
    %v9886 = vunpack.c.l.b16 %v7588
    %v9887 = vunpack.c.h.b16 %v7588
    %v9888 = vunpack.c.l.b16 %v7589
    %v9889 = vunpack.c.h.b16 %v7589
    %v9890 = vunpack.c.l.b16 %v7590
    %v9891 = vunpack.c.h.b16 %v7590
    %v9892 = vunpack.c.l.b16 %v7591
    %v9893 = vunpack.c.h.b16 %v7591
    %v9894 = vunpack.c.l.b16 %v7592
    %v9895 = vunpack.c.h.b16 %v7592
    %v9896 = vunpack.c.l.b16 %v7593
    %v9897 = vunpack.c.h.b16 %v7593
    %v9898 = vunpack.c.l.b16 %v7594
    %v9899 = vunpack.c.h.b16 %v7594
    %v9900 = vunpack.c.l.b16 %v7595
    %v9901 = vunpack.c.h.b16 %v7595
    %v9902 = vunpack.c.l.b16 %v7596
    %v9903 = vunpack.c.h.b16 %v7596
    %v9904 = vunpack.c.l.b16 %v7597
    %v9905 = vunpack.c.h.b16 %v7597
    %v9906 = vunpack.c.l.b16 %v7598
    %v9907 = vunpack.c.h.b16 %v7598
    %v9908 = vunpack.c.l.b16 %v7599
    %v9909 = vunpack.c.h.b16 %v7599
    %v9910 = vunpack.c.l.b16 %v7600
    %v9911 = vunpack.c.h.b16 %v7600
    %v9912 = vunpack.c.l.b16 %v7601
    %v9913 = vunpack.c.h.b16 %v7601
    %v9914 = vunpack.c.l.b16 %v7602
    %v9915 = vunpack.c.h.b16 %v7602
    %v9916 = vunpack.c.l.b16 %v7603
    %v9917 = vunpack.c.h.b16 %v7603
    %v9918 = vunpack.c.l.b16 %v7604
    %v9919 = vunpack.c.h.b16 %v7604
    %v9920 = vunpack.c.l.b16 %v7605
    %v9921 = vunpack.c.h.b16 %v7605
    %v9922 = vunpack.c.l.b16 %v7606
    %v9923 = vunpack.c.h.b16 %v7606
    %v9924 = vunpack.c.l.b16 %v7607
    %v9925 = vunpack.c.h.b16 %v7607
    %v9926 = vunpack.c.l.b16 %v7608
    %v9927 = vunpack.c.h.b16 %v7608
    %v9928 = vunpack.c.l.b16 %v7609
    %v9929 = vunpack.c.h.b16 %v7609
    %v9930 = vunpack.c.l.b16 %v7610
    %v9931 = vunpack.c.h.b16 %v7610
    %v9932 = vunpack.c.l.b16 %v7611
    %v9933 = vunpack.c.h.b16 %v7611
    %v9934 = vunpack.c.l.b16 %v7612
    %v9935 = vunpack.c.h.b16 %v7612
    %v9936 = vunpack.c.l.b16 %v7613
    %v9937 = vunpack.c.h.b16 %v7613
    %v9938 = vunpack.c.l.b16 %v7614
    %v9939 = vunpack.c.h.b16 %v7614
    %v9940 = vunpack.c.l.b16 %v7615
    %v9941 = vunpack.c.h.b16 %v7615
    %v9942 = vunpack.c.l.b16 %v7616
    %v9943 = vunpack.c.h.b16 %v7616
    %v9944 = vunpack.c.l.b16 %v7617
    %v9945 = vunpack.c.h.b16 %v7617
    %v9946 = vunpack.c.l.b16 %v7618
    %v9947 = vunpack.c.h.b16 %v7618
    %v9948 = vunpack.c.l.b16 %v7619
    %v9949 = vunpack.c.h.b16 %v7619
    %v9950 = vunpack.c.l.b16 %v7620
    %v9951 = vunpack.c.h.b16 %v7620
    %v9952 = vunpack.c.l.b16 %v7621
    %v9953 = vunpack.c.h.b16 %v7621
    %v9954 = vunpack.c.l.b16 %v7622
    %v9955 = vunpack.c.h.b16 %v7622
    %v9956 = vunpack.c.l.b16 %v7623
    %v9957 = vunpack.c.h.b16 %v7623
    %v9958 = vunpack.c.l.b16 %v7624
    %v9959 = vunpack.c.h.b16 %v7624
    %v9960 = vunpack.c.l.b16 %v7625
    %v9961 = vunpack.c.h.b16 %v7625
    %v9962 = vunpack.c.l.b16 %v7626
    %v9963 = vunpack.c.h.b16 %v7626
    %v9964 = vunpack.c.l.b16 %v7627
    %v9965 = vunpack.c.h.b16 %v7627
    %v9966 = vunpack.c.l.b16 %v7628
    %v9967 = vunpack.c.h.b16 %v7628
    %v9968 = vunpack.c.l.b16 %v7629
    %v9969 = vunpack.c.h.b16 %v7629
    %v9970 = vunpack.c.l.b16 %v7630
    %v9971 = vunpack.c.h.b16 %v7630
    %v9972 = vunpack.c.l.b16 %v7631
    %v9973 = vunpack.c.h.b16 %v7631
    %v9974 = vunpack.c.l.b16 %v7632
    %v9975 = vunpack.c.h.b16 %v7632
    %v9976 = vunpack.c.l.b16 %v7633
    %v9977 = vunpack.c.h.b16 %v7633
    %v9978 = vunpack.c.l.b16 %v7634
    %v9979 = vunpack.c.h.b16 %v7634
    %v9980 = vunpack.c.l.b16 %v7635
    %v9981 = vunpack.c.h.b16 %v7635
    %v9982 = vunpack.c.l.b16 %v7636
    %v9983 = vunpack.c.h.b16 %v7636
    %v9984 = vunpack.c.l.b16 %v7637
    %v9985 = vunpack.c.h.b16 %v7637
    %v9986 = vunpack.c.l.b16 %v7638
    %v9987 = vunpack.c.h.b16 %v7638
    %v9988 = vunpack.c.l.b16 %v7639
    %v9989 = vunpack.c.h.b16 %v7639
    %v9990 = vunpack.c.l.b16 %v7640
    %v9991 = vunpack.c.h.b16 %v7640
    %v9992 = vunpack.c.l.b16 %v7641
    %v9993 = vunpack.c.h.b16 %v7641
    %v9994 = vunpack.c.l.b16 %v7642
    %v9995 = vunpack.c.h.b16 %v7642
    %v9996 = vunpack.c.l.b16 %v7643
    %v9997 = vunpack.c.h.b16 %v7643
    %v9998 = vunpack.c.l.b16 %v7644
    %v9999 = vunpack.c.h.b16 %v7644
    %v10000 = vunpack.c.l.b16 %v7645
    %v10001 = vunpack.c.h.b16 %v7645
    %v10002 = vunpack.c.l.b16 %v7646
    %v10003 = vunpack.c.h.b16 %v7646
    %v10004 = vunpack.c.l.b16 %v7647
    %v10005 = vunpack.c.h.b16 %v7647
    %v10006 = vunpack.c.l.b16 %v7648
    %v10007 = vunpack.c.h.b16 %v7648
    %v10008 = vunpack.c.l.b16 %v7649
    %v10009 = vunpack.c.h.b16 %v7649
    %v10010 = vunpack.c.l.b16 %v7650
    %v10011 = vunpack.c.h.b16 %v7650
    %v10012 = vunpack.c.l.b16 %v7651
    %v10013 = vunpack.c.h.b16 %v7651
    %v10014 = vunpack.c.l.b16 %v7652
    %v10015 = vunpack.c.h.b16 %v7652
    %v10016 = vunpack.c.l.b16 %v7653
    %v10017 = vunpack.c.h.b16 %v7653
    %v10018 = vunpack.c.l.b16 %v7654
    %v10019 = vunpack.c.h.b16 %v7654
    %v10020 = vunpack.c.l.b16 %v7655
    %v10021 = vunpack.c.h.b16 %v7655
    %v10022 = vunpack.c.l.b16 %v7656
    %v10023 = vunpack.c.h.b16 %v7656
    %v10024 = vunpack.c.l.b16 %v7657
    %v10025 = vunpack.c.h.b16 %v7657
    %v10026 = vunpack.c.l.b16 %v7658
    %v10027 = vunpack.c.h.b16 %v7658
    %v10028 = vunpack.c.l.b16 %v7659
    %v10029 = vunpack.c.h.b16 %v7659
    %v10030 = vunpack.c.l.b16 %v7660
    %v10031 = vunpack.c.h.b16 %v7660
    %v10032 = vunpack.c.l.b16 %v7661
    %v10033 = vunpack.c.h.b16 %v7661
    %v10034 = vunpack.c.l.b16 %v7662
    %v10035 = vunpack.c.h.b16 %v7662
    %v10036 = vunpack.c.l.b16 %v7663
    %v10037 = vunpack.c.h.b16 %v7663
    %v10038 = vunpack.c.l.b16 %v7664
    %v10039 = vunpack.c.h.b16 %v7664
    %v10040 = vunpack.c.l.b16 %v7665
    %v10041 = vunpack.c.h.b16 %v7665
    %v10042 = vunpack.c.l.b16 %v7666
    %v10043 = vunpack.c.h.b16 %v7666
    %v10044 = vunpack.c.l.b16 %v7667
    %v10045 = vunpack.c.h.b16 %v7667
    %v10046 = vunpack.c.l.b16 %v7668
    %v10047 = vunpack.c.h.b16 %v7668
    %v10048 = vunpack.c.l.b16 %v7669
    %v10049 = vunpack.c.h.b16 %v7669
    %v10050 = vunpack.c.l.b16 %v7670
    %v10051 = vunpack.c.h.b16 %v7670
    %v10052 = vunpack.c.l.b16 %v7671
    %v10053 = vunpack.c.h.b16 %v7671
    %v10054 = vunpack.c.l.b16 %v7672
    %v10055 = vunpack.c.h.b16 %v7672
    %v10056 = vunpack.c.l.b16 %v7673
    %v10057 = vunpack.c.h.b16 %v7673
    %v10058 = vunpack.c.l.b16 %v7674
    %v10059 = vunpack.c.h.b16 %v7674
    %v10060 = vunpack.c.l.b16 %v7675
    %v10061 = vunpack.c.h.b16 %v7675
    %v10062 = vunpack.c.l.b16 %v7676
    %v10063 = vunpack.c.h.b16 %v7676
    %v10064 = vunpack.c.l.b16 %v7677
    %v10065 = vunpack.c.h.b16 %v7677
    %v10066 = vunpack.c.l.b16 %v7678
    %v10067 = vunpack.c.h.b16 %v7678
    %v10068 = vunpack.c.l.b16 %v7679
    %v10069 = vunpack.c.h.b16 %v7679
    %v10070 = vunpack.c.l.b16 %v7680
    %v10071 = vunpack.c.h.b16 %v7680
    %v10072 = vunpack.c.l.b16 %v7681
    %v10073 = vunpack.c.h.b16 %v7681
    %v10074 = vunpack.c.l.b16 %v7682
    %v10075 = vunpack.c.h.b16 %v7682
    %v10076 = vunpack.c.l.b16 %v7683
    %v10077 = vunpack.c.h.b16 %v7683
    %v10078 = vunpack.c.l.b16 %v7684
    %v10079 = vunpack.c.h.b16 %v7684
    %v10080 = vunpack.c.l.b16 %v7685
    %v10081 = vunpack.c.h.b16 %v7685
    %v10082 = vunpack.c.l.b16 %v7686
    %v10083 = vunpack.c.h.b16 %v7686
    %v10084 = vunpack.c.l.b16 %v7687
    %v10085 = vunpack.c.h.b16 %v7687
    %v10086 = vunpack.c.l.b16 %v7688
    %v10087 = vunpack.c.h.b16 %v7688
    %v10088 = vunpack.c.l.b16 %v7689
    %v10089 = vunpack.c.h.b16 %v7689
    %v10090 = vunpack.c.l.b16 %v7690
    %v10091 = vunpack.c.h.b16 %v7690
    %v10092 = vunpack.c.l.b16 %v7691
    %v10093 = vunpack.c.h.b16 %v7691
    %v10094 = vunpack.c.l.b16 %v7692
    %v10095 = vunpack.c.h.b16 %v7692
    %v10096 = vunpack.c.l.b16 %v7693
    %v10097 = vunpack.c.h.b16 %v7693
    %v10098 = vunpack.c.l.b16 %v7694
    %v10099 = vunpack.c.h.b16 %v7694
    %v10100 = vunpack.c.l.b16 %v7695
    %v10101 = vunpack.c.h.b16 %v7695
    %v10102 = vunpack.c.l.b16 %v7696
    %v10103 = vunpack.c.h.b16 %v7696
    %v10104 = vunpack.c.l.b16 %v7697
    %v10105 = vunpack.c.h.b16 %v7697
    %v10106 = vunpack.c.l.b16 %v7698
    %v10107 = vunpack.c.h.b16 %v7698
    %v10108 = vunpack.c.l.b16 %v7699
    %v10109 = vunpack.c.h.b16 %v7699
    %v10110 = vpack.c.b16 %v8514, %v8510
    %v10111 = vpack.c.b16 %v8515, %v8511
    %v10112 = vpack.c.b16 %v8516, %v8512
    %v10113 = vpack.c.b16 %v8517, %v8513
    %v10114 = vpack.c.b16 %v8522, %v8518
    %v10115 = vpack.c.b16 %v8523, %v8519
    %v10116 = vpack.c.b16 %v8524, %v8520
    %v10117 = vpack.c.b16 %v8525, %v8521
    %v10118 = vpack.c.b16 %v8530, %v8526
    %v10119 = vpack.c.b16 %v8531, %v8527
    %v10120 = vpack.c.b16 %v8532, %v8528
    %v10121 = vpack.c.b16 %v8533, %v8529
    %v10122 = vpack.c.b16 %v8538, %v8534
    %v10123 = vpack.c.b16 %v8539, %v8535
    %v10124 = vpack.c.b16 %v8540, %v8536
    %v10125 = vpack.c.b16 %v8541, %v8537
    %v10126 = vpack.c.b16 %v8546, %v8542
    %v10127 = vpack.c.b16 %v8547, %v8543
    %v10128 = vpack.c.b16 %v8548, %v8544
    %v10129 = vpack.c.b16 %v8549, %v8545
    %v10130 = vpack.c.b16 %v8554, %v8550
    %v10131 = vpack.c.b16 %v8555, %v8551
    %v10132 = vpack.c.b16 %v8556, %v8552
    %v10133 = vpack.c.b16 %v8557, %v8553
    %v10134 = vpack.c.b16 %v8562, %v8558
    %v10135 = vpack.c.b16 %v8563, %v8559
    %v10136 = vpack.c.b16 %v8564, %v8560
    %v10137 = vpack.c.b16 %v8565, %v8561
    %v10138 = vpack.c.b16 %v8570, %v8566
    %v10139 = vpack.c.b16 %v8571, %v8567
    %v10140 = vpack.c.b16 %v8572, %v8568
    %v10141 = vpack.c.b16 %v8573, %v8569
    %v10142 = vpack.c.b16 %v8578, %v8574
    %v10143 = vpack.c.b16 %v8579, %v8575
    %v10144 = vpack.c.b16 %v8580, %v8576
    %v10145 = vpack.c.b16 %v8581, %v8577
    %v10146 = vpack.c.b16 %v8586, %v8582
    %v10147 = vpack.c.b16 %v8587, %v8583
    %v10148 = vpack.c.b16 %v8588, %v8584
    %v10149 = vpack.c.b16 %v8589, %v8585
    %v10150 = vpack.c.b16 %v8594, %v8590
    %v10151 = vpack.c.b16 %v8595, %v8591
    %v10152 = vpack.c.b16 %v8596, %v8592
    %v10153 = vpack.c.b16 %v8597, %v8593
    %v10154 = vpack.c.b16 %v8602, %v8598
    %v10155 = vpack.c.b16 %v8603, %v8599
    %v10156 = vpack.c.b16 %v8604, %v8600
    %v10157 = vpack.c.b16 %v8605, %v8601
    %v10158 = vpack.c.b16 %v8610, %v8606
    %v10159 = vpack.c.b16 %v8611, %v8607
    %v10160 = vpack.c.b16 %v8612, %v8608
    %v10161 = vpack.c.b16 %v8613, %v8609
    %v10162 = vpack.c.b16 %v8618, %v8614
    %v10163 = vpack.c.b16 %v8619, %v8615
    %v10164 = vpack.c.b16 %v8620, %v8616
    %v10165 = vpack.c.b16 %v8621, %v8617
    %v10166 = vpack.c.b16 %v8626, %v8622
    %v10167 = vpack.c.b16 %v8627, %v8623
    %v10168 = vpack.c.b16 %v8628, %v8624
    %v10169 = vpack.c.b16 %v8629, %v8625
    %v10170 = vpack.c.b16 %v8634, %v8630
    %v10171 = vpack.c.b16 %v8635, %v8631
    %v10172 = vpack.c.b16 %v8636, %v8632
    %v10173 = vpack.c.b16 %v8637, %v8633
    %v10174 = vpack.c.b16 %v8642, %v8638
    %v10175 = vpack.c.b16 %v8643, %v8639
    %v10176 = vpack.c.b16 %v8644, %v8640
    %v10177 = vpack.c.b16 %v8645, %v8641
    %v10178 = vpack.c.b16 %v8650, %v8646
    %v10179 = vpack.c.b16 %v8651, %v8647
    %v10180 = vpack.c.b16 %v8652, %v8648
    %v10181 = vpack.c.b16 %v8653, %v8649
    %v10182 = vpack.c.b16 %v8658, %v8654
    %v10183 = vpack.c.b16 %v8659, %v8655
    %v10184 = vpack.c.b16 %v8660, %v8656
    %v10185 = vpack.c.b16 %v8661, %v8657
    %v10186 = vpack.c.b16 %v8666, %v8662
    %v10187 = vpack.c.b16 %v8667, %v8663
    %v10188 = vpack.c.b16 %v8668, %v8664
    %v10189 = vpack.c.b16 %v8669, %v8665
    %v10190 = vpack.c.b16 %v8674, %v8670
    %v10191 = vpack.c.b16 %v8675, %v8671
    %v10192 = vpack.c.b16 %v8676, %v8672
    %v10193 = vpack.c.b16 %v8677, %v8673
    %v10194 = vpack.c.b16 %v8682, %v8678
    %v10195 = vpack.c.b16 %v8683, %v8679
    %v10196 = vpack.c.b16 %v8684, %v8680
    %v10197 = vpack.c.b16 %v8685, %v8681
    %v10198 = vpack.c.b16 %v8690, %v8686
    %v10199 = vpack.c.b16 %v8691, %v8687
    %v10200 = vpack.c.b16 %v8692, %v8688
    %v10201 = vpack.c.b16 %v8693, %v8689
    %v10202 = vpack.c.b16 %v8698, %v8694
    %v10203 = vpack.c.b16 %v8699, %v8695
    %v10204 = vpack.c.b16 %v8700, %v8696
    %v10205 = vpack.c.b16 %v8701, %v8697
    %v10206 = vpack.c.b16 %v8706, %v8702
    %v10207 = vpack.c.b16 %v8707, %v8703
    %v10208 = vpack.c.b16 %v8708, %v8704
    %v10209 = vpack.c.b16 %v8709, %v8705
    %v10210 = vpack.c.b16 %v8714, %v8710
    %v10211 = vpack.c.b16 %v8715, %v8711
    %v10212 = vpack.c.b16 %v8716, %v8712
    %v10213 = vpack.c.b16 %v8717, %v8713
    %v10214 = vpack.c.b16 %v8722, %v8718
    %v10215 = vpack.c.b16 %v8723, %v8719
    %v10216 = vpack.c.b16 %v8724, %v8720
    %v10217 = vpack.c.b16 %v8725, %v8721
    %v10218 = vpack.c.b16 %v8730, %v8726
    %v10219 = vpack.c.b16 %v8731, %v8727
    %v10220 = vpack.c.b16 %v8732, %v8728
    %v10221 = vpack.c.b16 %v8733, %v8729
    %v10222 = vpack.c.b16 %v8738, %v8734
    %v10223 = vpack.c.b16 %v8739, %v8735
    %v10224 = vpack.c.b16 %v8740, %v8736
    %v10225 = vpack.c.b16 %v8741, %v8737
    %v10226 = vpack.c.b16 %v8746, %v8742
    %v10227 = vpack.c.b16 %v8747, %v8743
    %v10228 = vpack.c.b16 %v8748, %v8744
    %v10229 = vpack.c.b16 %v8749, %v8745
    %v10230 = vpack.c.b16 %v8754, %v8750
    %v10231 = vpack.c.b16 %v8755, %v8751
    %v10232 = vpack.c.b16 %v8756, %v8752
    %v10233 = vpack.c.b16 %v8757, %v8753
    %v10234 = vpack.c.b16 %v8762, %v8758
    %v10235 = vpack.c.b16 %v8763, %v8759
    %v10236 = vpack.c.b16 %v8764, %v8760
    %v10237 = vpack.c.b16 %v8765, %v8761
    %v10238 = vpack.c.b16 %v8770, %v8766
    %v10239 = vpack.c.b16 %v8771, %v8767
    %v10240 = vpack.c.b16 %v8772, %v8768
    %v10241 = vpack.c.b16 %v8773, %v8769
    %v10242 = vpack.c.b16 %v8778, %v8774
    %v10243 = vpack.c.b16 %v8779, %v8775
    %v10244 = vpack.c.b16 %v8780, %v8776
    %v10245 = vpack.c.b16 %v8781, %v8777
    %v10246 = vpack.c.b16 %v8786, %v8782
    %v10247 = vpack.c.b16 %v8787, %v8783
    %v10248 = vpack.c.b16 %v8788, %v8784
    %v10249 = vpack.c.b16 %v8789, %v8785
    %v10250 = vpack.c.b16 %v8794, %v8790
    %v10251 = vpack.c.b16 %v8795, %v8791
    %v10252 = vpack.c.b16 %v8796, %v8792
    %v10253 = vpack.c.b16 %v8797, %v8793
    %v10254 = vpack.c.b16 %v8802, %v8798
    %v10255 = vpack.c.b16 %v8803, %v8799
    %v10256 = vpack.c.b16 %v8804, %v8800
    %v10257 = vpack.c.b16 %v8805, %v8801
    %v10258 = vpack.c.b16 %v8810, %v8806
    %v10259 = vpack.c.b16 %v8811, %v8807
    %v10260 = vpack.c.b16 %v8812, %v8808
    %v10261 = vpack.c.b16 %v8813, %v8809
    %v10262 = vpack.c.b16 %v8818, %v8814
    %v10263 = vpack.c.b16 %v8819, %v8815
    %v10264 = vpack.c.b16 %v8820, %v8816
    %v10265 = vpack.c.b16 %v8821, %v8817
    %v10266 = vpack.c.b16 %v8826, %v8822
    %v10267 = vpack.c.b16 %v8827, %v8823
    %v10268 = vpack.c.b16 %v8828, %v8824
    %v10269 = vpack.c.b16 %v8829, %v8825
    %v10270 = vpack.c.b16 %v8834, %v8830
    %v10271 = vpack.c.b16 %v8835, %v8831
    %v10272 = vpack.c.b16 %v8836, %v8832
    %v10273 = vpack.c.b16 %v8837, %v8833
    %v10274 = vpack.c.b16 %v8842, %v8838
    %v10275 = vpack.c.b16 %v8843, %v8839
    %v10276 = vpack.c.b16 %v8844, %v8840
    %v10277 = vpack.c.b16 %v8845, %v8841
    %v10278 = vpack.c.b16 %v8850, %v8846
    %v10279 = vpack.c.b16 %v8851, %v8847
    %v10280 = vpack.c.b16 %v8852, %v8848
    %v10281 = vpack.c.b16 %v8853, %v8849
    %v10282 = vpack.c.b16 %v8858, %v8854
    %v10283 = vpack.c.b16 %v8859, %v8855
    %v10284 = vpack.c.b16 %v8860, %v8856
    %v10285 = vpack.c.b16 %v8861, %v8857
    %v10286 = vpack.c.b16 %v8866, %v8862
    %v10287 = vpack.c.b16 %v8867, %v8863
    %v10288 = vpack.c.b16 %v8868, %v8864
    %v10289 = vpack.c.b16 %v8869, %v8865
    %v10290 = vpack.c.b16 %v8874, %v8870
    %v10291 = vpack.c.b16 %v8875, %v8871
    %v10292 = vpack.c.b16 %v8876, %v8872
    %v10293 = vpack.c.b16 %v8877, %v8873
    %v10294 = vpack.c.b16 %v8882, %v8878
    %v10295 = vpack.c.b16 %v8883, %v8879
    %v10296 = vpack.c.b16 %v8884, %v8880
    %v10297 = vpack.c.b16 %v8885, %v8881
    %v10298 = vpack.c.b16 %v8890, %v8886
    %v10299 = vpack.c.b16 %v8891, %v8887
    %v10300 = vpack.c.b16 %v8892, %v8888
    %v10301 = vpack.c.b16 %v8893, %v8889
    %v10302 = vpack.c.b16 %v8898, %v8894
    %v10303 = vpack.c.b16 %v8899, %v8895
    %v10304 = vpack.c.b16 %v8900, %v8896
    %v10305 = vpack.c.b16 %v8901, %v8897
    %v10306 = vpack.c.b16 %v8906, %v8902
    %v10307 = vpack.c.b16 %v8907, %v8903
    %v10308 = vpack.c.b16 %v8908, %v8904
    %v10309 = vpack.c.b16 %v8909, %v8905
    %v10310 = vpack.c.b16 %v8914, %v8910
    %v10311 = vpack.c.b16 %v8915, %v8911
    %v10312 = vpack.c.b16 %v8916, %v8912
    %v10313 = vpack.c.b16 %v8917, %v8913
    %v10314 = vpack.c.b16 %v8922, %v8918
    %v10315 = vpack.c.b16 %v8923, %v8919
    %v10316 = vpack.c.b16 %v8924, %v8920
    %v10317 = vpack.c.b16 %v8925, %v8921
    %v10318 = vpack.c.b16 %v8930, %v8926
    %v10319 = vpack.c.b16 %v8931, %v8927
    %v10320 = vpack.c.b16 %v8932, %v8928
    %v10321 = vpack.c.b16 %v8933, %v8929
    %v10322 = vpack.c.b16 %v8938, %v8934
    %v10323 = vpack.c.b16 %v8939, %v8935
    %v10324 = vpack.c.b16 %v8940, %v8936
    %v10325 = vpack.c.b16 %v8941, %v8937
    %v10326 = vpack.c.b16 %v8946, %v8942
    %v10327 = vpack.c.b16 %v8947, %v8943
    %v10328 = vpack.c.b16 %v8948, %v8944
    %v10329 = vpack.c.b16 %v8949, %v8945
    %v10330 = vpack.c.b16 %v8954, %v8950
    %v10331 = vpack.c.b16 %v8955, %v8951
    %v10332 = vpack.c.b16 %v8956, %v8952
    %v10333 = vpack.c.b16 %v8957, %v8953
    %v10334 = vpack.c.b16 %v8962, %v8958
    %v10335 = vpack.c.b16 %v8963, %v8959
    %v10336 = vpack.c.b16 %v8964, %v8960
    %v10337 = vpack.c.b16 %v8965, %v8961
    %v10338 = vpack.c.b16 %v8970, %v8966
    %v10339 = vpack.c.b16 %v8971, %v8967
    %v10340 = vpack.c.b16 %v8972, %v8968
    %v10341 = vpack.c.b16 %v8973, %v8969
    %v10342 = vpack.c.b16 %v8978, %v8974
    %v10343 = vpack.c.b16 %v8979, %v8975
    %v10344 = vpack.c.b16 %v8980, %v8976
    %v10345 = vpack.c.b16 %v8981, %v8977
    %v10346 = vpack.c.b16 %v8986, %v8982
    %v10347 = vpack.c.b16 %v8987, %v8983
    %v10348 = vpack.c.b16 %v8988, %v8984
    %v10349 = vpack.c.b16 %v8989, %v8985
    %v10350 = vpack.c.b16 %v8994, %v8990
    %v10351 = vpack.c.b16 %v8995, %v8991
    %v10352 = vpack.c.b16 %v8996, %v8992
    %v10353 = vpack.c.b16 %v8997, %v8993
    %v10354 = vpack.c.b16 %v9002, %v8998
    %v10355 = vpack.c.b16 %v9003, %v8999
    %v10356 = vpack.c.b16 %v9004, %v9000
    %v10357 = vpack.c.b16 %v9005, %v9001
    %v10358 = vpack.c.b16 %v9010, %v9006
    %v10359 = vpack.c.b16 %v9011, %v9007
    %v10360 = vpack.c.b16 %v9012, %v9008
    %v10361 = vpack.c.b16 %v9013, %v9009
    %v10362 = vpack.c.b16 %v9018, %v9014
    %v10363 = vpack.c.b16 %v9019, %v9015
    %v10364 = vpack.c.b16 %v9020, %v9016
    %v10365 = vpack.c.b16 %v9021, %v9017
    %v10366 = vpack.c.b16 %v9026, %v9022
    %v10367 = vpack.c.b16 %v9027, %v9023
    %v10368 = vpack.c.b16 %v9028, %v9024
    %v10369 = vpack.c.b16 %v9029, %v9025
    %v10370 = vpack.c.b16 %v9034, %v9030
    %v10371 = vpack.c.b16 %v9035, %v9031
    %v10372 = vpack.c.b16 %v9036, %v9032
    %v10373 = vpack.c.b16 %v9037, %v9033
    %v10374 = vpack.c.b16 %v9042, %v9038
    %v10375 = vpack.c.b16 %v9043, %v9039
    %v10376 = vpack.c.b16 %v9044, %v9040
    %v10377 = vpack.c.b16 %v9045, %v9041
    %v10378 = vpack.c.b16 %v9050, %v9046
    %v10379 = vpack.c.b16 %v9051, %v9047
    %v10380 = vpack.c.b16 %v9052, %v9048
    %v10381 = vpack.c.b16 %v9053, %v9049
    %v10382 = vpack.c.b16 %v9058, %v9054
    %v10383 = vpack.c.b16 %v9059, %v9055
    %v10384 = vpack.c.b16 %v9060, %v9056
    %v10385 = vpack.c.b16 %v9061, %v9057
    %v10386 = vpack.c.b16 %v9066, %v9062
    %v10387 = vpack.c.b16 %v9067, %v9063
    %v10388 = vpack.c.b16 %v9068, %v9064
    %v10389 = vpack.c.b16 %v9069, %v9065
    %v10390 = vpack.c.b16 %v9074, %v9070
    %v10391 = vpack.c.b16 %v9075, %v9071
    %v10392 = vpack.c.b16 %v9076, %v9072
    %v10393 = vpack.c.b16 %v9077, %v9073
    %v10394 = vpack.c.b16 %v9082, %v9078
    %v10395 = vpack.c.b16 %v9083, %v9079
    %v10396 = vpack.c.b16 %v9084, %v9080
    %v10397 = vpack.c.b16 %v9085, %v9081
    %v10398 = vpack.c.b16 %v9090, %v9086
    %v10399 = vpack.c.b16 %v9091, %v9087
    %v10400 = vpack.c.b16 %v9092, %v9088
    %v10401 = vpack.c.b16 %v9093, %v9089
    %v10402 = vpack.c.b16 %v9098, %v9094
    %v10403 = vpack.c.b16 %v9099, %v9095
    %v10404 = vpack.c.b16 %v9100, %v9096
    %v10405 = vpack.c.b16 %v9101, %v9097
    %v10406 = vpack.c.b16 %v9106, %v9102
    %v10407 = vpack.c.b16 %v9107, %v9103
    %v10408 = vpack.c.b16 %v9108, %v9104
    %v10409 = vpack.c.b16 %v9109, %v9105
    %v10410 = vpack.c.b16 %v9114, %v9110
    %v10411 = vpack.c.b16 %v9115, %v9111
    %v10412 = vpack.c.b16 %v9116, %v9112
    %v10413 = vpack.c.b16 %v9117, %v9113
    %v10414 = vpack.c.b16 %v9122, %v9118
    %v10415 = vpack.c.b16 %v9123, %v9119
    %v10416 = vpack.c.b16 %v9124, %v9120
    %v10417 = vpack.c.b16 %v9125, %v9121
    %v10418 = vpack.c.b16 %v9130, %v9126
    %v10419 = vpack.c.b16 %v9131, %v9127
    %v10420 = vpack.c.b16 %v9132, %v9128
    %v10421 = vpack.c.b16 %v9133, %v9129
    %v10422 = vpack.c.b16 %v9138, %v9134
    %v10423 = vpack.c.b16 %v9139, %v9135
    %v10424 = vpack.c.b16 %v9140, %v9136
    %v10425 = vpack.c.b16 %v9141, %v9137
    %v10426 = vpack.c.b16 %v9146, %v9142
    %v10427 = vpack.c.b16 %v9147, %v9143
    %v10428 = vpack.c.b16 %v9148, %v9144
    %v10429 = vpack.c.b16 %v9149, %v9145
    %v10430 = vpack.c.b16 %v9154, %v9150
    %v10431 = vpack.c.b16 %v9155, %v9151
    %v10432 = vpack.c.b16 %v9156, %v9152
    %v10433 = vpack.c.b16 %v9157, %v9153
    %v10434 = vpack.c.b16 %v9162, %v9158
    %v10435 = vpack.c.b16 %v9163, %v9159
    %v10436 = vpack.c.b16 %v9164, %v9160
    %v10437 = vpack.c.b16 %v9165, %v9161
    %v10438 = vpack.c.b16 %v9170, %v9166
    %v10439 = vpack.c.b16 %v9171, %v9167
    %v10440 = vpack.c.b16 %v9172, %v9168
    %v10441 = vpack.c.b16 %v9173, %v9169
    %v10442 = vpack.c.b16 %v9178, %v9174
    %v10443 = vpack.c.b16 %v9179, %v9175
    %v10444 = vpack.c.b16 %v9180, %v9176
    %v10445 = vpack.c.b16 %v9181, %v9177
    %v10446 = vpack.c.b16 %v9186, %v9182
    %v10447 = vpack.c.b16 %v9187, %v9183
    %v10448 = vpack.c.b16 %v9188, %v9184
    %v10449 = vpack.c.b16 %v9189, %v9185
    %v10450 = vpack.c.b16 %v9194, %v9190
    %v10451 = vpack.c.b16 %v9195, %v9191
    %v10452 = vpack.c.b16 %v9196, %v9192
    %v10453 = vpack.c.b16 %v9197, %v9193
    %v10454 = vpack.c.b16 %v9202, %v9198
    %v10455 = vpack.c.b16 %v9203, %v9199
    %v10456 = vpack.c.b16 %v9204, %v9200
    %v10457 = vpack.c.b16 %v9205, %v9201
    %v10458 = vpack.c.b16 %v9210, %v9206
    %v10459 = vpack.c.b16 %v9211, %v9207
    %v10460 = vpack.c.b16 %v9212, %v9208
    %v10461 = vpack.c.b16 %v9213, %v9209
    %v10462 = vpack.c.b16 %v9218, %v9214
    %v10463 = vpack.c.b16 %v9219, %v9215
    %v10464 = vpack.c.b16 %v9220, %v9216
    %v10465 = vpack.c.b16 %v9221, %v9217
    %v10466 = vpack.c.b16 %v9226, %v9222
    %v10467 = vpack.c.b16 %v9227, %v9223
    %v10468 = vpack.c.b16 %v9228, %v9224
    %v10469 = vpack.c.b16 %v9229, %v9225
    %v10470 = vpack.c.b16 %v9234, %v9230
    %v10471 = vpack.c.b16 %v9235, %v9231
    %v10472 = vpack.c.b16 %v9236, %v9232
    %v10473 = vpack.c.b16 %v9237, %v9233
    %v10474 = vpack.c.b16 %v9242, %v9238
    %v10475 = vpack.c.b16 %v9243, %v9239
    %v10476 = vpack.c.b16 %v9244, %v9240
    %v10477 = vpack.c.b16 %v9245, %v9241
    %v10478 = vpack.c.b16 %v9250, %v9246
    %v10479 = vpack.c.b16 %v9251, %v9247
    %v10480 = vpack.c.b16 %v9252, %v9248
    %v10481 = vpack.c.b16 %v9253, %v9249
    %v10482 = vpack.c.b16 %v9258, %v9254
    %v10483 = vpack.c.b16 %v9259, %v9255
    %v10484 = vpack.c.b16 %v9260, %v9256
    %v10485 = vpack.c.b16 %v9261, %v9257
    %v10486 = vpack.c.b16 %v9266, %v9262
    %v10487 = vpack.c.b16 %v9267, %v9263
    %v10488 = vpack.c.b16 %v9268, %v9264
    %v10489 = vpack.c.b16 %v9269, %v9265
    %v10490 = vpack.c.b16 %v9274, %v9270
    %v10491 = vpack.c.b16 %v9275, %v9271
    %v10492 = vpack.c.b16 %v9276, %v9272
    %v10493 = vpack.c.b16 %v9277, %v9273
    %v10494 = vpack.c.b16 %v9282, %v9278
    %v10495 = vpack.c.b16 %v9283, %v9279
    %v10496 = vpack.c.b16 %v9284, %v9280
    %v10497 = vpack.c.b16 %v9285, %v9281
    %v10498 = vpack.c.b16 %v9290, %v9286
    %v10499 = vpack.c.b16 %v9291, %v9287
    %v10500 = vpack.c.b16 %v9292, %v9288
    %v10501 = vpack.c.b16 %v9293, %v9289
    %v10502 = vpack.c.b16 %v9298, %v9294
    %v10503 = vpack.c.b16 %v9299, %v9295
    %v10504 = vpack.c.b16 %v9300, %v9296
    %v10505 = vpack.c.b16 %v9301, %v9297
    %v10506 = vpack.c.b16 %v9306, %v9302
    %v10507 = vpack.c.b16 %v9307, %v9303
    %v10508 = vpack.c.b16 %v9308, %v9304
    %v10509 = vpack.c.b16 %v9309, %v9305
    %v10510 = vpack.c.b16 %v9314, %v9310
    %v10511 = vpack.c.b16 %v9315, %v9311
    %v10512 = vpack.c.b16 %v9316, %v9312
    %v10513 = vpack.c.b16 %v9317, %v9313
    %v10514 = vpack.c.b16 %v9322, %v9318
    %v10515 = vpack.c.b16 %v9323, %v9319
    %v10516 = vpack.c.b16 %v9324, %v9320
    %v10517 = vpack.c.b16 %v9325, %v9321
    %v10518 = vpack.c.b16 %v9330, %v9326
    %v10519 = vpack.c.b16 %v9331, %v9327
    %v10520 = vpack.c.b16 %v9332, %v9328
    %v10521 = vpack.c.b16 %v9333, %v9329
    %v10522 = vpack.c.b16 %v9338, %v9334
    %v10523 = vpack.c.b16 %v9339, %v9335
    %v10524 = vpack.c.b16 %v9340, %v9336
    %v10525 = vpack.c.b16 %v9341, %v9337
    %v10526 = vpack.c.b16 %v9346, %v9342
    %v10527 = vpack.c.b16 %v9347, %v9343
    %v10528 = vpack.c.b16 %v9348, %v9344
    %v10529 = vpack.c.b16 %v9349, %v9345
    %v10530 = vpack.c.b16 %v9354, %v9350
    %v10531 = vpack.c.b16 %v9355, %v9351
    %v10532 = vpack.c.b16 %v9356, %v9352
    %v10533 = vpack.c.b16 %v9357, %v9353
    %v10534 = vpack.c.b16 %v9362, %v9358
    %v10535 = vpack.c.b16 %v9363, %v9359
    %v10536 = vpack.c.b16 %v9364, %v9360
    %v10537 = vpack.c.b16 %v9365, %v9361
    %v10538 = vpack.c.b16 %v9370, %v9366
    %v10539 = vpack.c.b16 %v9371, %v9367
    %v10540 = vpack.c.b16 %v9372, %v9368
    %v10541 = vpack.c.b16 %v9373, %v9369
    %v10542 = vpack.c.b16 %v9378, %v9374
    %v10543 = vpack.c.b16 %v9379, %v9375
    %v10544 = vpack.c.b16 %v9380, %v9376
    %v10545 = vpack.c.b16 %v9381, %v9377
    %v10546 = vpack.c.b16 %v9386, %v9382
    %v10547 = vpack.c.b16 %v9387, %v9383
    %v10548 = vpack.c.b16 %v9388, %v9384
    %v10549 = vpack.c.b16 %v9389, %v9385
    %v10550 = vpack.c.b16 %v9394, %v9390
    %v10551 = vpack.c.b16 %v9395, %v9391
    %v10552 = vpack.c.b16 %v9396, %v9392
    %v10553 = vpack.c.b16 %v9397, %v9393
    %v10554 = vpack.c.b16 %v9402, %v9398
    %v10555 = vpack.c.b16 %v9403, %v9399
    %v10556 = vpack.c.b16 %v9404, %v9400
    %v10557 = vpack.c.b16 %v9405, %v9401
    %v10558 = vpack.c.b16 %v9410, %v9406
    %v10559 = vpack.c.b16 %v9411, %v9407
    %v10560 = vpack.c.b16 %v9412, %v9408
    %v10561 = vpack.c.b16 %v9413, %v9409
    %v10562 = vpack.c.b16 %v9418, %v9414
    %v10563 = vpack.c.b16 %v9419, %v9415
    %v10564 = vpack.c.b16 %v9420, %v9416
    %v10565 = vpack.c.b16 %v9421, %v9417
    %v10566 = vpack.c.b16 %v9426, %v9422
    %v10567 = vpack.c.b16 %v9427, %v9423
    %v10568 = vpack.c.b16 %v9428, %v9424
    %v10569 = vpack.c.b16 %v9429, %v9425
    %v10570 = vpack.c.b16 %v9434, %v9430
    %v10571 = vpack.c.b16 %v9435, %v9431
    %v10572 = vpack.c.b16 %v9436, %v9432
    %v10573 = vpack.c.b16 %v9437, %v9433
    %v10574 = vpack.c.b16 %v9442, %v9438
    %v10575 = vpack.c.b16 %v9443, %v9439
    %v10576 = vpack.c.b16 %v9444, %v9440
    %v10577 = vpack.c.b16 %v9445, %v9441
    %v10578 = vpack.c.b16 %v9450, %v9446
    %v10579 = vpack.c.b16 %v9451, %v9447
    %v10580 = vpack.c.b16 %v9452, %v9448
    %v10581 = vpack.c.b16 %v9453, %v9449
    %v10582 = vpack.c.b16 %v9458, %v9454
    %v10583 = vpack.c.b16 %v9459, %v9455
    %v10584 = vpack.c.b16 %v9460, %v9456
    %v10585 = vpack.c.b16 %v9461, %v9457
    %v10586 = vpack.c.b16 %v9466, %v9462
    %v10587 = vpack.c.b16 %v9467, %v9463
    %v10588 = vpack.c.b16 %v9468, %v9464
    %v10589 = vpack.c.b16 %v9469, %v9465
    %v10590 = vpack.c.b16 %v9474, %v9470
    %v10591 = vpack.c.b16 %v9475, %v9471
    %v10592 = vpack.c.b16 %v9476, %v9472
    %v10593 = vpack.c.b16 %v9477, %v9473
    %v10594 = vpack.c.b16 %v9482, %v9478
    %v10595 = vpack.c.b16 %v9483, %v9479
    %v10596 = vpack.c.b16 %v9484, %v9480
    %v10597 = vpack.c.b16 %v9485, %v9481
    %v10598 = vpack.c.b16 %v9490, %v9486
    %v10599 = vpack.c.b16 %v9491, %v9487
    %v10600 = vpack.c.b16 %v9492, %v9488
    %v10601 = vpack.c.b16 %v9493, %v9489
    %v10602 = vpack.c.b16 %v9498, %v9494
    %v10603 = vpack.c.b16 %v9499, %v9495
    %v10604 = vpack.c.b16 %v9500, %v9496
    %v10605 = vpack.c.b16 %v9501, %v9497
    %v10606 = vpack.c.b16 %v9506, %v9502
    %v10607 = vpack.c.b16 %v9507, %v9503
    %v10608 = vpack.c.b16 %v9508, %v9504
    %v10609 = vpack.c.b16 %v9509, %v9505
    %v10610 = vpack.c.b16 %v9514, %v9510
    %v10611 = vpack.c.b16 %v9515, %v9511
    %v10612 = vpack.c.b16 %v9516, %v9512
    %v10613 = vpack.c.b16 %v9517, %v9513
    %v10614 = vpack.c.b16 %v9522, %v9518
    %v10615 = vpack.c.b16 %v9523, %v9519
    %v10616 = vpack.c.b16 %v9524, %v9520
    %v10617 = vpack.c.b16 %v9525, %v9521
    %v10618 = vpack.c.b16 %v9530, %v9526
    %v10619 = vpack.c.b16 %v9531, %v9527
    %v10620 = vpack.c.b16 %v9532, %v9528
    %v10621 = vpack.c.b16 %v9533, %v9529
    %v10622 = vpack.c.b16 %v9538, %v9534
    %v10623 = vpack.c.b16 %v9539, %v9535
    %v10624 = vpack.c.b16 %v9540, %v9536
    %v10625 = vpack.c.b16 %v9541, %v9537
    %v10626 = vpack.c.b16 %v9546, %v9542
    %v10627 = vpack.c.b16 %v9547, %v9543
    %v10628 = vpack.c.b16 %v9548, %v9544
    %v10629 = vpack.c.b16 %v9549, %v9545
    %v10630 = vpack.c.b16 %v9554, %v9550
    %v10631 = vpack.c.b16 %v9555, %v9551
    %v10632 = vpack.c.b16 %v9556, %v9552
    %v10633 = vpack.c.b16 %v9557, %v9553
    %v10634 = vpack.c.b16 %v9562, %v9558
    %v10635 = vpack.c.b16 %v9563, %v9559
    %v10636 = vpack.c.b16 %v9564, %v9560
    %v10637 = vpack.c.b16 %v9565, %v9561
    %v10638 = vpack.c.b16 %v9570, %v9566
    %v10639 = vpack.c.b16 %v9571, %v9567
    %v10640 = vpack.c.b16 %v9572, %v9568
    %v10641 = vpack.c.b16 %v9573, %v9569
    %v10642 = vpack.c.b16 %v9578, %v9574
    %v10643 = vpack.c.b16 %v9579, %v9575
    %v10644 = vpack.c.b16 %v9580, %v9576
    %v10645 = vpack.c.b16 %v9581, %v9577
    %v10646 = vpack.c.b16 %v9586, %v9582
    %v10647 = vpack.c.b16 %v9587, %v9583
    %v10648 = vpack.c.b16 %v9588, %v9584
    %v10649 = vpack.c.b16 %v9589, %v9585
    %v10650 = vpack.c.b16 %v9594, %v9590
    %v10651 = vpack.c.b16 %v9595, %v9591
    %v10652 = vpack.c.b16 %v9596, %v9592
    %v10653 = vpack.c.b16 %v9597, %v9593
    %v10654 = vpack.c.b16 %v9602, %v9598
    %v10655 = vpack.c.b16 %v9603, %v9599
    %v10656 = vpack.c.b16 %v9604, %v9600
    %v10657 = vpack.c.b16 %v9605, %v9601
    %v10658 = vpack.c.b16 %v9610, %v9606
    %v10659 = vpack.c.b16 %v9611, %v9607
    %v10660 = vpack.c.b16 %v9612, %v9608
    %v10661 = vpack.c.b16 %v9613, %v9609
    %v10662 = vpack.c.b16 %v9618, %v9614
    %v10663 = vpack.c.b16 %v9619, %v9615
    %v10664 = vpack.c.b16 %v9620, %v9616
    %v10665 = vpack.c.b16 %v9621, %v9617
    %v10666 = vpack.c.b16 %v9626, %v9622
    %v10667 = vpack.c.b16 %v9627, %v9623
    %v10668 = vpack.c.b16 %v9628, %v9624
    %v10669 = vpack.c.b16 %v9629, %v9625
    %v10670 = vpack.c.b16 %v9634, %v9630
    %v10671 = vpack.c.b16 %v9635, %v9631
    %v10672 = vpack.c.b16 %v9636, %v9632
    %v10673 = vpack.c.b16 %v9637, %v9633
    %v10674 = vpack.c.b16 %v9642, %v9638
    %v10675 = vpack.c.b16 %v9643, %v9639
    %v10676 = vpack.c.b16 %v9644, %v9640
    %v10677 = vpack.c.b16 %v9645, %v9641
    %v10678 = vpack.c.b16 %v9650, %v9646
    %v10679 = vpack.c.b16 %v9651, %v9647
    %v10680 = vpack.c.b16 %v9652, %v9648
    %v10681 = vpack.c.b16 %v9653, %v9649
    %v10682 = vpack.c.b16 %v9658, %v9654
    %v10683 = vpack.c.b16 %v9659, %v9655
    %v10684 = vpack.c.b16 %v9660, %v9656
    %v10685 = vpack.c.b16 %v9661, %v9657
    %v10686 = vpack.c.b16 %v9666, %v9662
    %v10687 = vpack.c.b16 %v9667, %v9663
    %v10688 = vpack.c.b16 %v9668, %v9664
    %v10689 = vpack.c.b16 %v9669, %v9665
    %v10690 = vpack.c.b16 %v9674, %v9670
    %v10691 = vpack.c.b16 %v9675, %v9671
    %v10692 = vpack.c.b16 %v9676, %v9672
    %v10693 = vpack.c.b16 %v9677, %v9673
    %v10694 = vpack.c.b16 %v9682, %v9678
    %v10695 = vpack.c.b16 %v9683, %v9679
    %v10696 = vpack.c.b16 %v9684, %v9680
    %v10697 = vpack.c.b16 %v9685, %v9681
    %v10698 = vpack.c.b16 %v9690, %v9686
    %v10699 = vpack.c.b16 %v9691, %v9687
    %v10700 = vpack.c.b16 %v9692, %v9688
    %v10701 = vpack.c.b16 %v9693, %v9689
    %v10702 = vpack.c.b16 %v9698, %v9694
    %v10703 = vpack.c.b16 %v9699, %v9695
    %v10704 = vpack.c.b16 %v9700, %v9696
    %v10705 = vpack.c.b16 %v9701, %v9697
    %v10706 = vpack.c.b16 %v9706, %v9702
    %v10707 = vpack.c.b16 %v9707, %v9703
    %v10708 = vpack.c.b16 %v9708, %v9704
    %v10709 = vpack.c.b16 %v9709, %v9705
    %v10710 = vpack.c.b16 %v9714, %v9710
    %v10711 = vpack.c.b16 %v9715, %v9711
    %v10712 = vpack.c.b16 %v9716, %v9712
    %v10713 = vpack.c.b16 %v9717, %v9713
    %v10714 = vpack.c.b16 %v9722, %v9718
    %v10715 = vpack.c.b16 %v9723, %v9719
    %v10716 = vpack.c.b16 %v9724, %v9720
    %v10717 = vpack.c.b16 %v9725, %v9721
    %v10718 = vpack.c.b16 %v9730, %v9726
    %v10719 = vpack.c.b16 %v9731, %v9727
    %v10720 = vpack.c.b16 %v9732, %v9728
    %v10721 = vpack.c.b16 %v9733, %v9729
    %v10722 = vpack.c.b16 %v9738, %v9734
    %v10723 = vpack.c.b16 %v9739, %v9735
    %v10724 = vpack.c.b16 %v9740, %v9736
    %v10725 = vpack.c.b16 %v9741, %v9737
    %v10726 = vpack.c.b16 %v9746, %v9742
    %v10727 = vpack.c.b16 %v9747, %v9743
    %v10728 = vpack.c.b16 %v9748, %v9744
    %v10729 = vpack.c.b16 %v9749, %v9745
    %v10730 = vpack.c.b16 %v9754, %v9750
    %v10731 = vpack.c.b16 %v9755, %v9751
    %v10732 = vpack.c.b16 %v9756, %v9752
    %v10733 = vpack.c.b16 %v9757, %v9753
    %v10734 = vpack.c.b16 %v9762, %v9758
    %v10735 = vpack.c.b16 %v9763, %v9759
    %v10736 = vpack.c.b16 %v9764, %v9760
    %v10737 = vpack.c.b16 %v9765, %v9761
    %v10738 = vpack.c.b16 %v9770, %v9766
    %v10739 = vpack.c.b16 %v9771, %v9767
    %v10740 = vpack.c.b16 %v9772, %v9768
    %v10741 = vpack.c.b16 %v9773, %v9769
    %v10742 = vpack.c.b16 %v9778, %v9774
    %v10743 = vpack.c.b16 %v9779, %v9775
    %v10744 = vpack.c.b16 %v9780, %v9776
    %v10745 = vpack.c.b16 %v9781, %v9777
    %v10746 = vpack.c.b16 %v9786, %v9782
    %v10747 = vpack.c.b16 %v9787, %v9783
    %v10748 = vpack.c.b16 %v9788, %v9784
    %v10749 = vpack.c.b16 %v9789, %v9785
    %v10750 = vpack.c.b16 %v9794, %v9790
    %v10751 = vpack.c.b16 %v9795, %v9791
    %v10752 = vpack.c.b16 %v9796, %v9792
    %v10753 = vpack.c.b16 %v9797, %v9793
    %v10754 = vpack.c.b16 %v9802, %v9798
    %v10755 = vpack.c.b16 %v9803, %v9799
    %v10756 = vpack.c.b16 %v9804, %v9800
    %v10757 = vpack.c.b16 %v9805, %v9801
    %v10758 = vpack.c.b16 %v9810, %v9806
    %v10759 = vpack.c.b16 %v9811, %v9807
    %v10760 = vpack.c.b16 %v9812, %v9808
    %v10761 = vpack.c.b16 %v9813, %v9809
    %v10762 = vpack.c.b16 %v9818, %v9814
    %v10763 = vpack.c.b16 %v9819, %v9815
    %v10764 = vpack.c.b16 %v9820, %v9816
    %v10765 = vpack.c.b16 %v9821, %v9817
    %v10766 = vpack.c.b16 %v9826, %v9822
    %v10767 = vpack.c.b16 %v9827, %v9823
    %v10768 = vpack.c.b16 %v9828, %v9824
    %v10769 = vpack.c.b16 %v9829, %v9825
    %v10770 = vpack.c.b16 %v9834, %v9830
    %v10771 = vpack.c.b16 %v9835, %v9831
    %v10772 = vpack.c.b16 %v9836, %v9832
    %v10773 = vpack.c.b16 %v9837, %v9833
    %v10774 = vpack.c.b16 %v9842, %v9838
    %v10775 = vpack.c.b16 %v9843, %v9839
    %v10776 = vpack.c.b16 %v9844, %v9840
    %v10777 = vpack.c.b16 %v9845, %v9841
    %v10778 = vpack.c.b16 %v9850, %v9846
    %v10779 = vpack.c.b16 %v9851, %v9847
    %v10780 = vpack.c.b16 %v9852, %v9848
    %v10781 = vpack.c.b16 %v9853, %v9849
    %v10782 = vpack.c.b16 %v9858, %v9854
    %v10783 = vpack.c.b16 %v9859, %v9855
    %v10784 = vpack.c.b16 %v9860, %v9856
    %v10785 = vpack.c.b16 %v9861, %v9857
    %v10786 = vpack.c.b16 %v9866, %v9862
    %v10787 = vpack.c.b16 %v9867, %v9863
    %v10788 = vpack.c.b16 %v9868, %v9864
    %v10789 = vpack.c.b16 %v9869, %v9865
    %v10790 = vpack.c.b16 %v9874, %v9870
    %v10791 = vpack.c.b16 %v9875, %v9871
    %v10792 = vpack.c.b16 %v9876, %v9872
    %v10793 = vpack.c.b16 %v9877, %v9873
    %v10794 = vpack.c.b16 %v9882, %v9878
    %v10795 = vpack.c.b16 %v9883, %v9879
    %v10796 = vpack.c.b16 %v9884, %v9880
    %v10797 = vpack.c.b16 %v9885, %v9881
    %v10798 = vpack.c.b16 %v9890, %v9886
    %v10799 = vpack.c.b16 %v9891, %v9887
    %v10800 = vpack.c.b16 %v9892, %v9888
    %v10801 = vpack.c.b16 %v9893, %v9889
    %v10802 = vpack.c.b16 %v9898, %v9894
    %v10803 = vpack.c.b16 %v9899, %v9895
    %v10804 = vpack.c.b16 %v9900, %v9896
    %v10805 = vpack.c.b16 %v9901, %v9897
    %v10806 = vpack.c.b16 %v9906, %v9902
    %v10807 = vpack.c.b16 %v9907, %v9903
    %v10808 = vpack.c.b16 %v9908, %v9904
    %v10809 = vpack.c.b16 %v9909, %v9905
    %v10810 = vpack.c.b16 %v9914, %v9910
    %v10811 = vpack.c.b16 %v9915, %v9911
    %v10812 = vpack.c.b16 %v9916, %v9912
    %v10813 = vpack.c.b16 %v9917, %v9913
    %v10814 = vpack.c.b16 %v9922, %v9918
    %v10815 = vpack.c.b16 %v9923, %v9919
    %v10816 = vpack.c.b16 %v9924, %v9920
    %v10817 = vpack.c.b16 %v9925, %v9921
    %v10818 = vpack.c.b16 %v9930, %v9926
    %v10819 = vpack.c.b16 %v9931, %v9927
    %v10820 = vpack.c.b16 %v9932, %v9928
    %v10821 = vpack.c.b16 %v9933, %v9929
    %v10822 = vpack.c.b16 %v9938, %v9934
    %v10823 = vpack.c.b16 %v9939, %v9935
    %v10824 = vpack.c.b16 %v9940, %v9936
    %v10825 = vpack.c.b16 %v9941, %v9937
    %v10826 = vpack.c.b16 %v9946, %v9942
    %v10827 = vpack.c.b16 %v9947, %v9943
    %v10828 = vpack.c.b16 %v9948, %v9944
    %v10829 = vpack.c.b16 %v9949, %v9945
    %v10830 = vpack.c.b16 %v9954, %v9950
    %v10831 = vpack.c.b16 %v9955, %v9951
    %v10832 = vpack.c.b16 %v9956, %v9952
    %v10833 = vpack.c.b16 %v9957, %v9953
    %v10834 = vpack.c.b16 %v9962, %v9958
    %v10835 = vpack.c.b16 %v9963, %v9959
    %v10836 = vpack.c.b16 %v9964, %v9960
    %v10837 = vpack.c.b16 %v9965, %v9961
    %v10838 = vpack.c.b16 %v9970, %v9966
    %v10839 = vpack.c.b16 %v9971, %v9967
    %v10840 = vpack.c.b16 %v9972, %v9968
    %v10841 = vpack.c.b16 %v9973, %v9969
    %v10842 = vpack.c.b16 %v9978, %v9974
    %v10843 = vpack.c.b16 %v9979, %v9975
    %v10844 = vpack.c.b16 %v9980, %v9976
    %v10845 = vpack.c.b16 %v9981, %v9977
    %v10846 = vpack.c.b16 %v9986, %v9982
    %v10847 = vpack.c.b16 %v9987, %v9983
    %v10848 = vpack.c.b16 %v9988, %v9984
    %v10849 = vpack.c.b16 %v9989, %v9985
    %v10850 = vpack.c.b16 %v9994, %v9990
    %v10851 = vpack.c.b16 %v9995, %v9991
    %v10852 = vpack.c.b16 %v9996, %v9992
    %v10853 = vpack.c.b16 %v9997, %v9993
    %v10854 = vpack.c.b16 %v10002, %v9998
    %v10855 = vpack.c.b16 %v10003, %v9999
    %v10856 = vpack.c.b16 %v10004, %v10000
    %v10857 = vpack.c.b16 %v10005, %v10001
    %v10858 = vpack.c.b16 %v10010, %v10006
    %v10859 = vpack.c.b16 %v10011, %v10007
    %v10860 = vpack.c.b16 %v10012, %v10008
    %v10861 = vpack.c.b16 %v10013, %v10009
    %v10862 = vpack.c.b16 %v10018, %v10014
    %v10863 = vpack.c.b16 %v10019, %v10015
    %v10864 = vpack.c.b16 %v10020, %v10016
    %v10865 = vpack.c.b16 %v10021, %v10017
    %v10866 = vpack.c.b16 %v10026, %v10022
    %v10867 = vpack.c.b16 %v10027, %v10023
    %v10868 = vpack.c.b16 %v10028, %v10024
    %v10869 = vpack.c.b16 %v10029, %v10025
    %v10870 = vpack.c.b16 %v10034, %v10030
    %v10871 = vpack.c.b16 %v10035, %v10031
    %v10872 = vpack.c.b16 %v10036, %v10032
    %v10873 = vpack.c.b16 %v10037, %v10033
    %v10874 = vpack.c.b16 %v10042, %v10038
    %v10875 = vpack.c.b16 %v10043, %v10039
    %v10876 = vpack.c.b16 %v10044, %v10040
    %v10877 = vpack.c.b16 %v10045, %v10041
    %v10878 = vpack.c.b16 %v10050, %v10046
    %v10879 = vpack.c.b16 %v10051, %v10047
    %v10880 = vpack.c.b16 %v10052, %v10048
    %v10881 = vpack.c.b16 %v10053, %v10049
    %v10882 = vpack.c.b16 %v10058, %v10054
    %v10883 = vpack.c.b16 %v10059, %v10055
    %v10884 = vpack.c.b16 %v10060, %v10056
    %v10885 = vpack.c.b16 %v10061, %v10057
    %v10886 = vpack.c.b16 %v10066, %v10062
    %v10887 = vpack.c.b16 %v10067, %v10063
    %v10888 = vpack.c.b16 %v10068, %v10064
    %v10889 = vpack.c.b16 %v10069, %v10065
    %v10890 = vpack.c.b16 %v10074, %v10070
    %v10891 = vpack.c.b16 %v10075, %v10071
    %v10892 = vpack.c.b16 %v10076, %v10072
    %v10893 = vpack.c.b16 %v10077, %v10073
    %v10894 = vpack.c.b16 %v10082, %v10078
    %v10895 = vpack.c.b16 %v10083, %v10079
    %v10896 = vpack.c.b16 %v10084, %v10080
    %v10897 = vpack.c.b16 %v10085, %v10081
    %v10898 = vpack.c.b16 %v10090, %v10086
    %v10899 = vpack.c.b16 %v10091, %v10087
    %v10900 = vpack.c.b16 %v10092, %v10088
    %v10901 = vpack.c.b16 %v10093, %v10089
    %v10902 = vpack.c.b16 %v10098, %v10094
    %v10903 = vpack.c.b16 %v10099, %v10095
    %v10904 = vpack.c.b16 %v10100, %v10096
    %v10905 = vpack.c.b16 %v10101, %v10097
    %v10906 = vpack.c.b16 %v10106, %v10102
    %v10907 = vpack.c.b16 %v10107, %v10103
    %v10908 = vpack.c.b16 %v10108, %v10104
    %v10909 = vpack.c.b16 %v10109, %v10105
    %11710 = vmatpush.bf16.msra.mxu0 %v10138
    %11711 = vmatpush.bf16.msra.mxu0 %v10134
    %11712 = vmatpush.bf16.msra.mxu0 %v10130
    %11713 = vmatpush.bf16.msra.mxu0 %v10126
    %11714 = vmatpush.bf16.msra.mxu0 %v10122
    %11715 = vmatpush.bf16.msra.mxu0 %v10118
    %11716 = vmatpush.bf16.msra.mxu0 %v10114
    %11717 = vmatpush.bf16.msra.mxu0 %v10110
    %11718 = vmatmul.bf16.gmra.mxu0 %v6875
    %v11719 = vpop.f32.mrf.mxu0
    %v11720 = vadd.f32 %v7702, %v11719
    %v11721 = vpop.f32.mrf.mxu0
    %11722 = vdwg.mxu0
    %11723 = vmatpush.bf16.msra.mxu0 %v10170
    %11724 = vmatpush.bf16.msra.mxu0 %v10166
    %11725 = vmatpush.bf16.msra.mxu0 %v10162
    %11726 = vmatpush.bf16.msra.mxu0 %v10158
    %11727 = vmatpush.bf16.msra.mxu0 %v10154
    %11728 = vmatpush.bf16.msra.mxu0 %v10150
    %11729 = vmatpush.bf16.msra.mxu0 %v10146
    %11730 = vmatpush.bf16.msra.mxu0 %v10142
    %11731 = vmatmul.bf16.gmra.mxu0 %v6876
    %v11732 = vpop.f32.mrf.mxu0
    %v11733 = vadd.f32 %v11720, %v11732
    %v11734 = vpop.f32.mrf.mxu0
    %11735 = vdwg.mxu0
    %11736 = vmatpush.bf16.msra.mxu0 %v10202
    %11737 = vmatpush.bf16.msra.mxu0 %v10198
    %11738 = vmatpush.bf16.msra.mxu0 %v10194
    %11739 = vmatpush.bf16.msra.mxu0 %v10190
    %11740 = vmatpush.bf16.msra.mxu0 %v10186
    %11741 = vmatpush.bf16.msra.mxu0 %v10182
    %11742 = vmatpush.bf16.msra.mxu0 %v10178
    %11743 = vmatpush.bf16.msra.mxu0 %v10174
    %11744 = vmatmul.bf16.gmra.mxu0 %v6877
    %v11745 = vpop.f32.mrf.mxu0
    %v11746 = vadd.f32 %v11733, %v11745
    %v11747 = vpop.f32.mrf.mxu0
    %11748 = vdwg.mxu0
    %11749 = vmatpush.bf16.msra.mxu0 %v10234
    %11750 = vmatpush.bf16.msra.mxu0 %v10230
    %11751 = vmatpush.bf16.msra.mxu0 %v10226
    %11752 = vmatpush.bf16.msra.mxu0 %v10222
    %11753 = vmatpush.bf16.msra.mxu0 %v10218
    %11754 = vmatpush.bf16.msra.mxu0 %v10214
    %11755 = vmatpush.bf16.msra.mxu0 %v10210
    %11756 = vmatpush.bf16.msra.mxu0 %v10206
    %11757 = vmatmul.bf16.gmra.mxu0 %v6878
    %v11758 = vpop.f32.mrf.mxu0
    %v11759 = vadd.f32 %v11746, %v11758
    %v11760 = vpop.f32.mrf.mxu0
    %11761 = vdwg.mxu0
    %11762 = vmatpush.bf16.msra.mxu0 %v10266
    %11763 = vmatpush.bf16.msra.mxu0 %v10262
    %11764 = vmatpush.bf16.msra.mxu0 %v10258
    %11765 = vmatpush.bf16.msra.mxu0 %v10254
    %11766 = vmatpush.bf16.msra.mxu0 %v10250
    %11767 = vmatpush.bf16.msra.mxu0 %v10246
    %11768 = vmatpush.bf16.msra.mxu0 %v10242
    %11769 = vmatpush.bf16.msra.mxu0 %v10238
    %11770 = vmatmul.bf16.gmra.mxu0 %v6879
    %v11771 = vpop.f32.mrf.mxu0
    %v11772 = vadd.f32 %v11759, %v11771
    %v11773 = vpop.f32.mrf.mxu0
    %11774 = vdwg.mxu0
    %11775 = vmatpush.bf16.msra.mxu0 %v10298
    %11776 = vmatpush.bf16.msra.mxu0 %v10294
    %11777 = vmatpush.bf16.msra.mxu0 %v10290
    %11778 = vmatpush.bf16.msra.mxu0 %v10286
    %11779 = vmatpush.bf16.msra.mxu0 %v10282
    %11780 = vmatpush.bf16.msra.mxu0 %v10278
    %11781 = vmatpush.bf16.msra.mxu0 %v10274
    %11782 = vmatpush.bf16.msra.mxu0 %v10270
    %11783 = vmatmul.bf16.gmra.mxu0 %v6880
    %v11784 = vpop.f32.mrf.mxu0
    %v11785 = vadd.f32 %v11772, %v11784
    %v11786 = vpop.f32.mrf.mxu0
    %11787 = vdwg.mxu0
    %11788 = vmatpush.bf16.msra.mxu0 %v10330
    %11789 = vmatpush.bf16.msra.mxu0 %v10326
    %11790 = vmatpush.bf16.msra.mxu0 %v10322
    %11791 = vmatpush.bf16.msra.mxu0 %v10318
    %11792 = vmatpush.bf16.msra.mxu0 %v10314
    %11793 = vmatpush.bf16.msra.mxu0 %v10310
    %11794 = vmatpush.bf16.msra.mxu0 %v10306
    %11795 = vmatpush.bf16.msra.mxu0 %v10302
    %11796 = vmatmul.bf16.gmra.mxu0 %v6881
    %v11797 = vpop.f32.mrf.mxu0
    %v11798 = vadd.f32 %v11785, %v11797
    %v11799 = vpop.f32.mrf.mxu0
    %11800 = vdwg.mxu0
    %11801 = vmatpush.bf16.msra.mxu0 %v10362
    %11802 = vmatpush.bf16.msra.mxu0 %v10358
    %11803 = vmatpush.bf16.msra.mxu0 %v10354
    %11804 = vmatpush.bf16.msra.mxu0 %v10350
    %11805 = vmatpush.bf16.msra.mxu0 %v10346
    %11806 = vmatpush.bf16.msra.mxu0 %v10342
    %11807 = vmatpush.bf16.msra.mxu0 %v10338
    %11808 = vmatpush.bf16.msra.mxu0 %v10334
    %11809 = vmatmul.bf16.gmra.mxu0 %v6882
    %v11810 = vpop.f32.mrf.mxu0
    %v11811 = vadd.f32 %v11798, %v11810
    %v11812 = vpop.f32.mrf.mxu0
    %11813 = vdwg.mxu0
    %11814 = vmatpush.bf16.msra.mxu0 %v10394
    %11815 = vmatpush.bf16.msra.mxu0 %v10390
    %11816 = vmatpush.bf16.msra.mxu0 %v10386
    %11817 = vmatpush.bf16.msra.mxu0 %v10382
    %11818 = vmatpush.bf16.msra.mxu0 %v10378
    %11819 = vmatpush.bf16.msra.mxu0 %v10374
    %11820 = vmatpush.bf16.msra.mxu0 %v10370
    %11821 = vmatpush.bf16.msra.mxu0 %v10366
    %11822 = vmatmul.bf16.gmra.mxu0 %v6883
    %v11823 = vpop.f32.mrf.mxu0
    %v11824 = vadd.f32 %v11811, %v11823
    %v11825 = vpop.f32.mrf.mxu0
    %11826 = vdwg.mxu0
    %11827 = vmatpush.bf16.msra.mxu0 %v10426
    %11828 = vmatpush.bf16.msra.mxu0 %v10422
    %11829 = vmatpush.bf16.msra.mxu0 %v10418
    %11830 = vmatpush.bf16.msra.mxu0 %v10414
    %11831 = vmatpush.bf16.msra.mxu0 %v10410
    %11832 = vmatpush.bf16.msra.mxu0 %v10406
    %11833 = vmatpush.bf16.msra.mxu0 %v10402
    %11834 = vmatpush.bf16.msra.mxu0 %v10398
    %11835 = vmatmul.bf16.gmra.mxu0 %v6884
    %v11836 = vpop.f32.mrf.mxu0
    %v11837 = vadd.f32 %v11824, %v11836
    %v11838 = vpop.f32.mrf.mxu0
    %11839 = vdwg.mxu0
    %11840 = vmatpush.bf16.msra.mxu0 %v10458
    %11841 = vmatpush.bf16.msra.mxu0 %v10454
    %11842 = vmatpush.bf16.msra.mxu0 %v10450
    %11843 = vmatpush.bf16.msra.mxu0 %v10446
    %11844 = vmatpush.bf16.msra.mxu0 %v10442
    %11845 = vmatpush.bf16.msra.mxu0 %v10438
    %11846 = vmatpush.bf16.msra.mxu0 %v10434
    %11847 = vmatpush.bf16.msra.mxu0 %v10430
    %11848 = vmatmul.bf16.gmra.mxu0 %v6885
    %v11849 = vpop.f32.mrf.mxu0
    %v11850 = vadd.f32 %v11837, %v11849
    %v11851 = vpop.f32.mrf.mxu0
    %11852 = vdwg.mxu0
    %11853 = vmatpush.bf16.msra.mxu0 %v10490
    %11854 = vmatpush.bf16.msra.mxu0 %v10486
    %11855 = vmatpush.bf16.msra.mxu0 %v10482
    %11856 = vmatpush.bf16.msra.mxu0 %v10478
    %11857 = vmatpush.bf16.msra.mxu0 %v10474
    %11858 = vmatpush.bf16.msra.mxu0 %v10470
    %11859 = vmatpush.bf16.msra.mxu0 %v10466
    %11860 = vmatpush.bf16.msra.mxu0 %v10462
    %11861 = vmatmul.bf16.gmra.mxu0 %v6886
    %v11862 = vpop.f32.mrf.mxu0
    %v11863 = vadd.f32 %v11850, %v11862
    %v11864 = vpop.f32.mrf.mxu0
    %11865 = vdwg.mxu0
    %11866 = vmatpush.bf16.msra.mxu0 %v10522
    %11867 = vmatpush.bf16.msra.mxu0 %v10518
    %11868 = vmatpush.bf16.msra.mxu0 %v10514
    %11869 = vmatpush.bf16.msra.mxu0 %v10510
    %11870 = vmatpush.bf16.msra.mxu0 %v10506
    %11871 = vmatpush.bf16.msra.mxu0 %v10502
    %11872 = vmatpush.bf16.msra.mxu0 %v10498
    %11873 = vmatpush.bf16.msra.mxu0 %v10494
    %11874 = vmatmul.bf16.gmra.mxu0 %v6887
    %v11875 = vpop.f32.mrf.mxu0
    %v11876 = vadd.f32 %v11863, %v11875
    %v11877 = vpop.f32.mrf.mxu0
    %11878 = vdwg.mxu0
    %11879 = vmatpush.bf16.msra.mxu0 %v10554
    %11880 = vmatpush.bf16.msra.mxu0 %v10550
    %11881 = vmatpush.bf16.msra.mxu0 %v10546
    %11882 = vmatpush.bf16.msra.mxu0 %v10542
    %11883 = vmatpush.bf16.msra.mxu0 %v10538
    %11884 = vmatpush.bf16.msra.mxu0 %v10534
    %11885 = vmatpush.bf16.msra.mxu0 %v10530
    %11886 = vmatpush.bf16.msra.mxu0 %v10526
    %11887 = vmatmul.bf16.gmra.mxu0 %v6888
    %v11888 = vpop.f32.mrf.mxu0
    %v11889 = vadd.f32 %v11876, %v11888
    %v11890 = vpop.f32.mrf.mxu0
    %11891 = vdwg.mxu0
    %11892 = vmatpush.bf16.msra.mxu0 %v10586
    %11893 = vmatpush.bf16.msra.mxu0 %v10582
    %11894 = vmatpush.bf16.msra.mxu0 %v10578
    %11895 = vmatpush.bf16.msra.mxu0 %v10574
    %11896 = vmatpush.bf16.msra.mxu0 %v10570
    %11897 = vmatpush.bf16.msra.mxu0 %v10566
    %11898 = vmatpush.bf16.msra.mxu0 %v10562
    %11899 = vmatpush.bf16.msra.mxu0 %v10558
    %11900 = vmatmul.bf16.gmra.mxu0 %v6889
    %v11901 = vpop.f32.mrf.mxu0
    %v11902 = vadd.f32 %v11889, %v11901
    %v11903 = vpop.f32.mrf.mxu0
    %11904 = vdwg.mxu0
    %11905 = vmatpush.bf16.msra.mxu0 %v10618
    %11906 = vmatpush.bf16.msra.mxu0 %v10614
    %11907 = vmatpush.bf16.msra.mxu0 %v10610
    %11908 = vmatpush.bf16.msra.mxu0 %v10606
    %11909 = vmatpush.bf16.msra.mxu0 %v10602
    %11910 = vmatpush.bf16.msra.mxu0 %v10598
    %11911 = vmatpush.bf16.msra.mxu0 %v10594
    %11912 = vmatpush.bf16.msra.mxu0 %v10590
    %11913 = vmatmul.bf16.gmra.mxu0 %v6890
    %v11914 = vpop.f32.mrf.mxu0
    %v11915 = vadd.f32 %v11902, %v11914
    %v11916 = vpop.f32.mrf.mxu0
    %11917 = vdwg.mxu0
    %11918 = vmatpush.bf16.msra.mxu0 %v10650
    %11919 = vmatpush.bf16.msra.mxu0 %v10646
    %11920 = vmatpush.bf16.msra.mxu0 %v10642
    %11921 = vmatpush.bf16.msra.mxu0 %v10638
    %11922 = vmatpush.bf16.msra.mxu0 %v10634
    %11923 = vmatpush.bf16.msra.mxu0 %v10630
    %11924 = vmatpush.bf16.msra.mxu0 %v10626
    %11925 = vmatpush.bf16.msra.mxu0 %v10622
    %11926 = vmatmul.bf16.gmra.mxu0 %v6891
    %v11927 = vpop.f32.mrf.mxu0
    %v11928 = vadd.f32 %v11915, %v11927
    %v11929 = vpop.f32.mrf.mxu0
    %11930 = vdwg.mxu0
    %11931 = vmatpush.bf16.msra.mxu0 %v10682
    %11932 = vmatpush.bf16.msra.mxu0 %v10678
    %11933 = vmatpush.bf16.msra.mxu0 %v10674
    %11934 = vmatpush.bf16.msra.mxu0 %v10670
    %11935 = vmatpush.bf16.msra.mxu0 %v10666
    %11936 = vmatpush.bf16.msra.mxu0 %v10662
    %11937 = vmatpush.bf16.msra.mxu0 %v10658
    %11938 = vmatpush.bf16.msra.mxu0 %v10654
    %11939 = vmatmul.bf16.gmra.mxu0 %v6892
    %v11940 = vpop.f32.mrf.mxu0
    %v11941 = vadd.f32 %v11928, %v11940
    %v11942 = vpop.f32.mrf.mxu0
    %11943 = vdwg.mxu0
    %11944 = vmatpush.bf16.msra.mxu0 %v10714
    %11945 = vmatpush.bf16.msra.mxu0 %v10710
    %11946 = vmatpush.bf16.msra.mxu0 %v10706
    %11947 = vmatpush.bf16.msra.mxu0 %v10702
    %11948 = vmatpush.bf16.msra.mxu0 %v10698
    %11949 = vmatpush.bf16.msra.mxu0 %v10694
    %11950 = vmatpush.bf16.msra.mxu0 %v10690
    %11951 = vmatpush.bf16.msra.mxu0 %v10686
    %11952 = vmatmul.bf16.gmra.mxu0 %v6893
    %v11953 = vpop.f32.mrf.mxu0
    %v11954 = vadd.f32 %v11941, %v11953
    %v11955 = vpop.f32.mrf.mxu0
    %11956 = vdwg.mxu0
    %11957 = vmatpush.bf16.msra.mxu0 %v10746
    %11958 = vmatpush.bf16.msra.mxu0 %v10742
    %11959 = vmatpush.bf16.msra.mxu0 %v10738
    %11960 = vmatpush.bf16.msra.mxu0 %v10734
    %11961 = vmatpush.bf16.msra.mxu0 %v10730
    %11962 = vmatpush.bf16.msra.mxu0 %v10726
    %11963 = vmatpush.bf16.msra.mxu0 %v10722
    %11964 = vmatpush.bf16.msra.mxu0 %v10718
    %11965 = vmatmul.bf16.gmra.mxu0 %v6894
    %v11966 = vpop.f32.mrf.mxu0
    %v11967 = vadd.f32 %v11954, %v11966
    %v11968 = vpop.f32.mrf.mxu0
    %11969 = vdwg.mxu0
    %11970 = vmatpush.bf16.msra.mxu0 %v10778
    %11971 = vmatpush.bf16.msra.mxu0 %v10774
    %11972 = vmatpush.bf16.msra.mxu0 %v10770
    %11973 = vmatpush.bf16.msra.mxu0 %v10766
    %11974 = vmatpush.bf16.msra.mxu0 %v10762
    %11975 = vmatpush.bf16.msra.mxu0 %v10758
    %11976 = vmatpush.bf16.msra.mxu0 %v10754
    %11977 = vmatpush.bf16.msra.mxu0 %v10750
    %11978 = vmatmul.bf16.gmra.mxu0 %v6895
    %v11979 = vpop.f32.mrf.mxu0
    %v11980 = vadd.f32 %v11967, %v11979
    %v11981 = vpop.f32.mrf.mxu0
    %11982 = vdwg.mxu0
    %11983 = vmatpush.bf16.msra.mxu0 %v10810
    %11984 = vmatpush.bf16.msra.mxu0 %v10806
    %11985 = vmatpush.bf16.msra.mxu0 %v10802
    %11986 = vmatpush.bf16.msra.mxu0 %v10798
    %11987 = vmatpush.bf16.msra.mxu0 %v10794
    %11988 = vmatpush.bf16.msra.mxu0 %v10790
    %11989 = vmatpush.bf16.msra.mxu0 %v10786
    %11990 = vmatpush.bf16.msra.mxu0 %v10782
    %11991 = vmatmul.bf16.gmra.mxu0 %v6896
    %v11992 = vpop.f32.mrf.mxu0
    %v11993 = vadd.f32 %v11980, %v11992
    %v11994 = vpop.f32.mrf.mxu0
    %11995 = vdwg.mxu0
    %11996 = vmatpush.bf16.msra.mxu0 %v10842
    %11997 = vmatpush.bf16.msra.mxu0 %v10838
    %11998 = vmatpush.bf16.msra.mxu0 %v10834
    %11999 = vmatpush.bf16.msra.mxu0 %v10830
    %12000 = vmatpush.bf16.msra.mxu0 %v10826
    %12001 = vmatpush.bf16.msra.mxu0 %v10822
    %12002 = vmatpush.bf16.msra.mxu0 %v10818
    %12003 = vmatpush.bf16.msra.mxu0 %v10814
    %12004 = vmatmul.bf16.gmra.mxu0 %v6897
    %v12005 = vpop.f32.mrf.mxu0
    %v12006 = vadd.f32 %v11993, %v12005
    %v12007 = vpop.f32.mrf.mxu0
    %12008 = vdwg.mxu0
    %12009 = vmatpush.bf16.msra.mxu0 %v10874
    %12010 = vmatpush.bf16.msra.mxu0 %v10870
    %12011 = vmatpush.bf16.msra.mxu0 %v10866
    %12012 = vmatpush.bf16.msra.mxu0 %v10862
    %12013 = vmatpush.bf16.msra.mxu0 %v10858
    %12014 = vmatpush.bf16.msra.mxu0 %v10854
    %12015 = vmatpush.bf16.msra.mxu0 %v10850
    %12016 = vmatpush.bf16.msra.mxu0 %v10846
    %12017 = vmatmul.bf16.gmra.mxu0 %v6898
    %v12018 = vpop.f32.mrf.mxu0
    %v12019 = vadd.f32 %v12006, %v12018
    %v12020 = vpop.f32.mrf.mxu0
    %12021 = vdwg.mxu0
    %12022 = vmatpush.bf16.msra.mxu0 %v10906
    %12023 = vmatpush.bf16.msra.mxu0 %v10902
    %12024 = vmatpush.bf16.msra.mxu0 %v10898
    %12025 = vmatpush.bf16.msra.mxu0 %v10894
    %12026 = vmatpush.bf16.msra.mxu0 %v10890
    %12027 = vmatpush.bf16.msra.mxu0 %v10886
    %12028 = vmatpush.bf16.msra.mxu0 %v10882
    %12029 = vmatpush.bf16.msra.mxu0 %v10878
    %12030 = vmatmul.bf16.gmra.mxu0 %v6899
    %v12031 = vpop.f32.mrf.mxu0
    %v12032 = vadd.f32 %v12019, %v12031
    %v12033 = vpop.f32.mrf.mxu0
    %12034 = vdwg.mxu0
    %12035 = vmatpush.bf16.msra.mxu0 %v10139
    %12036 = vmatpush.bf16.msra.mxu0 %v10135
    %12037 = vmatpush.bf16.msra.mxu0 %v10131
    %12038 = vmatpush.bf16.msra.mxu0 %v10127
    %12039 = vmatpush.bf16.msra.mxu0 %v10123
    %12040 = vmatpush.bf16.msra.mxu0 %v10119
    %12041 = vmatpush.bf16.msra.mxu0 %v10115
    %12042 = vmatpush.bf16.msra.mxu0 %v10111
    %12043 = vmatmul.bf16.gmra.mxu0 %v6875
    %v12044 = vpop.f32.mrf.mxu0
    %v12045 = vadd.f32 %v7703, %v12044
    %v12046 = vpop.f32.mrf.mxu0
    %12047 = vdwg.mxu0
    %12048 = vmatpush.bf16.msra.mxu0 %v10171
    %12049 = vmatpush.bf16.msra.mxu0 %v10167
    %12050 = vmatpush.bf16.msra.mxu0 %v10163
    %12051 = vmatpush.bf16.msra.mxu0 %v10159
    %12052 = vmatpush.bf16.msra.mxu0 %v10155
    %12053 = vmatpush.bf16.msra.mxu0 %v10151
    %12054 = vmatpush.bf16.msra.mxu0 %v10147
    %12055 = vmatpush.bf16.msra.mxu0 %v10143
    %12056 = vmatmul.bf16.gmra.mxu0 %v6876
    %v12057 = vpop.f32.mrf.mxu0
    %v12058 = vadd.f32 %v12045, %v12057
    %v12059 = vpop.f32.mrf.mxu0
    %12060 = vdwg.mxu0
    %12061 = vmatpush.bf16.msra.mxu0 %v10203
    %12062 = vmatpush.bf16.msra.mxu0 %v10199
    %12063 = vmatpush.bf16.msra.mxu0 %v10195
    %12064 = vmatpush.bf16.msra.mxu0 %v10191
    %12065 = vmatpush.bf16.msra.mxu0 %v10187
    %12066 = vmatpush.bf16.msra.mxu0 %v10183
    %12067 = vmatpush.bf16.msra.mxu0 %v10179
    %12068 = vmatpush.bf16.msra.mxu0 %v10175
    %12069 = vmatmul.bf16.gmra.mxu0 %v6877
    %v12070 = vpop.f32.mrf.mxu0
    %v12071 = vadd.f32 %v12058, %v12070
    %v12072 = vpop.f32.mrf.mxu0
    %12073 = vdwg.mxu0
    %12074 = vmatpush.bf16.msra.mxu0 %v10235
    %12075 = vmatpush.bf16.msra.mxu0 %v10231
    %12076 = vmatpush.bf16.msra.mxu0 %v10227
    %12077 = vmatpush.bf16.msra.mxu0 %v10223
    %12078 = vmatpush.bf16.msra.mxu0 %v10219
    %12079 = vmatpush.bf16.msra.mxu0 %v10215
    %12080 = vmatpush.bf16.msra.mxu0 %v10211
    %12081 = vmatpush.bf16.msra.mxu0 %v10207
    %12082 = vmatmul.bf16.gmra.mxu0 %v6878
    %v12083 = vpop.f32.mrf.mxu0
    %v12084 = vadd.f32 %v12071, %v12083
    %v12085 = vpop.f32.mrf.mxu0
    %12086 = vdwg.mxu0
    %12087 = vmatpush.bf16.msra.mxu0 %v10267
    %12088 = vmatpush.bf16.msra.mxu0 %v10263
    %12089 = vmatpush.bf16.msra.mxu0 %v10259
    %12090 = vmatpush.bf16.msra.mxu0 %v10255
    %12091 = vmatpush.bf16.msra.mxu0 %v10251
    %12092 = vmatpush.bf16.msra.mxu0 %v10247
    %12093 = vmatpush.bf16.msra.mxu0 %v10243
    %12094 = vmatpush.bf16.msra.mxu0 %v10239
    %12095 = vmatmul.bf16.gmra.mxu0 %v6879
    %v12096 = vpop.f32.mrf.mxu0
    %v12097 = vadd.f32 %v12084, %v12096
    %v12098 = vpop.f32.mrf.mxu0
    %12099 = vdwg.mxu0
    %12100 = vmatpush.bf16.msra.mxu0 %v10299
    %12101 = vmatpush.bf16.msra.mxu0 %v10295
    %12102 = vmatpush.bf16.msra.mxu0 %v10291
    %12103 = vmatpush.bf16.msra.mxu0 %v10287
    %12104 = vmatpush.bf16.msra.mxu0 %v10283
    %12105 = vmatpush.bf16.msra.mxu0 %v10279
    %12106 = vmatpush.bf16.msra.mxu0 %v10275
    %12107 = vmatpush.bf16.msra.mxu0 %v10271
    %12108 = vmatmul.bf16.gmra.mxu0 %v6880
    %v12109 = vpop.f32.mrf.mxu0
    %v12110 = vadd.f32 %v12097, %v12109
    %v12111 = vpop.f32.mrf.mxu0
    %12112 = vdwg.mxu0
    %12113 = vmatpush.bf16.msra.mxu0 %v10331
    %12114 = vmatpush.bf16.msra.mxu0 %v10327
    %12115 = vmatpush.bf16.msra.mxu0 %v10323
    %12116 = vmatpush.bf16.msra.mxu0 %v10319
    %12117 = vmatpush.bf16.msra.mxu0 %v10315
    %12118 = vmatpush.bf16.msra.mxu0 %v10311
    %12119 = vmatpush.bf16.msra.mxu0 %v10307
    %12120 = vmatpush.bf16.msra.mxu0 %v10303
    %12121 = vmatmul.bf16.gmra.mxu0 %v6881
    %v12122 = vpop.f32.mrf.mxu0
    %v12123 = vadd.f32 %v12110, %v12122
    %v12124 = vpop.f32.mrf.mxu0
    %12125 = vdwg.mxu0
    %12126 = vmatpush.bf16.msra.mxu0 %v10363
    %12127 = vmatpush.bf16.msra.mxu0 %v10359
    %12128 = vmatpush.bf16.msra.mxu0 %v10355
    %12129 = vmatpush.bf16.msra.mxu0 %v10351
    %12130 = vmatpush.bf16.msra.mxu0 %v10347
    %12131 = vmatpush.bf16.msra.mxu0 %v10343
    %12132 = vmatpush.bf16.msra.mxu0 %v10339
    %12133 = vmatpush.bf16.msra.mxu0 %v10335
    %12134 = vmatmul.bf16.gmra.mxu0 %v6882
    %v12135 = vpop.f32.mrf.mxu0
    %v12136 = vadd.f32 %v12123, %v12135
    %v12137 = vpop.f32.mrf.mxu0
    %12138 = vdwg.mxu0
    %12139 = vmatpush.bf16.msra.mxu0 %v10395
    %12140 = vmatpush.bf16.msra.mxu0 %v10391
    %12141 = vmatpush.bf16.msra.mxu0 %v10387
    %12142 = vmatpush.bf16.msra.mxu0 %v10383
    %12143 = vmatpush.bf16.msra.mxu0 %v10379
    %12144 = vmatpush.bf16.msra.mxu0 %v10375
    %12145 = vmatpush.bf16.msra.mxu0 %v10371
    %12146 = vmatpush.bf16.msra.mxu0 %v10367
    %12147 = vmatmul.bf16.gmra.mxu0 %v6883
    %v12148 = vpop.f32.mrf.mxu0
    %v12149 = vadd.f32 %v12136, %v12148
    %v12150 = vpop.f32.mrf.mxu0
    %12151 = vdwg.mxu0
    %12152 = vmatpush.bf16.msra.mxu0 %v10427
    %12153 = vmatpush.bf16.msra.mxu0 %v10423
    %12154 = vmatpush.bf16.msra.mxu0 %v10419
    %12155 = vmatpush.bf16.msra.mxu0 %v10415
    %12156 = vmatpush.bf16.msra.mxu0 %v10411
    %12157 = vmatpush.bf16.msra.mxu0 %v10407
    %12158 = vmatpush.bf16.msra.mxu0 %v10403
    %12159 = vmatpush.bf16.msra.mxu0 %v10399
    %12160 = vmatmul.bf16.gmra.mxu0 %v6884
    %v12161 = vpop.f32.mrf.mxu0
    %v12162 = vadd.f32 %v12149, %v12161
    %v12163 = vpop.f32.mrf.mxu0
    %12164 = vdwg.mxu0
    %12165 = vmatpush.bf16.msra.mxu0 %v10459
    %12166 = vmatpush.bf16.msra.mxu0 %v10455
    %12167 = vmatpush.bf16.msra.mxu0 %v10451
    %12168 = vmatpush.bf16.msra.mxu0 %v10447
    %12169 = vmatpush.bf16.msra.mxu0 %v10443
    %12170 = vmatpush.bf16.msra.mxu0 %v10439
    %12171 = vmatpush.bf16.msra.mxu0 %v10435
    %12172 = vmatpush.bf16.msra.mxu0 %v10431
    %12173 = vmatmul.bf16.gmra.mxu0 %v6885
    %v12174 = vpop.f32.mrf.mxu0
    %v12175 = vadd.f32 %v12162, %v12174
    %v12176 = vpop.f32.mrf.mxu0
    %12177 = vdwg.mxu0
    %12178 = vmatpush.bf16.msra.mxu0 %v10491
    %12179 = vmatpush.bf16.msra.mxu0 %v10487
    %12180 = vmatpush.bf16.msra.mxu0 %v10483
    %12181 = vmatpush.bf16.msra.mxu0 %v10479
    %12182 = vmatpush.bf16.msra.mxu0 %v10475
    %12183 = vmatpush.bf16.msra.mxu0 %v10471
    %12184 = vmatpush.bf16.msra.mxu0 %v10467
    %12185 = vmatpush.bf16.msra.mxu0 %v10463
    %12186 = vmatmul.bf16.gmra.mxu0 %v6886
    %v12187 = vpop.f32.mrf.mxu0
    %v12188 = vadd.f32 %v12175, %v12187
    %v12189 = vpop.f32.mrf.mxu0
    %12190 = vdwg.mxu0
    %12191 = vmatpush.bf16.msra.mxu0 %v10523
    %12192 = vmatpush.bf16.msra.mxu0 %v10519
    %12193 = vmatpush.bf16.msra.mxu0 %v10515
    %12194 = vmatpush.bf16.msra.mxu0 %v10511
    %12195 = vmatpush.bf16.msra.mxu0 %v10507
    %12196 = vmatpush.bf16.msra.mxu0 %v10503
    %12197 = vmatpush.bf16.msra.mxu0 %v10499
    %12198 = vmatpush.bf16.msra.mxu0 %v10495
    %12199 = vmatmul.bf16.gmra.mxu0 %v6887
    %v12200 = vpop.f32.mrf.mxu0
    %v12201 = vadd.f32 %v12188, %v12200
    %v12202 = vpop.f32.mrf.mxu0
    %12203 = vdwg.mxu0
    %12204 = vmatpush.bf16.msra.mxu0 %v10555
    %12205 = vmatpush.bf16.msra.mxu0 %v10551
    %12206 = vmatpush.bf16.msra.mxu0 %v10547
    %12207 = vmatpush.bf16.msra.mxu0 %v10543
    %12208 = vmatpush.bf16.msra.mxu0 %v10539
    %12209 = vmatpush.bf16.msra.mxu0 %v10535
    %12210 = vmatpush.bf16.msra.mxu0 %v10531
    %12211 = vmatpush.bf16.msra.mxu0 %v10527
    %12212 = vmatmul.bf16.gmra.mxu0 %v6888
    %v12213 = vpop.f32.mrf.mxu0
    %v12214 = vadd.f32 %v12201, %v12213
    %v12215 = vpop.f32.mrf.mxu0
    %12216 = vdwg.mxu0
    %12217 = vmatpush.bf16.msra.mxu0 %v10587
    %12218 = vmatpush.bf16.msra.mxu0 %v10583
    %12219 = vmatpush.bf16.msra.mxu0 %v10579
    %12220 = vmatpush.bf16.msra.mxu0 %v10575
    %12221 = vmatpush.bf16.msra.mxu0 %v10571
    %12222 = vmatpush.bf16.msra.mxu0 %v10567
    %12223 = vmatpush.bf16.msra.mxu0 %v10563
    %12224 = vmatpush.bf16.msra.mxu0 %v10559
    %12225 = vmatmul.bf16.gmra.mxu0 %v6889
    %v12226 = vpop.f32.mrf.mxu0
    %v12227 = vadd.f32 %v12214, %v12226
    %v12228 = vpop.f32.mrf.mxu0
    %12229 = vdwg.mxu0
    %12230 = vmatpush.bf16.msra.mxu0 %v10619
    %12231 = vmatpush.bf16.msra.mxu0 %v10615
    %12232 = vmatpush.bf16.msra.mxu0 %v10611
    %12233 = vmatpush.bf16.msra.mxu0 %v10607
    %12234 = vmatpush.bf16.msra.mxu0 %v10603
    %12235 = vmatpush.bf16.msra.mxu0 %v10599
    %12236 = vmatpush.bf16.msra.mxu0 %v10595
    %12237 = vmatpush.bf16.msra.mxu0 %v10591
    %12238 = vmatmul.bf16.gmra.mxu0 %v6890
    %v12239 = vpop.f32.mrf.mxu0
    %v12240 = vadd.f32 %v12227, %v12239
    %v12241 = vpop.f32.mrf.mxu0
    %12242 = vdwg.mxu0
    %12243 = vmatpush.bf16.msra.mxu0 %v10651
    %12244 = vmatpush.bf16.msra.mxu0 %v10647
    %12245 = vmatpush.bf16.msra.mxu0 %v10643
    %12246 = vmatpush.bf16.msra.mxu0 %v10639
    %12247 = vmatpush.bf16.msra.mxu0 %v10635
    %12248 = vmatpush.bf16.msra.mxu0 %v10631
    %12249 = vmatpush.bf16.msra.mxu0 %v10627
    %12250 = vmatpush.bf16.msra.mxu0 %v10623
    %12251 = vmatmul.bf16.gmra.mxu0 %v6891
    %v12252 = vpop.f32.mrf.mxu0
    %v12253 = vadd.f32 %v12240, %v12252
    %v12254 = vpop.f32.mrf.mxu0
    %12255 = vdwg.mxu0
    %12256 = vmatpush.bf16.msra.mxu0 %v10683
    %12257 = vmatpush.bf16.msra.mxu0 %v10679
    %12258 = vmatpush.bf16.msra.mxu0 %v10675
    %12259 = vmatpush.bf16.msra.mxu0 %v10671
    %12260 = vmatpush.bf16.msra.mxu0 %v10667
    %12261 = vmatpush.bf16.msra.mxu0 %v10663
    %12262 = vmatpush.bf16.msra.mxu0 %v10659
    %12263 = vmatpush.bf16.msra.mxu0 %v10655
    %12264 = vmatmul.bf16.gmra.mxu0 %v6892
    %v12265 = vpop.f32.mrf.mxu0
    %v12266 = vadd.f32 %v12253, %v12265
    %v12267 = vpop.f32.mrf.mxu0
    %12268 = vdwg.mxu0
    %12269 = vmatpush.bf16.msra.mxu0 %v10715
    %12270 = vmatpush.bf16.msra.mxu0 %v10711
    %12271 = vmatpush.bf16.msra.mxu0 %v10707
    %12272 = vmatpush.bf16.msra.mxu0 %v10703
    %12273 = vmatpush.bf16.msra.mxu0 %v10699
    %12274 = vmatpush.bf16.msra.mxu0 %v10695
    %12275 = vmatpush.bf16.msra.mxu0 %v10691
    %12276 = vmatpush.bf16.msra.mxu0 %v10687
    %12277 = vmatmul.bf16.gmra.mxu0 %v6893
    %v12278 = vpop.f32.mrf.mxu0
    %v12279 = vadd.f32 %v12266, %v12278
    %v12280 = vpop.f32.mrf.mxu0
    %12281 = vdwg.mxu0
    %12282 = vmatpush.bf16.msra.mxu0 %v10747
    %12283 = vmatpush.bf16.msra.mxu0 %v10743
    %12284 = vmatpush.bf16.msra.mxu0 %v10739
    %12285 = vmatpush.bf16.msra.mxu0 %v10735
    %12286 = vmatpush.bf16.msra.mxu0 %v10731
    %12287 = vmatpush.bf16.msra.mxu0 %v10727
    %12288 = vmatpush.bf16.msra.mxu0 %v10723
    %12289 = vmatpush.bf16.msra.mxu0 %v10719
    %12290 = vmatmul.bf16.gmra.mxu0 %v6894
    %v12291 = vpop.f32.mrf.mxu0
    %v12292 = vadd.f32 %v12279, %v12291
    %v12293 = vpop.f32.mrf.mxu0
    %12294 = vdwg.mxu0
    %12295 = vmatpush.bf16.msra.mxu0 %v10779
    %12296 = vmatpush.bf16.msra.mxu0 %v10775
    %12297 = vmatpush.bf16.msra.mxu0 %v10771
    %12298 = vmatpush.bf16.msra.mxu0 %v10767
    %12299 = vmatpush.bf16.msra.mxu0 %v10763
    %12300 = vmatpush.bf16.msra.mxu0 %v10759
    %12301 = vmatpush.bf16.msra.mxu0 %v10755
    %12302 = vmatpush.bf16.msra.mxu0 %v10751
    %12303 = vmatmul.bf16.gmra.mxu0 %v6895
    %v12304 = vpop.f32.mrf.mxu0
    %v12305 = vadd.f32 %v12292, %v12304
    %v12306 = vpop.f32.mrf.mxu0
    %12307 = vdwg.mxu0
    %12308 = vmatpush.bf16.msra.mxu0 %v10811
    %12309 = vmatpush.bf16.msra.mxu0 %v10807
    %12310 = vmatpush.bf16.msra.mxu0 %v10803
    %12311 = vmatpush.bf16.msra.mxu0 %v10799
    %12312 = vmatpush.bf16.msra.mxu0 %v10795
    %12313 = vmatpush.bf16.msra.mxu0 %v10791
    %12314 = vmatpush.bf16.msra.mxu0 %v10787
    %12315 = vmatpush.bf16.msra.mxu0 %v10783
    %12316 = vmatmul.bf16.gmra.mxu0 %v6896
    %v12317 = vpop.f32.mrf.mxu0
    %v12318 = vadd.f32 %v12305, %v12317
    %v12319 = vpop.f32.mrf.mxu0
    %12320 = vdwg.mxu0
    %12321 = vmatpush.bf16.msra.mxu0 %v10843
    %12322 = vmatpush.bf16.msra.mxu0 %v10839
    %12323 = vmatpush.bf16.msra.mxu0 %v10835
    %12324 = vmatpush.bf16.msra.mxu0 %v10831
    %12325 = vmatpush.bf16.msra.mxu0 %v10827
    %12326 = vmatpush.bf16.msra.mxu0 %v10823
    %12327 = vmatpush.bf16.msra.mxu0 %v10819
    %12328 = vmatpush.bf16.msra.mxu0 %v10815
    %12329 = vmatmul.bf16.gmra.mxu0 %v6897
    %v12330 = vpop.f32.mrf.mxu0
    %v12331 = vadd.f32 %v12318, %v12330
    %v12332 = vpop.f32.mrf.mxu0
    %12333 = vdwg.mxu0
    %12334 = vmatpush.bf16.msra.mxu0 %v10875
    %12335 = vmatpush.bf16.msra.mxu0 %v10871
    %12336 = vmatpush.bf16.msra.mxu0 %v10867
    %12337 = vmatpush.bf16.msra.mxu0 %v10863
    %12338 = vmatpush.bf16.msra.mxu0 %v10859
    %12339 = vmatpush.bf16.msra.mxu0 %v10855
    %12340 = vmatpush.bf16.msra.mxu0 %v10851
    %12341 = vmatpush.bf16.msra.mxu0 %v10847
    %12342 = vmatmul.bf16.gmra.mxu0 %v6898
    %v12343 = vpop.f32.mrf.mxu0
    %v12344 = vadd.f32 %v12331, %v12343
    %v12345 = vpop.f32.mrf.mxu0
    %12346 = vdwg.mxu0
    %12347 = vmatpush.bf16.msra.mxu0 %v10907
    %12348 = vmatpush.bf16.msra.mxu0 %v10903
    %12349 = vmatpush.bf16.msra.mxu0 %v10899
    %12350 = vmatpush.bf16.msra.mxu0 %v10895
    %12351 = vmatpush.bf16.msra.mxu0 %v10891
    %12352 = vmatpush.bf16.msra.mxu0 %v10887
    %12353 = vmatpush.bf16.msra.mxu0 %v10883
    %12354 = vmatpush.bf16.msra.mxu0 %v10879
    %12355 = vmatmul.bf16.gmra.mxu0 %v6899
    %v12356 = vpop.f32.mrf.mxu0
    %v12357 = vadd.f32 %v12344, %v12356
    %v12358 = vpop.f32.mrf.mxu0
    %12359 = vdwg.mxu0
    %12360 = vmatpush.bf16.msra.mxu0 %v10140
    %12361 = vmatpush.bf16.msra.mxu0 %v10136
    %12362 = vmatpush.bf16.msra.mxu0 %v10132
    %12363 = vmatpush.bf16.msra.mxu0 %v10128
    %12364 = vmatpush.bf16.msra.mxu0 %v10124
    %12365 = vmatpush.bf16.msra.mxu0 %v10120
    %12366 = vmatpush.bf16.msra.mxu0 %v10116
    %12367 = vmatpush.bf16.msra.mxu0 %v10112
    %12368 = vmatmul.bf16.gmra.mxu0 %v6875
    %v12369 = vpop.f32.mrf.mxu0
    %v12370 = vadd.f32 %v7704, %v12369
    %v12371 = vpop.f32.mrf.mxu0
    %12372 = vdwg.mxu0
    %12373 = vmatpush.bf16.msra.mxu0 %v10172
    %12374 = vmatpush.bf16.msra.mxu0 %v10168
    %12375 = vmatpush.bf16.msra.mxu0 %v10164
    %12376 = vmatpush.bf16.msra.mxu0 %v10160
    %12377 = vmatpush.bf16.msra.mxu0 %v10156
    %12378 = vmatpush.bf16.msra.mxu0 %v10152
    %12379 = vmatpush.bf16.msra.mxu0 %v10148
    %12380 = vmatpush.bf16.msra.mxu0 %v10144
    %12381 = vmatmul.bf16.gmra.mxu0 %v6876
    %v12382 = vpop.f32.mrf.mxu0
    %v12383 = vadd.f32 %v12370, %v12382
    %v12384 = vpop.f32.mrf.mxu0
    %12385 = vdwg.mxu0
    %12386 = vmatpush.bf16.msra.mxu0 %v10204
    %12387 = vmatpush.bf16.msra.mxu0 %v10200
    %12388 = vmatpush.bf16.msra.mxu0 %v10196
    %12389 = vmatpush.bf16.msra.mxu0 %v10192
    %12390 = vmatpush.bf16.msra.mxu0 %v10188
    %12391 = vmatpush.bf16.msra.mxu0 %v10184
    %12392 = vmatpush.bf16.msra.mxu0 %v10180
    %12393 = vmatpush.bf16.msra.mxu0 %v10176
    %12394 = vmatmul.bf16.gmra.mxu0 %v6877
    %v12395 = vpop.f32.mrf.mxu0
    %v12396 = vadd.f32 %v12383, %v12395
    %v12397 = vpop.f32.mrf.mxu0
    %12398 = vdwg.mxu0
    %12399 = vmatpush.bf16.msra.mxu0 %v10236
    %12400 = vmatpush.bf16.msra.mxu0 %v10232
    %12401 = vmatpush.bf16.msra.mxu0 %v10228
    %12402 = vmatpush.bf16.msra.mxu0 %v10224
    %12403 = vmatpush.bf16.msra.mxu0 %v10220
    %12404 = vmatpush.bf16.msra.mxu0 %v10216
    %12405 = vmatpush.bf16.msra.mxu0 %v10212
    %12406 = vmatpush.bf16.msra.mxu0 %v10208
    %12407 = vmatmul.bf16.gmra.mxu0 %v6878
    %v12408 = vpop.f32.mrf.mxu0
    %v12409 = vadd.f32 %v12396, %v12408
    %v12410 = vpop.f32.mrf.mxu0
    %12411 = vdwg.mxu0
    %12412 = vmatpush.bf16.msra.mxu0 %v10268
    %12413 = vmatpush.bf16.msra.mxu0 %v10264
    %12414 = vmatpush.bf16.msra.mxu0 %v10260
    %12415 = vmatpush.bf16.msra.mxu0 %v10256
    %12416 = vmatpush.bf16.msra.mxu0 %v10252
    %12417 = vmatpush.bf16.msra.mxu0 %v10248
    %12418 = vmatpush.bf16.msra.mxu0 %v10244
    %12419 = vmatpush.bf16.msra.mxu0 %v10240
    %12420 = vmatmul.bf16.gmra.mxu0 %v6879
    %v12421 = vpop.f32.mrf.mxu0
    %v12422 = vadd.f32 %v12409, %v12421
    %v12423 = vpop.f32.mrf.mxu0
    %12424 = vdwg.mxu0
    %12425 = vmatpush.bf16.msra.mxu0 %v10300
    %12426 = vmatpush.bf16.msra.mxu0 %v10296
    %12427 = vmatpush.bf16.msra.mxu0 %v10292
    %12428 = vmatpush.bf16.msra.mxu0 %v10288
    %12429 = vmatpush.bf16.msra.mxu0 %v10284
    %12430 = vmatpush.bf16.msra.mxu0 %v10280
    %12431 = vmatpush.bf16.msra.mxu0 %v10276
    %12432 = vmatpush.bf16.msra.mxu0 %v10272
    %12433 = vmatmul.bf16.gmra.mxu0 %v6880
    %v12434 = vpop.f32.mrf.mxu0
    %v12435 = vadd.f32 %v12422, %v12434
    %v12436 = vpop.f32.mrf.mxu0
    %12437 = vdwg.mxu0
    %12438 = vmatpush.bf16.msra.mxu0 %v10332
    %12439 = vmatpush.bf16.msra.mxu0 %v10328
    %12440 = vmatpush.bf16.msra.mxu0 %v10324
    %12441 = vmatpush.bf16.msra.mxu0 %v10320
    %12442 = vmatpush.bf16.msra.mxu0 %v10316
    %12443 = vmatpush.bf16.msra.mxu0 %v10312
    %12444 = vmatpush.bf16.msra.mxu0 %v10308
    %12445 = vmatpush.bf16.msra.mxu0 %v10304
    %12446 = vmatmul.bf16.gmra.mxu0 %v6881
    %v12447 = vpop.f32.mrf.mxu0
    %v12448 = vadd.f32 %v12435, %v12447
    %v12449 = vpop.f32.mrf.mxu0
    %12450 = vdwg.mxu0
    %12451 = vmatpush.bf16.msra.mxu0 %v10364
    %12452 = vmatpush.bf16.msra.mxu0 %v10360
    %12453 = vmatpush.bf16.msra.mxu0 %v10356
    %12454 = vmatpush.bf16.msra.mxu0 %v10352
    %12455 = vmatpush.bf16.msra.mxu0 %v10348
    %12456 = vmatpush.bf16.msra.mxu0 %v10344
    %12457 = vmatpush.bf16.msra.mxu0 %v10340
    %12458 = vmatpush.bf16.msra.mxu0 %v10336
    %12459 = vmatmul.bf16.gmra.mxu0 %v6882
    %v12460 = vpop.f32.mrf.mxu0
    %v12461 = vadd.f32 %v12448, %v12460
    %v12462 = vpop.f32.mrf.mxu0
    %12463 = vdwg.mxu0
    %12464 = vmatpush.bf16.msra.mxu0 %v10396
    %12465 = vmatpush.bf16.msra.mxu0 %v10392
    %12466 = vmatpush.bf16.msra.mxu0 %v10388
    %12467 = vmatpush.bf16.msra.mxu0 %v10384
    %12468 = vmatpush.bf16.msra.mxu0 %v10380
    %12469 = vmatpush.bf16.msra.mxu0 %v10376
    %12470 = vmatpush.bf16.msra.mxu0 %v10372
    %12471 = vmatpush.bf16.msra.mxu0 %v10368
    %12472 = vmatmul.bf16.gmra.mxu0 %v6883
    %v12473 = vpop.f32.mrf.mxu0
    %v12474 = vadd.f32 %v12461, %v12473
    %v12475 = vpop.f32.mrf.mxu0
    %12476 = vdwg.mxu0
    %12477 = vmatpush.bf16.msra.mxu0 %v10428
    %12478 = vmatpush.bf16.msra.mxu0 %v10424
    %12479 = vmatpush.bf16.msra.mxu0 %v10420
    %12480 = vmatpush.bf16.msra.mxu0 %v10416
    %12481 = vmatpush.bf16.msra.mxu0 %v10412
    %12482 = vmatpush.bf16.msra.mxu0 %v10408
    %12483 = vmatpush.bf16.msra.mxu0 %v10404
    %12484 = vmatpush.bf16.msra.mxu0 %v10400
    %12485 = vmatmul.bf16.gmra.mxu0 %v6884
    %v12486 = vpop.f32.mrf.mxu0
    %v12487 = vadd.f32 %v12474, %v12486
    %v12488 = vpop.f32.mrf.mxu0
    %12489 = vdwg.mxu0
    %12490 = vmatpush.bf16.msra.mxu0 %v10460
    %12491 = vmatpush.bf16.msra.mxu0 %v10456
    %12492 = vmatpush.bf16.msra.mxu0 %v10452
    %12493 = vmatpush.bf16.msra.mxu0 %v10448
    %12494 = vmatpush.bf16.msra.mxu0 %v10444
    %12495 = vmatpush.bf16.msra.mxu0 %v10440
    %12496 = vmatpush.bf16.msra.mxu0 %v10436
    %12497 = vmatpush.bf16.msra.mxu0 %v10432
    %12498 = vmatmul.bf16.gmra.mxu0 %v6885
    %v12499 = vpop.f32.mrf.mxu0
    %v12500 = vadd.f32 %v12487, %v12499
    %v12501 = vpop.f32.mrf.mxu0
    %12502 = vdwg.mxu0
    %12503 = vmatpush.bf16.msra.mxu0 %v10492
    %12504 = vmatpush.bf16.msra.mxu0 %v10488
    %12505 = vmatpush.bf16.msra.mxu0 %v10484
    %12506 = vmatpush.bf16.msra.mxu0 %v10480
    %12507 = vmatpush.bf16.msra.mxu0 %v10476
    %12508 = vmatpush.bf16.msra.mxu0 %v10472
    %12509 = vmatpush.bf16.msra.mxu0 %v10468
    %12510 = vmatpush.bf16.msra.mxu0 %v10464
    %12511 = vmatmul.bf16.gmra.mxu0 %v6886
    %v12512 = vpop.f32.mrf.mxu0
    %v12513 = vadd.f32 %v12500, %v12512
    %v12514 = vpop.f32.mrf.mxu0
    %12515 = vdwg.mxu0
    %12516 = vmatpush.bf16.msra.mxu0 %v10524
    %12517 = vmatpush.bf16.msra.mxu0 %v10520
    %12518 = vmatpush.bf16.msra.mxu0 %v10516
    %12519 = vmatpush.bf16.msra.mxu0 %v10512
    %12520 = vmatpush.bf16.msra.mxu0 %v10508
    %12521 = vmatpush.bf16.msra.mxu0 %v10504
    %12522 = vmatpush.bf16.msra.mxu0 %v10500
    %12523 = vmatpush.bf16.msra.mxu0 %v10496
    %12524 = vmatmul.bf16.gmra.mxu0 %v6887
    %v12525 = vpop.f32.mrf.mxu0
    %v12526 = vadd.f32 %v12513, %v12525
    %v12527 = vpop.f32.mrf.mxu0
    %12528 = vdwg.mxu0
    %12529 = vmatpush.bf16.msra.mxu0 %v10556
    %12530 = vmatpush.bf16.msra.mxu0 %v10552
    %12531 = vmatpush.bf16.msra.mxu0 %v10548
    %12532 = vmatpush.bf16.msra.mxu0 %v10544
    %12533 = vmatpush.bf16.msra.mxu0 %v10540
    %12534 = vmatpush.bf16.msra.mxu0 %v10536
    %12535 = vmatpush.bf16.msra.mxu0 %v10532
    %12536 = vmatpush.bf16.msra.mxu0 %v10528
    %12537 = vmatmul.bf16.gmra.mxu0 %v6888
    %v12538 = vpop.f32.mrf.mxu0
    %v12539 = vadd.f32 %v12526, %v12538
    %v12540 = vpop.f32.mrf.mxu0
    %12541 = vdwg.mxu0
    %12542 = vmatpush.bf16.msra.mxu0 %v10588
    %12543 = vmatpush.bf16.msra.mxu0 %v10584
    %12544 = vmatpush.bf16.msra.mxu0 %v10580
    %12545 = vmatpush.bf16.msra.mxu0 %v10576
    %12546 = vmatpush.bf16.msra.mxu0 %v10572
    %12547 = vmatpush.bf16.msra.mxu0 %v10568
    %12548 = vmatpush.bf16.msra.mxu0 %v10564
    %12549 = vmatpush.bf16.msra.mxu0 %v10560
    %12550 = vmatmul.bf16.gmra.mxu0 %v6889
    %v12551 = vpop.f32.mrf.mxu0
    %v12552 = vadd.f32 %v12539, %v12551
    %v12553 = vpop.f32.mrf.mxu0
    %12554 = vdwg.mxu0
    %12555 = vmatpush.bf16.msra.mxu0 %v10620
    %12556 = vmatpush.bf16.msra.mxu0 %v10616
    %12557 = vmatpush.bf16.msra.mxu0 %v10612
    %12558 = vmatpush.bf16.msra.mxu0 %v10608
    %12559 = vmatpush.bf16.msra.mxu0 %v10604
    %12560 = vmatpush.bf16.msra.mxu0 %v10600
    %12561 = vmatpush.bf16.msra.mxu0 %v10596
    %12562 = vmatpush.bf16.msra.mxu0 %v10592
    %12563 = vmatmul.bf16.gmra.mxu0 %v6890
    %v12564 = vpop.f32.mrf.mxu0
    %v12565 = vadd.f32 %v12552, %v12564
    %v12566 = vpop.f32.mrf.mxu0
    %12567 = vdwg.mxu0
    %12568 = vmatpush.bf16.msra.mxu0 %v10652
    %12569 = vmatpush.bf16.msra.mxu0 %v10648
    %12570 = vmatpush.bf16.msra.mxu0 %v10644
    %12571 = vmatpush.bf16.msra.mxu0 %v10640
    %12572 = vmatpush.bf16.msra.mxu0 %v10636
    %12573 = vmatpush.bf16.msra.mxu0 %v10632
    %12574 = vmatpush.bf16.msra.mxu0 %v10628
    %12575 = vmatpush.bf16.msra.mxu0 %v10624
    %12576 = vmatmul.bf16.gmra.mxu0 %v6891
    %v12577 = vpop.f32.mrf.mxu0
    %v12578 = vadd.f32 %v12565, %v12577
    %v12579 = vpop.f32.mrf.mxu0
    %12580 = vdwg.mxu0
    %12581 = vmatpush.bf16.msra.mxu0 %v10684
    %12582 = vmatpush.bf16.msra.mxu0 %v10680
    %12583 = vmatpush.bf16.msra.mxu0 %v10676
    %12584 = vmatpush.bf16.msra.mxu0 %v10672
    %12585 = vmatpush.bf16.msra.mxu0 %v10668
    %12586 = vmatpush.bf16.msra.mxu0 %v10664
    %12587 = vmatpush.bf16.msra.mxu0 %v10660
    %12588 = vmatpush.bf16.msra.mxu0 %v10656
    %12589 = vmatmul.bf16.gmra.mxu0 %v6892
    %v12590 = vpop.f32.mrf.mxu0
    %v12591 = vadd.f32 %v12578, %v12590
    %v12592 = vpop.f32.mrf.mxu0
    %12593 = vdwg.mxu0
    %12594 = vmatpush.bf16.msra.mxu0 %v10716
    %12595 = vmatpush.bf16.msra.mxu0 %v10712
    %12596 = vmatpush.bf16.msra.mxu0 %v10708
    %12597 = vmatpush.bf16.msra.mxu0 %v10704
    %12598 = vmatpush.bf16.msra.mxu0 %v10700
    %12599 = vmatpush.bf16.msra.mxu0 %v10696
    %12600 = vmatpush.bf16.msra.mxu0 %v10692
    %12601 = vmatpush.bf16.msra.mxu0 %v10688
    %12602 = vmatmul.bf16.gmra.mxu0 %v6893
    %v12603 = vpop.f32.mrf.mxu0
    %v12604 = vadd.f32 %v12591, %v12603
    %v12605 = vpop.f32.mrf.mxu0
    %12606 = vdwg.mxu0
    %12607 = vmatpush.bf16.msra.mxu0 %v10748
    %12608 = vmatpush.bf16.msra.mxu0 %v10744
    %12609 = vmatpush.bf16.msra.mxu0 %v10740
    %12610 = vmatpush.bf16.msra.mxu0 %v10736
    %12611 = vmatpush.bf16.msra.mxu0 %v10732
    %12612 = vmatpush.bf16.msra.mxu0 %v10728
    %12613 = vmatpush.bf16.msra.mxu0 %v10724
    %12614 = vmatpush.bf16.msra.mxu0 %v10720
    %12615 = vmatmul.bf16.gmra.mxu0 %v6894
    %v12616 = vpop.f32.mrf.mxu0
    %v12617 = vadd.f32 %v12604, %v12616
    %v12618 = vpop.f32.mrf.mxu0
    %12619 = vdwg.mxu0
    %12620 = vmatpush.bf16.msra.mxu0 %v10780
    %12621 = vmatpush.bf16.msra.mxu0 %v10776
    %12622 = vmatpush.bf16.msra.mxu0 %v10772
    %12623 = vmatpush.bf16.msra.mxu0 %v10768
    %12624 = vmatpush.bf16.msra.mxu0 %v10764
    %12625 = vmatpush.bf16.msra.mxu0 %v10760
    %12626 = vmatpush.bf16.msra.mxu0 %v10756
    %12627 = vmatpush.bf16.msra.mxu0 %v10752
    %12628 = vmatmul.bf16.gmra.mxu0 %v6895
    %v12629 = vpop.f32.mrf.mxu0
    %v12630 = vadd.f32 %v12617, %v12629
    %v12631 = vpop.f32.mrf.mxu0
    %12632 = vdwg.mxu0
    %12633 = vmatpush.bf16.msra.mxu0 %v10812
    %12634 = vmatpush.bf16.msra.mxu0 %v10808
    %12635 = vmatpush.bf16.msra.mxu0 %v10804
    %12636 = vmatpush.bf16.msra.mxu0 %v10800
    %12637 = vmatpush.bf16.msra.mxu0 %v10796
    %12638 = vmatpush.bf16.msra.mxu0 %v10792
    %12639 = vmatpush.bf16.msra.mxu0 %v10788
    %12640 = vmatpush.bf16.msra.mxu0 %v10784
    %12641 = vmatmul.bf16.gmra.mxu0 %v6896
    %v12642 = vpop.f32.mrf.mxu0
    %v12643 = vadd.f32 %v12630, %v12642
    %v12644 = vpop.f32.mrf.mxu0
    %12645 = vdwg.mxu0
    %12646 = vmatpush.bf16.msra.mxu0 %v10844
    %12647 = vmatpush.bf16.msra.mxu0 %v10840
    %12648 = vmatpush.bf16.msra.mxu0 %v10836
    %12649 = vmatpush.bf16.msra.mxu0 %v10832
    %12650 = vmatpush.bf16.msra.mxu0 %v10828
    %12651 = vmatpush.bf16.msra.mxu0 %v10824
    %12652 = vmatpush.bf16.msra.mxu0 %v10820
    %12653 = vmatpush.bf16.msra.mxu0 %v10816
    %12654 = vmatmul.bf16.gmra.mxu0 %v6897
    %v12655 = vpop.f32.mrf.mxu0
    %v12656 = vadd.f32 %v12643, %v12655
    %v12657 = vpop.f32.mrf.mxu0
    %12658 = vdwg.mxu0
    %12659 = vmatpush.bf16.msra.mxu0 %v10876
    %12660 = vmatpush.bf16.msra.mxu0 %v10872
    %12661 = vmatpush.bf16.msra.mxu0 %v10868
    %12662 = vmatpush.bf16.msra.mxu0 %v10864
    %12663 = vmatpush.bf16.msra.mxu0 %v10860
    %12664 = vmatpush.bf16.msra.mxu0 %v10856
    %12665 = vmatpush.bf16.msra.mxu0 %v10852
    %12666 = vmatpush.bf16.msra.mxu0 %v10848
    %12667 = vmatmul.bf16.gmra.mxu0 %v6898
    %v12668 = vpop.f32.mrf.mxu0
    %v12669 = vadd.f32 %v12656, %v12668
    %v12670 = vpop.f32.mrf.mxu0
    %12671 = vdwg.mxu0
    %12672 = vmatpush.bf16.msra.mxu0 %v10908
    %12673 = vmatpush.bf16.msra.mxu0 %v10904
    %12674 = vmatpush.bf16.msra.mxu0 %v10900
    %12675 = vmatpush.bf16.msra.mxu0 %v10896
    %12676 = vmatpush.bf16.msra.mxu0 %v10892
    %12677 = vmatpush.bf16.msra.mxu0 %v10888
    %12678 = vmatpush.bf16.msra.mxu0 %v10884
    %12679 = vmatpush.bf16.msra.mxu0 %v10880
    %12680 = vmatmul.bf16.gmra.mxu0 %v6899
    %v12681 = vpop.f32.mrf.mxu0
    %v12682 = vadd.f32 %v12669, %v12681
    %v12683 = vpop.f32.mrf.mxu0
    %12684 = vdwg.mxu0
    %12685 = vmatpush.bf16.msra.mxu0 %v10141
    %12686 = vmatpush.bf16.msra.mxu0 %v10137
    %12687 = vmatpush.bf16.msra.mxu0 %v10133
    %12688 = vmatpush.bf16.msra.mxu0 %v10129
    %12689 = vmatpush.bf16.msra.mxu0 %v10125
    %12690 = vmatpush.bf16.msra.mxu0 %v10121
    %12691 = vmatpush.bf16.msra.mxu0 %v10117
    %12692 = vmatpush.bf16.msra.mxu0 %v10113
    %12693 = vmatmul.bf16.gmra.mxu0 %v6875
    %v12694 = vpop.f32.mrf.mxu0
    %v12695 = vadd.f32 %v7705, %v12694
    %v12696 = vpop.f32.mrf.mxu0
    %12697 = vdwg.mxu0
    %12698 = vmatpush.bf16.msra.mxu0 %v10173
    %12699 = vmatpush.bf16.msra.mxu0 %v10169
    %12700 = vmatpush.bf16.msra.mxu0 %v10165
    %12701 = vmatpush.bf16.msra.mxu0 %v10161
    %12702 = vmatpush.bf16.msra.mxu0 %v10157
    %12703 = vmatpush.bf16.msra.mxu0 %v10153
    %12704 = vmatpush.bf16.msra.mxu0 %v10149
    %12705 = vmatpush.bf16.msra.mxu0 %v10145
    %12706 = vmatmul.bf16.gmra.mxu0 %v6876
    %v12707 = vpop.f32.mrf.mxu0
    %v12708 = vadd.f32 %v12695, %v12707
    %v12709 = vpop.f32.mrf.mxu0
    %12710 = vdwg.mxu0
    %12711 = vmatpush.bf16.msra.mxu0 %v10205
    %12712 = vmatpush.bf16.msra.mxu0 %v10201
    %12713 = vmatpush.bf16.msra.mxu0 %v10197
    %12714 = vmatpush.bf16.msra.mxu0 %v10193
    %12715 = vmatpush.bf16.msra.mxu0 %v10189
    %12716 = vmatpush.bf16.msra.mxu0 %v10185
    %12717 = vmatpush.bf16.msra.mxu0 %v10181
    %12718 = vmatpush.bf16.msra.mxu0 %v10177
    %12719 = vmatmul.bf16.gmra.mxu0 %v6877
    %v12720 = vpop.f32.mrf.mxu0
    %v12721 = vadd.f32 %v12708, %v12720
    %v12722 = vpop.f32.mrf.mxu0
    %12723 = vdwg.mxu0
    %12724 = vmatpush.bf16.msra.mxu0 %v10237
    %12725 = vmatpush.bf16.msra.mxu0 %v10233
    %12726 = vmatpush.bf16.msra.mxu0 %v10229
    %12727 = vmatpush.bf16.msra.mxu0 %v10225
    %12728 = vmatpush.bf16.msra.mxu0 %v10221
    %12729 = vmatpush.bf16.msra.mxu0 %v10217
    %12730 = vmatpush.bf16.msra.mxu0 %v10213
    %12731 = vmatpush.bf16.msra.mxu0 %v10209
    %12732 = vmatmul.bf16.gmra.mxu0 %v6878
    %v12733 = vpop.f32.mrf.mxu0
    %v12734 = vadd.f32 %v12721, %v12733
    %v12735 = vpop.f32.mrf.mxu0
    %12736 = vdwg.mxu0
    %12737 = vmatpush.bf16.msra.mxu0 %v10269
    %12738 = vmatpush.bf16.msra.mxu0 %v10265
    %12739 = vmatpush.bf16.msra.mxu0 %v10261
    %12740 = vmatpush.bf16.msra.mxu0 %v10257
    %12741 = vmatpush.bf16.msra.mxu0 %v10253
    %12742 = vmatpush.bf16.msra.mxu0 %v10249
    %12743 = vmatpush.bf16.msra.mxu0 %v10245
    %12744 = vmatpush.bf16.msra.mxu0 %v10241
    %12745 = vmatmul.bf16.gmra.mxu0 %v6879
    %v12746 = vpop.f32.mrf.mxu0
    %v12747 = vadd.f32 %v12734, %v12746
    %v12748 = vpop.f32.mrf.mxu0
    %12749 = vdwg.mxu0
    %12750 = vmatpush.bf16.msra.mxu0 %v10301
    %12751 = vmatpush.bf16.msra.mxu0 %v10297
    %12752 = vmatpush.bf16.msra.mxu0 %v10293
    %12753 = vmatpush.bf16.msra.mxu0 %v10289
    %12754 = vmatpush.bf16.msra.mxu0 %v10285
    %12755 = vmatpush.bf16.msra.mxu0 %v10281
    %12756 = vmatpush.bf16.msra.mxu0 %v10277
    %12757 = vmatpush.bf16.msra.mxu0 %v10273
    %12758 = vmatmul.bf16.gmra.mxu0 %v6880
    %v12759 = vpop.f32.mrf.mxu0
    %v12760 = vadd.f32 %v12747, %v12759
    %v12761 = vpop.f32.mrf.mxu0
    %12762 = vdwg.mxu0
    %12763 = vmatpush.bf16.msra.mxu0 %v10333
    %12764 = vmatpush.bf16.msra.mxu0 %v10329
    %12765 = vmatpush.bf16.msra.mxu0 %v10325
    %12766 = vmatpush.bf16.msra.mxu0 %v10321
    %12767 = vmatpush.bf16.msra.mxu0 %v10317
    %12768 = vmatpush.bf16.msra.mxu0 %v10313
    %12769 = vmatpush.bf16.msra.mxu0 %v10309
    %12770 = vmatpush.bf16.msra.mxu0 %v10305
    %12771 = vmatmul.bf16.gmra.mxu0 %v6881
    %v12772 = vpop.f32.mrf.mxu0
    %v12773 = vadd.f32 %v12760, %v12772
    %v12774 = vpop.f32.mrf.mxu0
    %12775 = vdwg.mxu0
    %12776 = vmatpush.bf16.msra.mxu0 %v10365
    %12777 = vmatpush.bf16.msra.mxu0 %v10361
    %12778 = vmatpush.bf16.msra.mxu0 %v10357
    %12779 = vmatpush.bf16.msra.mxu0 %v10353
    %12780 = vmatpush.bf16.msra.mxu0 %v10349
    %12781 = vmatpush.bf16.msra.mxu0 %v10345
    %12782 = vmatpush.bf16.msra.mxu0 %v10341
    %12783 = vmatpush.bf16.msra.mxu0 %v10337
    %12784 = vmatmul.bf16.gmra.mxu0 %v6882
    %v12785 = vpop.f32.mrf.mxu0
    %v12786 = vadd.f32 %v12773, %v12785
    %v12787 = vpop.f32.mrf.mxu0
    %12788 = vdwg.mxu0
    %12789 = vmatpush.bf16.msra.mxu0 %v10397
    %12790 = vmatpush.bf16.msra.mxu0 %v10393
    %12791 = vmatpush.bf16.msra.mxu0 %v10389
    %12792 = vmatpush.bf16.msra.mxu0 %v10385
    %12793 = vmatpush.bf16.msra.mxu0 %v10381
    %12794 = vmatpush.bf16.msra.mxu0 %v10377
    %12795 = vmatpush.bf16.msra.mxu0 %v10373
    %12796 = vmatpush.bf16.msra.mxu0 %v10369
    %12797 = vmatmul.bf16.gmra.mxu0 %v6883
    %v12798 = vpop.f32.mrf.mxu0
    %v12799 = vadd.f32 %v12786, %v12798
    %v12800 = vpop.f32.mrf.mxu0
    %12801 = vdwg.mxu0
    %12802 = vmatpush.bf16.msra.mxu0 %v10429
    %12803 = vmatpush.bf16.msra.mxu0 %v10425
    %12804 = vmatpush.bf16.msra.mxu0 %v10421
    %12805 = vmatpush.bf16.msra.mxu0 %v10417
    %12806 = vmatpush.bf16.msra.mxu0 %v10413
    %12807 = vmatpush.bf16.msra.mxu0 %v10409
    %12808 = vmatpush.bf16.msra.mxu0 %v10405
    %12809 = vmatpush.bf16.msra.mxu0 %v10401
    %12810 = vmatmul.bf16.gmra.mxu0 %v6884
    %v12811 = vpop.f32.mrf.mxu0
    %v12812 = vadd.f32 %v12799, %v12811
    %v12813 = vpop.f32.mrf.mxu0
    %12814 = vdwg.mxu0
    %12815 = vmatpush.bf16.msra.mxu0 %v10461
    %12816 = vmatpush.bf16.msra.mxu0 %v10457
    %12817 = vmatpush.bf16.msra.mxu0 %v10453
    %12818 = vmatpush.bf16.msra.mxu0 %v10449
    %12819 = vmatpush.bf16.msra.mxu0 %v10445
    %12820 = vmatpush.bf16.msra.mxu0 %v10441
    %12821 = vmatpush.bf16.msra.mxu0 %v10437
    %12822 = vmatpush.bf16.msra.mxu0 %v10433
    %12823 = vmatmul.bf16.gmra.mxu0 %v6885
    %v12824 = vpop.f32.mrf.mxu0
    %v12825 = vadd.f32 %v12812, %v12824
    %v12826 = vpop.f32.mrf.mxu0
    %12827 = vdwg.mxu0
    %12828 = vmatpush.bf16.msra.mxu0 %v10493
    %12829 = vmatpush.bf16.msra.mxu0 %v10489
    %12830 = vmatpush.bf16.msra.mxu0 %v10485
    %12831 = vmatpush.bf16.msra.mxu0 %v10481
    %12832 = vmatpush.bf16.msra.mxu0 %v10477
    %12833 = vmatpush.bf16.msra.mxu0 %v10473
    %12834 = vmatpush.bf16.msra.mxu0 %v10469
    %12835 = vmatpush.bf16.msra.mxu0 %v10465
    %12836 = vmatmul.bf16.gmra.mxu0 %v6886
    %v12837 = vpop.f32.mrf.mxu0
    %v12838 = vadd.f32 %v12825, %v12837
    %v12839 = vpop.f32.mrf.mxu0
    %12840 = vdwg.mxu0
    %12841 = vmatpush.bf16.msra.mxu0 %v10525
    %12842 = vmatpush.bf16.msra.mxu0 %v10521
    %12843 = vmatpush.bf16.msra.mxu0 %v10517
    %12844 = vmatpush.bf16.msra.mxu0 %v10513
    %12845 = vmatpush.bf16.msra.mxu0 %v10509
    %12846 = vmatpush.bf16.msra.mxu0 %v10505
    %12847 = vmatpush.bf16.msra.mxu0 %v10501
    %12848 = vmatpush.bf16.msra.mxu0 %v10497
    %12849 = vmatmul.bf16.gmra.mxu0 %v6887
    %v12850 = vpop.f32.mrf.mxu0
    %v12851 = vadd.f32 %v12838, %v12850
    %v12852 = vpop.f32.mrf.mxu0
    %12853 = vdwg.mxu0
    %12854 = vmatpush.bf16.msra.mxu0 %v10557
    %12855 = vmatpush.bf16.msra.mxu0 %v10553
    %12856 = vmatpush.bf16.msra.mxu0 %v10549
    %12857 = vmatpush.bf16.msra.mxu0 %v10545
    %12858 = vmatpush.bf16.msra.mxu0 %v10541
    %12859 = vmatpush.bf16.msra.mxu0 %v10537
    %12860 = vmatpush.bf16.msra.mxu0 %v10533
    %12861 = vmatpush.bf16.msra.mxu0 %v10529
    %12862 = vmatmul.bf16.gmra.mxu0 %v6888
    %v12863 = vpop.f32.mrf.mxu0
    %v12864 = vadd.f32 %v12851, %v12863
    %v12865 = vpop.f32.mrf.mxu0
    %12866 = vdwg.mxu0
    %12867 = vmatpush.bf16.msra.mxu0 %v10589
    %12868 = vmatpush.bf16.msra.mxu0 %v10585
    %12869 = vmatpush.bf16.msra.mxu0 %v10581
    %12870 = vmatpush.bf16.msra.mxu0 %v10577
    %12871 = vmatpush.bf16.msra.mxu0 %v10573
    %12872 = vmatpush.bf16.msra.mxu0 %v10569
    %12873 = vmatpush.bf16.msra.mxu0 %v10565
    %12874 = vmatpush.bf16.msra.mxu0 %v10561
    %12875 = vmatmul.bf16.gmra.mxu0 %v6889
    %v12876 = vpop.f32.mrf.mxu0
    %v12877 = vadd.f32 %v12864, %v12876
    %v12878 = vpop.f32.mrf.mxu0
    %12879 = vdwg.mxu0
    %12880 = vmatpush.bf16.msra.mxu0 %v10621
    %12881 = vmatpush.bf16.msra.mxu0 %v10617
    %12882 = vmatpush.bf16.msra.mxu0 %v10613
    %12883 = vmatpush.bf16.msra.mxu0 %v10609
    %12884 = vmatpush.bf16.msra.mxu0 %v10605
    %12885 = vmatpush.bf16.msra.mxu0 %v10601
    %12886 = vmatpush.bf16.msra.mxu0 %v10597
    %12887 = vmatpush.bf16.msra.mxu0 %v10593
    %12888 = vmatmul.bf16.gmra.mxu0 %v6890
    %v12889 = vpop.f32.mrf.mxu0
    %v12890 = vadd.f32 %v12877, %v12889
    %v12891 = vpop.f32.mrf.mxu0
    %12892 = vdwg.mxu0
    %12893 = vmatpush.bf16.msra.mxu0 %v10653
    %12894 = vmatpush.bf16.msra.mxu0 %v10649
    %12895 = vmatpush.bf16.msra.mxu0 %v10645
    %12896 = vmatpush.bf16.msra.mxu0 %v10641
    %12897 = vmatpush.bf16.msra.mxu0 %v10637
    %12898 = vmatpush.bf16.msra.mxu0 %v10633
    %12899 = vmatpush.bf16.msra.mxu0 %v10629
    %12900 = vmatpush.bf16.msra.mxu0 %v10625
    %12901 = vmatmul.bf16.gmra.mxu0 %v6891
    %v12902 = vpop.f32.mrf.mxu0
    %v12903 = vadd.f32 %v12890, %v12902
    %v12904 = vpop.f32.mrf.mxu0
    %12905 = vdwg.mxu0
    %12906 = vmatpush.bf16.msra.mxu0 %v10685
    %12907 = vmatpush.bf16.msra.mxu0 %v10681
    %12908 = vmatpush.bf16.msra.mxu0 %v10677
    %12909 = vmatpush.bf16.msra.mxu0 %v10673
    %12910 = vmatpush.bf16.msra.mxu0 %v10669
    %12911 = vmatpush.bf16.msra.mxu0 %v10665
    %12912 = vmatpush.bf16.msra.mxu0 %v10661
    %12913 = vmatpush.bf16.msra.mxu0 %v10657
    %12914 = vmatmul.bf16.gmra.mxu0 %v6892
    %v12915 = vpop.f32.mrf.mxu0
    %v12916 = vadd.f32 %v12903, %v12915
    %v12917 = vpop.f32.mrf.mxu0
    %12918 = vdwg.mxu0
    %12919 = vmatpush.bf16.msra.mxu0 %v10717
    %12920 = vmatpush.bf16.msra.mxu0 %v10713
    %12921 = vmatpush.bf16.msra.mxu0 %v10709
    %12922 = vmatpush.bf16.msra.mxu0 %v10705
    %12923 = vmatpush.bf16.msra.mxu0 %v10701
    %12924 = vmatpush.bf16.msra.mxu0 %v10697
    %12925 = vmatpush.bf16.msra.mxu0 %v10693
    %12926 = vmatpush.bf16.msra.mxu0 %v10689
    %12927 = vmatmul.bf16.gmra.mxu0 %v6893
    %v12928 = vpop.f32.mrf.mxu0
    %v12929 = vadd.f32 %v12916, %v12928
    %v12930 = vpop.f32.mrf.mxu0
    %12931 = vdwg.mxu0
    %12932 = vmatpush.bf16.msra.mxu0 %v10749
    %12933 = vmatpush.bf16.msra.mxu0 %v10745
    %12934 = vmatpush.bf16.msra.mxu0 %v10741
    %12935 = vmatpush.bf16.msra.mxu0 %v10737
    %12936 = vmatpush.bf16.msra.mxu0 %v10733
    %12937 = vmatpush.bf16.msra.mxu0 %v10729
    %12938 = vmatpush.bf16.msra.mxu0 %v10725
    %12939 = vmatpush.bf16.msra.mxu0 %v10721
    %12940 = vmatmul.bf16.gmra.mxu0 %v6894
    %v12941 = vpop.f32.mrf.mxu0
    %v12942 = vadd.f32 %v12929, %v12941
    %v12943 = vpop.f32.mrf.mxu0
    %12944 = vdwg.mxu0
    %12945 = vmatpush.bf16.msra.mxu0 %v10781
    %12946 = vmatpush.bf16.msra.mxu0 %v10777
    %12947 = vmatpush.bf16.msra.mxu0 %v10773
    %12948 = vmatpush.bf16.msra.mxu0 %v10769
    %12949 = vmatpush.bf16.msra.mxu0 %v10765
    %12950 = vmatpush.bf16.msra.mxu0 %v10761
    %12951 = vmatpush.bf16.msra.mxu0 %v10757
    %12952 = vmatpush.bf16.msra.mxu0 %v10753
    %12953 = vmatmul.bf16.gmra.mxu0 %v6895
    %v12954 = vpop.f32.mrf.mxu0
    %v12955 = vadd.f32 %v12942, %v12954
    %v12956 = vpop.f32.mrf.mxu0
    %12957 = vdwg.mxu0
    %12958 = vmatpush.bf16.msra.mxu0 %v10813
    %12959 = vmatpush.bf16.msra.mxu0 %v10809
    %12960 = vmatpush.bf16.msra.mxu0 %v10805
    %12961 = vmatpush.bf16.msra.mxu0 %v10801
    %12962 = vmatpush.bf16.msra.mxu0 %v10797
    %12963 = vmatpush.bf16.msra.mxu0 %v10793
    %12964 = vmatpush.bf16.msra.mxu0 %v10789
    %12965 = vmatpush.bf16.msra.mxu0 %v10785
    %12966 = vmatmul.bf16.gmra.mxu0 %v6896
    %v12967 = vpop.f32.mrf.mxu0
    %v12968 = vadd.f32 %v12955, %v12967
    %v12969 = vpop.f32.mrf.mxu0
    %12970 = vdwg.mxu0
    %12971 = vmatpush.bf16.msra.mxu0 %v10845
    %12972 = vmatpush.bf16.msra.mxu0 %v10841
    %12973 = vmatpush.bf16.msra.mxu0 %v10837
    %12974 = vmatpush.bf16.msra.mxu0 %v10833
    %12975 = vmatpush.bf16.msra.mxu0 %v10829
    %12976 = vmatpush.bf16.msra.mxu0 %v10825
    %12977 = vmatpush.bf16.msra.mxu0 %v10821
    %12978 = vmatpush.bf16.msra.mxu0 %v10817
    %12979 = vmatmul.bf16.gmra.mxu0 %v6897
    %v12980 = vpop.f32.mrf.mxu0
    %v12981 = vadd.f32 %v12968, %v12980
    %v12982 = vpop.f32.mrf.mxu0
    %12983 = vdwg.mxu0
    %12984 = vmatpush.bf16.msra.mxu0 %v10877
    %12985 = vmatpush.bf16.msra.mxu0 %v10873
    %12986 = vmatpush.bf16.msra.mxu0 %v10869
    %12987 = vmatpush.bf16.msra.mxu0 %v10865
    %12988 = vmatpush.bf16.msra.mxu0 %v10861
    %12989 = vmatpush.bf16.msra.mxu0 %v10857
    %12990 = vmatpush.bf16.msra.mxu0 %v10853
    %12991 = vmatpush.bf16.msra.mxu0 %v10849
    %12992 = vmatmul.bf16.gmra.mxu0 %v6898
    %v12993 = vpop.f32.mrf.mxu0
    %v12994 = vadd.f32 %v12981, %v12993
    %v12995 = vpop.f32.mrf.mxu0
    %12996 = vdwg.mxu0
    %12997 = vmatpush.bf16.msra.mxu0 %v10909
    %12998 = vmatpush.bf16.msra.mxu0 %v10905
    %12999 = vmatpush.bf16.msra.mxu0 %v10901
    %13000 = vmatpush.bf16.msra.mxu0 %v10897
    %13001 = vmatpush.bf16.msra.mxu0 %v10893
    %13002 = vmatpush.bf16.msra.mxu0 %v10889
    %13003 = vmatpush.bf16.msra.mxu0 %v10885
    %13004 = vmatpush.bf16.msra.mxu0 %v10881
    %13005 = vmatmul.bf16.gmra.mxu0 %v6899
    %v13006 = vpop.f32.mrf.mxu0
    %v13007 = vadd.f32 %v12994, %v13006
    %v13008 = vpop.f32.mrf.mxu0
    %13009 = vdwg.mxu0
    %v13010 = vpack.c.bf16 %v12032, %v12032
    %v13011 = vpack.c.bf16 %v12357, %v12357
    %v13012 = vpack.c.bf16 %v12682, %v12682
    %v13013 = vpack.c.bf16 %v13007, %v13007
    %v13014 = vld [vmem:[#allocation13] sm:$0xf]
    %v13015 = vld [vmem:[#allocation13 + $0x4] sm:$0xf]
    %v13016 = vld [vmem:[#allocation13 + $0x8] sm:$0xf]
    %v13017 = vld [vmem:[#allocation13 + $0xc] sm:$0xf]
    %v13018 = vld [vmem:[#allocation13 + $0x10] sm:$0xf]
    %v13019 = vld [vmem:[#allocation13 + $0x14] sm:$0xf]
    %v13020 = vld [vmem:[#allocation13 + $0x18] sm:$0xf]
    %v13021 = vld [vmem:[#allocation13 + $0x1c] sm:$0xf]
    %v13022 = vld [vmem:[#allocation13 + $0x20] sm:$0xf]
    %v13023 = vld [vmem:[#allocation13 + $0x24] sm:$0xf]
    %v13024 = vld [vmem:[#allocation13 + $0x28] sm:$0xf]
    %v13025 = vld [vmem:[#allocation13 + $0x2c] sm:$0xf]
    %v13026 = vld [vmem:[#allocation13 + $0x30] sm:$0xf]
    %v13027 = vld [vmem:[#allocation13 + $0x34] sm:$0xf]
    %v13028 = vld [vmem:[#allocation13 + $0x38] sm:$0xf]
    %v13029 = vld [vmem:[#allocation13 + $0x3c] sm:$0xf]
    %v13030 = vld [vmem:[#allocation13 + $0x40] sm:$0xf]
    %v13031 = vld [vmem:[#allocation13 + $0x44] sm:$0xf]
    %v13032 = vld [vmem:[#allocation13 + $0x48] sm:$0xf]
    %v13033 = vld [vmem:[#allocation13 + $0x4c] sm:$0xf]
    %v13034 = vld [vmem:[#allocation13 + $0x50] sm:$0xf]
    %v13035 = vld [vmem:[#allocation13 + $0x54] sm:$0xf]
    %v13036 = vld [vmem:[#allocation13 + $0x58] sm:$0xf]
    %v13037 = vld [vmem:[#allocation13 + $0x5c] sm:$0xf]
    %v13038 = vld [vmem:[#allocation13 + $0x60] sm:$0xf]
    %v13039 = vld [vmem:[#allocation13 + $0x64] sm:$0xf]
    %v13040 = vld [vmem:[#allocation13 + $0x68] sm:$0xf]
    %v13041 = vld [vmem:[#allocation13 + $0x6c] sm:$0xf]
    %v13042 = vld [vmem:[#allocation13 + $0x70] sm:$0xf]
    %v13043 = vld [vmem:[#allocation13 + $0x74] sm:$0xf]
    %v13044 = vld [vmem:[#allocation13 + $0x78] sm:$0xf]
    %v13045 = vld [vmem:[#allocation13 + $0x7c] sm:$0xf]
    %v13046 = vld [vmem:[#allocation13 + $0x80] sm:$0xf]
    %v13047 = vld [vmem:[#allocation13 + $0x84] sm:$0xf]
    %v13048 = vld [vmem:[#allocation13 + $0x88] sm:$0xf]
    %v13049 = vld [vmem:[#allocation13 + $0x8c] sm:$0xf]
    %v13050 = vld [vmem:[#allocation13 + $0x90] sm:$0xf]
    %v13051 = vld [vmem:[#allocation13 + $0x94] sm:$0xf]
    %v13052 = vld [vmem:[#allocation13 + $0x98] sm:$0xf]
    %v13053 = vld [vmem:[#allocation13 + $0x9c] sm:$0xf]
    %v13054 = vld [vmem:[#allocation13 + $0xa0] sm:$0xf]
    %v13055 = vld [vmem:[#allocation13 + $0xa4] sm:$0xf]
    %v13056 = vld [vmem:[#allocation13 + $0xa8] sm:$0xf]
    %v13057 = vld [vmem:[#allocation13 + $0xac] sm:$0xf]
    %v13058 = vld [vmem:[#allocation13 + $0xb0] sm:$0xf]
    %v13059 = vld [vmem:[#allocation13 + $0xb4] sm:$0xf]
    %v13060 = vld [vmem:[#allocation13 + $0xb8] sm:$0xf]
    %v13061 = vld [vmem:[#allocation13 + $0xbc] sm:$0xf]
    %v13062 = vld [vmem:[#allocation13 + $0xc0] sm:$0xf]
    %v13063 = vld [vmem:[#allocation13 + $0xc4] sm:$0xf]
    %v13064 = vld [vmem:[#allocation13 + $0xc8] sm:$0xf]
    %v13065 = vld [vmem:[#allocation13 + $0xcc] sm:$0xf]
    %v13066 = vld [vmem:[#allocation13 + $0xd0] sm:$0xf]
    %v13067 = vld [vmem:[#allocation13 + $0xd4] sm:$0xf]
    %v13068 = vld [vmem:[#allocation13 + $0xd8] sm:$0xf]
    %v13069 = vld [vmem:[#allocation13 + $0xdc] sm:$0xf]
    %v13070 = vld [vmem:[#allocation13 + $0xe0] sm:$0xf]
    %v13071 = vld [vmem:[#allocation13 + $0xe4] sm:$0xf]
    %v13072 = vld [vmem:[#allocation13 + $0xe8] sm:$0xf]
    %v13073 = vld [vmem:[#allocation13 + $0xec] sm:$0xf]
    %v13074 = vld [vmem:[#allocation13 + $0xf0] sm:$0xf]
    %v13075 = vld [vmem:[#allocation13 + $0xf4] sm:$0xf]
    %v13076 = vld [vmem:[#allocation13 + $0xf8] sm:$0xf]
    %v13077 = vld [vmem:[#allocation13 + $0xfc] sm:$0xf]
    %v13078 = vld [vmem:[#allocation15] sm:$0x1]
    %v13080 = vperm.slane %v13078, 0
    %v13146 = vunpack.c.l.b16 %v13014
    %v13147 = vunpack.c.l.b16 %v13015
    %v13148 = vunpack.c.l.b16 %v13016
    %v13149 = vunpack.c.l.b16 %v13017
    %v13150 = vunpack.c.l.b16 %v13018
    %v13151 = vunpack.c.l.b16 %v13019
    %v13152 = vunpack.c.l.b16 %v13020
    %v13153 = vunpack.c.l.b16 %v13021
    %v13154 = vunpack.c.l.b16 %v13022
    %v13155 = vunpack.c.l.b16 %v13023
    %v13156 = vunpack.c.l.b16 %v13024
    %v13157 = vunpack.c.l.b16 %v13025
    %v13158 = vunpack.c.l.b16 %v13026
    %v13159 = vunpack.c.l.b16 %v13027
    %v13160 = vunpack.c.l.b16 %v13028
    %v13161 = vunpack.c.l.b16 %v13029
    %v13162 = vunpack.c.l.b16 %v13030
    %v13163 = vunpack.c.l.b16 %v13031
    %v13164 = vunpack.c.l.b16 %v13032
    %v13165 = vunpack.c.l.b16 %v13033
    %v13166 = vunpack.c.l.b16 %v13034
    %v13167 = vunpack.c.l.b16 %v13035
    %v13168 = vunpack.c.l.b16 %v13036
    %v13169 = vunpack.c.l.b16 %v13037
    %v13170 = vunpack.c.l.b16 %v13038
    %v13171 = vunpack.c.l.b16 %v13039
    %v13172 = vunpack.c.l.b16 %v13040
    %v13173 = vunpack.c.l.b16 %v13041
    %v13174 = vunpack.c.l.b16 %v13042
    %v13175 = vunpack.c.l.b16 %v13043
    %v13176 = vunpack.c.l.b16 %v13044
    %v13177 = vunpack.c.l.b16 %v13045
    %v13178 = vunpack.c.l.b16 %v13046
    %v13179 = vunpack.c.l.b16 %v13047
    %v13180 = vunpack.c.l.b16 %v13048
    %v13181 = vunpack.c.l.b16 %v13049
    %v13182 = vunpack.c.l.b16 %v13050
    %v13183 = vunpack.c.l.b16 %v13051
    %v13184 = vunpack.c.l.b16 %v13052
    %v13185 = vunpack.c.l.b16 %v13053
    %v13186 = vunpack.c.l.b16 %v13054
    %v13187 = vunpack.c.l.b16 %v13055
    %v13188 = vunpack.c.l.b16 %v13056
    %v13189 = vunpack.c.l.b16 %v13057
    %v13190 = vunpack.c.l.b16 %v13058
    %v13191 = vunpack.c.l.b16 %v13059
    %v13192 = vunpack.c.l.b16 %v13060
    %v13193 = vunpack.c.l.b16 %v13061
    %v13194 = vunpack.c.l.b16 %v13062
    %v13195 = vunpack.c.l.b16 %v13063
    %v13196 = vunpack.c.l.b16 %v13064
    %v13197 = vunpack.c.l.b16 %v13065
    %v13198 = vunpack.c.l.b16 %v13066
    %v13199 = vunpack.c.l.b16 %v13067
    %v13200 = vunpack.c.l.b16 %v13068
    %v13201 = vunpack.c.l.b16 %v13069
    %v13202 = vunpack.c.l.b16 %v13070
    %v13203 = vunpack.c.l.b16 %v13071
    %v13204 = vunpack.c.l.b16 %v13072
    %v13205 = vunpack.c.l.b16 %v13073
    %v13206 = vunpack.c.l.b16 %v13074
    %v13207 = vunpack.c.l.b16 %v13075
    %v13208 = vunpack.c.l.b16 %v13076
    %v13209 = vunpack.c.l.b16 %v13077
    %v13210 = vpack.c.b16 %v13147, %v13146
    %v13211 = vpack.c.b16 %v13149, %v13148
    %v13212 = vpack.c.b16 %v13151, %v13150
    %v13213 = vpack.c.b16 %v13153, %v13152
    %v13214 = vpack.c.b16 %v13155, %v13154
    %v13215 = vpack.c.b16 %v13157, %v13156
    %v13216 = vpack.c.b16 %v13159, %v13158
    %v13217 = vpack.c.b16 %v13161, %v13160
    %v13218 = vpack.c.b16 %v13163, %v13162
    %v13219 = vpack.c.b16 %v13165, %v13164
    %v13220 = vpack.c.b16 %v13167, %v13166
    %v13221 = vpack.c.b16 %v13169, %v13168
    %v13222 = vpack.c.b16 %v13171, %v13170
    %v13223 = vpack.c.b16 %v13173, %v13172
    %v13224 = vpack.c.b16 %v13175, %v13174
    %v13225 = vpack.c.b16 %v13177, %v13176
    %v13226 = vpack.c.b16 %v13179, %v13178
    %v13227 = vpack.c.b16 %v13181, %v13180
    %v13228 = vpack.c.b16 %v13183, %v13182
    %v13229 = vpack.c.b16 %v13185, %v13184
    %v13230 = vpack.c.b16 %v13187, %v13186
    %v13231 = vpack.c.b16 %v13189, %v13188
    %v13232 = vpack.c.b16 %v13191, %v13190
    %v13233 = vpack.c.b16 %v13193, %v13192
    %v13234 = vpack.c.b16 %v13195, %v13194
    %v13235 = vpack.c.b16 %v13197, %v13196
    %v13236 = vpack.c.b16 %v13199, %v13198
    %v13237 = vpack.c.b16 %v13201, %v13200
    %v13238 = vpack.c.b16 %v13203, %v13202
    %v13239 = vpack.c.b16 %v13205, %v13204
    %v13240 = vpack.c.b16 %v13207, %v13206
    %v13241 = vpack.c.b16 %v13209, %v13208
    %13274 = vmatpush.bf16.msra.mxu0 %v13217
    %13275 = vmatpush.bf16.msra.mxu0 %v13216
    %13276 = vmatpush.bf16.msra.mxu0 %v13215
    %13277 = vmatpush.bf16.msra.mxu0 %v13214
    %13278 = vmatpush.bf16.msra.mxu0 %v13213
    %13279 = vmatpush.bf16.msra.mxu0 %v13212
    %13280 = vmatpush.bf16.msra.mxu0 %v13211
    %13281 = vmatpush.bf16.msra.mxu0 %v13210
    %13282 = vmatmul.bf16.gmra.mxu0 %v13010
    %v13283 = vpop.f32.mrf.mxu0
    %v13284 = vadd.f32 %v13080, %v13283
    %v13285 = vpop.f32.mrf.mxu0
    %13286 = vdwg.mxu0
    %13287 = vmatpush.bf16.msra.mxu0 %v13225
    %13288 = vmatpush.bf16.msra.mxu0 %v13224
    %13289 = vmatpush.bf16.msra.mxu0 %v13223
    %13290 = vmatpush.bf16.msra.mxu0 %v13222
    %13291 = vmatpush.bf16.msra.mxu0 %v13221
    %13292 = vmatpush.bf16.msra.mxu0 %v13220
    %13293 = vmatpush.bf16.msra.mxu0 %v13219
    %13294 = vmatpush.bf16.msra.mxu0 %v13218
    %13295 = vmatmul.bf16.gmra.mxu0 %v13011
    %v13296 = vpop.f32.mrf.mxu0
    %v13297 = vadd.f32 %v13284, %v13296
    %v13298 = vpop.f32.mrf.mxu0
    %13299 = vdwg.mxu0
    %13300 = vmatpush.bf16.msra.mxu0 %v13233
    %13301 = vmatpush.bf16.msra.mxu0 %v13232
    %13302 = vmatpush.bf16.msra.mxu0 %v13231
    %13303 = vmatpush.bf16.msra.mxu0 %v13230
    %13304 = vmatpush.bf16.msra.mxu0 %v13229
    %13305 = vmatpush.bf16.msra.mxu0 %v13228
    %13306 = vmatpush.bf16.msra.mxu0 %v13227
    %13307 = vmatpush.bf16.msra.mxu0 %v13226
    %13308 = vmatmul.bf16.gmra.mxu0 %v13012
    %v13309 = vpop.f32.mrf.mxu0
    %v13310 = vadd.f32 %v13297, %v13309
    %v13311 = vpop.f32.mrf.mxu0
    %13312 = vdwg.mxu0
    %13313 = vmatpush.bf16.msra.mxu0 %v13241
    %13314 = vmatpush.bf16.msra.mxu0 %v13240
    %13315 = vmatpush.bf16.msra.mxu0 %v13239
    %13316 = vmatpush.bf16.msra.mxu0 %v13238
    %13317 = vmatpush.bf16.msra.mxu0 %v13237
    %13318 = vmatpush.bf16.msra.mxu0 %v13236
    %13319 = vmatpush.bf16.msra.mxu0 %v13235
    %13320 = vmatpush.bf16.msra.mxu0 %v13234
    %13321 = vmatmul.bf16.gmra.mxu0 %v13013
    %v13322 = vpop.f32.mrf.mxu0
    %v13323 = vadd.f32 %v13310, %v13322
    %v13324 = vpop.f32.mrf.mxu0
    %13325 = vdwg.mxu0
    %13326 = vst [vmem:[%s11] sm:$0xff] %v13323
    // Predicated region
    $region82: #{simple_model_forward.1} parent=1 // pred_check
      _
    $region83: #{simple_model_forward.1} parent=1 // pred_check_branch
      %13328 = sbr.rel (0) target = $region85
    $region84: #{simple_model_forward.1} parent=1 // pred_region
      _
    $region85: #{simple_model_forward.1} parent=1 // pred_fallthru
      _
    // Predicated region
    $region86: #{simple_model_forward.1} parent=1 // pred_check
      _
    $region87: #{simple_model_forward.1} parent=1 // pred_check_branch
      %13330 = sbr.rel (0) target = $region89
    $region88: #{simple_model_forward.1} parent=1 // pred_region
      _
    $region89: #{simple_model_forward.1} parent=1 // pred_fallthru
      _
    %13331 = vsyncpa [#allocation3], 1
    %13332 = vsyncpa [#allocation5], 1
    %13333 = vsyncpa [#allocation8], 1
    %13334 = vsyncpa [#allocation11], 1
    %13335 = vsyncpa [#allocation14], 1

</llo_original>
